<compile_context>
chip_gen: v7x
topology: tpu7x:2x2x1
jax: 0.10.0
libtpu: 0.0.40
codegen_flags: <defaults>
</compile_context>

<pallas_src>
import functools

import jax
import jax.numpy as jnp
from jax.experimental import pallas as pl
from jax.experimental.pallas import tpu as pltpu

HIGHEST = jax.lax.Precision.HIGHEST


def bp_rnet_kernel(xh_ref, hebb_ref,
                   w_cat_ref, bi_ref,
                   repa_ref, rep_ref, tile_ref, fold_ref,
                   wh_ref, bh_ref, wmf_ref, bmf_ref,
                   out_ref, hebb_out_ref, *, num_actions):
    xh = xh_ref[...]        # (TB, isize+H)   [x | h_prev]
    hebb = hebb_ref[...]    # (TB, H*H)       previous Hebbian trace, flat [i*H+j]

    # Plastic recurrent term.
    #   ha_rep[b, i*H+j] = h[b,i] * alpha[i,j]   (alpha folded into the repeat matrix)
    ha_rep = jnp.dot(xh, repa_ref[...], precision=HIGHEST,
                     preferred_element_type=jnp.float32)            # (TB, HH)
    #   rec[b, j] = sum_i h[b,i] * alpha[i,j] * hebb[b,i,j]
    rec = jnp.dot(ha_rep * hebb, fold_ref[...], precision=HIGHEST,
                  preferred_element_type=jnp.float32)                # (TB, H)

    # hactiv = tanh(i2h(x) + h @ w + rec)   — i2h and w fused into one matmul.
    pre = (jnp.dot(xh, w_cat_ref[...], precision=HIGHEST,
                   preferred_element_type=jnp.float32)
           + bi_ref[...] + rec)
    hact = jnp.tanh(pre)                                             # (TB, H)

    # Fused heads + hact passthrough (identity block appended to the weights):
    #   [policy logits | value | h2mod pre-activation | hactiv]
    heads = (jnp.dot(hact, wh_ref[...], precision=HIGHEST,
                     preferred_element_type=jnp.float32) + bh_ref[...])
    out_ref[...] = heads                                             # (TB, A+2+H)

    # Hebbian trace update (internal neuromodulation).
    mod = jnp.tanh(heads[:, num_actions + 1:num_actions + 2])        # (TB, 1)
    # g[b, j] = eta[b, j] * hact[b, j], built at width H then tiled to H*H.
    g = (mod * wmf_ref[...] + bmf_ref[...]) * hact                    # (TB, H)
    gt = jnp.dot(g, tile_ref[...], precision=HIGHEST,
                 preferred_element_type=jnp.float32)                  # (TB, HH)
    # h_rep[b, i*H+j] = h[b, i]
    h_rep = jnp.dot(xh, rep_ref[...], precision=HIGHEST,
                    preferred_element_type=jnp.float32)               # (TB, HH)
    # hebb_new = clip(hebb + eta[b,j] * h[b,i] * hact[b,j], -2, 2)
    hebb_out_ref[...] = jnp.clip(hebb + h_rep * gt, -2.0, 2.0)


@functools.partial(jax.jit, static_argnames=("block_b",))
def bp_rnet_forward(params, inputs, h_prev, hebb, *, block_b=512):
    B, isize = inputs.shape
    H = h_prev.shape[1]
    A = params["h2o_w"].shape[0]
    HH = H * H
    IH = isize + H
    NH = A + 2 + H          # fused output width: logits | value | modpre | hact

    # --- batch tiling --------------------------------------------------------
    if B <= 8:
        TB = B                                  # single block == full batch dim
    else:
        tb_cap = max(8, (block_b // 8) * 8)
        # Aim for >= 2 grid steps so v7x's two TensorCores both get work and the
        # pipeline has something to overlap; keep the tile a multiple of 8.
        tb_half = (((B + 1) // 2) + 7) // 8 * 8
        TB = min(tb_cap, tb_half)
    grid_b = pl.cdiv(B, TB)
    # No padding: the trailing block may be ragged; Pallas masks the partial
    # write-back, and pad-row garbage never mixes into valid rows (batch is the
    # M dimension of every matmul).

    # --- operand prep (all constants pre-fused / pre-transposed) -------------
    xh = jnp.concatenate([inputs, h_prev], axis=1)                    # (B, IH)
    hebb_flat = hebb.reshape(B, HH)

    eye = jnp.eye(H, dtype=jnp.float32)
    rep_m = jnp.repeat(eye, H, axis=1)     # (H, HH): h_rep[b, i*H+j]  = h[b, i]
    tile_m = jnp.tile(eye, (1, H))         # (H, HH): tile[b, i*H+j]   = v[b, j]
    fold_m = jnp.tile(eye, (H, 1))         # (HH, H): sum over i of flat[i*H+j]
    zpad = jnp.zeros((isize, HH), jnp.float32)
    rep_cat = jnp.concatenate([zpad, rep_m], axis=0)                  # (IH, HH)
    repa_cat = jnp.concatenate(
        [zpad, rep_m * params["alpha"].reshape(1, HH)], axis=0)       # (IH, HH)
    w_cat = jnp.concatenate([params["i2h_w"].T, params["w"]], axis=0)  # (IH, H)
    bi = params["i2h_b"].reshape(1, H)

    wh_ext = jnp.concatenate([params["h2o_w"].T, params["h2v_w"].T,
                              params["h2mod_w"].T, eye], axis=1)      # (H, NH)
    bh_ext = jnp.concatenate([params["h2o_b"], params["h2v_b"],
                              params["h2mod_b"],
                              jnp.zeros((H,), jnp.float32)]).reshape(1, NH)
    wmf = params["modfanout_w"].reshape(1, H)
    bmf = params["modfanout_b"].reshape(1, H)

    def tiled(shape):
        return pl.BlockSpec(shape, lambda b: (b, 0))

    def whole(shape):
        return pl.BlockSpec(shape, lambda b: (0, 0))

    out_shapes = (
        jax.ShapeDtypeStruct((B, NH), jnp.float32),    # fused heads + hact
        jax.ShapeDtypeStruct((B, HH), jnp.float32),    # new hebb (flat)
    )

    flops = 2 * B * (2 * IH * HH + HH * H + H * HH + IH * H + H * NH)
    bytes_accessed = 4 * (B * (IH + 2 * HH + NH)
                          + 2 * IH * HH + IH * H + H * HH + HH * H
                          + H * NH + NH + 3 * H)
    cost = pl.CostEstimate(flops=flops, transcendentals=B * (H + 1),
                           bytes_accessed=bytes_accessed)

    heads_full, hebb_new = pl.pallas_call(
        functools.partial(bp_rnet_kernel, num_actions=A),
        out_shape=out_shapes,
        grid_spec=pltpu.PrefetchScalarGridSpec(
            num_scalar_prefetch=0,
            grid=(grid_b,),
            in_specs=[
                tiled((TB, IH)),                    # xh
                tiled((TB, HH)),                    # hebb (flat, aliased below)
                whole((IH, H)), whole((1, H)),      # w_cat, bi
                whole((IH, HH)), whole((IH, HH)),   # repa_cat, rep_cat
                whole((H, HH)), whole((HH, H)),     # tile, fold
                whole((H, NH)), whole((1, NH)),     # fused heads
                whole((1, H)), whole((1, H)),       # modfanout w, b
            ],
            out_specs=(
                tiled((TB, NH)),
                tiled((TB, HH)),
            ),
        ),
        input_output_aliases={1: 1},                # hebb updated in place
        compiler_params=pltpu.CompilerParams(
            dimension_semantics=("parallel",),
            vmem_limit_bytes=48 * 1024 * 1024),
        cost_estimate=cost,
    )(xh, hebb_flat, w_cat, bi, repa_cat, rep_cat, tile_m, fold_m,
      wh_ext, bh_ext, wmf, bmf)

    act = heads_full[:, :A]
    val = heads_full[:, A:A + 1]
    hact = heads_full[:, A + 2:]
    return act, val, hact, hebb_new.reshape(B, H, H)


def bp_rnet_reference(params, inputs, h_prev, hebb):
    """Plain-JAX reference mirroring the PyTorch forward (default flags)."""
    hp = HIGHEST
    plastic = params["w"] + params["alpha"] * hebb                        # (B,H,H)
    hactiv = jnp.tanh(jnp.dot(inputs, params["i2h_w"].T, precision=hp)
                      + params["i2h_b"]
                      + jnp.einsum('bh,bhk->bk', h_prev, plastic, precision=hp))
    activout = jnp.dot(hactiv, params["h2o_w"].T, precision=hp) + params["h2o_b"]
    valueout = jnp.dot(hactiv, params["h2v_w"].T, precision=hp) + params["h2v_b"]
    deltahebb = jnp.einsum('bi,bj->bij', h_prev, hactiv, precision=hp)
    mod = jnp.tanh(jnp.dot(hactiv, params["h2mod_w"].T, precision=hp)
                   + params["h2mod_b"])                                   # (B,1)
    eta = (mod[:, :, None] * params["modfanout_w"].reshape(1, 1, -1)
           + params["modfanout_b"].reshape(1, 1, -1))                     # (B,1,H)
    hebb_new = jnp.clip(hebb + eta * deltahebb, -2.0, 2.0)
    return activout, valueout, hactiv, hebb_new


def init_params(key, isize, hsize, num_actions):
    ks = jax.random.split(key, 12)

    def linear(kw, kb, in_f, out_f):
        bound = 1.0 / float(in_f) ** 0.5
        w = jax.random.uniform(kw, (out_f, in_f), jnp.float32, -bound, bound)
        b = jax.random.uniform(kb, (out_f,), jnp.float32, -bound, bound)
        return w, b

    i2h_w, i2h_b = linear(ks[0], ks[1], isize, hsize)
    h2mod_w, h2mod_b = linear(ks[2], ks[3], hsize, 1)
    modfanout_w, modfanout_b = linear(ks[4], ks[5], 1, hsize)
    h2o_w, h2o_b = linear(ks[6], ks[7], hsize, num_actions)
    h2v_w, h2v_b = linear(ks[8], ks[9], hsize, 1)
    w = 0.001 * jax.random.uniform(ks[10], (hsize, hsize), jnp.float32)
    alpha = 0.001 * jax.random.uniform(ks[11], (hsize, hsize), jnp.float32)
    return dict(i2h_w=i2h_w, i2h_b=i2h_b, w=w, alpha=alpha,
                h2mod_w=h2mod_w, h2mod_b=h2mod_b,
                modfanout_w=modfanout_w, modfanout_b=modfanout_b,
                h2o_w=h2o_w, h2o_b=h2o_b, h2v_w=h2v_w, h2v_b=h2v_b)


def _check(params, inputs, h_prev, hebb, nact, hsize, **kw):
    B = inputs.shape[0]
    act, val, hact, hebb_new = bp_rnet_forward(params, inputs, h_prev, hebb, **kw)
    jax.block_until_ready((act, val, hact, hebb_new))
    act_r, val_r, hact_r, hebb_r = bp_rnet_reference(params, inputs, h_prev, hebb)
    assert act.shape == (B, nact) and val.shape == (B, 1)
    assert hact.shape == (B, hsize) and hebb_new.shape == (B, hsize, hsize)
    assert jnp.allclose(act, act_r, atol=1e-3, rtol=1e-3)
    assert jnp.allclose(val, val_r, atol=1e-3, rtol=1e-3)
    assert jnp.allclose(hact, hact_r, atol=1e-3, rtol=1e-3)
    assert jnp.allclose(hebb_new, hebb_r, atol=1e-3, rtol=1e-3)


if __name__ == "__main__":
    ISIZE, HSIZE, NACT = 16, 32, 4

    key = jax.random.PRNGKey(0)
    kp, kx, kh, khebb = jax.random.split(key, 4)
    params = init_params(kp, ISIZE, HSIZE, NACT)

    # Tiny single-block case (B=2 -> one grid step, block == full batch dim).
    B = 2
    inputs = jax.random.normal(kx, (B, ISIZE), jnp.float32)
    h_prev = jax.random.normal(kh, (B, HSIZE), jnp.float32)
    hebb = 0.01 * jax.random.normal(khebb, (B, HSIZE, HSIZE), jnp.float32)
    _check(params, inputs, h_prev, hebb, NACT, HSIZE)

    # Ragged multi-tile case: B=10, TB=8 -> 2 grid steps, masked trailing block,
    # no wrapper-side padding of the hebb stream, in-place hebb aliasing.
    B2 = 10
    inputs2 = jax.random.normal(kx, (B2, ISIZE), jnp.float32)
    h_prev2 = jax.random.normal(kh, (B2, HSIZE), jnp.float32)
    hebb2 = 0.01 * jax.random.normal(khebb, (B2, HSIZE, HSIZE), jnp.float32)
    _check(params, inputs2, h_prev2, hebb2, NACT, HSIZE, block_b=8)

    # Default config: batch splits into two equal tiles (both v7x TCs get work).
    B3 = 48
    inputs3 = jax.random.normal(kx, (B3, ISIZE), jnp.float32)
    h_prev3 = jax.random.normal(kh, (B3, HSIZE), jnp.float32)
    hebb3 = 0.01 * jax.random.normal(khebb, (B3, HSIZE, HSIZE), jnp.float32)
    _check(params, inputs3, h_prev3, hebb3, NACT, HSIZE)

    print("KERNEL_OK")
</pallas_src>

<mosaic_0001>
module attributes {stable_mosaic.version = 11 : i64} {
  func.func @bp_rnet_kernel(%arg0: i32, %arg1: memref<2x48xf32, #tpu.memory_space<vmem>>, %arg2: memref<2x1024xf32, #tpu.memory_space<vmem>>, %arg3: memref<48x32xf32, #tpu.memory_space<vmem>>, %arg4: memref<1x32xf32, #tpu.memory_space<vmem>>, %arg5: memref<48x1024xf32, #tpu.memory_space<vmem>>, %arg6: memref<48x1024xf32, #tpu.memory_space<vmem>>, %arg7: memref<32x1024xf32, #tpu.memory_space<vmem>>, %arg8: memref<1024x32xf32, #tpu.memory_space<vmem>>, %arg9: memref<32x38xf32, #tpu.memory_space<vmem>>, %arg10: memref<1x38xf32, #tpu.memory_space<vmem>>, %arg11: memref<1x32xf32, #tpu.memory_space<vmem>>, %arg12: memref<1x32xf32, #tpu.memory_space<vmem>>, %arg13: memref<2x38xf32, #tpu.memory_space<vmem>>, %arg14: memref<2x1024xf32, #tpu.memory_space<vmem>>) attributes {dimension_semantics = [#tpu.dimension_semantics<parallel>], iteration_bounds = array<i64: 1>, scalar_prefetch = 0 : i64, scratch_operands = 0 : i64, tpu.core_type = #tpu.core_type<tc>, window_params = [{transform_indices = @transform_0, window_bounds = array<i64: 2, 48>}, {transform_indices = @transform_1, window_bounds = array<i64: 2, 1024>}, {pipeline_mode = #tpu.pipeline_mode<synchronous>, transform_indices = @transform_2, window_bounds = array<i64: 48, 32>}, {pipeline_mode = #tpu.pipeline_mode<synchronous>, transform_indices = @transform_3, window_bounds = array<i64: 1, 32>}, {pipeline_mode = #tpu.pipeline_mode<synchronous>, transform_indices = @transform_4, window_bounds = array<i64: 48, 1024>}, {pipeline_mode = #tpu.pipeline_mode<synchronous>, transform_indices = @transform_5, window_bounds = array<i64: 48, 1024>}, {pipeline_mode = #tpu.pipeline_mode<synchronous>, transform_indices = @transform_6, window_bounds = array<i64: 32, 1024>}, {pipeline_mode = #tpu.pipeline_mode<synchronous>, transform_indices = @transform_7, window_bounds = array<i64: 1024, 32>}, {pipeline_mode = #tpu.pipeline_mode<synchronous>, transform_indices = @transform_8, window_bounds = array<i64: 32, 38>}, {pipeline_mode = #tpu.pipeline_mode<synchronous>, transform_indices = @transform_9, window_bounds = array<i64: 1, 38>}, {pipeline_mode = #tpu.pipeline_mode<synchronous>, transform_indices = @transform_10, window_bounds = array<i64: 1, 32>}, {pipeline_mode = #tpu.pipeline_mode<synchronous>, transform_indices = @transform_11, window_bounds = array<i64: 1, 32>}, {transform_indices = @transform_12, window_bounds = array<i64: 2, 38>}, {transform_indices = @transform_13, window_bounds = array<i64: 2, 1024>}]} {
    %c0 = arith.constant 0 : index
    %c0_0 = arith.constant 0 : index
    %0 = vector.load %arg1[%c0, %c0_0] : memref<2x48xf32, #tpu.memory_space<vmem>>, vector<2x48xf32>
    %c0_1 = arith.constant 0 : index
    %c0_2 = arith.constant 0 : index
    %1 = vector.load %arg2[%c0_1, %c0_2] : memref<2x1024xf32, #tpu.memory_space<vmem>>, vector<2x1024xf32>
    %c0_3 = arith.constant 0 : index
    %c0_4 = arith.constant 0 : index
    %2 = vector.load %arg5[%c0_3, %c0_4] : memref<48x1024xf32, #tpu.memory_space<vmem>>, vector<48x1024xf32>
    %cst = arith.constant dense<0.000000e+00> : vector<2x1024xf32>
    %3 = tpu.matmul %0, %2, %cst {dimension_numbers = #tpu.dot_dimension_numbers<[1], [0], [0], [1], [0, 0, 1, 1], [], []>, precision = #tpu.contract_precision<fp32>} : vector<2x48xf32>, vector<48x1024xf32>, vector<2x1024xf32> -> vector<2x1024xf32>
    %4 = arith.mulf %3, %1 : vector<2x1024xf32>
    %c0_5 = arith.constant 0 : index
    %c0_6 = arith.constant 0 : index
    %5 = vector.load %arg8[%c0_5, %c0_6] : memref<1024x32xf32, #tpu.memory_space<vmem>>, vector<1024x32xf32>
    %cst_7 = arith.constant dense<0.000000e+00> : vector<2x32xf32>
    %6 = tpu.matmul %4, %5, %cst_7 {dimension_numbers = #tpu.dot_dimension_numbers<[1], [0], [0], [1], [0, 0, 1, 1], [], []>, precision = #tpu.contract_precision<fp32>} : vector<2x1024xf32>, vector<1024x32xf32>, vector<2x32xf32> -> vector<2x32xf32>
    %c0_8 = arith.constant 0 : index
    %c0_9 = arith.constant 0 : index
    %7 = vector.load %arg3[%c0_8, %c0_9] : memref<48x32xf32, #tpu.memory_space<vmem>>, vector<48x32xf32>
    %cst_10 = arith.constant dense<0.000000e+00> : vector<2x32xf32>
    %8 = tpu.matmul %0, %7, %cst_10 {dimension_numbers = #tpu.dot_dimension_numbers<[1], [0], [0], [1], [0, 0, 1, 1], [], []>, precision = #tpu.contract_precision<fp32>} : vector<2x48xf32>, vector<48x32xf32>, vector<2x32xf32> -> vector<2x32xf32>
    %c0_11 = arith.constant 0 : index
    %c0_12 = arith.constant 0 : index
    %9 = vector.load %arg4[%c0_11, %c0_12] : memref<1x32xf32, #tpu.memory_space<vmem>>, vector<1x32xf32>
    %10 = vector.broadcast %9 : vector<1x32xf32> to vector<2x32xf32>
    %11 = arith.addf %8, %10 : vector<2x32xf32>
    %12 = arith.addf %11, %6 : vector<2x32xf32>
    %13 = math.tanh %12 : vector<2x32xf32>
    %c0_13 = arith.constant 0 : index
    %c0_14 = arith.constant 0 : index
    %14 = vector.load %arg9[%c0_13, %c0_14] : memref<32x38xf32, #tpu.memory_space<vmem>>, vector<32x38xf32>
    %cst_15 = arith.constant dense<0.000000e+00> : vector<2x38xf32>
    %15 = tpu.matmul %13, %14, %cst_15 {dimension_numbers = #tpu.dot_dimension_numbers<[1], [0], [0], [1], [0, 0, 1, 1], [], []>, precision = #tpu.contract_precision<fp32>} : vector<2x32xf32>, vector<32x38xf32>, vector<2x38xf32> -> vector<2x38xf32>
    %c0_16 = arith.constant 0 : index
    %c0_17 = arith.constant 0 : index
    %16 = vector.load %arg10[%c0_16, %c0_17] : memref<1x38xf32, #tpu.memory_space<vmem>>, vector<1x38xf32>
    %17 = vector.broadcast %16 : vector<1x38xf32> to vector<2x38xf32>
    %18 = arith.addf %15, %17 : vector<2x38xf32>
    %c0_18 = arith.constant 0 : index
    %c0_19 = arith.constant 0 : index
    %19 = vector.load %arg13[%c0_18, %c0_19] : memref<2x38xf32, #tpu.memory_space<vmem>>, vector<2x38xf32>
    tpu.vector_store %arg13[%c0_18, %c0_19], %18 {strides = array<i32>} : memref<2x38xf32, #tpu.memory_space<vmem>>, vector<2x38xf32>,
    %20 = vector.extract_strided_slice %18 {offsets = [0, 5], sizes = [2, 1], strides = [1, 1]} : vector<2x38xf32> to vector<2x1xf32>
    %21 = math.tanh %20 : vector<2x1xf32>
    %c0_20 = arith.constant 0 : index
    %c0_21 = arith.constant 0 : index
    %22 = vector.load %arg11[%c0_20, %c0_21] : memref<1x32xf32, #tpu.memory_space<vmem>>, vector<1x32xf32>
    %23 = vector.broadcast %21 : vector<2x1xf32> to vector<2x32xf32>
    %24 = vector.broadcast %22 : vector<1x32xf32> to vector<2x32xf32>
    %25 = arith.mulf %23, %24 : vector<2x32xf32>
    %c0_22 = arith.constant 0 : index
    %c0_23 = arith.constant 0 : index
    %26 = vector.load %arg12[%c0_22, %c0_23] : memref<1x32xf32, #tpu.memory_space<vmem>>, vector<1x32xf32>
    %27 = vector.broadcast %26 : vector<1x32xf32> to vector<2x32xf32>
    %28 = arith.addf %25, %27 : vector<2x32xf32>
    %29 = arith.mulf %28, %13 : vector<2x32xf32>
    %c0_24 = arith.constant 0 : index
    %c0_25 = arith.constant 0 : index
    %30 = vector.load %arg7[%c0_24, %c0_25] : memref<32x1024xf32, #tpu.memory_space<vmem>>, vector<32x1024xf32>
    %cst_26 = arith.constant dense<0.000000e+00> : vector<2x1024xf32>
    %31 = tpu.matmul %29, %30, %cst_26 {dimension_numbers = #tpu.dot_dimension_numbers<[1], [0], [0], [1], [0, 0, 1, 1], [], []>, precision = #tpu.contract_precision<fp32>} : vector<2x32xf32>, vector<32x1024xf32>, vector<2x1024xf32> -> vector<2x1024xf32>
    %c0_27 = arith.constant 0 : index
    %c0_28 = arith.constant 0 : index
    %32 = vector.load %arg6[%c0_27, %c0_28] : memref<48x1024xf32, #tpu.memory_space<vmem>>, vector<48x1024xf32>
    %cst_29 = arith.constant dense<0.000000e+00> : vector<2x1024xf32>
    %33 = tpu.matmul %0, %32, %cst_29 {dimension_numbers = #tpu.dot_dimension_numbers<[1], [0], [0], [1], [0, 0, 1, 1], [], []>, precision = #tpu.contract_precision<fp32>} : vector<2x48xf32>, vector<48x1024xf32>, vector<2x1024xf32> -> vector<2x1024xf32>
    %34 = arith.mulf %33, %31 : vector<2x1024xf32>
    %35 = arith.addf %1, %34 : vector<2x1024xf32>
    %cst_30 = arith.constant -2.000000e+00 : f32
    %cst_31 = arith.constant 2.000000e+00 : f32
    %36 = vector.broadcast %cst_30 : f32 to vector<2x1024xf32>
    %37 = arith.maximumf %36, %35 : vector<2x1024xf32>
    %38 = vector.broadcast %cst_31 : f32 to vector<2x1024xf32>
    %39 = arith.minimumf %38, %37 : vector<2x1024xf32>
    %c0_32 = arith.constant 0 : index
    %c0_33 = arith.constant 0 : index
    %40 = vector.load %arg14[%c0_32, %c0_33] : memref<2x1024xf32, #tpu.memory_space<vmem>>, vector<2x1024xf32>
    tpu.vector_store %arg14[%c0_32, %c0_33], %39 {strides = array<i32>} : memref<2x1024xf32, #tpu.memory_space<vmem>>, vector<2x1024xf32>,
    return
  }
  func.func @transform_0(%arg0: i32) -> (i32, i32) {
    %c0_i32 = arith.constant 0 : i32
    %c0_i32_0 = arith.constant 0 : i32
    return %arg0, %c0_i32 : i32, i32
  }
  func.func @transform_1(%arg0: i32) -> (i32, i32) {
    %c0_i32 = arith.constant 0 : i32
    %c0_i32_0 = arith.constant 0 : i32
    return %arg0, %c0_i32 : i32, i32
  }
  func.func @transform_2(%arg0: i32) -> (i32, i32) {
    %c0_i32 = arith.constant 0 : i32
    %c0_i32_0 = arith.constant 0 : i32
    %c0_i32_1 = arith.constant 0 : i32
    return %c0_i32, %c0_i32_0 : i32, i32
  }
  func.func @transform_3(%arg0: i32) -> (i32, i32) {
    %c0_i32 = arith.constant 0 : i32
    %c0_i32_0 = arith.constant 0 : i32
    %c0_i32_1 = arith.constant 0 : i32
    return %c0_i32, %c0_i32_0 : i32, i32
  }
  func.func @transform_4(%arg0: i32) -> (i32, i32) {
    %c0_i32 = arith.constant 0 : i32
    %c0_i32_0 = arith.constant 0 : i32
    %c0_i32_1 = arith.constant 0 : i32
    return %c0_i32, %c0_i32_0 : i32, i32
  }
  func.func @transform_5(%arg0: i32) -> (i32, i32) {
    %c0_i32 = arith.constant 0 : i32
    %c0_i32_0 = arith.constant 0 : i32
    %c0_i32_1 = arith.constant 0 : i32
    return %c0_i32, %c0_i32_0 : i32, i32
  }
  func.func @transform_6(%arg0: i32) -> (i32, i32) {
    %c0_i32 = arith.constant 0 : i32
    %c0_i32_0 = arith.constant 0 : i32
    %c0_i32_1 = arith.constant 0 : i32
    return %c0_i32, %c0_i32_0 : i32, i32
  }
  func.func @transform_7(%arg0: i32) -> (i32, i32) {
    %c0_i32 = arith.constant 0 : i32
    %c0_i32_0 = arith.constant 0 : i32
    %c0_i32_1 = arith.constant 0 : i32
    return %c0_i32, %c0_i32_0 : i32, i32
  }
  func.func @transform_8(%arg0: i32) -> (i32, i32) {
    %c0_i32 = arith.constant 0 : i32
    %c0_i32_0 = arith.constant 0 : i32
    %c0_i32_1 = arith.constant 0 : i32
    return %c0_i32, %c0_i32_0 : i32, i32
  }
  func.func @transform_9(%arg0: i32) -> (i32, i32) {
    %c0_i32 = arith.constant 0 : i32
    %c0_i32_0 = arith.constant 0 : i32
    %c0_i32_1 = arith.constant 0 : i32
    return %c0_i32, %c0_i32_0 : i32, i32
  }
  func.func @transform_10(%arg0: i32) -> (i32, i32) {
    %c0_i32 = arith.constant 0 : i32
    %c0_i32_0 = arith.constant 0 : i32
    %c0_i32_1 = arith.constant 0 : i32
    return %c0_i32, %c0_i32_0 : i32, i32
  }
  func.func @transform_11(%arg0: i32) -> (i32, i32) {
    %c0_i32 = arith.constant 0 : i32
    %c0_i32_0 = arith.constant 0 : i32
    %c0_i32_1 = arith.constant 0 : i32
    return %c0_i32, %c0_i32_0 : i32, i32
  }
  func.func @transform_12(%arg0: i32) -> (i32, i32) {
    %c0_i32 = arith.constant 0 : i32
    %c0_i32_0 = arith.constant 0 : i32
    return %arg0, %c0_i32 : i32, i32
  }
  func.func @transform_13(%arg0: i32) -> (i32, i32) {
    %c0_i32 = arith.constant 0 : i32
    %c0_i32_0 = arith.constant 0 : i32
    return %arg0, %c0_i32 : i32, i32
  }
}

</mosaic_0001>

<llo_original>
// kernel: mul.5
$region0: #{mul.5}
  %s0 = inlined_call_operand.vmem [shape: f32[32,32], index: 0, kind: input, shape index: {}]
  %s1 = inlined_call_operand.vmem [shape: f32[1024], index: 1, kind: output, shape index: {}]
  %v2 = vld [vmem:[%s0] ss:$4 sm:$0xff]
  %vm3 = vcmask 261120
  %4 = vst.msk [vmem:[%s1] sm:$0xff] %vm3, %v2
  %s5 = scalar_lea.vmem %s0, 3
  %v6 = vld [vmem:[%s5] ss:$4 sm:$0xff]
  %7 = vrot.lane.b32.xlu0 %v6, 96
  %v8 = vpop.permute.xlu0 %7
  %vm9 = vcmask 1048320
  %10 = vst.msk [vmem:[%s1] sm:$0xff] %vm9, %v8
  %s11 = scalar_lea.vmem %s0, 2
  %v12 = vld [vmem:[%s11] ss:$4 sm:$0xff]
  %13 = vrot.lane.b32.xlu0 %v12, 64
  %v14 = vpop.permute.xlu0 %13
  %vm15 = vcmask 785920
  %16 = vst.msk [vmem:[%s1] sm:$0xff] %vm15, %v14
  %s17 = scalar_lea.vmem %s0, 1
  %v18 = vld [vmem:[%s17] ss:$4 sm:$0xff]
  %19 = vrot.lane.b32.xlu0 %v18, 32
  %v20 = vpop.permute.xlu0 %19
  %vm21 = vcmask 523520
  %22 = vst.msk [vmem:[%s1] sm:$0xff] %vm21, %v20

// kernel: bp_rnet_forward.1
$region0: #{bp_rnet_forward.1}
  #allocation0 [shape = 'u32[]', space=smem, size = 0x4, offset = 0x4, fixed_abs, tag = 'smem constant byte address 0x4 - core index']
  #allocation1 [shape = 'u32[144,128]{1,0:T(1,128)}', space=vmem, size = 0x12000, scoped, tag = 'internal scratch']
  %s0 = inlined_call_operand.vmem [shape: f32[2,48], index: 0, kind: input, shape index: {}]
  %s1 = inlined_call_operand.vmem [shape: f32[2,1024], index: 1, kind: input, shape index: {}, may-alias: {1,13}]
  %s2 = inlined_call_operand.vmem [shape: f32[48,32], index: 2, kind: input, shape index: {}]
  %s3 = inlined_call_operand.vmem [shape: f32[1,32], index: 3, kind: input, shape index: {}]
  %s4 = inlined_call_operand.vmem [shape: f32[48,1024], index: 4, kind: input, shape index: {}]
  %s5 = inlined_call_operand.vmem [shape: f32[48,1024], index: 5, kind: input, shape index: {}]
  %s6 = inlined_call_operand.vmem [shape: f32[32,1024], index: 6, kind: input, shape index: {}]
  %s7 = inlined_call_operand.vmem [shape: f32[1024,32], index: 7, kind: input, shape index: {}]
  %s8 = inlined_call_operand.vmem [shape: f32[32,38], index: 8, kind: input, shape index: {}]
  %s9 = inlined_call_operand.vmem [shape: f32[1,38], index: 9, kind: input, shape index: {}]
  %s10 = inlined_call_operand.vmem [shape: f32[1,32], index: 10, kind: input, shape index: {}]
  %s11 = inlined_call_operand.vmem [shape: f32[1,32], index: 11, kind: input, shape index: {}]
  %s12 = inlined_call_operand.vmem [shape: f32[2,38], index: 12, kind: output, shape index: {0}]
  %s13 = inlined_call_operand.vmem [shape: f32[2,1024], index: 13, kind: output, shape index: {1}, may-alias: {1,13}]
  %14 = xla_tuple %s12, %s13
  %s15 = sld [smem:[#allocation0]]
  $region66: #{bp_rnet_forward.1} parent=0
    _
  %s17 = ssub.s32 1, %s15
  %s18 = scalar_select 0, %s17, %s15
  // Predicated region
  $region2: #{bp_rnet_forward.1} parent=0 // pred_check
    _
  $region3: #{bp_rnet_forward.1} parent=0 // pred_check_branch
    %20 = sbr.rel (0) target = $region5
  $region4: #{bp_rnet_forward.1} parent=0 // pred_region
    _
  $region5: #{bp_rnet_forward.1} parent=0 // pred_fallthru
    _
  // Predicated region
  $region6: #{bp_rnet_forward.1} parent=0 // pred_check
    _
  $region7: #{bp_rnet_forward.1} parent=0 // pred_check_branch
    %22 = sbr.rel (0) target = $region9
  $region8: #{bp_rnet_forward.1} parent=0 // pred_region
    _
  $region9: #{bp_rnet_forward.1} parent=0 // pred_fallthru
    _
  // Predicated region
  $region10: #{bp_rnet_forward.1} parent=0 // pred_check
    _
  $region11: #{bp_rnet_forward.1} parent=0 // pred_check_branch
    %24 = sbr.rel (0) target = $region13
  $region12: #{bp_rnet_forward.1} parent=0 // pred_region
    _
  $region13: #{bp_rnet_forward.1} parent=0 // pred_fallthru
    _
  // Predicated region
  $region14: #{bp_rnet_forward.1} parent=0 // pred_check
    _
  $region15: #{bp_rnet_forward.1} parent=0 // pred_check_branch
    %26 = sbr.rel (0) target = $region17
  $region16: #{bp_rnet_forward.1} parent=0 // pred_region
    _
  $region17: #{bp_rnet_forward.1} parent=0 // pred_fallthru
    _
  // Predicated region
  $region18: #{bp_rnet_forward.1} parent=0 // pred_check
    _
  $region19: #{bp_rnet_forward.1} parent=0 // pred_check_branch
    %28 = sbr.rel (0) target = $region21
  $region20: #{bp_rnet_forward.1} parent=0 // pred_region
    _
  $region21: #{bp_rnet_forward.1} parent=0 // pred_fallthru
    _
  // Predicated region
  $region22: #{bp_rnet_forward.1} parent=0 // pred_check
    _
  $region23: #{bp_rnet_forward.1} parent=0 // pred_check_branch
    %30 = sbr.rel (0) target = $region25
  $region24: #{bp_rnet_forward.1} parent=0 // pred_region
    _
  $region25: #{bp_rnet_forward.1} parent=0 // pred_fallthru
    _
  // Predicated region
  $region26: #{bp_rnet_forward.1} parent=0 // pred_check
    _
  $region27: #{bp_rnet_forward.1} parent=0 // pred_check_branch
    %32 = sbr.rel (0) target = $region29
  $region28: #{bp_rnet_forward.1} parent=0 // pred_region
    _
  $region29: #{bp_rnet_forward.1} parent=0 // pred_fallthru
    _
  // Predicated region
  $region30: #{bp_rnet_forward.1} parent=0 // pred_check
    _
  $region31: #{bp_rnet_forward.1} parent=0 // pred_check_branch
    %34 = sbr.rel (0) target = $region33
  $region32: #{bp_rnet_forward.1} parent=0 // pred_region
    _
  $region33: #{bp_rnet_forward.1} parent=0 // pred_fallthru
    _
  // Predicated region
  $region34: #{bp_rnet_forward.1} parent=0 // pred_check
    _
  $region35: #{bp_rnet_forward.1} parent=0 // pred_check_branch
    %36 = sbr.rel (0) target = $region37
  $region36: #{bp_rnet_forward.1} parent=0 // pred_region
    _
  $region37: #{bp_rnet_forward.1} parent=0 // pred_fallthru
    _
  // Predicated region
  $region38: #{bp_rnet_forward.1} parent=0 // pred_check
    _
  $region39: #{bp_rnet_forward.1} parent=0 // pred_check_branch
    %38 = sbr.rel (0) target = $region41
  $region40: #{bp_rnet_forward.1} parent=0 // pred_region
    _
  $region41: #{bp_rnet_forward.1} parent=0 // pred_fallthru
    _
  // Predicated region
  $region42: #{bp_rnet_forward.1} parent=0 // pred_check
    _
  $region43: #{bp_rnet_forward.1} parent=0 // pred_check_branch
    %40 = sbr.rel (0) target = $region45
  $region44: #{bp_rnet_forward.1} parent=0 // pred_region
    _
  $region45: #{bp_rnet_forward.1} parent=0 // pred_fallthru
    _
  // Predicated region
  $region46: #{bp_rnet_forward.1} parent=0 // pred_check
    _
  $region47: #{bp_rnet_forward.1} parent=0 // pred_check_branch
    %42 = sbr.rel (0) target = $region49
  $region48: #{bp_rnet_forward.1} parent=0 // pred_region
    _
  $region49: #{bp_rnet_forward.1} parent=0 // pred_fallthru
    _
  %v43 = vld [vmem:[%s0] sm:$0x3]
  %v44 = vld [vmem:[%s1] sm:$0xff]
  %v45 = vld [vmem:[%s1 + $0x8] sm:$0xff]
  %v46 = vld [vmem:[%s4] sm:$0xff]
  %v47 = vld [vmem:[%s4 + $0x8] sm:$0xff]
  %v48 = vld [vmem:[%s4 + $0x10] sm:$0xff]
  %v49 = vld [vmem:[%s4 + $0x18] sm:$0xff]
  %v50 = vld [vmem:[%s4 + $0x20] sm:$0xff]
  %v51 = vld [vmem:[%s4 + $0x28] sm:$0xff]
  %v52 = vld [vmem:[%s4 + $0x30] sm:$0xff]
  %v53 = vld [vmem:[%s4 + $0x38] sm:$0xff]
  %v54 = vld [vmem:[%s4 + $0x40] sm:$0xff]
  %v55 = vld [vmem:[%s4 + $0x48] sm:$0xff]
  %v56 = vld [vmem:[%s4 + $0x50] sm:$0xff]
  %v57 = vld [vmem:[%s4 + $0x58] sm:$0xff]
  %v58 = vld [vmem:[%s4 + $0x60] sm:$0xff]
  %v59 = vld [vmem:[%s4 + $0x68] sm:$0xff]
  %v60 = vld [vmem:[%s4 + $0x70] sm:$0xff]
  %v61 = vld [vmem:[%s4 + $0x78] sm:$0xff]
  %v62 = vld [vmem:[%s4 + $0x80] sm:$0xff]
  %v63 = vld [vmem:[%s4 + $0x88] sm:$0xff]
  %v64 = vld [vmem:[%s4 + $0x90] sm:$0xff]
  %v65 = vld [vmem:[%s4 + $0x98] sm:$0xff]
  %v66 = vld [vmem:[%s4 + $0xa0] sm:$0xff]
  %v67 = vld [vmem:[%s4 + $0xa8] sm:$0xff]
  %v68 = vld [vmem:[%s4 + $0xb0] sm:$0xff]
  %v69 = vld [vmem:[%s4 + $0xb8] sm:$0xff]
  %v70 = vld [vmem:[%s4 + $0xc0] sm:$0xff]
  %v71 = vld [vmem:[%s4 + $0xc8] sm:$0xff]
  %v72 = vld [vmem:[%s4 + $0xd0] sm:$0xff]
  %v73 = vld [vmem:[%s4 + $0xd8] sm:$0xff]
  %v74 = vld [vmem:[%s4 + $0xe0] sm:$0xff]
  %v75 = vld [vmem:[%s4 + $0xe8] sm:$0xff]
  %v76 = vld [vmem:[%s4 + $0xf0] sm:$0xff]
  %v77 = vld [vmem:[%s4 + $0xf8] sm:$0xff]
  %v78 = vld [vmem:[%s4 + $0x100] sm:$0xff]
  %v79 = vld [vmem:[%s4 + $0x108] sm:$0xff]
  %v80 = vld [vmem:[%s4 + $0x110] sm:$0xff]
  %v81 = vld [vmem:[%s4 + $0x118] sm:$0xff]
  %v82 = vld [vmem:[%s4 + $0x120] sm:$0xff]
  %v83 = vld [vmem:[%s4 + $0x128] sm:$0xff]
  %v84 = vld [vmem:[%s4 + $0x130] sm:$0xff]
  %v85 = vld [vmem:[%s4 + $0x138] sm:$0xff]
  %v86 = vld [vmem:[%s4 + $0x140] sm:$0xff]
  %v87 = vld [vmem:[%s4 + $0x148] sm:$0xff]
  %v88 = vld [vmem:[%s4 + $0x150] sm:$0xff]
  %v89 = vld [vmem:[%s4 + $0x158] sm:$0xff]
  %v90 = vld [vmem:[%s4 + $0x160] sm:$0xff]
  %v91 = vld [vmem:[%s4 + $0x168] sm:$0xff]
  %v92 = vld [vmem:[%s4 + $0x170] sm:$0xff]
  %v93 = vld [vmem:[%s4 + $0x178] sm:$0xff]
  %vm94 = vcmask 392192
  %v96 = vsel %vm94, %v43, 0
  %v98 = vand.u32 %v47, 4294901760
  %99 = vmatprep.subr.mxu0 %v98
  %v100 = vand.u32 %v46, 4294901760
  %101 = vmatpush1.msra.mxu0 %v100
  %v102 = vand.u32 %v55, 4294901760
  %103 = vmatprep.subr.mxu0 %v102
  %v104 = vand.u32 %v54, 4294901760
  %105 = vmatpush1.msra.mxu0 %v104
  %v106 = vand.u32 %v63, 4294901760
  %107 = vmatprep.subr.mxu0 %v106
  %v108 = vand.u32 %v62, 4294901760
  %109 = vmatpush1.msra.mxu0 %v108
  %v110 = vand.u32 %v71, 4294901760
  %111 = vmatprep.subr.mxu0 %v110
  %v112 = vand.u32 %v70, 4294901760
  %113 = vmatpush1.msra.mxu0 %v112
  %v114 = vand.u32 %v79, 4294901760
  %115 = vmatprep.subr.mxu0 %v114
  %v116 = vand.u32 %v78, 4294901760
  %117 = vmatpush1.msra.mxu0 %v116
  %v118 = vand.u32 %v87, 4294901760
  %119 = vmatprep.subr.mxu0 %v118
  %v120 = vand.u32 %v86, 4294901760
  %121 = vmatpush1.msra.mxu0 %v120
  %122 = vmatprep.subr.mxu0 0.0
  %123 = vmatpush1.msra.mxu0 0.0
  %124 = vmatprep.subr.mxu0 0.0
  %125 = vmatpush1.msra.mxu0 0.0
  %126 = vmatprep.subr.mxu0 0.0
  %127 = vmatpush1.msra.mxu0 0.0
  %128 = vmatprep.subr.mxu0 0.0
  %129 = vmatpush1.msra.mxu0 0.0
  %130 = vmatprep.subr.mxu0 0.0
  %131 = vmatpush1.msra.mxu0 0.0
  %132 = vmatprep.subr.mxu0 0.0
  %133 = vmatpush1.msra.mxu0 0.0
  %134 = vmatprep.subr.mxu0 0.0
  %135 = vmatpush1.msra.mxu0 0.0
  %136 = vmatprep.subr.mxu0 0.0
  %137 = vmatpush1.msra.mxu0 0.0
  %138 = vmatprep.subr.mxu0 0.0
  %139 = vmatpush1.msra.mxu0 0.0
  %140 = vmatprep.subr.mxu0 0.0
  %141 = vmatpush1.msra.mxu0 0.0
  %142 = vmatprep.subr.mxu0 0.0
  %143 = vmatpush1.msra.mxu0 0.0
  %144 = vmatprep.subr.mxu0 0.0
  %145 = vmatpush1.msra.mxu0 0.0
  %146 = vmatprep.subr.mxu0 0.0
  %147 = vmatpush1.msra.mxu0 0.0
  %148 = vmatprep.subr.mxu0 0.0
  %149 = vmatpush1.msra.mxu0 0.0
  %150 = vmatprep.subr.mxu0 0.0
  %151 = vmatpush1.msra.mxu0 0.0
  %152 = vmatprep.subr.mxu0 0.0
  %153 = vmatpush1.msra.mxu0 0.0
  %154 = vmatprep.subr.mxu0 0.0
  %155 = vmatpush1.msra.mxu0 0.0
  %156 = vmatprep.subr.mxu0 0.0
  %157 = vmatpush1.msra.mxu0 0.0
  %158 = vmatprep.subr.mxu0 0.0
  %159 = vmatpush1.msra.mxu0 0.0
  %160 = vmatprep.subr.mxu0 0.0
  %161 = vmatpush1.msra.mxu0 0.0
  %162 = vmatprep.subr.mxu0 0.0
  %163 = vmatpush1.msra.mxu0 0.0
  %164 = vmatprep.subr.mxu0 0.0
  %165 = vmatpush1.msra.mxu0 0.0
  %166 = vmatprep.subr.mxu0 0.0
  %167 = vmatpush1.msra.mxu0 0.0
  %168 = vmatprep.subr.mxu0 0.0
  %169 = vmatpush1.msra.mxu0 0.0
  %170 = vmatprep.subr.mxu0 0.0
  %171 = vmatpush1.msra.mxu0 0.0
  %172 = vmatprep.subr.mxu0 0.0
  %173 = vmatpush1.msra.mxu0 0.0
  %174 = vmatprep.mubr.f32.mxu0 0.0
  %v175 = vand.u32 %v96, 4294901760
  %v176 = vsub.f32 %v96, %v175
  %v177 = vand.u32 %v176, 4294901760
  %v178 = vsub.f32 %v176, %v177
  %v179 = vand.u32 %v178, 4294901760
  %180 = vmatmul.mubr.f32.gmra.mrb[0].mxu0 %v179
  %v181 = vpop.f32.mrb[0].mxu0
  %v182 = vadd.f32 0.0, %v181
  %v183 = vpop.f32.mrb[0].mxu0
  %v184 = vadd.f32 0.0, %v183
  %185 = vdwg.mxu0
  %v186 = vand.u32 %v47, 4294901760
  %v187 = vsub.f32 %v47, %v186
  %v188 = vand.u32 %v187, 4294901760
  %v189 = vsub.f32 %v187, %v188
  %v190 = vand.u32 %v189, 4294901760
  %191 = vmatprep.subr.mxu0 %v190
  %v192 = vand.u32 %v46, 4294901760
  %v193 = vsub.f32 %v46, %v192
  %v194 = vand.u32 %v193, 4294901760
  %v195 = vsub.f32 %v193, %v194
  %v196 = vand.u32 %v195, 4294901760
  %197 = vmatpush1.msra.mxu0 %v196
  %v198 = vand.u32 %v55, 4294901760
  %v199 = vsub.f32 %v55, %v198
  %v200 = vand.u32 %v199, 4294901760
  %v201 = vsub.f32 %v199, %v200
  %v202 = vand.u32 %v201, 4294901760
  %203 = vmatprep.subr.mxu0 %v202
  %v204 = vand.u32 %v54, 4294901760
  %v205 = vsub.f32 %v54, %v204
  %v206 = vand.u32 %v205, 4294901760
  %v207 = vsub.f32 %v205, %v206
  %v208 = vand.u32 %v207, 4294901760
  %209 = vmatpush1.msra.mxu0 %v208
  %v210 = vand.u32 %v63, 4294901760
  %v211 = vsub.f32 %v63, %v210
  %v212 = vand.u32 %v211, 4294901760
  %v213 = vsub.f32 %v211, %v212
  %v214 = vand.u32 %v213, 4294901760
  %215 = vmatprep.subr.mxu0 %v214
  %v216 = vand.u32 %v62, 4294901760
  %v217 = vsub.f32 %v62, %v216
  %v218 = vand.u32 %v217, 4294901760
  %v219 = vsub.f32 %v217, %v218
  %v220 = vand.u32 %v219, 4294901760
  %221 = vmatpush1.msra.mxu0 %v220
  %v222 = vand.u32 %v71, 4294901760
  %v223 = vsub.f32 %v71, %v222
  %v224 = vand.u32 %v223, 4294901760
  %v225 = vsub.f32 %v223, %v224
  %v226 = vand.u32 %v225, 4294901760
  %227 = vmatprep.subr.mxu0 %v226
  %v228 = vand.u32 %v70, 4294901760
  %v229 = vsub.f32 %v70, %v228
  %v230 = vand.u32 %v229, 4294901760
  %v231 = vsub.f32 %v229, %v230
  %v232 = vand.u32 %v231, 4294901760
  %233 = vmatpush1.msra.mxu0 %v232
  %v234 = vand.u32 %v79, 4294901760
  %v235 = vsub.f32 %v79, %v234
  %v236 = vand.u32 %v235, 4294901760
  %v237 = vsub.f32 %v235, %v236
  %v238 = vand.u32 %v237, 4294901760
  %239 = vmatprep.subr.mxu0 %v238
  %v240 = vand.u32 %v78, 4294901760
  %v241 = vsub.f32 %v78, %v240
  %v242 = vand.u32 %v241, 4294901760
  %v243 = vsub.f32 %v241, %v242
  %v244 = vand.u32 %v243, 4294901760
  %245 = vmatpush1.msra.mxu0 %v244
  %v246 = vand.u32 %v87, 4294901760
  %v247 = vsub.f32 %v87, %v246
  %v248 = vand.u32 %v247, 4294901760
  %v249 = vsub.f32 %v247, %v248
  %v250 = vand.u32 %v249, 4294901760
  %251 = vmatprep.subr.mxu0 %v250
  %v252 = vand.u32 %v86, 4294901760
  %v253 = vsub.f32 %v86, %v252
  %v254 = vand.u32 %v253, 4294901760
  %v255 = vsub.f32 %v253, %v254
  %v256 = vand.u32 %v255, 4294901760
  %257 = vmatpush1.msra.mxu0 %v256
  %258 = vmatprep.subr.mxu0 0.0
  %259 = vmatpush1.msra.mxu0 0.0
  %260 = vmatprep.subr.mxu0 0.0
  %261 = vmatpush1.msra.mxu0 0.0
  %262 = vmatprep.subr.mxu0 0.0
  %263 = vmatpush1.msra.mxu0 0.0
  %264 = vmatprep.subr.mxu0 0.0
  %265 = vmatpush1.msra.mxu0 0.0
  %266 = vmatprep.subr.mxu0 0.0
  %267 = vmatpush1.msra.mxu0 0.0
  %268 = vmatprep.subr.mxu0 0.0
  %269 = vmatpush1.msra.mxu0 0.0
  %270 = vmatprep.subr.mxu0 0.0
  %271 = vmatpush1.msra.mxu0 0.0
  %272 = vmatprep.subr.mxu0 0.0
  %273 = vmatpush1.msra.mxu0 0.0
  %274 = vmatprep.subr.mxu0 0.0
  %275 = vmatpush1.msra.mxu0 0.0
  %276 = vmatprep.subr.mxu0 0.0
  %277 = vmatpush1.msra.mxu0 0.0
  %278 = vmatprep.subr.mxu0 0.0
  %279 = vmatpush1.msra.mxu0 0.0
  %280 = vmatprep.subr.mxu0 0.0
  %281 = vmatpush1.msra.mxu0 0.0
  %282 = vmatprep.subr.mxu0 0.0
  %283 = vmatpush1.msra.mxu0 0.0
  %284 = vmatprep.subr.mxu0 0.0
  %285 = vmatpush1.msra.mxu0 0.0
  %286 = vmatprep.subr.mxu0 0.0
  %287 = vmatpush1.msra.mxu0 0.0
  %288 = vmatprep.subr.mxu0 0.0
  %289 = vmatpush1.msra.mxu0 0.0
  %290 = vmatprep.subr.mxu0 0.0
  %291 = vmatpush1.msra.mxu0 0.0
  %292 = vmatprep.subr.mxu0 0.0
  %293 = vmatpush1.msra.mxu0 0.0
  %294 = vmatprep.subr.mxu0 0.0
  %295 = vmatpush1.msra.mxu0 0.0
  %296 = vmatprep.subr.mxu0 0.0
  %297 = vmatpush1.msra.mxu0 0.0
  %298 = vmatprep.subr.mxu0 0.0
  %299 = vmatpush1.msra.mxu0 0.0
  %300 = vmatprep.subr.mxu0 0.0
  %301 = vmatpush1.msra.mxu0 0.0
  %302 = vmatprep.subr.mxu0 0.0
  %303 = vmatpush1.msra.mxu0 0.0
  %304 = vmatprep.subr.mxu0 0.0
  %305 = vmatpush1.msra.mxu0 0.0
  %306 = vmatprep.subr.mxu0 0.0
  %307 = vmatpush1.msra.mxu0 0.0
  %308 = vmatprep.subr.mxu0 0.0
  %309 = vmatpush1.msra.mxu0 0.0
  %310 = vmatprep.mubr.f32.mxu0 0.0
  %v311 = vand.u32 %v96, 4294901760
  %312 = vmatmul.mubr.f32.gmra.mrb[0].mxu0 %v311
  %v313 = vpop.f32.mrb[0].mxu0
  %v314 = vadd.f32 %v182, %v313
  %v315 = vpop.f32.mrb[0].mxu0
  %v316 = vadd.f32 %v184, %v315
  %317 = vdwg.mxu0
  %v318 = vand.u32 %v47, 4294901760
  %v319 = vsub.f32 %v47, %v318
  %320 = vmatprep.subr.mxu0 %v319
  %v321 = vand.u32 %v46, 4294901760
  %v322 = vsub.f32 %v46, %v321
  %323 = vmatpush1.msra.mxu0 %v322
  %v324 = vand.u32 %v55, 4294901760
  %v325 = vsub.f32 %v55, %v324
  %326 = vmatprep.subr.mxu0 %v325
  %v327 = vand.u32 %v54, 4294901760
  %v328 = vsub.f32 %v54, %v327
  %329 = vmatpush1.msra.mxu0 %v328
  %v330 = vand.u32 %v63, 4294901760
  %v331 = vsub.f32 %v63, %v330
  %332 = vmatprep.subr.mxu0 %v331
  %v333 = vand.u32 %v62, 4294901760
  %v334 = vsub.f32 %v62, %v333
  %335 = vmatpush1.msra.mxu0 %v334
  %v336 = vand.u32 %v71, 4294901760
  %v337 = vsub.f32 %v71, %v336
  %338 = vmatprep.subr.mxu0 %v337
  %v339 = vand.u32 %v70, 4294901760
  %v340 = vsub.f32 %v70, %v339
  %341 = vmatpush1.msra.mxu0 %v340
  %v342 = vand.u32 %v79, 4294901760
  %v343 = vsub.f32 %v79, %v342
  %344 = vmatprep.subr.mxu0 %v343
  %v345 = vand.u32 %v78, 4294901760
  %v346 = vsub.f32 %v78, %v345
  %347 = vmatpush1.msra.mxu0 %v346
  %v348 = vand.u32 %v87, 4294901760
  %v349 = vsub.f32 %v87, %v348
  %350 = vmatprep.subr.mxu0 %v349
  %v351 = vand.u32 %v86, 4294901760
  %v352 = vsub.f32 %v86, %v351
  %353 = vmatpush1.msra.mxu0 %v352
  %354 = vmatprep.subr.mxu0 0.0
  %355 = vmatpush1.msra.mxu0 0.0
  %356 = vmatprep.subr.mxu0 0.0
  %357 = vmatpush1.msra.mxu0 0.0
  %358 = vmatprep.subr.mxu0 0.0
  %359 = vmatpush1.msra.mxu0 0.0
  %360 = vmatprep.subr.mxu0 0.0
  %361 = vmatpush1.msra.mxu0 0.0
  %362 = vmatprep.subr.mxu0 0.0
  %363 = vmatpush1.msra.mxu0 0.0
  %364 = vmatprep.subr.mxu0 0.0
  %365 = vmatpush1.msra.mxu0 0.0
  %366 = vmatprep.subr.mxu0 0.0
  %367 = vmatpush1.msra.mxu0 0.0
  %368 = vmatprep.subr.mxu0 0.0
  %369 = vmatpush1.msra.mxu0 0.0
  %370 = vmatprep.subr.mxu0 0.0
  %371 = vmatpush1.msra.mxu0 0.0
  %372 = vmatprep.subr.mxu0 0.0
  %373 = vmatpush1.msra.mxu0 0.0
  %374 = vmatprep.subr.mxu0 0.0
  %375 = vmatpush1.msra.mxu0 0.0
  %376 = vmatprep.subr.mxu0 0.0
  %377 = vmatpush1.msra.mxu0 0.0
  %378 = vmatprep.subr.mxu0 0.0
  %379 = vmatpush1.msra.mxu0 0.0
  %380 = vmatprep.subr.mxu0 0.0
  %381 = vmatpush1.msra.mxu0 0.0
  %382 = vmatprep.subr.mxu0 0.0
  %383 = vmatpush1.msra.mxu0 0.0
  %384 = vmatprep.subr.mxu0 0.0
  %385 = vmatpush1.msra.mxu0 0.0
  %386 = vmatprep.subr.mxu0 0.0
  %387 = vmatpush1.msra.mxu0 0.0
  %388 = vmatprep.subr.mxu0 0.0
  %389 = vmatpush1.msra.mxu0 0.0
  %390 = vmatprep.subr.mxu0 0.0
  %391 = vmatpush1.msra.mxu0 0.0
  %392 = vmatprep.subr.mxu0 0.0
  %393 = vmatpush1.msra.mxu0 0.0
  %394 = vmatprep.subr.mxu0 0.0
  %395 = vmatpush1.msra.mxu0 0.0
  %396 = vmatprep.subr.mxu0 0.0
  %397 = vmatpush1.msra.mxu0 0.0
  %398 = vmatprep.subr.mxu0 0.0
  %399 = vmatpush1.msra.mxu0 0.0
  %400 = vmatprep.subr.mxu0 0.0
  %401 = vmatpush1.msra.mxu0 0.0
  %402 = vmatprep.subr.mxu0 0.0
  %403 = vmatpush1.msra.mxu0 0.0
  %404 = vmatprep.subr.mxu0 0.0
  %405 = vmatpush1.msra.mxu0 0.0
  %406 = vmatprep.mubr.f32.mxu0 0.0
  %v407 = vand.u32 %v96, 4294901760
  %v408 = vsub.f32 %v96, %v407
  %409 = vmatmul.mubr.f32.gmra.mrb[0].mxu0 %v408
  %v410 = vpop.f32.mrb[0].mxu0
  %v411 = vadd.f32 %v314, %v410
  %v412 = vpop.f32.mrb[0].mxu0
  %v413 = vadd.f32 %v316, %v412
  %414 = vdwg.mxu0
  %v415 = vand.u32 %v47, 4294901760
  %416 = vmatprep.subr.mxu0 %v415
  %v417 = vand.u32 %v46, 4294901760
  %418 = vmatpush1.msra.mxu0 %v417
  %v419 = vand.u32 %v55, 4294901760
  %420 = vmatprep.subr.mxu0 %v419
  %v421 = vand.u32 %v54, 4294901760
  %422 = vmatpush1.msra.mxu0 %v421
  %v423 = vand.u32 %v63, 4294901760
  %424 = vmatprep.subr.mxu0 %v423
  %v425 = vand.u32 %v62, 4294901760
  %426 = vmatpush1.msra.mxu0 %v425
  %v427 = vand.u32 %v71, 4294901760
  %428 = vmatprep.subr.mxu0 %v427
  %v429 = vand.u32 %v70, 4294901760
  %430 = vmatpush1.msra.mxu0 %v429
  %v431 = vand.u32 %v79, 4294901760
  %432 = vmatprep.subr.mxu0 %v431
  %v433 = vand.u32 %v78, 4294901760
  %434 = vmatpush1.msra.mxu0 %v433
  %v435 = vand.u32 %v87, 4294901760
  %436 = vmatprep.subr.mxu0 %v435
  %v437 = vand.u32 %v86, 4294901760
  %438 = vmatpush1.msra.mxu0 %v437
  %439 = vmatprep.subr.mxu0 0.0
  %440 = vmatpush1.msra.mxu0 0.0
  %441 = vmatprep.subr.mxu0 0.0
  %442 = vmatpush1.msra.mxu0 0.0
  %443 = vmatprep.subr.mxu0 0.0
  %444 = vmatpush1.msra.mxu0 0.0
  %445 = vmatprep.subr.mxu0 0.0
  %446 = vmatpush1.msra.mxu0 0.0
  %447 = vmatprep.subr.mxu0 0.0
  %448 = vmatpush1.msra.mxu0 0.0
  %449 = vmatprep.subr.mxu0 0.0
  %450 = vmatpush1.msra.mxu0 0.0
  %451 = vmatprep.subr.mxu0 0.0
  %452 = vmatpush1.msra.mxu0 0.0
  %453 = vmatprep.subr.mxu0 0.0
  %454 = vmatpush1.msra.mxu0 0.0
  %455 = vmatprep.subr.mxu0 0.0
  %456 = vmatpush1.msra.mxu0 0.0
  %457 = vmatprep.subr.mxu0 0.0
  %458 = vmatpush1.msra.mxu0 0.0
  %459 = vmatprep.subr.mxu0 0.0
  %460 = vmatpush1.msra.mxu0 0.0
  %461 = vmatprep.subr.mxu0 0.0
  %462 = vmatpush1.msra.mxu0 0.0
  %463 = vmatprep.subr.mxu0 0.0
  %464 = vmatpush1.msra.mxu0 0.0
  %465 = vmatprep.subr.mxu0 0.0
  %466 = vmatpush1.msra.mxu0 0.0
  %467 = vmatprep.subr.mxu0 0.0
  %468 = vmatpush1.msra.mxu0 0.0
  %469 = vmatprep.subr.mxu0 0.0
  %470 = vmatpush1.msra.mxu0 0.0
  %471 = vmatprep.subr.mxu0 0.0
  %472 = vmatpush1.msra.mxu0 0.0
  %473 = vmatprep.subr.mxu0 0.0
  %474 = vmatpush1.msra.mxu0 0.0
  %475 = vmatprep.subr.mxu0 0.0
  %476 = vmatpush1.msra.mxu0 0.0
  %477 = vmatprep.subr.mxu0 0.0
  %478 = vmatpush1.msra.mxu0 0.0
  %479 = vmatprep.subr.mxu0 0.0
  %480 = vmatpush1.msra.mxu0 0.0
  %481 = vmatprep.subr.mxu0 0.0
  %482 = vmatpush1.msra.mxu0 0.0
  %483 = vmatprep.subr.mxu0 0.0
  %484 = vmatpush1.msra.mxu0 0.0
  %485 = vmatprep.subr.mxu0 0.0
  %486 = vmatpush1.msra.mxu0 0.0
  %487 = vmatprep.subr.mxu0 0.0
  %488 = vmatpush1.msra.mxu0 0.0
  %489 = vmatprep.subr.mxu0 0.0
  %490 = vmatpush1.msra.mxu0 0.0
  %491 = vmatprep.mubr.f32.mxu0 0.0
  %v492 = vand.u32 %v96, 4294901760
  %v493 = vsub.f32 %v96, %v492
  %v494 = vand.u32 %v493, 4294901760
  %495 = vmatmul.mubr.f32.gmra.mrb[0].mxu0 %v494
  %v496 = vpop.f32.mrb[0].mxu0
  %v497 = vadd.f32 %v411, %v496
  %v498 = vpop.f32.mrb[0].mxu0
  %v499 = vadd.f32 %v413, %v498
  %500 = vdwg.mxu0
  %v501 = vand.u32 %v47, 4294901760
  %v502 = vsub.f32 %v47, %v501
  %v503 = vand.u32 %v502, 4294901760
  %504 = vmatprep.subr.mxu0 %v503
  %v505 = vand.u32 %v46, 4294901760
  %v506 = vsub.f32 %v46, %v505
  %v507 = vand.u32 %v506, 4294901760
  %508 = vmatpush1.msra.mxu0 %v507
  %v509 = vand.u32 %v55, 4294901760
  %v510 = vsub.f32 %v55, %v509
  %v511 = vand.u32 %v510, 4294901760
  %512 = vmatprep.subr.mxu0 %v511
  %v513 = vand.u32 %v54, 4294901760
  %v514 = vsub.f32 %v54, %v513
  %v515 = vand.u32 %v514, 4294901760
  %516 = vmatpush1.msra.mxu0 %v515
  %v517 = vand.u32 %v63, 4294901760
  %v518 = vsub.f32 %v63, %v517
  %v519 = vand.u32 %v518, 4294901760
  %520 = vmatprep.subr.mxu0 %v519
  %v521 = vand.u32 %v62, 4294901760
  %v522 = vsub.f32 %v62, %v521
  %v523 = vand.u32 %v522, 4294901760
  %524 = vmatpush1.msra.mxu0 %v523
  %v525 = vand.u32 %v71, 4294901760
  %v526 = vsub.f32 %v71, %v525
  %v527 = vand.u32 %v526, 4294901760
  %528 = vmatprep.subr.mxu0 %v527
  %v529 = vand.u32 %v70, 4294901760
  %v530 = vsub.f32 %v70, %v529
  %v531 = vand.u32 %v530, 4294901760
  %532 = vmatpush1.msra.mxu0 %v531
  %v533 = vand.u32 %v79, 4294901760
  %v534 = vsub.f32 %v79, %v533
  %v535 = vand.u32 %v534, 4294901760
  %536 = vmatprep.subr.mxu0 %v535
  %v537 = vand.u32 %v78, 4294901760
  %v538 = vsub.f32 %v78, %v537
  %v539 = vand.u32 %v538, 4294901760
  %540 = vmatpush1.msra.mxu0 %v539
  %v541 = vand.u32 %v87, 4294901760
  %v542 = vsub.f32 %v87, %v541
  %v543 = vand.u32 %v542, 4294901760
  %544 = vmatprep.subr.mxu0 %v543
  %v545 = vand.u32 %v86, 4294901760
  %v546 = vsub.f32 %v86, %v545
  %v547 = vand.u32 %v546, 4294901760
  %548 = vmatpush1.msra.mxu0 %v547
  %549 = vmatprep.subr.mxu0 0.0
  %550 = vmatpush1.msra.mxu0 0.0
  %551 = vmatprep.subr.mxu0 0.0
  %552 = vmatpush1.msra.mxu0 0.0
  %553 = vmatprep.subr.mxu0 0.0
  %554 = vmatpush1.msra.mxu0 0.0
  %555 = vmatprep.subr.mxu0 0.0
  %556 = vmatpush1.msra.mxu0 0.0
  %557 = vmatprep.subr.mxu0 0.0
  %558 = vmatpush1.msra.mxu0 0.0
  %559 = vmatprep.subr.mxu0 0.0
  %560 = vmatpush1.msra.mxu0 0.0
  %561 = vmatprep.subr.mxu0 0.0
  %562 = vmatpush1.msra.mxu0 0.0
  %563 = vmatprep.subr.mxu0 0.0
  %564 = vmatpush1.msra.mxu0 0.0
  %565 = vmatprep.subr.mxu0 0.0
  %566 = vmatpush1.msra.mxu0 0.0
  %567 = vmatprep.subr.mxu0 0.0
  %568 = vmatpush1.msra.mxu0 0.0
  %569 = vmatprep.subr.mxu0 0.0
  %570 = vmatpush1.msra.mxu0 0.0
  %571 = vmatprep.subr.mxu0 0.0
  %572 = vmatpush1.msra.mxu0 0.0
  %573 = vmatprep.subr.mxu0 0.0
  %574 = vmatpush1.msra.mxu0 0.0
  %575 = vmatprep.subr.mxu0 0.0
  %576 = vmatpush1.msra.mxu0 0.0
  %577 = vmatprep.subr.mxu0 0.0
  %578 = vmatpush1.msra.mxu0 0.0
  %579 = vmatprep.subr.mxu0 0.0
  %580 = vmatpush1.msra.mxu0 0.0
  %581 = vmatprep.subr.mxu0 0.0
  %582 = vmatpush1.msra.mxu0 0.0
  %583 = vmatprep.subr.mxu0 0.0
  %584 = vmatpush1.msra.mxu0 0.0
  %585 = vmatprep.subr.mxu0 0.0
  %586 = vmatpush1.msra.mxu0 0.0
  %587 = vmatprep.subr.mxu0 0.0
  %588 = vmatpush1.msra.mxu0 0.0
  %589 = vmatprep.subr.mxu0 0.0
  %590 = vmatpush1.msra.mxu0 0.0
  %591 = vmatprep.subr.mxu0 0.0
  %592 = vmatpush1.msra.mxu0 0.0
  %593 = vmatprep.subr.mxu0 0.0
  %594 = vmatpush1.msra.mxu0 0.0
  %595 = vmatprep.subr.mxu0 0.0
  %596 = vmatpush1.msra.mxu0 0.0
  %597 = vmatprep.subr.mxu0 0.0
  %598 = vmatpush1.msra.mxu0 0.0
  %599 = vmatprep.subr.mxu0 0.0
  %600 = vmatpush1.msra.mxu0 0.0
  %601 = vmatprep.mubr.f32.mxu0 0.0
  %v602 = vand.u32 %v96, 4294901760
  %603 = vmatmul.mubr.f32.gmra.mrb[0].mxu0 %v602
  %v604 = vpop.f32.mrb[0].mxu0
  %v605 = vadd.f32 %v497, %v604
  %v606 = vpop.f32.mrb[0].mxu0
  %v607 = vadd.f32 %v499, %v606
  %608 = vdwg.mxu0
  %v609 = vand.u32 %v47, 4294901760
  %610 = vmatprep.subr.mxu0 %v609
  %v611 = vand.u32 %v46, 4294901760
  %612 = vmatpush1.msra.mxu0 %v611
  %v613 = vand.u32 %v55, 4294901760
  %614 = vmatprep.subr.mxu0 %v613
  %v615 = vand.u32 %v54, 4294901760
  %616 = vmatpush1.msra.mxu0 %v615
  %v617 = vand.u32 %v63, 4294901760
  %618 = vmatprep.subr.mxu0 %v617
  %v619 = vand.u32 %v62, 4294901760
  %620 = vmatpush1.msra.mxu0 %v619
  %v621 = vand.u32 %v71, 4294901760
  %622 = vmatprep.subr.mxu0 %v621
  %v623 = vand.u32 %v70, 4294901760
  %624 = vmatpush1.msra.mxu0 %v623
  %v625 = vand.u32 %v79, 4294901760
  %626 = vmatprep.subr.mxu0 %v625
  %v627 = vand.u32 %v78, 4294901760
  %628 = vmatpush1.msra.mxu0 %v627
  %v629 = vand.u32 %v87, 4294901760
  %630 = vmatprep.subr.mxu0 %v629
  %v631 = vand.u32 %v86, 4294901760
  %632 = vmatpush1.msra.mxu0 %v631
  %633 = vmatprep.subr.mxu0 0.0
  %634 = vmatpush1.msra.mxu0 0.0
  %635 = vmatprep.subr.mxu0 0.0
  %636 = vmatpush1.msra.mxu0 0.0
  %637 = vmatprep.subr.mxu0 0.0
  %638 = vmatpush1.msra.mxu0 0.0
  %639 = vmatprep.subr.mxu0 0.0
  %640 = vmatpush1.msra.mxu0 0.0
  %641 = vmatprep.subr.mxu0 0.0
  %642 = vmatpush1.msra.mxu0 0.0
  %643 = vmatprep.subr.mxu0 0.0
  %644 = vmatpush1.msra.mxu0 0.0
  %645 = vmatprep.subr.mxu0 0.0
  %646 = vmatpush1.msra.mxu0 0.0
  %647 = vmatprep.subr.mxu0 0.0
  %648 = vmatpush1.msra.mxu0 0.0
  %649 = vmatprep.subr.mxu0 0.0
  %650 = vmatpush1.msra.mxu0 0.0
  %651 = vmatprep.subr.mxu0 0.0
  %652 = vmatpush1.msra.mxu0 0.0
  %653 = vmatprep.subr.mxu0 0.0
  %654 = vmatpush1.msra.mxu0 0.0
  %655 = vmatprep.subr.mxu0 0.0
  %656 = vmatpush1.msra.mxu0 0.0
  %657 = vmatprep.subr.mxu0 0.0
  %658 = vmatpush1.msra.mxu0 0.0
  %659 = vmatprep.subr.mxu0 0.0
  %660 = vmatpush1.msra.mxu0 0.0
  %661 = vmatprep.subr.mxu0 0.0
  %662 = vmatpush1.msra.mxu0 0.0
  %663 = vmatprep.subr.mxu0 0.0
  %664 = vmatpush1.msra.mxu0 0.0
  %665 = vmatprep.subr.mxu0 0.0
  %666 = vmatpush1.msra.mxu0 0.0
  %667 = vmatprep.subr.mxu0 0.0
  %668 = vmatpush1.msra.mxu0 0.0
  %669 = vmatprep.subr.mxu0 0.0
  %670 = vmatpush1.msra.mxu0 0.0
  %671 = vmatprep.subr.mxu0 0.0
  %672 = vmatpush1.msra.mxu0 0.0
  %673 = vmatprep.subr.mxu0 0.0
  %674 = vmatpush1.msra.mxu0 0.0
  %675 = vmatprep.subr.mxu0 0.0
  %676 = vmatpush1.msra.mxu0 0.0
  %677 = vmatprep.subr.mxu0 0.0
  %678 = vmatpush1.msra.mxu0 0.0
  %679 = vmatprep.subr.mxu0 0.0
  %680 = vmatpush1.msra.mxu0 0.0
  %681 = vmatprep.subr.mxu0 0.0
  %682 = vmatpush1.msra.mxu0 0.0
  %683 = vmatprep.subr.mxu0 0.0
  %684 = vmatpush1.msra.mxu0 0.0
  %685 = vmatprep.mubr.f32.mxu0 0.0
  %v686 = vand.u32 %v96, 4294901760
  %687 = vmatmul.mubr.f32.gmra.mrb[0].mxu0 %v686
  %v688 = vpop.f32.mrb[0].mxu0
  %v689 = vadd.f32 %v605, %v688
  %v690 = vpop.f32.mrb[0].mxu0
  %v691 = vadd.f32 %v607, %v690
  %692 = vdwg.mxu0
  %v693 = vand.u32 %v49, 4294901760
  %694 = vmatprep.subr.mxu0 %v693
  %v695 = vand.u32 %v48, 4294901760
  %696 = vmatpush1.msra.mxu0 %v695
  %v697 = vand.u32 %v57, 4294901760
  %698 = vmatprep.subr.mxu0 %v697
  %v699 = vand.u32 %v56, 4294901760
  %700 = vmatpush1.msra.mxu0 %v699
  %v701 = vand.u32 %v65, 4294901760
  %702 = vmatprep.subr.mxu0 %v701
  %v703 = vand.u32 %v64, 4294901760
  %704 = vmatpush1.msra.mxu0 %v703
  %v705 = vand.u32 %v73, 4294901760
  %706 = vmatprep.subr.mxu0 %v705
  %v707 = vand.u32 %v72, 4294901760
  %708 = vmatpush1.msra.mxu0 %v707
  %v709 = vand.u32 %v81, 4294901760
  %710 = vmatprep.subr.mxu0 %v709
  %v711 = vand.u32 %v80, 4294901760
  %712 = vmatpush1.msra.mxu0 %v711
  %v713 = vand.u32 %v89, 4294901760
  %714 = vmatprep.subr.mxu0 %v713
  %v715 = vand.u32 %v88, 4294901760
  %716 = vmatpush1.msra.mxu0 %v715
  %717 = vmatprep.subr.mxu0 0.0
  %718 = vmatpush1.msra.mxu0 0.0
  %719 = vmatprep.subr.mxu0 0.0
  %720 = vmatpush1.msra.mxu0 0.0
  %721 = vmatprep.subr.mxu0 0.0
  %722 = vmatpush1.msra.mxu0 0.0
  %723 = vmatprep.subr.mxu0 0.0
  %724 = vmatpush1.msra.mxu0 0.0
  %725 = vmatprep.subr.mxu0 0.0
  %726 = vmatpush1.msra.mxu0 0.0
  %727 = vmatprep.subr.mxu0 0.0
  %728 = vmatpush1.msra.mxu0 0.0
  %729 = vmatprep.subr.mxu0 0.0
  %730 = vmatpush1.msra.mxu0 0.0
  %731 = vmatprep.subr.mxu0 0.0
  %732 = vmatpush1.msra.mxu0 0.0
  %733 = vmatprep.subr.mxu0 0.0
  %734 = vmatpush1.msra.mxu0 0.0
  %735 = vmatprep.subr.mxu0 0.0
  %736 = vmatpush1.msra.mxu0 0.0
  %737 = vmatprep.subr.mxu0 0.0
  %738 = vmatpush1.msra.mxu0 0.0
  %739 = vmatprep.subr.mxu0 0.0
  %740 = vmatpush1.msra.mxu0 0.0
  %741 = vmatprep.subr.mxu0 0.0
  %742 = vmatpush1.msra.mxu0 0.0
  %743 = vmatprep.subr.mxu0 0.0
  %744 = vmatpush1.msra.mxu0 0.0
  %745 = vmatprep.subr.mxu0 0.0
  %746 = vmatpush1.msra.mxu0 0.0
  %747 = vmatprep.subr.mxu0 0.0
  %748 = vmatpush1.msra.mxu0 0.0
  %749 = vmatprep.subr.mxu0 0.0
  %750 = vmatpush1.msra.mxu0 0.0
  %751 = vmatprep.subr.mxu0 0.0
  %752 = vmatpush1.msra.mxu0 0.0
  %753 = vmatprep.subr.mxu0 0.0
  %754 = vmatpush1.msra.mxu0 0.0
  %755 = vmatprep.subr.mxu0 0.0
  %756 = vmatpush1.msra.mxu0 0.0
  %757 = vmatprep.subr.mxu0 0.0
  %758 = vmatpush1.msra.mxu0 0.0
  %759 = vmatprep.subr.mxu0 0.0
  %760 = vmatpush1.msra.mxu0 0.0
  %761 = vmatprep.subr.mxu0 0.0
  %762 = vmatpush1.msra.mxu0 0.0
  %763 = vmatprep.subr.mxu0 0.0
  %764 = vmatpush1.msra.mxu0 0.0
  %765 = vmatprep.subr.mxu0 0.0
  %766 = vmatpush1.msra.mxu0 0.0
  %767 = vmatprep.subr.mxu0 0.0
  %768 = vmatpush1.msra.mxu0 0.0
  %769 = vmatprep.mubr.f32.mxu0 0.0
  %v770 = vand.u32 %v96, 4294901760
  %v771 = vsub.f32 %v96, %v770
  %v772 = vand.u32 %v771, 4294901760
  %v773 = vsub.f32 %v771, %v772
  %v774 = vand.u32 %v773, 4294901760
  %775 = vmatmul.mubr.f32.gmra.mrb[0].mxu0 %v774
  %v776 = vpop.f32.mrb[0].mxu0
  %v777 = vadd.f32 0.0, %v776
  %v778 = vpop.f32.mrb[0].mxu0
  %v779 = vadd.f32 0.0, %v778
  %780 = vdwg.mxu0
  %v781 = vand.u32 %v49, 4294901760
  %v782 = vsub.f32 %v49, %v781
  %v783 = vand.u32 %v782, 4294901760
  %v784 = vsub.f32 %v782, %v783
  %v785 = vand.u32 %v784, 4294901760
  %786 = vmatprep.subr.mxu0 %v785
  %v787 = vand.u32 %v48, 4294901760
  %v788 = vsub.f32 %v48, %v787
  %v789 = vand.u32 %v788, 4294901760
  %v790 = vsub.f32 %v788, %v789
  %v791 = vand.u32 %v790, 4294901760
  %792 = vmatpush1.msra.mxu0 %v791
  %v793 = vand.u32 %v57, 4294901760
  %v794 = vsub.f32 %v57, %v793
  %v795 = vand.u32 %v794, 4294901760
  %v796 = vsub.f32 %v794, %v795
  %v797 = vand.u32 %v796, 4294901760
  %798 = vmatprep.subr.mxu0 %v797
  %v799 = vand.u32 %v56, 4294901760
  %v800 = vsub.f32 %v56, %v799
  %v801 = vand.u32 %v800, 4294901760
  %v802 = vsub.f32 %v800, %v801
  %v803 = vand.u32 %v802, 4294901760
  %804 = vmatpush1.msra.mxu0 %v803
  %v805 = vand.u32 %v65, 4294901760
  %v806 = vsub.f32 %v65, %v805
  %v807 = vand.u32 %v806, 4294901760
  %v808 = vsub.f32 %v806, %v807
  %v809 = vand.u32 %v808, 4294901760
  %810 = vmatprep.subr.mxu0 %v809
  %v811 = vand.u32 %v64, 4294901760
  %v812 = vsub.f32 %v64, %v811
  %v813 = vand.u32 %v812, 4294901760
  %v814 = vsub.f32 %v812, %v813
  %v815 = vand.u32 %v814, 4294901760
  %816 = vmatpush1.msra.mxu0 %v815
  %v817 = vand.u32 %v73, 4294901760
  %v818 = vsub.f32 %v73, %v817
  %v819 = vand.u32 %v818, 4294901760
  %v820 = vsub.f32 %v818, %v819
  %v821 = vand.u32 %v820, 4294901760
  %822 = vmatprep.subr.mxu0 %v821
  %v823 = vand.u32 %v72, 4294901760
  %v824 = vsub.f32 %v72, %v823
  %v825 = vand.u32 %v824, 4294901760
  %v826 = vsub.f32 %v824, %v825
  %v827 = vand.u32 %v826, 4294901760
  %828 = vmatpush1.msra.mxu0 %v827
  %v829 = vand.u32 %v81, 4294901760
  %v830 = vsub.f32 %v81, %v829
  %v831 = vand.u32 %v830, 4294901760
  %v832 = vsub.f32 %v830, %v831
  %v833 = vand.u32 %v832, 4294901760
  %834 = vmatprep.subr.mxu0 %v833
  %v835 = vand.u32 %v80, 4294901760
  %v836 = vsub.f32 %v80, %v835
  %v837 = vand.u32 %v836, 4294901760
  %v838 = vsub.f32 %v836, %v837
  %v839 = vand.u32 %v838, 4294901760
  %840 = vmatpush1.msra.mxu0 %v839
  %v841 = vand.u32 %v89, 4294901760
  %v842 = vsub.f32 %v89, %v841
  %v843 = vand.u32 %v842, 4294901760
  %v844 = vsub.f32 %v842, %v843
  %v845 = vand.u32 %v844, 4294901760
  %846 = vmatprep.subr.mxu0 %v845
  %v847 = vand.u32 %v88, 4294901760
  %v848 = vsub.f32 %v88, %v847
  %v849 = vand.u32 %v848, 4294901760
  %v850 = vsub.f32 %v848, %v849
  %v851 = vand.u32 %v850, 4294901760
  %852 = vmatpush1.msra.mxu0 %v851
  %853 = vmatprep.subr.mxu0 0.0
  %854 = vmatpush1.msra.mxu0 0.0
  %855 = vmatprep.subr.mxu0 0.0
  %856 = vmatpush1.msra.mxu0 0.0
  %857 = vmatprep.subr.mxu0 0.0
  %858 = vmatpush1.msra.mxu0 0.0
  %859 = vmatprep.subr.mxu0 0.0
  %860 = vmatpush1.msra.mxu0 0.0
  %861 = vmatprep.subr.mxu0 0.0
  %862 = vmatpush1.msra.mxu0 0.0
  %863 = vmatprep.subr.mxu0 0.0
  %864 = vmatpush1.msra.mxu0 0.0
  %865 = vmatprep.subr.mxu0 0.0
  %866 = vmatpush1.msra.mxu0 0.0
  %867 = vmatprep.subr.mxu0 0.0
  %868 = vmatpush1.msra.mxu0 0.0
  %869 = vmatprep.subr.mxu0 0.0
  %870 = vmatpush1.msra.mxu0 0.0
  %871 = vmatprep.subr.mxu0 0.0
  %872 = vmatpush1.msra.mxu0 0.0
  %873 = vmatprep.subr.mxu0 0.0
  %874 = vmatpush1.msra.mxu0 0.0
  %875 = vmatprep.subr.mxu0 0.0
  %876 = vmatpush1.msra.mxu0 0.0
  %877 = vmatprep.subr.mxu0 0.0
  %878 = vmatpush1.msra.mxu0 0.0
  %879 = vmatprep.subr.mxu0 0.0
  %880 = vmatpush1.msra.mxu0 0.0
  %881 = vmatprep.subr.mxu0 0.0
  %882 = vmatpush1.msra.mxu0 0.0
  %883 = vmatprep.subr.mxu0 0.0
  %884 = vmatpush1.msra.mxu0 0.0
  %885 = vmatprep.subr.mxu0 0.0
  %886 = vmatpush1.msra.mxu0 0.0
  %887 = vmatprep.subr.mxu0 0.0
  %888 = vmatpush1.msra.mxu0 0.0
  %889 = vmatprep.subr.mxu0 0.0
  %890 = vmatpush1.msra.mxu0 0.0
  %891 = vmatprep.subr.mxu0 0.0
  %892 = vmatpush1.msra.mxu0 0.0
  %893 = vmatprep.subr.mxu0 0.0
  %894 = vmatpush1.msra.mxu0 0.0
  %895 = vmatprep.subr.mxu0 0.0
  %896 = vmatpush1.msra.mxu0 0.0
  %897 = vmatprep.subr.mxu0 0.0
  %898 = vmatpush1.msra.mxu0 0.0
  %899 = vmatprep.subr.mxu0 0.0
  %900 = vmatpush1.msra.mxu0 0.0
  %901 = vmatprep.subr.mxu0 0.0
  %902 = vmatpush1.msra.mxu0 0.0
  %903 = vmatprep.subr.mxu0 0.0
  %904 = vmatpush1.msra.mxu0 0.0
  %905 = vmatprep.mubr.f32.mxu0 0.0
  %v906 = vand.u32 %v96, 4294901760
  %907 = vmatmul.mubr.f32.gmra.mrb[0].mxu0 %v906
  %v908 = vpop.f32.mrb[0].mxu0
  %v909 = vadd.f32 %v777, %v908
  %v910 = vpop.f32.mrb[0].mxu0
  %v911 = vadd.f32 %v779, %v910
  %912 = vdwg.mxu0
  %v913 = vand.u32 %v49, 4294901760
  %v914 = vsub.f32 %v49, %v913
  %915 = vmatprep.subr.mxu0 %v914
  %v916 = vand.u32 %v48, 4294901760
  %v917 = vsub.f32 %v48, %v916
  %918 = vmatpush1.msra.mxu0 %v917
  %v919 = vand.u32 %v57, 4294901760
  %v920 = vsub.f32 %v57, %v919
  %921 = vmatprep.subr.mxu0 %v920
  %v922 = vand.u32 %v56, 4294901760
  %v923 = vsub.f32 %v56, %v922
  %924 = vmatpush1.msra.mxu0 %v923
  %v925 = vand.u32 %v65, 4294901760
  %v926 = vsub.f32 %v65, %v925
  %927 = vmatprep.subr.mxu0 %v926
  %v928 = vand.u32 %v64, 4294901760
  %v929 = vsub.f32 %v64, %v928
  %930 = vmatpush1.msra.mxu0 %v929
  %v931 = vand.u32 %v73, 4294901760
  %v932 = vsub.f32 %v73, %v931
  %933 = vmatprep.subr.mxu0 %v932
  %v934 = vand.u32 %v72, 4294901760
  %v935 = vsub.f32 %v72, %v934
  %936 = vmatpush1.msra.mxu0 %v935
  %v937 = vand.u32 %v81, 4294901760
  %v938 = vsub.f32 %v81, %v937
  %939 = vmatprep.subr.mxu0 %v938
  %v940 = vand.u32 %v80, 4294901760
  %v941 = vsub.f32 %v80, %v940
  %942 = vmatpush1.msra.mxu0 %v941
  %v943 = vand.u32 %v89, 4294901760
  %v944 = vsub.f32 %v89, %v943
  %945 = vmatprep.subr.mxu0 %v944
  %v946 = vand.u32 %v88, 4294901760
  %v947 = vsub.f32 %v88, %v946
  %948 = vmatpush1.msra.mxu0 %v947
  %949 = vmatprep.subr.mxu0 0.0
  %950 = vmatpush1.msra.mxu0 0.0
  %951 = vmatprep.subr.mxu0 0.0
  %952 = vmatpush1.msra.mxu0 0.0
  %953 = vmatprep.subr.mxu0 0.0
  %954 = vmatpush1.msra.mxu0 0.0
  %955 = vmatprep.subr.mxu0 0.0
  %956 = vmatpush1.msra.mxu0 0.0
  %957 = vmatprep.subr.mxu0 0.0
  %958 = vmatpush1.msra.mxu0 0.0
  %959 = vmatprep.subr.mxu0 0.0
  %960 = vmatpush1.msra.mxu0 0.0
  %961 = vmatprep.subr.mxu0 0.0
  %962 = vmatpush1.msra.mxu0 0.0
  %963 = vmatprep.subr.mxu0 0.0
  %964 = vmatpush1.msra.mxu0 0.0
  %965 = vmatprep.subr.mxu0 0.0
  %966 = vmatpush1.msra.mxu0 0.0
  %967 = vmatprep.subr.mxu0 0.0
  %968 = vmatpush1.msra.mxu0 0.0
  %969 = vmatprep.subr.mxu0 0.0
  %970 = vmatpush1.msra.mxu0 0.0
  %971 = vmatprep.subr.mxu0 0.0
  %972 = vmatpush1.msra.mxu0 0.0
  %973 = vmatprep.subr.mxu0 0.0
  %974 = vmatpush1.msra.mxu0 0.0
  %975 = vmatprep.subr.mxu0 0.0
  %976 = vmatpush1.msra.mxu0 0.0
  %977 = vmatprep.subr.mxu0 0.0
  %978 = vmatpush1.msra.mxu0 0.0
  %979 = vmatprep.subr.mxu0 0.0
  %980 = vmatpush1.msra.mxu0 0.0
  %981 = vmatprep.subr.mxu0 0.0
  %982 = vmatpush1.msra.mxu0 0.0
  %983 = vmatprep.subr.mxu0 0.0
  %984 = vmatpush1.msra.mxu0 0.0
  %985 = vmatprep.subr.mxu0 0.0
  %986 = vmatpush1.msra.mxu0 0.0
  %987 = vmatprep.subr.mxu0 0.0
  %988 = vmatpush1.msra.mxu0 0.0
  %989 = vmatprep.subr.mxu0 0.0
  %990 = vmatpush1.msra.mxu0 0.0
  %991 = vmatprep.subr.mxu0 0.0
  %992 = vmatpush1.msra.mxu0 0.0
  %993 = vmatprep.subr.mxu0 0.0
  %994 = vmatpush1.msra.mxu0 0.0
  %995 = vmatprep.subr.mxu0 0.0
  %996 = vmatpush1.msra.mxu0 0.0
  %997 = vmatprep.subr.mxu0 0.0
  %998 = vmatpush1.msra.mxu0 0.0
  %999 = vmatprep.subr.mxu0 0.0
  %1000 = vmatpush1.msra.mxu0 0.0
  %1001 = vmatprep.mubr.f32.mxu0 0.0
  %v1002 = vand.u32 %v96, 4294901760
  %v1003 = vsub.f32 %v96, %v1002
  %1004 = vmatmul.mubr.f32.gmra.mrb[0].mxu0 %v1003
  %v1005 = vpop.f32.mrb[0].mxu0
  %v1006 = vadd.f32 %v909, %v1005
  %v1007 = vpop.f32.mrb[0].mxu0
  %v1008 = vadd.f32 %v911, %v1007
  %1009 = vdwg.mxu0
  %v1010 = vand.u32 %v49, 4294901760
  %1011 = vmatprep.subr.mxu0 %v1010
  %v1012 = vand.u32 %v48, 4294901760
  %1013 = vmatpush1.msra.mxu0 %v1012
  %v1014 = vand.u32 %v57, 4294901760
  %1015 = vmatprep.subr.mxu0 %v1014
  %v1016 = vand.u32 %v56, 4294901760
  %1017 = vmatpush1.msra.mxu0 %v1016
  %v1018 = vand.u32 %v65, 4294901760
  %1019 = vmatprep.subr.mxu0 %v1018
  %v1020 = vand.u32 %v64, 4294901760
  %1021 = vmatpush1.msra.mxu0 %v1020
  %v1022 = vand.u32 %v73, 4294901760
  %1023 = vmatprep.subr.mxu0 %v1022
  %v1024 = vand.u32 %v72, 4294901760
  %1025 = vmatpush1.msra.mxu0 %v1024
  %v1026 = vand.u32 %v81, 4294901760
  %1027 = vmatprep.subr.mxu0 %v1026
  %v1028 = vand.u32 %v80, 4294901760
  %1029 = vmatpush1.msra.mxu0 %v1028
  %v1030 = vand.u32 %v89, 4294901760
  %1031 = vmatprep.subr.mxu0 %v1030
  %v1032 = vand.u32 %v88, 4294901760
  %1033 = vmatpush1.msra.mxu0 %v1032
  %1034 = vmatprep.subr.mxu0 0.0
  %1035 = vmatpush1.msra.mxu0 0.0
  %1036 = vmatprep.subr.mxu0 0.0
  %1037 = vmatpush1.msra.mxu0 0.0
  %1038 = vmatprep.subr.mxu0 0.0
  %1039 = vmatpush1.msra.mxu0 0.0
  %1040 = vmatprep.subr.mxu0 0.0
  %1041 = vmatpush1.msra.mxu0 0.0
  %1042 = vmatprep.subr.mxu0 0.0
  %1043 = vmatpush1.msra.mxu0 0.0
  %1044 = vmatprep.subr.mxu0 0.0
  %1045 = vmatpush1.msra.mxu0 0.0
  %1046 = vmatprep.subr.mxu0 0.0
  %1047 = vmatpush1.msra.mxu0 0.0
  %1048 = vmatprep.subr.mxu0 0.0
  %1049 = vmatpush1.msra.mxu0 0.0
  %1050 = vmatprep.subr.mxu0 0.0
  %1051 = vmatpush1.msra.mxu0 0.0
  %1052 = vmatprep.subr.mxu0 0.0
  %1053 = vmatpush1.msra.mxu0 0.0
  %1054 = vmatprep.subr.mxu0 0.0
  %1055 = vmatpush1.msra.mxu0 0.0
  %1056 = vmatprep.subr.mxu0 0.0
  %1057 = vmatpush1.msra.mxu0 0.0
  %1058 = vmatprep.subr.mxu0 0.0
  %1059 = vmatpush1.msra.mxu0 0.0
  %1060 = vmatprep.subr.mxu0 0.0
  %1061 = vmatpush1.msra.mxu0 0.0
  %1062 = vmatprep.subr.mxu0 0.0
  %1063 = vmatpush1.msra.mxu0 0.0
  %1064 = vmatprep.subr.mxu0 0.0
  %1065 = vmatpush1.msra.mxu0 0.0
  %1066 = vmatprep.subr.mxu0 0.0
  %1067 = vmatpush1.msra.mxu0 0.0
  %1068 = vmatprep.subr.mxu0 0.0
  %1069 = vmatpush1.msra.mxu0 0.0
  %1070 = vmatprep.subr.mxu0 0.0
  %1071 = vmatpush1.msra.mxu0 0.0
  %1072 = vmatprep.subr.mxu0 0.0
  %1073 = vmatpush1.msra.mxu0 0.0
  %1074 = vmatprep.subr.mxu0 0.0
  %1075 = vmatpush1.msra.mxu0 0.0
  %1076 = vmatprep.subr.mxu0 0.0
  %1077 = vmatpush1.msra.mxu0 0.0
  %1078 = vmatprep.subr.mxu0 0.0
  %1079 = vmatpush1.msra.mxu0 0.0
  %1080 = vmatprep.subr.mxu0 0.0
  %1081 = vmatpush1.msra.mxu0 0.0
  %1082 = vmatprep.subr.mxu0 0.0
  %1083 = vmatpush1.msra.mxu0 0.0
  %1084 = vmatprep.subr.mxu0 0.0
  %1085 = vmatpush1.msra.mxu0 0.0
  %1086 = vmatprep.mubr.f32.mxu0 0.0
  %v1087 = vand.u32 %v96, 4294901760
  %v1088 = vsub.f32 %v96, %v1087
  %v1089 = vand.u32 %v1088, 4294901760
  %1090 = vmatmul.mubr.f32.gmra.mrb[0].mxu0 %v1089
  %v1091 = vpop.f32.mrb[0].mxu0
  %v1092 = vadd.f32 %v1006, %v1091
  %v1093 = vpop.f32.mrb[0].mxu0
  %v1094 = vadd.f32 %v1008, %v1093
  %1095 = vdwg.mxu0
  %v1096 = vand.u32 %v49, 4294901760
  %v1097 = vsub.f32 %v49, %v1096
  %v1098 = vand.u32 %v1097, 4294901760
  %1099 = vmatprep.subr.mxu0 %v1098
  %v1100 = vand.u32 %v48, 4294901760
  %v1101 = vsub.f32 %v48, %v1100
  %v1102 = vand.u32 %v1101, 4294901760
  %1103 = vmatpush1.msra.mxu0 %v1102
  %v1104 = vand.u32 %v57, 4294901760
  %v1105 = vsub.f32 %v57, %v1104
  %v1106 = vand.u32 %v1105, 4294901760
  %1107 = vmatprep.subr.mxu0 %v1106
  %v1108 = vand.u32 %v56, 4294901760
  %v1109 = vsub.f32 %v56, %v1108
  %v1110 = vand.u32 %v1109, 4294901760
  %1111 = vmatpush1.msra.mxu0 %v1110
  %v1112 = vand.u32 %v65, 4294901760
  %v1113 = vsub.f32 %v65, %v1112
  %v1114 = vand.u32 %v1113, 4294901760
  %1115 = vmatprep.subr.mxu0 %v1114
  %v1116 = vand.u32 %v64, 4294901760
  %v1117 = vsub.f32 %v64, %v1116
  %v1118 = vand.u32 %v1117, 4294901760
  %1119 = vmatpush1.msra.mxu0 %v1118
  %v1120 = vand.u32 %v73, 4294901760
  %v1121 = vsub.f32 %v73, %v1120
  %v1122 = vand.u32 %v1121, 4294901760
  %1123 = vmatprep.subr.mxu0 %v1122
  %v1124 = vand.u32 %v72, 4294901760
  %v1125 = vsub.f32 %v72, %v1124
  %v1126 = vand.u32 %v1125, 4294901760
  %1127 = vmatpush1.msra.mxu0 %v1126
  %v1128 = vand.u32 %v81, 4294901760
  %v1129 = vsub.f32 %v81, %v1128
  %v1130 = vand.u32 %v1129, 4294901760
  %1131 = vmatprep.subr.mxu0 %v1130
  %v1132 = vand.u32 %v80, 4294901760
  %v1133 = vsub.f32 %v80, %v1132
  %v1134 = vand.u32 %v1133, 4294901760
  %1135 = vmatpush1.msra.mxu0 %v1134
  %v1136 = vand.u32 %v89, 4294901760
  %v1137 = vsub.f32 %v89, %v1136
  %v1138 = vand.u32 %v1137, 4294901760
  %1139 = vmatprep.subr.mxu0 %v1138
  %v1140 = vand.u32 %v88, 4294901760
  %v1141 = vsub.f32 %v88, %v1140
  %v1142 = vand.u32 %v1141, 4294901760
  %1143 = vmatpush1.msra.mxu0 %v1142
  %1144 = vmatprep.subr.mxu0 0.0
  %1145 = vmatpush1.msra.mxu0 0.0
  %1146 = vmatprep.subr.mxu0 0.0
  %1147 = vmatpush1.msra.mxu0 0.0
  %1148 = vmatprep.subr.mxu0 0.0
  %1149 = vmatpush1.msra.mxu0 0.0
  %1150 = vmatprep.subr.mxu0 0.0
  %1151 = vmatpush1.msra.mxu0 0.0
  %1152 = vmatprep.subr.mxu0 0.0
  %1153 = vmatpush1.msra.mxu0 0.0
  %1154 = vmatprep.subr.mxu0 0.0
  %1155 = vmatpush1.msra.mxu0 0.0
  %1156 = vmatprep.subr.mxu0 0.0
  %1157 = vmatpush1.msra.mxu0 0.0
  %1158 = vmatprep.subr.mxu0 0.0
  %1159 = vmatpush1.msra.mxu0 0.0
  %1160 = vmatprep.subr.mxu0 0.0
  %1161 = vmatpush1.msra.mxu0 0.0
  %1162 = vmatprep.subr.mxu0 0.0
  %1163 = vmatpush1.msra.mxu0 0.0
  %1164 = vmatprep.subr.mxu0 0.0
  %1165 = vmatpush1.msra.mxu0 0.0
  %1166 = vmatprep.subr.mxu0 0.0
  %1167 = vmatpush1.msra.mxu0 0.0
  %1168 = vmatprep.subr.mxu0 0.0
  %1169 = vmatpush1.msra.mxu0 0.0
  %1170 = vmatprep.subr.mxu0 0.0
  %1171 = vmatpush1.msra.mxu0 0.0
  %1172 = vmatprep.subr.mxu0 0.0
  %1173 = vmatpush1.msra.mxu0 0.0
  %1174 = vmatprep.subr.mxu0 0.0
  %1175 = vmatpush1.msra.mxu0 0.0
  %1176 = vmatprep.subr.mxu0 0.0
  %1177 = vmatpush1.msra.mxu0 0.0
  %1178 = vmatprep.subr.mxu0 0.0
  %1179 = vmatpush1.msra.mxu0 0.0
  %1180 = vmatprep.subr.mxu0 0.0
  %1181 = vmatpush1.msra.mxu0 0.0
  %1182 = vmatprep.subr.mxu0 0.0
  %1183 = vmatpush1.msra.mxu0 0.0
  %1184 = vmatprep.subr.mxu0 0.0
  %1185 = vmatpush1.msra.mxu0 0.0
  %1186 = vmatprep.subr.mxu0 0.0
  %1187 = vmatpush1.msra.mxu0 0.0
  %1188 = vmatprep.subr.mxu0 0.0
  %1189 = vmatpush1.msra.mxu0 0.0
  %1190 = vmatprep.subr.mxu0 0.0
  %1191 = vmatpush1.msra.mxu0 0.0
  %1192 = vmatprep.subr.mxu0 0.0
  %1193 = vmatpush1.msra.mxu0 0.0
  %1194 = vmatprep.subr.mxu0 0.0
  %1195 = vmatpush1.msra.mxu0 0.0
  %1196 = vmatprep.mubr.f32.mxu0 0.0
  %v1197 = vand.u32 %v96, 4294901760
  %1198 = vmatmul.mubr.f32.gmra.mrb[0].mxu0 %v1197
  %v1199 = vpop.f32.mrb[0].mxu0
  %v1200 = vadd.f32 %v1092, %v1199
  %v1201 = vpop.f32.mrb[0].mxu0
  %v1202 = vadd.f32 %v1094, %v1201
  %1203 = vdwg.mxu0
  %v1204 = vand.u32 %v49, 4294901760
  %1205 = vmatprep.subr.mxu0 %v1204
  %v1206 = vand.u32 %v48, 4294901760
  %1207 = vmatpush1.msra.mxu0 %v1206
  %v1208 = vand.u32 %v57, 4294901760
  %1209 = vmatprep.subr.mxu0 %v1208
  %v1210 = vand.u32 %v56, 4294901760
  %1211 = vmatpush1.msra.mxu0 %v1210
  %v1212 = vand.u32 %v65, 4294901760
  %1213 = vmatprep.subr.mxu0 %v1212
  %v1214 = vand.u32 %v64, 4294901760
  %1215 = vmatpush1.msra.mxu0 %v1214
  %v1216 = vand.u32 %v73, 4294901760
  %1217 = vmatprep.subr.mxu0 %v1216
  %v1218 = vand.u32 %v72, 4294901760
  %1219 = vmatpush1.msra.mxu0 %v1218
  %v1220 = vand.u32 %v81, 4294901760
  %1221 = vmatprep.subr.mxu0 %v1220
  %v1222 = vand.u32 %v80, 4294901760
  %1223 = vmatpush1.msra.mxu0 %v1222
  %v1224 = vand.u32 %v89, 4294901760
  %1225 = vmatprep.subr.mxu0 %v1224
  %v1226 = vand.u32 %v88, 4294901760
  %1227 = vmatpush1.msra.mxu0 %v1226
  %1228 = vmatprep.subr.mxu0 0.0
  %1229 = vmatpush1.msra.mxu0 0.0
  %1230 = vmatprep.subr.mxu0 0.0
  %1231 = vmatpush1.msra.mxu0 0.0
  %1232 = vmatprep.subr.mxu0 0.0
  %1233 = vmatpush1.msra.mxu0 0.0
  %1234 = vmatprep.subr.mxu0 0.0
  %1235 = vmatpush1.msra.mxu0 0.0
  %1236 = vmatprep.subr.mxu0 0.0
  %1237 = vmatpush1.msra.mxu0 0.0
  %1238 = vmatprep.subr.mxu0 0.0
  %1239 = vmatpush1.msra.mxu0 0.0
  %1240 = vmatprep.subr.mxu0 0.0
  %1241 = vmatpush1.msra.mxu0 0.0
  %1242 = vmatprep.subr.mxu0 0.0
  %1243 = vmatpush1.msra.mxu0 0.0
  %1244 = vmatprep.subr.mxu0 0.0
  %1245 = vmatpush1.msra.mxu0 0.0
  %1246 = vmatprep.subr.mxu0 0.0
  %1247 = vmatpush1.msra.mxu0 0.0
  %1248 = vmatprep.subr.mxu0 0.0
  %1249 = vmatpush1.msra.mxu0 0.0
  %1250 = vmatprep.subr.mxu0 0.0
  %1251 = vmatpush1.msra.mxu0 0.0
  %1252 = vmatprep.subr.mxu0 0.0
  %1253 = vmatpush1.msra.mxu0 0.0
  %1254 = vmatprep.subr.mxu0 0.0
  %1255 = vmatpush1.msra.mxu0 0.0
  %1256 = vmatprep.subr.mxu0 0.0
  %1257 = vmatpush1.msra.mxu0 0.0
  %1258 = vmatprep.subr.mxu0 0.0
  %1259 = vmatpush1.msra.mxu0 0.0
  %1260 = vmatprep.subr.mxu0 0.0
  %1261 = vmatpush1.msra.mxu0 0.0
  %1262 = vmatprep.subr.mxu0 0.0
  %1263 = vmatpush1.msra.mxu0 0.0
  %1264 = vmatprep.subr.mxu0 0.0
  %1265 = vmatpush1.msra.mxu0 0.0
  %1266 = vmatprep.subr.mxu0 0.0
  %1267 = vmatpush1.msra.mxu0 0.0
  %1268 = vmatprep.subr.mxu0 0.0
  %1269 = vmatpush1.msra.mxu0 0.0
  %1270 = vmatprep.subr.mxu0 0.0
  %1271 = vmatpush1.msra.mxu0 0.0
  %1272 = vmatprep.subr.mxu0 0.0
  %1273 = vmatpush1.msra.mxu0 0.0
  %1274 = vmatprep.subr.mxu0 0.0
  %1275 = vmatpush1.msra.mxu0 0.0
  %1276 = vmatprep.subr.mxu0 0.0
  %1277 = vmatpush1.msra.mxu0 0.0
  %1278 = vmatprep.subr.mxu0 0.0
  %1279 = vmatpush1.msra.mxu0 0.0
  %1280 = vmatprep.mubr.f32.mxu0 0.0
  %v1281 = vand.u32 %v96, 4294901760
  %1282 = vmatmul.mubr.f32.gmra.mrb[0].mxu0 %v1281
  %v1283 = vpop.f32.mrb[0].mxu0
  %v1284 = vadd.f32 %v1200, %v1283
  %v1285 = vpop.f32.mrb[0].mxu0
  %v1286 = vadd.f32 %v1202, %v1285
  %1287 = vdwg.mxu0
  %v1288 = vand.u32 %v51, 4294901760
  %1289 = vmatprep.subr.mxu0 %v1288
  %v1290 = vand.u32 %v50, 4294901760
  %1291 = vmatpush1.msra.mxu0 %v1290
  %v1292 = vand.u32 %v59, 4294901760
  %1293 = vmatprep.subr.mxu0 %v1292
  %v1294 = vand.u32 %v58, 4294901760
  %1295 = vmatpush1.msra.mxu0 %v1294
  %v1296 = vand.u32 %v67, 4294901760
  %1297 = vmatprep.subr.mxu0 %v1296
  %v1298 = vand.u32 %v66, 4294901760
  %1299 = vmatpush1.msra.mxu0 %v1298
  %v1300 = vand.u32 %v75, 4294901760
  %1301 = vmatprep.subr.mxu0 %v1300
  %v1302 = vand.u32 %v74, 4294901760
  %1303 = vmatpush1.msra.mxu0 %v1302
  %v1304 = vand.u32 %v83, 4294901760
  %1305 = vmatprep.subr.mxu0 %v1304
  %v1306 = vand.u32 %v82, 4294901760
  %1307 = vmatpush1.msra.mxu0 %v1306
  %v1308 = vand.u32 %v91, 4294901760
  %1309 = vmatprep.subr.mxu0 %v1308
  %v1310 = vand.u32 %v90, 4294901760
  %1311 = vmatpush1.msra.mxu0 %v1310
  %1312 = vmatprep.subr.mxu0 0.0
  %1313 = vmatpush1.msra.mxu0 0.0
  %1314 = vmatprep.subr.mxu0 0.0
  %1315 = vmatpush1.msra.mxu0 0.0
  %1316 = vmatprep.subr.mxu0 0.0
  %1317 = vmatpush1.msra.mxu0 0.0
  %1318 = vmatprep.subr.mxu0 0.0
  %1319 = vmatpush1.msra.mxu0 0.0
  %1320 = vmatprep.subr.mxu0 0.0
  %1321 = vmatpush1.msra.mxu0 0.0
  %1322 = vmatprep.subr.mxu0 0.0
  %1323 = vmatpush1.msra.mxu0 0.0
  %1324 = vmatprep.subr.mxu0 0.0
  %1325 = vmatpush1.msra.mxu0 0.0
  %1326 = vmatprep.subr.mxu0 0.0
  %1327 = vmatpush1.msra.mxu0 0.0
  %1328 = vmatprep.subr.mxu0 0.0
  %1329 = vmatpush1.msra.mxu0 0.0
  %1330 = vmatprep.subr.mxu0 0.0
  %1331 = vmatpush1.msra.mxu0 0.0
  %1332 = vmatprep.subr.mxu0 0.0
  %1333 = vmatpush1.msra.mxu0 0.0
  %1334 = vmatprep.subr.mxu0 0.0
  %1335 = vmatpush1.msra.mxu0 0.0
  %1336 = vmatprep.subr.mxu0 0.0
  %1337 = vmatpush1.msra.mxu0 0.0
  %1338 = vmatprep.subr.mxu0 0.0
  %1339 = vmatpush1.msra.mxu0 0.0
  %1340 = vmatprep.subr.mxu0 0.0
  %1341 = vmatpush1.msra.mxu0 0.0
  %1342 = vmatprep.subr.mxu0 0.0
  %1343 = vmatpush1.msra.mxu0 0.0
  %1344 = vmatprep.subr.mxu0 0.0
  %1345 = vmatpush1.msra.mxu0 0.0
  %1346 = vmatprep.subr.mxu0 0.0
  %1347 = vmatpush1.msra.mxu0 0.0
  %1348 = vmatprep.subr.mxu0 0.0
  %1349 = vmatpush1.msra.mxu0 0.0
  %1350 = vmatprep.subr.mxu0 0.0
  %1351 = vmatpush1.msra.mxu0 0.0
  %1352 = vmatprep.subr.mxu0 0.0
  %1353 = vmatpush1.msra.mxu0 0.0
  %1354 = vmatprep.subr.mxu0 0.0
  %1355 = vmatpush1.msra.mxu0 0.0
  %1356 = vmatprep.subr.mxu0 0.0
  %1357 = vmatpush1.msra.mxu0 0.0
  %1358 = vmatprep.subr.mxu0 0.0
  %1359 = vmatpush1.msra.mxu0 0.0
  %1360 = vmatprep.subr.mxu0 0.0
  %1361 = vmatpush1.msra.mxu0 0.0
  %1362 = vmatprep.subr.mxu0 0.0
  %1363 = vmatpush1.msra.mxu0 0.0
  %1364 = vmatprep.mubr.f32.mxu0 0.0
  %v1365 = vand.u32 %v96, 4294901760
  %v1366 = vsub.f32 %v96, %v1365
  %v1367 = vand.u32 %v1366, 4294901760
  %v1368 = vsub.f32 %v1366, %v1367
  %v1369 = vand.u32 %v1368, 4294901760
  %1370 = vmatmul.mubr.f32.gmra.mrb[0].mxu0 %v1369
  %v1371 = vpop.f32.mrb[0].mxu0
  %v1372 = vadd.f32 0.0, %v1371
  %v1373 = vpop.f32.mrb[0].mxu0
  %v1374 = vadd.f32 0.0, %v1373
  %1375 = vdwg.mxu0
  %v1376 = vand.u32 %v51, 4294901760
  %v1377 = vsub.f32 %v51, %v1376
  %v1378 = vand.u32 %v1377, 4294901760
  %v1379 = vsub.f32 %v1377, %v1378
  %v1380 = vand.u32 %v1379, 4294901760
  %1381 = vmatprep.subr.mxu0 %v1380
  %v1382 = vand.u32 %v50, 4294901760
  %v1383 = vsub.f32 %v50, %v1382
  %v1384 = vand.u32 %v1383, 4294901760
  %v1385 = vsub.f32 %v1383, %v1384
  %v1386 = vand.u32 %v1385, 4294901760
  %1387 = vmatpush1.msra.mxu0 %v1386
  %v1388 = vand.u32 %v59, 4294901760
  %v1389 = vsub.f32 %v59, %v1388
  %v1390 = vand.u32 %v1389, 4294901760
  %v1391 = vsub.f32 %v1389, %v1390
  %v1392 = vand.u32 %v1391, 4294901760
  %1393 = vmatprep.subr.mxu0 %v1392
  %v1394 = vand.u32 %v58, 4294901760
  %v1395 = vsub.f32 %v58, %v1394
  %v1396 = vand.u32 %v1395, 4294901760
  %v1397 = vsub.f32 %v1395, %v1396
  %v1398 = vand.u32 %v1397, 4294901760
  %1399 = vmatpush1.msra.mxu0 %v1398
  %v1400 = vand.u32 %v67, 4294901760
  %v1401 = vsub.f32 %v67, %v1400
  %v1402 = vand.u32 %v1401, 4294901760
  %v1403 = vsub.f32 %v1401, %v1402
  %v1404 = vand.u32 %v1403, 4294901760
  %1405 = vmatprep.subr.mxu0 %v1404
  %v1406 = vand.u32 %v66, 4294901760
  %v1407 = vsub.f32 %v66, %v1406
  %v1408 = vand.u32 %v1407, 4294901760
  %v1409 = vsub.f32 %v1407, %v1408
  %v1410 = vand.u32 %v1409, 4294901760
  %1411 = vmatpush1.msra.mxu0 %v1410
  %v1412 = vand.u32 %v75, 4294901760
  %v1413 = vsub.f32 %v75, %v1412
  %v1414 = vand.u32 %v1413, 4294901760
  %v1415 = vsub.f32 %v1413, %v1414
  %v1416 = vand.u32 %v1415, 4294901760
  %1417 = vmatprep.subr.mxu0 %v1416
  %v1418 = vand.u32 %v74, 4294901760
  %v1419 = vsub.f32 %v74, %v1418
  %v1420 = vand.u32 %v1419, 4294901760
  %v1421 = vsub.f32 %v1419, %v1420
  %v1422 = vand.u32 %v1421, 4294901760
  %1423 = vmatpush1.msra.mxu0 %v1422
  %v1424 = vand.u32 %v83, 4294901760
  %v1425 = vsub.f32 %v83, %v1424
  %v1426 = vand.u32 %v1425, 4294901760
  %v1427 = vsub.f32 %v1425, %v1426
  %v1428 = vand.u32 %v1427, 4294901760
  %1429 = vmatprep.subr.mxu0 %v1428
  %v1430 = vand.u32 %v82, 4294901760
  %v1431 = vsub.f32 %v82, %v1430
  %v1432 = vand.u32 %v1431, 4294901760
  %v1433 = vsub.f32 %v1431, %v1432
  %v1434 = vand.u32 %v1433, 4294901760
  %1435 = vmatpush1.msra.mxu0 %v1434
  %v1436 = vand.u32 %v91, 4294901760
  %v1437 = vsub.f32 %v91, %v1436
  %v1438 = vand.u32 %v1437, 4294901760
  %v1439 = vsub.f32 %v1437, %v1438
  %v1440 = vand.u32 %v1439, 4294901760
  %1441 = vmatprep.subr.mxu0 %v1440
  %v1442 = vand.u32 %v90, 4294901760
  %v1443 = vsub.f32 %v90, %v1442
  %v1444 = vand.u32 %v1443, 4294901760
  %v1445 = vsub.f32 %v1443, %v1444
  %v1446 = vand.u32 %v1445, 4294901760
  %1447 = vmatpush1.msra.mxu0 %v1446
  %1448 = vmatprep.subr.mxu0 0.0
  %1449 = vmatpush1.msra.mxu0 0.0
  %1450 = vmatprep.subr.mxu0 0.0
  %1451 = vmatpush1.msra.mxu0 0.0
  %1452 = vmatprep.subr.mxu0 0.0
  %1453 = vmatpush1.msra.mxu0 0.0
  %1454 = vmatprep.subr.mxu0 0.0
  %1455 = vmatpush1.msra.mxu0 0.0
  %1456 = vmatprep.subr.mxu0 0.0
  %1457 = vmatpush1.msra.mxu0 0.0
  %1458 = vmatprep.subr.mxu0 0.0
  %1459 = vmatpush1.msra.mxu0 0.0
  %1460 = vmatprep.subr.mxu0 0.0
  %1461 = vmatpush1.msra.mxu0 0.0
  %1462 = vmatprep.subr.mxu0 0.0
  %1463 = vmatpush1.msra.mxu0 0.0
  %1464 = vmatprep.subr.mxu0 0.0
  %1465 = vmatpush1.msra.mxu0 0.0
  %1466 = vmatprep.subr.mxu0 0.0
  %1467 = vmatpush1.msra.mxu0 0.0
  %1468 = vmatprep.subr.mxu0 0.0
  %1469 = vmatpush1.msra.mxu0 0.0
  %1470 = vmatprep.subr.mxu0 0.0
  %1471 = vmatpush1.msra.mxu0 0.0
  %1472 = vmatprep.subr.mxu0 0.0
  %1473 = vmatpush1.msra.mxu0 0.0
  %1474 = vmatprep.subr.mxu0 0.0
  %1475 = vmatpush1.msra.mxu0 0.0
  %1476 = vmatprep.subr.mxu0 0.0
  %1477 = vmatpush1.msra.mxu0 0.0
  %1478 = vmatprep.subr.mxu0 0.0
  %1479 = vmatpush1.msra.mxu0 0.0
  %1480 = vmatprep.subr.mxu0 0.0
  %1481 = vmatpush1.msra.mxu0 0.0
  %1482 = vmatprep.subr.mxu0 0.0
  %1483 = vmatpush1.msra.mxu0 0.0
  %1484 = vmatprep.subr.mxu0 0.0
  %1485 = vmatpush1.msra.mxu0 0.0
  %1486 = vmatprep.subr.mxu0 0.0
  %1487 = vmatpush1.msra.mxu0 0.0
  %1488 = vmatprep.subr.mxu0 0.0
  %1489 = vmatpush1.msra.mxu0 0.0
  %1490 = vmatprep.subr.mxu0 0.0
  %1491 = vmatpush1.msra.mxu0 0.0
  %1492 = vmatprep.subr.mxu0 0.0
  %1493 = vmatpush1.msra.mxu0 0.0
  %1494 = vmatprep.subr.mxu0 0.0
  %1495 = vmatpush1.msra.mxu0 0.0
  %1496 = vmatprep.subr.mxu0 0.0
  %1497 = vmatpush1.msra.mxu0 0.0
  %1498 = vmatprep.subr.mxu0 0.0
  %1499 = vmatpush1.msra.mxu0 0.0
  %1500 = vmatprep.mubr.f32.mxu0 0.0
  %v1501 = vand.u32 %v96, 4294901760
  %1502 = vmatmul.mubr.f32.gmra.mrb[0].mxu0 %v1501
  %v1503 = vpop.f32.mrb[0].mxu0
  %v1504 = vadd.f32 %v1372, %v1503
  %v1505 = vpop.f32.mrb[0].mxu0
  %v1506 = vadd.f32 %v1374, %v1505
  %1507 = vdwg.mxu0
  %v1508 = vand.u32 %v51, 4294901760
  %v1509 = vsub.f32 %v51, %v1508
  %1510 = vmatprep.subr.mxu0 %v1509
  %v1511 = vand.u32 %v50, 4294901760
  %v1512 = vsub.f32 %v50, %v1511
  %1513 = vmatpush1.msra.mxu0 %v1512
  %v1514 = vand.u32 %v59, 4294901760
  %v1515 = vsub.f32 %v59, %v1514
  %1516 = vmatprep.subr.mxu0 %v1515
  %v1517 = vand.u32 %v58, 4294901760
  %v1518 = vsub.f32 %v58, %v1517
  %1519 = vmatpush1.msra.mxu0 %v1518
  %v1520 = vand.u32 %v67, 4294901760
  %v1521 = vsub.f32 %v67, %v1520
  %1522 = vmatprep.subr.mxu0 %v1521
  %v1523 = vand.u32 %v66, 4294901760
  %v1524 = vsub.f32 %v66, %v1523
  %1525 = vmatpush1.msra.mxu0 %v1524
  %v1526 = vand.u32 %v75, 4294901760
  %v1527 = vsub.f32 %v75, %v1526
  %1528 = vmatprep.subr.mxu0 %v1527
  %v1529 = vand.u32 %v74, 4294901760
  %v1530 = vsub.f32 %v74, %v1529
  %1531 = vmatpush1.msra.mxu0 %v1530
  %v1532 = vand.u32 %v83, 4294901760
  %v1533 = vsub.f32 %v83, %v1532
  %1534 = vmatprep.subr.mxu0 %v1533
  %v1535 = vand.u32 %v82, 4294901760
  %v1536 = vsub.f32 %v82, %v1535
  %1537 = vmatpush1.msra.mxu0 %v1536
  %v1538 = vand.u32 %v91, 4294901760
  %v1539 = vsub.f32 %v91, %v1538
  %1540 = vmatprep.subr.mxu0 %v1539
  %v1541 = vand.u32 %v90, 4294901760
  %v1542 = vsub.f32 %v90, %v1541
  %1543 = vmatpush1.msra.mxu0 %v1542
  %1544 = vmatprep.subr.mxu0 0.0
  %1545 = vmatpush1.msra.mxu0 0.0
  %1546 = vmatprep.subr.mxu0 0.0
  %1547 = vmatpush1.msra.mxu0 0.0
  %1548 = vmatprep.subr.mxu0 0.0
  %1549 = vmatpush1.msra.mxu0 0.0
  %1550 = vmatprep.subr.mxu0 0.0
  %1551 = vmatpush1.msra.mxu0 0.0
  %1552 = vmatprep.subr.mxu0 0.0
  %1553 = vmatpush1.msra.mxu0 0.0
  %1554 = vmatprep.subr.mxu0 0.0
  %1555 = vmatpush1.msra.mxu0 0.0
  %1556 = vmatprep.subr.mxu0 0.0
  %1557 = vmatpush1.msra.mxu0 0.0
  %1558 = vmatprep.subr.mxu0 0.0
  %1559 = vmatpush1.msra.mxu0 0.0
  %1560 = vmatprep.subr.mxu0 0.0
  %1561 = vmatpush1.msra.mxu0 0.0
  %1562 = vmatprep.subr.mxu0 0.0
  %1563 = vmatpush1.msra.mxu0 0.0
  %1564 = vmatprep.subr.mxu0 0.0
  %1565 = vmatpush1.msra.mxu0 0.0
  %1566 = vmatprep.subr.mxu0 0.0
  %1567 = vmatpush1.msra.mxu0 0.0
  %1568 = vmatprep.subr.mxu0 0.0
  %1569 = vmatpush1.msra.mxu0 0.0
  %1570 = vmatprep.subr.mxu0 0.0
  %1571 = vmatpush1.msra.mxu0 0.0
  %1572 = vmatprep.subr.mxu0 0.0
  %1573 = vmatpush1.msra.mxu0 0.0
  %1574 = vmatprep.subr.mxu0 0.0
  %1575 = vmatpush1.msra.mxu0 0.0
  %1576 = vmatprep.subr.mxu0 0.0
  %1577 = vmatpush1.msra.mxu0 0.0
  %1578 = vmatprep.subr.mxu0 0.0
  %1579 = vmatpush1.msra.mxu0 0.0
  %1580 = vmatprep.subr.mxu0 0.0
  %1581 = vmatpush1.msra.mxu0 0.0
  %1582 = vmatprep.subr.mxu0 0.0
  %1583 = vmatpush1.msra.mxu0 0.0
  %1584 = vmatprep.subr.mxu0 0.0
  %1585 = vmatpush1.msra.mxu0 0.0
  %1586 = vmatprep.subr.mxu0 0.0
  %1587 = vmatpush1.msra.mxu0 0.0
  %1588 = vmatprep.subr.mxu0 0.0
  %1589 = vmatpush1.msra.mxu0 0.0
  %1590 = vmatprep.subr.mxu0 0.0
  %1591 = vmatpush1.msra.mxu0 0.0
  %1592 = vmatprep.subr.mxu0 0.0
  %1593 = vmatpush1.msra.mxu0 0.0
  %1594 = vmatprep.subr.mxu0 0.0
  %1595 = vmatpush1.msra.mxu0 0.0
  %1596 = vmatprep.mubr.f32.mxu0 0.0
  %v1597 = vand.u32 %v96, 4294901760
  %v1598 = vsub.f32 %v96, %v1597
  %1599 = vmatmul.mubr.f32.gmra.mrb[0].mxu0 %v1598
  %v1600 = vpop.f32.mrb[0].mxu0
  %v1601 = vadd.f32 %v1504, %v1600
  %v1602 = vpop.f32.mrb[0].mxu0
  %v1603 = vadd.f32 %v1506, %v1602
  %1604 = vdwg.mxu0
  %v1605 = vand.u32 %v51, 4294901760
  %1606 = vmatprep.subr.mxu0 %v1605
  %v1607 = vand.u32 %v50, 4294901760
  %1608 = vmatpush1.msra.mxu0 %v1607
  %v1609 = vand.u32 %v59, 4294901760
  %1610 = vmatprep.subr.mxu0 %v1609
  %v1611 = vand.u32 %v58, 4294901760
  %1612 = vmatpush1.msra.mxu0 %v1611
  %v1613 = vand.u32 %v67, 4294901760
  %1614 = vmatprep.subr.mxu0 %v1613
  %v1615 = vand.u32 %v66, 4294901760
  %1616 = vmatpush1.msra.mxu0 %v1615
  %v1617 = vand.u32 %v75, 4294901760
  %1618 = vmatprep.subr.mxu0 %v1617
  %v1619 = vand.u32 %v74, 4294901760
  %1620 = vmatpush1.msra.mxu0 %v1619
  %v1621 = vand.u32 %v83, 4294901760
  %1622 = vmatprep.subr.mxu0 %v1621
  %v1623 = vand.u32 %v82, 4294901760
  %1624 = vmatpush1.msra.mxu0 %v1623
  %v1625 = vand.u32 %v91, 4294901760
  %1626 = vmatprep.subr.mxu0 %v1625
  %v1627 = vand.u32 %v90, 4294901760
  %1628 = vmatpush1.msra.mxu0 %v1627
  %1629 = vmatprep.subr.mxu0 0.0
  %1630 = vmatpush1.msra.mxu0 0.0
  %1631 = vmatprep.subr.mxu0 0.0
  %1632 = vmatpush1.msra.mxu0 0.0
  %1633 = vmatprep.subr.mxu0 0.0
  %1634 = vmatpush1.msra.mxu0 0.0
  %1635 = vmatprep.subr.mxu0 0.0
  %1636 = vmatpush1.msra.mxu0 0.0
  %1637 = vmatprep.subr.mxu0 0.0
  %1638 = vmatpush1.msra.mxu0 0.0
  %1639 = vmatprep.subr.mxu0 0.0
  %1640 = vmatpush1.msra.mxu0 0.0
  %1641 = vmatprep.subr.mxu0 0.0
  %1642 = vmatpush1.msra.mxu0 0.0
  %1643 = vmatprep.subr.mxu0 0.0
  %1644 = vmatpush1.msra.mxu0 0.0
  %1645 = vmatprep.subr.mxu0 0.0
  %1646 = vmatpush1.msra.mxu0 0.0
  %1647 = vmatprep.subr.mxu0 0.0
  %1648 = vmatpush1.msra.mxu0 0.0
  %1649 = vmatprep.subr.mxu0 0.0
  %1650 = vmatpush1.msra.mxu0 0.0
  %1651 = vmatprep.subr.mxu0 0.0
  %1652 = vmatpush1.msra.mxu0 0.0
  %1653 = vmatprep.subr.mxu0 0.0
  %1654 = vmatpush1.msra.mxu0 0.0
  %1655 = vmatprep.subr.mxu0 0.0
  %1656 = vmatpush1.msra.mxu0 0.0
  %1657 = vmatprep.subr.mxu0 0.0
  %1658 = vmatpush1.msra.mxu0 0.0
  %1659 = vmatprep.subr.mxu0 0.0
  %1660 = vmatpush1.msra.mxu0 0.0
  %1661 = vmatprep.subr.mxu0 0.0
  %1662 = vmatpush1.msra.mxu0 0.0
  %1663 = vmatprep.subr.mxu0 0.0
  %1664 = vmatpush1.msra.mxu0 0.0
  %1665 = vmatprep.subr.mxu0 0.0
  %1666 = vmatpush1.msra.mxu0 0.0
  %1667 = vmatprep.subr.mxu0 0.0
  %1668 = vmatpush1.msra.mxu0 0.0
  %1669 = vmatprep.subr.mxu0 0.0
  %1670 = vmatpush1.msra.mxu0 0.0
  %1671 = vmatprep.subr.mxu0 0.0
  %1672 = vmatpush1.msra.mxu0 0.0
  %1673 = vmatprep.subr.mxu0 0.0
  %1674 = vmatpush1.msra.mxu0 0.0
  %1675 = vmatprep.subr.mxu0 0.0
  %1676 = vmatpush1.msra.mxu0 0.0
  %1677 = vmatprep.subr.mxu0 0.0
  %1678 = vmatpush1.msra.mxu0 0.0
  %1679 = vmatprep.subr.mxu0 0.0
  %1680 = vmatpush1.msra.mxu0 0.0
  %1681 = vmatprep.mubr.f32.mxu0 0.0
  %v1682 = vand.u32 %v96, 4294901760
  %v1683 = vsub.f32 %v96, %v1682
  %v1684 = vand.u32 %v1683, 4294901760
  %1685 = vmatmul.mubr.f32.gmra.mrb[0].mxu0 %v1684
  %v1686 = vpop.f32.mrb[0].mxu0
  %v1687 = vadd.f32 %v1601, %v1686
  %v1688 = vpop.f32.mrb[0].mxu0
  %v1689 = vadd.f32 %v1603, %v1688
  %1690 = vdwg.mxu0
  %v1691 = vand.u32 %v51, 4294901760
  %v1692 = vsub.f32 %v51, %v1691
  %v1693 = vand.u32 %v1692, 4294901760
  %1694 = vmatprep.subr.mxu0 %v1693
  %v1695 = vand.u32 %v50, 4294901760
  %v1696 = vsub.f32 %v50, %v1695
  %v1697 = vand.u32 %v1696, 4294901760
  %1698 = vmatpush1.msra.mxu0 %v1697
  %v1699 = vand.u32 %v59, 4294901760
  %v1700 = vsub.f32 %v59, %v1699
  %v1701 = vand.u32 %v1700, 4294901760
  %1702 = vmatprep.subr.mxu0 %v1701
  %v1703 = vand.u32 %v58, 4294901760
  %v1704 = vsub.f32 %v58, %v1703
  %v1705 = vand.u32 %v1704, 4294901760
  %1706 = vmatpush1.msra.mxu0 %v1705
  %v1707 = vand.u32 %v67, 4294901760
  %v1708 = vsub.f32 %v67, %v1707
  %v1709 = vand.u32 %v1708, 4294901760
  %1710 = vmatprep.subr.mxu0 %v1709
  %v1711 = vand.u32 %v66, 4294901760
  %v1712 = vsub.f32 %v66, %v1711
  %v1713 = vand.u32 %v1712, 4294901760
  %1714 = vmatpush1.msra.mxu0 %v1713
  %v1715 = vand.u32 %v75, 4294901760
  %v1716 = vsub.f32 %v75, %v1715
  %v1717 = vand.u32 %v1716, 4294901760
  %1718 = vmatprep.subr.mxu0 %v1717
  %v1719 = vand.u32 %v74, 4294901760
  %v1720 = vsub.f32 %v74, %v1719
  %v1721 = vand.u32 %v1720, 4294901760
  %1722 = vmatpush1.msra.mxu0 %v1721
  %v1723 = vand.u32 %v83, 4294901760
  %v1724 = vsub.f32 %v83, %v1723
  %v1725 = vand.u32 %v1724, 4294901760
  %1726 = vmatprep.subr.mxu0 %v1725
  %v1727 = vand.u32 %v82, 4294901760
  %v1728 = vsub.f32 %v82, %v1727
  %v1729 = vand.u32 %v1728, 4294901760
  %1730 = vmatpush1.msra.mxu0 %v1729
  %v1731 = vand.u32 %v91, 4294901760
  %v1732 = vsub.f32 %v91, %v1731
  %v1733 = vand.u32 %v1732, 4294901760
  %1734 = vmatprep.subr.mxu0 %v1733
  %v1735 = vand.u32 %v90, 4294901760
  %v1736 = vsub.f32 %v90, %v1735
  %v1737 = vand.u32 %v1736, 4294901760
  %1738 = vmatpush1.msra.mxu0 %v1737
  %1739 = vmatprep.subr.mxu0 0.0
  %1740 = vmatpush1.msra.mxu0 0.0
  %1741 = vmatprep.subr.mxu0 0.0
  %1742 = vmatpush1.msra.mxu0 0.0
  %1743 = vmatprep.subr.mxu0 0.0
  %1744 = vmatpush1.msra.mxu0 0.0
  %1745 = vmatprep.subr.mxu0 0.0
  %1746 = vmatpush1.msra.mxu0 0.0
  %1747 = vmatprep.subr.mxu0 0.0
  %1748 = vmatpush1.msra.mxu0 0.0
  %1749 = vmatprep.subr.mxu0 0.0
  %1750 = vmatpush1.msra.mxu0 0.0
  %1751 = vmatprep.subr.mxu0 0.0
  %1752 = vmatpush1.msra.mxu0 0.0
  %1753 = vmatprep.subr.mxu0 0.0
  %1754 = vmatpush1.msra.mxu0 0.0
  %1755 = vmatprep.subr.mxu0 0.0
  %1756 = vmatpush1.msra.mxu0 0.0
  %1757 = vmatprep.subr.mxu0 0.0
  %1758 = vmatpush1.msra.mxu0 0.0
  %1759 = vmatprep.subr.mxu0 0.0
  %1760 = vmatpush1.msra.mxu0 0.0
  %1761 = vmatprep.subr.mxu0 0.0
  %1762 = vmatpush1.msra.mxu0 0.0
  %1763 = vmatprep.subr.mxu0 0.0
  %1764 = vmatpush1.msra.mxu0 0.0
  %1765 = vmatprep.subr.mxu0 0.0
  %1766 = vmatpush1.msra.mxu0 0.0
  %1767 = vmatprep.subr.mxu0 0.0
  %1768 = vmatpush1.msra.mxu0 0.0
  %1769 = vmatprep.subr.mxu0 0.0
  %1770 = vmatpush1.msra.mxu0 0.0
  %1771 = vmatprep.subr.mxu0 0.0
  %1772 = vmatpush1.msra.mxu0 0.0
  %1773 = vmatprep.subr.mxu0 0.0
  %1774 = vmatpush1.msra.mxu0 0.0
  %1775 = vmatprep.subr.mxu0 0.0
  %1776 = vmatpush1.msra.mxu0 0.0
  %1777 = vmatprep.subr.mxu0 0.0
  %1778 = vmatpush1.msra.mxu0 0.0
  %1779 = vmatprep.subr.mxu0 0.0
  %1780 = vmatpush1.msra.mxu0 0.0
  %1781 = vmatprep.subr.mxu0 0.0
  %1782 = vmatpush1.msra.mxu0 0.0
  %1783 = vmatprep.subr.mxu0 0.0
  %1784 = vmatpush1.msra.mxu0 0.0
  %1785 = vmatprep.subr.mxu0 0.0
  %1786 = vmatpush1.msra.mxu0 0.0
  %1787 = vmatprep.subr.mxu0 0.0
  %1788 = vmatpush1.msra.mxu0 0.0
  %1789 = vmatprep.subr.mxu0 0.0
  %1790 = vmatpush1.msra.mxu0 0.0
  %1791 = vmatprep.mubr.f32.mxu0 0.0
  %v1792 = vand.u32 %v96, 4294901760
  %1793 = vmatmul.mubr.f32.gmra.mrb[0].mxu0 %v1792
  %v1794 = vpop.f32.mrb[0].mxu0
  %v1795 = vadd.f32 %v1687, %v1794
  %v1796 = vpop.f32.mrb[0].mxu0
  %v1797 = vadd.f32 %v1689, %v1796
  %1798 = vdwg.mxu0
  %v1799 = vand.u32 %v51, 4294901760
  %1800 = vmatprep.subr.mxu0 %v1799
  %v1801 = vand.u32 %v50, 4294901760
  %1802 = vmatpush1.msra.mxu0 %v1801
  %v1803 = vand.u32 %v59, 4294901760
  %1804 = vmatprep.subr.mxu0 %v1803
  %v1805 = vand.u32 %v58, 4294901760
  %1806 = vmatpush1.msra.mxu0 %v1805
  %v1807 = vand.u32 %v67, 4294901760
  %1808 = vmatprep.subr.mxu0 %v1807
  %v1809 = vand.u32 %v66, 4294901760
  %1810 = vmatpush1.msra.mxu0 %v1809
  %v1811 = vand.u32 %v75, 4294901760
  %1812 = vmatprep.subr.mxu0 %v1811
  %v1813 = vand.u32 %v74, 4294901760
  %1814 = vmatpush1.msra.mxu0 %v1813
  %v1815 = vand.u32 %v83, 4294901760
  %1816 = vmatprep.subr.mxu0 %v1815
  %v1817 = vand.u32 %v82, 4294901760
  %1818 = vmatpush1.msra.mxu0 %v1817
  %v1819 = vand.u32 %v91, 4294901760
  %1820 = vmatprep.subr.mxu0 %v1819
  %v1821 = vand.u32 %v90, 4294901760
  %1822 = vmatpush1.msra.mxu0 %v1821
  %1823 = vmatprep.subr.mxu0 0.0
  %1824 = vmatpush1.msra.mxu0 0.0
  %1825 = vmatprep.subr.mxu0 0.0
  %1826 = vmatpush1.msra.mxu0 0.0
  %1827 = vmatprep.subr.mxu0 0.0
  %1828 = vmatpush1.msra.mxu0 0.0
  %1829 = vmatprep.subr.mxu0 0.0
  %1830 = vmatpush1.msra.mxu0 0.0
  %1831 = vmatprep.subr.mxu0 0.0
  %1832 = vmatpush1.msra.mxu0 0.0
  %1833 = vmatprep.subr.mxu0 0.0
  %1834 = vmatpush1.msra.mxu0 0.0
  %1835 = vmatprep.subr.mxu0 0.0
  %1836 = vmatpush1.msra.mxu0 0.0
  %1837 = vmatprep.subr.mxu0 0.0
  %1838 = vmatpush1.msra.mxu0 0.0
  %1839 = vmatprep.subr.mxu0 0.0
  %1840 = vmatpush1.msra.mxu0 0.0
  %1841 = vmatprep.subr.mxu0 0.0
  %1842 = vmatpush1.msra.mxu0 0.0
  %1843 = vmatprep.subr.mxu0 0.0
  %1844 = vmatpush1.msra.mxu0 0.0
  %1845 = vmatprep.subr.mxu0 0.0
  %1846 = vmatpush1.msra.mxu0 0.0
  %1847 = vmatprep.subr.mxu0 0.0
  %1848 = vmatpush1.msra.mxu0 0.0
  %1849 = vmatprep.subr.mxu0 0.0
  %1850 = vmatpush1.msra.mxu0 0.0
  %1851 = vmatprep.subr.mxu0 0.0
  %1852 = vmatpush1.msra.mxu0 0.0
  %1853 = vmatprep.subr.mxu0 0.0
  %1854 = vmatpush1.msra.mxu0 0.0
  %1855 = vmatprep.subr.mxu0 0.0
  %1856 = vmatpush1.msra.mxu0 0.0
  %1857 = vmatprep.subr.mxu0 0.0
  %1858 = vmatpush1.msra.mxu0 0.0
  %1859 = vmatprep.subr.mxu0 0.0
  %1860 = vmatpush1.msra.mxu0 0.0
  %1861 = vmatprep.subr.mxu0 0.0
  %1862 = vmatpush1.msra.mxu0 0.0
  %1863 = vmatprep.subr.mxu0 0.0
  %1864 = vmatpush1.msra.mxu0 0.0
  %1865 = vmatprep.subr.mxu0 0.0
  %1866 = vmatpush1.msra.mxu0 0.0
  %1867 = vmatprep.subr.mxu0 0.0
  %1868 = vmatpush1.msra.mxu0 0.0
  %1869 = vmatprep.subr.mxu0 0.0
  %1870 = vmatpush1.msra.mxu0 0.0
  %1871 = vmatprep.subr.mxu0 0.0
  %1872 = vmatpush1.msra.mxu0 0.0
  %1873 = vmatprep.subr.mxu0 0.0
  %1874 = vmatpush1.msra.mxu0 0.0
  %1875 = vmatprep.mubr.f32.mxu0 0.0
  %v1876 = vand.u32 %v96, 4294901760
  %1877 = vmatmul.mubr.f32.gmra.mrb[0].mxu0 %v1876
  %v1878 = vpop.f32.mrb[0].mxu0
  %v1879 = vadd.f32 %v1795, %v1878
  %v1880 = vpop.f32.mrb[0].mxu0
  %v1881 = vadd.f32 %v1797, %v1880
  %1882 = vdwg.mxu0
  %v1883 = vand.u32 %v53, 4294901760
  %1884 = vmatprep.subr.mxu0 %v1883
  %v1885 = vand.u32 %v52, 4294901760
  %1886 = vmatpush1.msra.mxu0 %v1885
  %v1887 = vand.u32 %v61, 4294901760
  %1888 = vmatprep.subr.mxu0 %v1887
  %v1889 = vand.u32 %v60, 4294901760
  %1890 = vmatpush1.msra.mxu0 %v1889
  %v1891 = vand.u32 %v69, 4294901760
  %1892 = vmatprep.subr.mxu0 %v1891
  %v1893 = vand.u32 %v68, 4294901760
  %1894 = vmatpush1.msra.mxu0 %v1893
  %v1895 = vand.u32 %v77, 4294901760
  %1896 = vmatprep.subr.mxu0 %v1895
  %v1897 = vand.u32 %v76, 4294901760
  %1898 = vmatpush1.msra.mxu0 %v1897
  %v1899 = vand.u32 %v85, 4294901760
  %1900 = vmatprep.subr.mxu0 %v1899
  %v1901 = vand.u32 %v84, 4294901760
  %1902 = vmatpush1.msra.mxu0 %v1901
  %v1903 = vand.u32 %v93, 4294901760
  %1904 = vmatprep.subr.mxu0 %v1903
  %v1905 = vand.u32 %v92, 4294901760
  %1906 = vmatpush1.msra.mxu0 %v1905
  %1907 = vmatprep.subr.mxu0 0.0
  %1908 = vmatpush1.msra.mxu0 0.0
  %1909 = vmatprep.subr.mxu0 0.0
  %1910 = vmatpush1.msra.mxu0 0.0
  %1911 = vmatprep.subr.mxu0 0.0
  %1912 = vmatpush1.msra.mxu0 0.0
  %1913 = vmatprep.subr.mxu0 0.0
  %1914 = vmatpush1.msra.mxu0 0.0
  %1915 = vmatprep.subr.mxu0 0.0
  %1916 = vmatpush1.msra.mxu0 0.0
  %1917 = vmatprep.subr.mxu0 0.0
  %1918 = vmatpush1.msra.mxu0 0.0
  %1919 = vmatprep.subr.mxu0 0.0
  %1920 = vmatpush1.msra.mxu0 0.0
  %1921 = vmatprep.subr.mxu0 0.0
  %1922 = vmatpush1.msra.mxu0 0.0
  %1923 = vmatprep.subr.mxu0 0.0
  %1924 = vmatpush1.msra.mxu0 0.0
  %1925 = vmatprep.subr.mxu0 0.0
  %1926 = vmatpush1.msra.mxu0 0.0
  %1927 = vmatprep.subr.mxu0 0.0
  %1928 = vmatpush1.msra.mxu0 0.0
  %1929 = vmatprep.subr.mxu0 0.0
  %1930 = vmatpush1.msra.mxu0 0.0
  %1931 = vmatprep.subr.mxu0 0.0
  %1932 = vmatpush1.msra.mxu0 0.0
  %1933 = vmatprep.subr.mxu0 0.0
  %1934 = vmatpush1.msra.mxu0 0.0
  %1935 = vmatprep.subr.mxu0 0.0
  %1936 = vmatpush1.msra.mxu0 0.0
  %1937 = vmatprep.subr.mxu0 0.0
  %1938 = vmatpush1.msra.mxu0 0.0
  %1939 = vmatprep.subr.mxu0 0.0
  %1940 = vmatpush1.msra.mxu0 0.0
  %1941 = vmatprep.subr.mxu0 0.0
  %1942 = vmatpush1.msra.mxu0 0.0
  %1943 = vmatprep.subr.mxu0 0.0
  %1944 = vmatpush1.msra.mxu0 0.0
  %1945 = vmatprep.subr.mxu0 0.0
  %1946 = vmatpush1.msra.mxu0 0.0
  %1947 = vmatprep.subr.mxu0 0.0
  %1948 = vmatpush1.msra.mxu0 0.0
  %1949 = vmatprep.subr.mxu0 0.0
  %1950 = vmatpush1.msra.mxu0 0.0
  %1951 = vmatprep.subr.mxu0 0.0
  %1952 = vmatpush1.msra.mxu0 0.0
  %1953 = vmatprep.subr.mxu0 0.0
  %1954 = vmatpush1.msra.mxu0 0.0
  %1955 = vmatprep.subr.mxu0 0.0
  %1956 = vmatpush1.msra.mxu0 0.0
  %1957 = vmatprep.subr.mxu0 0.0
  %1958 = vmatpush1.msra.mxu0 0.0
  %1959 = vmatprep.mubr.f32.mxu0 0.0
  %v1960 = vand.u32 %v96, 4294901760
  %v1961 = vsub.f32 %v96, %v1960
  %v1962 = vand.u32 %v1961, 4294901760
  %v1963 = vsub.f32 %v1961, %v1962
  %v1964 = vand.u32 %v1963, 4294901760
  %1965 = vmatmul.mubr.f32.gmra.mrb[0].mxu0 %v1964
  %v1966 = vpop.f32.mrb[0].mxu0
  %v1967 = vadd.f32 0.0, %v1966
  %v1968 = vpop.f32.mrb[0].mxu0
  %v1969 = vadd.f32 0.0, %v1968
  %1970 = vdwg.mxu0
  %v1971 = vand.u32 %v53, 4294901760
  %v1972 = vsub.f32 %v53, %v1971
  %v1973 = vand.u32 %v1972, 4294901760
  %v1974 = vsub.f32 %v1972, %v1973
  %v1975 = vand.u32 %v1974, 4294901760
  %1976 = vmatprep.subr.mxu0 %v1975
  %v1977 = vand.u32 %v52, 4294901760
  %v1978 = vsub.f32 %v52, %v1977
  %v1979 = vand.u32 %v1978, 4294901760
  %v1980 = vsub.f32 %v1978, %v1979
  %v1981 = vand.u32 %v1980, 4294901760
  %1982 = vmatpush1.msra.mxu0 %v1981
  %v1983 = vand.u32 %v61, 4294901760
  %v1984 = vsub.f32 %v61, %v1983
  %v1985 = vand.u32 %v1984, 4294901760
  %v1986 = vsub.f32 %v1984, %v1985
  %v1987 = vand.u32 %v1986, 4294901760
  %1988 = vmatprep.subr.mxu0 %v1987
  %v1989 = vand.u32 %v60, 4294901760
  %v1990 = vsub.f32 %v60, %v1989
  %v1991 = vand.u32 %v1990, 4294901760
  %v1992 = vsub.f32 %v1990, %v1991
  %v1993 = vand.u32 %v1992, 4294901760
  %1994 = vmatpush1.msra.mxu0 %v1993
  %v1995 = vand.u32 %v69, 4294901760
  %v1996 = vsub.f32 %v69, %v1995
  %v1997 = vand.u32 %v1996, 4294901760
  %v1998 = vsub.f32 %v1996, %v1997
  %v1999 = vand.u32 %v1998, 4294901760
  %2000 = vmatprep.subr.mxu0 %v1999
  %v2001 = vand.u32 %v68, 4294901760
  %v2002 = vsub.f32 %v68, %v2001
  %v2003 = vand.u32 %v2002, 4294901760
  %v2004 = vsub.f32 %v2002, %v2003
  %v2005 = vand.u32 %v2004, 4294901760
  %2006 = vmatpush1.msra.mxu0 %v2005
  %v2007 = vand.u32 %v77, 4294901760
  %v2008 = vsub.f32 %v77, %v2007
  %v2009 = vand.u32 %v2008, 4294901760
  %v2010 = vsub.f32 %v2008, %v2009
  %v2011 = vand.u32 %v2010, 4294901760
  %2012 = vmatprep.subr.mxu0 %v2011
  %v2013 = vand.u32 %v76, 4294901760
  %v2014 = vsub.f32 %v76, %v2013
  %v2015 = vand.u32 %v2014, 4294901760
  %v2016 = vsub.f32 %v2014, %v2015
  %v2017 = vand.u32 %v2016, 4294901760
  %2018 = vmatpush1.msra.mxu0 %v2017
  %v2019 = vand.u32 %v85, 4294901760
  %v2020 = vsub.f32 %v85, %v2019
  %v2021 = vand.u32 %v2020, 4294901760
  %v2022 = vsub.f32 %v2020, %v2021
  %v2023 = vand.u32 %v2022, 4294901760
  %2024 = vmatprep.subr.mxu0 %v2023
  %v2025 = vand.u32 %v84, 4294901760
  %v2026 = vsub.f32 %v84, %v2025
  %v2027 = vand.u32 %v2026, 4294901760
  %v2028 = vsub.f32 %v2026, %v2027
  %v2029 = vand.u32 %v2028, 4294901760
  %2030 = vmatpush1.msra.mxu0 %v2029
  %v2031 = vand.u32 %v93, 4294901760
  %v2032 = vsub.f32 %v93, %v2031
  %v2033 = vand.u32 %v2032, 4294901760
  %v2034 = vsub.f32 %v2032, %v2033
  %v2035 = vand.u32 %v2034, 4294901760
  %2036 = vmatprep.subr.mxu0 %v2035
  %v2037 = vand.u32 %v92, 4294901760
  %v2038 = vsub.f32 %v92, %v2037
  %v2039 = vand.u32 %v2038, 4294901760
  %v2040 = vsub.f32 %v2038, %v2039
  %v2041 = vand.u32 %v2040, 4294901760
  %2042 = vmatpush1.msra.mxu0 %v2041
  %2043 = vmatprep.subr.mxu0 0.0
  %2044 = vmatpush1.msra.mxu0 0.0
  %2045 = vmatprep.subr.mxu0 0.0
  %2046 = vmatpush1.msra.mxu0 0.0
  %2047 = vmatprep.subr.mxu0 0.0
  %2048 = vmatpush1.msra.mxu0 0.0
  %2049 = vmatprep.subr.mxu0 0.0
  %2050 = vmatpush1.msra.mxu0 0.0
  %2051 = vmatprep.subr.mxu0 0.0
  %2052 = vmatpush1.msra.mxu0 0.0
  %2053 = vmatprep.subr.mxu0 0.0
  %2054 = vmatpush1.msra.mxu0 0.0
  %2055 = vmatprep.subr.mxu0 0.0
  %2056 = vmatpush1.msra.mxu0 0.0
  %2057 = vmatprep.subr.mxu0 0.0
  %2058 = vmatpush1.msra.mxu0 0.0
  %2059 = vmatprep.subr.mxu0 0.0
  %2060 = vmatpush1.msra.mxu0 0.0
  %2061 = vmatprep.subr.mxu0 0.0
  %2062 = vmatpush1.msra.mxu0 0.0
  %2063 = vmatprep.subr.mxu0 0.0
  %2064 = vmatpush1.msra.mxu0 0.0
  %2065 = vmatprep.subr.mxu0 0.0
  %2066 = vmatpush1.msra.mxu0 0.0
  %2067 = vmatprep.subr.mxu0 0.0
  %2068 = vmatpush1.msra.mxu0 0.0
  %2069 = vmatprep.subr.mxu0 0.0
  %2070 = vmatpush1.msra.mxu0 0.0
  %2071 = vmatprep.subr.mxu0 0.0
  %2072 = vmatpush1.msra.mxu0 0.0
  %2073 = vmatprep.subr.mxu0 0.0
  %2074 = vmatpush1.msra.mxu0 0.0
  %2075 = vmatprep.subr.mxu0 0.0
  %2076 = vmatpush1.msra.mxu0 0.0
  %2077 = vmatprep.subr.mxu0 0.0
  %2078 = vmatpush1.msra.mxu0 0.0
  %2079 = vmatprep.subr.mxu0 0.0
  %2080 = vmatpush1.msra.mxu0 0.0
  %2081 = vmatprep.subr.mxu0 0.0
  %2082 = vmatpush1.msra.mxu0 0.0
  %2083 = vmatprep.subr.mxu0 0.0
  %2084 = vmatpush1.msra.mxu0 0.0
  %2085 = vmatprep.subr.mxu0 0.0
  %2086 = vmatpush1.msra.mxu0 0.0
  %2087 = vmatprep.subr.mxu0 0.0
  %2088 = vmatpush1.msra.mxu0 0.0
  %2089 = vmatprep.subr.mxu0 0.0
  %2090 = vmatpush1.msra.mxu0 0.0
  %2091 = vmatprep.subr.mxu0 0.0
  %2092 = vmatpush1.msra.mxu0 0.0
  %2093 = vmatprep.subr.mxu0 0.0
  %2094 = vmatpush1.msra.mxu0 0.0
  %2095 = vmatprep.mubr.f32.mxu0 0.0
  %v2096 = vand.u32 %v96, 4294901760
  %2097 = vmatmul.mubr.f32.gmra.mrb[0].mxu0 %v2096
  %v2098 = vpop.f32.mrb[0].mxu0
  %v2099 = vadd.f32 %v1967, %v2098
  %v2100 = vpop.f32.mrb[0].mxu0
  %v2101 = vadd.f32 %v1969, %v2100
  %2102 = vdwg.mxu0
  %v2103 = vand.u32 %v53, 4294901760
  %v2104 = vsub.f32 %v53, %v2103
  %2105 = vmatprep.subr.mxu0 %v2104
  %v2106 = vand.u32 %v52, 4294901760
  %v2107 = vsub.f32 %v52, %v2106
  %2108 = vmatpush1.msra.mxu0 %v2107
  %v2109 = vand.u32 %v61, 4294901760
  %v2110 = vsub.f32 %v61, %v2109
  %2111 = vmatprep.subr.mxu0 %v2110
  %v2112 = vand.u32 %v60, 4294901760
  %v2113 = vsub.f32 %v60, %v2112
  %2114 = vmatpush1.msra.mxu0 %v2113
  %v2115 = vand.u32 %v69, 4294901760
  %v2116 = vsub.f32 %v69, %v2115
  %2117 = vmatprep.subr.mxu0 %v2116
  %v2118 = vand.u32 %v68, 4294901760
  %v2119 = vsub.f32 %v68, %v2118
  %2120 = vmatpush1.msra.mxu0 %v2119
  %v2121 = vand.u32 %v77, 4294901760
  %v2122 = vsub.f32 %v77, %v2121
  %2123 = vmatprep.subr.mxu0 %v2122
  %v2124 = vand.u32 %v76, 4294901760
  %v2125 = vsub.f32 %v76, %v2124
  %2126 = vmatpush1.msra.mxu0 %v2125
  %v2127 = vand.u32 %v85, 4294901760
  %v2128 = vsub.f32 %v85, %v2127
  %2129 = vmatprep.subr.mxu0 %v2128
  %v2130 = vand.u32 %v84, 4294901760
  %v2131 = vsub.f32 %v84, %v2130
  %2132 = vmatpush1.msra.mxu0 %v2131
  %v2133 = vand.u32 %v93, 4294901760
  %v2134 = vsub.f32 %v93, %v2133
  %2135 = vmatprep.subr.mxu0 %v2134
  %v2136 = vand.u32 %v92, 4294901760
  %v2137 = vsub.f32 %v92, %v2136
  %2138 = vmatpush1.msra.mxu0 %v2137
  %2139 = vmatprep.subr.mxu0 0.0
  %2140 = vmatpush1.msra.mxu0 0.0
  %2141 = vmatprep.subr.mxu0 0.0
  %2142 = vmatpush1.msra.mxu0 0.0
  %2143 = vmatprep.subr.mxu0 0.0
  %2144 = vmatpush1.msra.mxu0 0.0
  %2145 = vmatprep.subr.mxu0 0.0
  %2146 = vmatpush1.msra.mxu0 0.0
  %2147 = vmatprep.subr.mxu0 0.0
  %2148 = vmatpush1.msra.mxu0 0.0
  %2149 = vmatprep.subr.mxu0 0.0
  %2150 = vmatpush1.msra.mxu0 0.0
  %2151 = vmatprep.subr.mxu0 0.0
  %2152 = vmatpush1.msra.mxu0 0.0
  %2153 = vmatprep.subr.mxu0 0.0
  %2154 = vmatpush1.msra.mxu0 0.0
  %2155 = vmatprep.subr.mxu0 0.0
  %2156 = vmatpush1.msra.mxu0 0.0
  %2157 = vmatprep.subr.mxu0 0.0
  %2158 = vmatpush1.msra.mxu0 0.0
  %2159 = vmatprep.subr.mxu0 0.0
  %2160 = vmatpush1.msra.mxu0 0.0
  %2161 = vmatprep.subr.mxu0 0.0
  %2162 = vmatpush1.msra.mxu0 0.0
  %2163 = vmatprep.subr.mxu0 0.0
  %2164 = vmatpush1.msra.mxu0 0.0
  %2165 = vmatprep.subr.mxu0 0.0
  %2166 = vmatpush1.msra.mxu0 0.0
  %2167 = vmatprep.subr.mxu0 0.0
  %2168 = vmatpush1.msra.mxu0 0.0
  %2169 = vmatprep.subr.mxu0 0.0
  %2170 = vmatpush1.msra.mxu0 0.0
  %2171 = vmatprep.subr.mxu0 0.0
  %2172 = vmatpush1.msra.mxu0 0.0
  %2173 = vmatprep.subr.mxu0 0.0
  %2174 = vmatpush1.msra.mxu0 0.0
  %2175 = vmatprep.subr.mxu0 0.0
  %2176 = vmatpush1.msra.mxu0 0.0
  %2177 = vmatprep.subr.mxu0 0.0
  %2178 = vmatpush1.msra.mxu0 0.0
  %2179 = vmatprep.subr.mxu0 0.0
  %2180 = vmatpush1.msra.mxu0 0.0
  %2181 = vmatprep.subr.mxu0 0.0
  %2182 = vmatpush1.msra.mxu0 0.0
  %2183 = vmatprep.subr.mxu0 0.0
  %2184 = vmatpush1.msra.mxu0 0.0
  %2185 = vmatprep.subr.mxu0 0.0
  %2186 = vmatpush1.msra.mxu0 0.0
  %2187 = vmatprep.subr.mxu0 0.0
  %2188 = vmatpush1.msra.mxu0 0.0
  %2189 = vmatprep.subr.mxu0 0.0
  %2190 = vmatpush1.msra.mxu0 0.0
  %2191 = vmatprep.mubr.f32.mxu0 0.0
  %v2192 = vand.u32 %v96, 4294901760
  %v2193 = vsub.f32 %v96, %v2192
  %2194 = vmatmul.mubr.f32.gmra.mrb[0].mxu0 %v2193
  %v2195 = vpop.f32.mrb[0].mxu0
  %v2196 = vadd.f32 %v2099, %v2195
  %v2197 = vpop.f32.mrb[0].mxu0
  %v2198 = vadd.f32 %v2101, %v2197
  %2199 = vdwg.mxu0
  %v2200 = vand.u32 %v53, 4294901760
  %2201 = vmatprep.subr.mxu0 %v2200
  %v2202 = vand.u32 %v52, 4294901760
  %2203 = vmatpush1.msra.mxu0 %v2202
  %v2204 = vand.u32 %v61, 4294901760
  %2205 = vmatprep.subr.mxu0 %v2204
  %v2206 = vand.u32 %v60, 4294901760
  %2207 = vmatpush1.msra.mxu0 %v2206
  %v2208 = vand.u32 %v69, 4294901760
  %2209 = vmatprep.subr.mxu0 %v2208
  %v2210 = vand.u32 %v68, 4294901760
  %2211 = vmatpush1.msra.mxu0 %v2210
  %v2212 = vand.u32 %v77, 4294901760
  %2213 = vmatprep.subr.mxu0 %v2212
  %v2214 = vand.u32 %v76, 4294901760
  %2215 = vmatpush1.msra.mxu0 %v2214
  %v2216 = vand.u32 %v85, 4294901760
  %2217 = vmatprep.subr.mxu0 %v2216
  %v2218 = vand.u32 %v84, 4294901760
  %2219 = vmatpush1.msra.mxu0 %v2218
  %v2220 = vand.u32 %v93, 4294901760
  %2221 = vmatprep.subr.mxu0 %v2220
  %v2222 = vand.u32 %v92, 4294901760
  %2223 = vmatpush1.msra.mxu0 %v2222
  %2224 = vmatprep.subr.mxu0 0.0
  %2225 = vmatpush1.msra.mxu0 0.0
  %2226 = vmatprep.subr.mxu0 0.0
  %2227 = vmatpush1.msra.mxu0 0.0
  %2228 = vmatprep.subr.mxu0 0.0
  %2229 = vmatpush1.msra.mxu0 0.0
  %2230 = vmatprep.subr.mxu0 0.0
  %2231 = vmatpush1.msra.mxu0 0.0
  %2232 = vmatprep.subr.mxu0 0.0
  %2233 = vmatpush1.msra.mxu0 0.0
  %2234 = vmatprep.subr.mxu0 0.0
  %2235 = vmatpush1.msra.mxu0 0.0
  %2236 = vmatprep.subr.mxu0 0.0
  %2237 = vmatpush1.msra.mxu0 0.0
  %2238 = vmatprep.subr.mxu0 0.0
  %2239 = vmatpush1.msra.mxu0 0.0
  %2240 = vmatprep.subr.mxu0 0.0
  %2241 = vmatpush1.msra.mxu0 0.0
  %2242 = vmatprep.subr.mxu0 0.0
  %2243 = vmatpush1.msra.mxu0 0.0
  %2244 = vmatprep.subr.mxu0 0.0
  %2245 = vmatpush1.msra.mxu0 0.0
  %2246 = vmatprep.subr.mxu0 0.0
  %2247 = vmatpush1.msra.mxu0 0.0
  %2248 = vmatprep.subr.mxu0 0.0
  %2249 = vmatpush1.msra.mxu0 0.0
  %2250 = vmatprep.subr.mxu0 0.0
  %2251 = vmatpush1.msra.mxu0 0.0
  %2252 = vmatprep.subr.mxu0 0.0
  %2253 = vmatpush1.msra.mxu0 0.0
  %2254 = vmatprep.subr.mxu0 0.0
  %2255 = vmatpush1.msra.mxu0 0.0
  %2256 = vmatprep.subr.mxu0 0.0
  %2257 = vmatpush1.msra.mxu0 0.0
  %2258 = vmatprep.subr.mxu0 0.0
  %2259 = vmatpush1.msra.mxu0 0.0
  %2260 = vmatprep.subr.mxu0 0.0
  %2261 = vmatpush1.msra.mxu0 0.0
  %2262 = vmatprep.subr.mxu0 0.0
  %2263 = vmatpush1.msra.mxu0 0.0
  %2264 = vmatprep.subr.mxu0 0.0
  %2265 = vmatpush1.msra.mxu0 0.0
  %2266 = vmatprep.subr.mxu0 0.0
  %2267 = vmatpush1.msra.mxu0 0.0
  %2268 = vmatprep.subr.mxu0 0.0
  %2269 = vmatpush1.msra.mxu0 0.0
  %2270 = vmatprep.subr.mxu0 0.0
  %2271 = vmatpush1.msra.mxu0 0.0
  %2272 = vmatprep.subr.mxu0 0.0
  %2273 = vmatpush1.msra.mxu0 0.0
  %2274 = vmatprep.subr.mxu0 0.0
  %2275 = vmatpush1.msra.mxu0 0.0
  %2276 = vmatprep.mubr.f32.mxu0 0.0
  %v2277 = vand.u32 %v96, 4294901760
  %v2278 = vsub.f32 %v96, %v2277
  %v2279 = vand.u32 %v2278, 4294901760
  %2280 = vmatmul.mubr.f32.gmra.mrb[0].mxu0 %v2279
  %v2281 = vpop.f32.mrb[0].mxu0
  %v2282 = vadd.f32 %v2196, %v2281
  %v2283 = vpop.f32.mrb[0].mxu0
  %v2284 = vadd.f32 %v2198, %v2283
  %2285 = vdwg.mxu0
  %v2286 = vand.u32 %v53, 4294901760
  %v2287 = vsub.f32 %v53, %v2286
  %v2288 = vand.u32 %v2287, 4294901760
  %2289 = vmatprep.subr.mxu0 %v2288
  %v2290 = vand.u32 %v52, 4294901760
  %v2291 = vsub.f32 %v52, %v2290
  %v2292 = vand.u32 %v2291, 4294901760
  %2293 = vmatpush1.msra.mxu0 %v2292
  %v2294 = vand.u32 %v61, 4294901760
  %v2295 = vsub.f32 %v61, %v2294
  %v2296 = vand.u32 %v2295, 4294901760
  %2297 = vmatprep.subr.mxu0 %v2296
  %v2298 = vand.u32 %v60, 4294901760
  %v2299 = vsub.f32 %v60, %v2298
  %v2300 = vand.u32 %v2299, 4294901760
  %2301 = vmatpush1.msra.mxu0 %v2300
  %v2302 = vand.u32 %v69, 4294901760
  %v2303 = vsub.f32 %v69, %v2302
  %v2304 = vand.u32 %v2303, 4294901760
  %2305 = vmatprep.subr.mxu0 %v2304
  %v2306 = vand.u32 %v68, 4294901760
  %v2307 = vsub.f32 %v68, %v2306
  %v2308 = vand.u32 %v2307, 4294901760
  %2309 = vmatpush1.msra.mxu0 %v2308
  %v2310 = vand.u32 %v77, 4294901760
  %v2311 = vsub.f32 %v77, %v2310
  %v2312 = vand.u32 %v2311, 4294901760
  %2313 = vmatprep.subr.mxu0 %v2312
  %v2314 = vand.u32 %v76, 4294901760
  %v2315 = vsub.f32 %v76, %v2314
  %v2316 = vand.u32 %v2315, 4294901760
  %2317 = vmatpush1.msra.mxu0 %v2316
  %v2318 = vand.u32 %v85, 4294901760
  %v2319 = vsub.f32 %v85, %v2318
  %v2320 = vand.u32 %v2319, 4294901760
  %2321 = vmatprep.subr.mxu0 %v2320
  %v2322 = vand.u32 %v84, 4294901760
  %v2323 = vsub.f32 %v84, %v2322
  %v2324 = vand.u32 %v2323, 4294901760
  %2325 = vmatpush1.msra.mxu0 %v2324
  %v2326 = vand.u32 %v93, 4294901760
  %v2327 = vsub.f32 %v93, %v2326
  %v2328 = vand.u32 %v2327, 4294901760
  %2329 = vmatprep.subr.mxu0 %v2328
  %v2330 = vand.u32 %v92, 4294901760
  %v2331 = vsub.f32 %v92, %v2330
  %v2332 = vand.u32 %v2331, 4294901760
  %2333 = vmatpush1.msra.mxu0 %v2332
  %2334 = vmatprep.subr.mxu0 0.0
  %2335 = vmatpush1.msra.mxu0 0.0
  %2336 = vmatprep.subr.mxu0 0.0
  %2337 = vmatpush1.msra.mxu0 0.0
  %2338 = vmatprep.subr.mxu0 0.0
  %2339 = vmatpush1.msra.mxu0 0.0
  %2340 = vmatprep.subr.mxu0 0.0
  %2341 = vmatpush1.msra.mxu0 0.0
  %2342 = vmatprep.subr.mxu0 0.0
  %2343 = vmatpush1.msra.mxu0 0.0
  %2344 = vmatprep.subr.mxu0 0.0
  %2345 = vmatpush1.msra.mxu0 0.0
  %2346 = vmatprep.subr.mxu0 0.0
  %2347 = vmatpush1.msra.mxu0 0.0
  %2348 = vmatprep.subr.mxu0 0.0
  %2349 = vmatpush1.msra.mxu0 0.0
  %2350 = vmatprep.subr.mxu0 0.0
  %2351 = vmatpush1.msra.mxu0 0.0
  %2352 = vmatprep.subr.mxu0 0.0
  %2353 = vmatpush1.msra.mxu0 0.0
  %2354 = vmatprep.subr.mxu0 0.0
  %2355 = vmatpush1.msra.mxu0 0.0
  %2356 = vmatprep.subr.mxu0 0.0
  %2357 = vmatpush1.msra.mxu0 0.0
  %2358 = vmatprep.subr.mxu0 0.0
  %2359 = vmatpush1.msra.mxu0 0.0
  %2360 = vmatprep.subr.mxu0 0.0
  %2361 = vmatpush1.msra.mxu0 0.0
  %2362 = vmatprep.subr.mxu0 0.0
  %2363 = vmatpush1.msra.mxu0 0.0
  %2364 = vmatprep.subr.mxu0 0.0
  %2365 = vmatpush1.msra.mxu0 0.0
  %2366 = vmatprep.subr.mxu0 0.0
  %2367 = vmatpush1.msra.mxu0 0.0
  %2368 = vmatprep.subr.mxu0 0.0
  %2369 = vmatpush1.msra.mxu0 0.0
  %2370 = vmatprep.subr.mxu0 0.0
  %2371 = vmatpush1.msra.mxu0 0.0
  %2372 = vmatprep.subr.mxu0 0.0
  %2373 = vmatpush1.msra.mxu0 0.0
  %2374 = vmatprep.subr.mxu0 0.0
  %2375 = vmatpush1.msra.mxu0 0.0
  %2376 = vmatprep.subr.mxu0 0.0
  %2377 = vmatpush1.msra.mxu0 0.0
  %2378 = vmatprep.subr.mxu0 0.0
  %2379 = vmatpush1.msra.mxu0 0.0
  %2380 = vmatprep.subr.mxu0 0.0
  %2381 = vmatpush1.msra.mxu0 0.0
  %2382 = vmatprep.subr.mxu0 0.0
  %2383 = vmatpush1.msra.mxu0 0.0
  %2384 = vmatprep.subr.mxu0 0.0
  %2385 = vmatpush1.msra.mxu0 0.0
  %2386 = vmatprep.mubr.f32.mxu0 0.0
  %v2387 = vand.u32 %v96, 4294901760
  %2388 = vmatmul.mubr.f32.gmra.mrb[0].mxu0 %v2387
  %v2389 = vpop.f32.mrb[0].mxu0
  %v2390 = vadd.f32 %v2282, %v2389
  %v2391 = vpop.f32.mrb[0].mxu0
  %v2392 = vadd.f32 %v2284, %v2391
  %2393 = vdwg.mxu0
  %v2394 = vand.u32 %v53, 4294901760
  %2395 = vmatprep.subr.mxu0 %v2394
  %v2396 = vand.u32 %v52, 4294901760
  %2397 = vmatpush1.msra.mxu0 %v2396
  %v2398 = vand.u32 %v61, 4294901760
  %2399 = vmatprep.subr.mxu0 %v2398
  %v2400 = vand.u32 %v60, 4294901760
  %2401 = vmatpush1.msra.mxu0 %v2400
  %v2402 = vand.u32 %v69, 4294901760
  %2403 = vmatprep.subr.mxu0 %v2402
  %v2404 = vand.u32 %v68, 4294901760
  %2405 = vmatpush1.msra.mxu0 %v2404
  %v2406 = vand.u32 %v77, 4294901760
  %2407 = vmatprep.subr.mxu0 %v2406
  %v2408 = vand.u32 %v76, 4294901760
  %2409 = vmatpush1.msra.mxu0 %v2408
  %v2410 = vand.u32 %v85, 4294901760
  %2411 = vmatprep.subr.mxu0 %v2410
  %v2412 = vand.u32 %v84, 4294901760
  %2413 = vmatpush1.msra.mxu0 %v2412
  %v2414 = vand.u32 %v93, 4294901760
  %2415 = vmatprep.subr.mxu0 %v2414
  %v2416 = vand.u32 %v92, 4294901760
  %2417 = vmatpush1.msra.mxu0 %v2416
  %2418 = vmatprep.subr.mxu0 0.0
  %2419 = vmatpush1.msra.mxu0 0.0
  %2420 = vmatprep.subr.mxu0 0.0
  %2421 = vmatpush1.msra.mxu0 0.0
  %2422 = vmatprep.subr.mxu0 0.0
  %2423 = vmatpush1.msra.mxu0 0.0
  %2424 = vmatprep.subr.mxu0 0.0
  %2425 = vmatpush1.msra.mxu0 0.0
  %2426 = vmatprep.subr.mxu0 0.0
  %2427 = vmatpush1.msra.mxu0 0.0
  %2428 = vmatprep.subr.mxu0 0.0
  %2429 = vmatpush1.msra.mxu0 0.0
  %2430 = vmatprep.subr.mxu0 0.0
  %2431 = vmatpush1.msra.mxu0 0.0
  %2432 = vmatprep.subr.mxu0 0.0
  %2433 = vmatpush1.msra.mxu0 0.0
  %2434 = vmatprep.subr.mxu0 0.0
  %2435 = vmatpush1.msra.mxu0 0.0
  %2436 = vmatprep.subr.mxu0 0.0
  %2437 = vmatpush1.msra.mxu0 0.0
  %2438 = vmatprep.subr.mxu0 0.0
  %2439 = vmatpush1.msra.mxu0 0.0
  %2440 = vmatprep.subr.mxu0 0.0
  %2441 = vmatpush1.msra.mxu0 0.0
  %2442 = vmatprep.subr.mxu0 0.0
  %2443 = vmatpush1.msra.mxu0 0.0
  %2444 = vmatprep.subr.mxu0 0.0
  %2445 = vmatpush1.msra.mxu0 0.0
  %2446 = vmatprep.subr.mxu0 0.0
  %2447 = vmatpush1.msra.mxu0 0.0
  %2448 = vmatprep.subr.mxu0 0.0
  %2449 = vmatpush1.msra.mxu0 0.0
  %2450 = vmatprep.subr.mxu0 0.0
  %2451 = vmatpush1.msra.mxu0 0.0
  %2452 = vmatprep.subr.mxu0 0.0
  %2453 = vmatpush1.msra.mxu0 0.0
  %2454 = vmatprep.subr.mxu0 0.0
  %2455 = vmatpush1.msra.mxu0 0.0
  %2456 = vmatprep.subr.mxu0 0.0
  %2457 = vmatpush1.msra.mxu0 0.0
  %2458 = vmatprep.subr.mxu0 0.0
  %2459 = vmatpush1.msra.mxu0 0.0
  %2460 = vmatprep.subr.mxu0 0.0
  %2461 = vmatpush1.msra.mxu0 0.0
  %2462 = vmatprep.subr.mxu0 0.0
  %2463 = vmatpush1.msra.mxu0 0.0
  %2464 = vmatprep.subr.mxu0 0.0
  %2465 = vmatpush1.msra.mxu0 0.0
  %2466 = vmatprep.subr.mxu0 0.0
  %2467 = vmatpush1.msra.mxu0 0.0
  %2468 = vmatprep.subr.mxu0 0.0
  %2469 = vmatpush1.msra.mxu0 0.0
  %2470 = vmatprep.mubr.f32.mxu0 0.0
  %v2471 = vand.u32 %v96, 4294901760
  %2472 = vmatmul.mubr.f32.gmra.mrb[0].mxu0 %v2471
  %v2473 = vpop.f32.mrb[0].mxu0
  %v2474 = vadd.f32 %v2390, %v2473
  %v2475 = vpop.f32.mrb[0].mxu0
  %v2476 = vadd.f32 %v2392, %v2475
  %2477 = vdwg.mxu0
  %v2480 = vcombine.high %v44, %v44
  %v2482 = vunpack.c.l.s4 1983009808
  %v2483 = vunpack.c.0.s8 %v2482
  %v2484 = vlaneseq
  %v2485 = vshrl.u32 %v2484, 7
  %v2486 = vsub.s32 %v2483, %v2485
  %v2487 = vrot.slane %v44, %v2486
  %v2489 = vunpack.c.l.s4 1983009808
  %v2490 = vunpack.c.0.s8 %v2489
  %v2491 = vlaneseq
  %v2492 = vshrl.u32 %v2491, 7
  %v2493 = vsub.s32 %v2490, %v2492
  %v2494 = vrot.slane %v2480, %v2493
  %v2495 = vcombine.high %v2487, %v2487
  %v2496 = vcombine.high %v2494, %v2494
  %v2497 = vcombine.high %v45, %v45
  %v2499 = vunpack.c.l.s4 1983009808
  %v2500 = vunpack.c.0.s8 %v2499
  %v2501 = vlaneseq
  %v2502 = vshrl.u32 %v2501, 7
  %v2503 = vsub.s32 %v2500, %v2502
  %v2504 = vrot.slane %v45, %v2503
  %v2506 = vunpack.c.l.s4 1983009808
  %v2507 = vunpack.c.0.s8 %v2506
  %v2508 = vlaneseq
  %v2509 = vshrl.u32 %v2508, 7
  %v2510 = vsub.s32 %v2507, %v2509
  %v2511 = vrot.slane %v2497, %v2510
  %v2512 = vcombine.high %v2504, %v2504
  %v2513 = vcombine.high %v2511, %v2511
  %v2522 = vmul.f32 %v689, %v2487
  %v2523 = vmul.f32 %v691, %v2495
  %v2524 = vmul.f32 %v1284, %v2494
  %v2525 = vmul.f32 %v1286, %v2496
  %v2526 = vmul.f32 %v1879, %v2504
  %v2527 = vmul.f32 %v1881, %v2512
  %v2528 = vmul.f32 %v2474, %v2511
  %v2529 = vmul.f32 %v2476, %v2513
  %v2530 = vld [vmem:[%s7] sm:$0xff]
  %v2531 = vld [vmem:[%s7 + $0x8] sm:$0xff]
  %v2532 = vld [vmem:[%s7 + $0x10] sm:$0xff]
  %v2533 = vld [vmem:[%s7 + $0x18] sm:$0xff]
  %v2534 = vld [vmem:[%s7 + $0x20] sm:$0xff]
  %v2535 = vld [vmem:[%s7 + $0x28] sm:$0xff]
  %v2536 = vld [vmem:[%s7 + $0x30] sm:$0xff]
  %v2537 = vld [vmem:[%s7 + $0x38] sm:$0xff]
  %v2538 = vld [vmem:[%s7 + $0x40] sm:$0xff]
  %v2539 = vld [vmem:[%s7 + $0x48] sm:$0xff]
  %v2540 = vld [vmem:[%s7 + $0x50] sm:$0xff]
  %v2541 = vld [vmem:[%s7 + $0x58] sm:$0xff]
  %v2542 = vld [vmem:[%s7 + $0x60] sm:$0xff]
  %v2543 = vld [vmem:[%s7 + $0x68] sm:$0xff]
  %v2544 = vld [vmem:[%s7 + $0x70] sm:$0xff]
  %v2545 = vld [vmem:[%s7 + $0x78] sm:$0xff]
  %v2546 = vld [vmem:[%s7 + $0x80] sm:$0xff]
  %v2547 = vld [vmem:[%s7 + $0x88] sm:$0xff]
  %v2548 = vld [vmem:[%s7 + $0x90] sm:$0xff]
  %v2549 = vld [vmem:[%s7 + $0x98] sm:$0xff]
  %v2550 = vld [vmem:[%s7 + $0xa0] sm:$0xff]
  %v2551 = vld [vmem:[%s7 + $0xa8] sm:$0xff]
  %v2552 = vld [vmem:[%s7 + $0xb0] sm:$0xff]
  %v2553 = vld [vmem:[%s7 + $0xb8] sm:$0xff]
  %v2554 = vld [vmem:[%s7 + $0xc0] sm:$0xff]
  %v2555 = vld [vmem:[%s7 + $0xc8] sm:$0xff]
  %v2556 = vld [vmem:[%s7 + $0xd0] sm:$0xff]
  %v2557 = vld [vmem:[%s7 + $0xd8] sm:$0xff]
  %v2558 = vld [vmem:[%s7 + $0xe0] sm:$0xff]
  %v2559 = vld [vmem:[%s7 + $0xe8] sm:$0xff]
  %v2560 = vld [vmem:[%s7 + $0xf0] sm:$0xff]
  %v2561 = vld [vmem:[%s7 + $0xf8] sm:$0xff]
  %v2562 = vld [vmem:[%s7 + $0x100] sm:$0xff]
  %v2563 = vld [vmem:[%s7 + $0x108] sm:$0xff]
  %v2564 = vld [vmem:[%s7 + $0x110] sm:$0xff]
  %v2565 = vld [vmem:[%s7 + $0x118] sm:$0xff]
  %v2566 = vld [vmem:[%s7 + $0x120] sm:$0xff]
  %v2567 = vld [vmem:[%s7 + $0x128] sm:$0xff]
  %v2568 = vld [vmem:[%s7 + $0x130] sm:$0xff]
  %v2569 = vld [vmem:[%s7 + $0x138] sm:$0xff]
  %v2570 = vld [vmem:[%s7 + $0x140] sm:$0xff]
  %v2571 = vld [vmem:[%s7 + $0x148] sm:$0xff]
  %v2572 = vld [vmem:[%s7 + $0x150] sm:$0xff]
  %v2573 = vld [vmem:[%s7 + $0x158] sm:$0xff]
  %v2574 = vld [vmem:[%s7 + $0x160] sm:$0xff]
  %v2575 = vld [vmem:[%s7 + $0x168] sm:$0xff]
  %v2576 = vld [vmem:[%s7 + $0x170] sm:$0xff]
  %v2577 = vld [vmem:[%s7 + $0x178] sm:$0xff]
  %v2578 = vld [vmem:[%s7 + $0x180] sm:$0xff]
  %v2579 = vld [vmem:[%s7 + $0x188] sm:$0xff]
  %v2580 = vld [vmem:[%s7 + $0x190] sm:$0xff]
  %v2581 = vld [vmem:[%s7 + $0x198] sm:$0xff]
  %v2582 = vld [vmem:[%s7 + $0x1a0] sm:$0xff]
  %v2583 = vld [vmem:[%s7 + $0x1a8] sm:$0xff]
  %v2584 = vld [vmem:[%s7 + $0x1b0] sm:$0xff]
  %v2585 = vld [vmem:[%s7 + $0x1b8] sm:$0xff]
  %v2586 = vld [vmem:[%s7 + $0x1c0] sm:$0xff]
  %v2587 = vld [vmem:[%s7 + $0x1c8] sm:$0xff]
  %v2588 = vld [vmem:[%s7 + $0x1d0] sm:$0xff]
  %v2589 = vld [vmem:[%s7 + $0x1d8] sm:$0xff]
  %v2590 = vld [vmem:[%s7 + $0x1e0] sm:$0xff]
  %v2591 = vld [vmem:[%s7 + $0x1e8] sm:$0xff]
  %v2592 = vld [vmem:[%s7 + $0x1f0] sm:$0xff]
  %v2593 = vld [vmem:[%s7 + $0x1f8] sm:$0xff]
  %v2594 = vld [vmem:[%s7 + $0x200] sm:$0xff]
  %v2595 = vld [vmem:[%s7 + $0x208] sm:$0xff]
  %v2596 = vld [vmem:[%s7 + $0x210] sm:$0xff]
  %v2597 = vld [vmem:[%s7 + $0x218] sm:$0xff]
  %v2598 = vld [vmem:[%s7 + $0x220] sm:$0xff]
  %v2599 = vld [vmem:[%s7 + $0x228] sm:$0xff]
  %v2600 = vld [vmem:[%s7 + $0x230] sm:$0xff]
  %v2601 = vld [vmem:[%s7 + $0x238] sm:$0xff]
  %v2602 = vld [vmem:[%s7 + $0x240] sm:$0xff]
  %v2603 = vld [vmem:[%s7 + $0x248] sm:$0xff]
  %v2604 = vld [vmem:[%s7 + $0x250] sm:$0xff]
  %v2605 = vld [vmem:[%s7 + $0x258] sm:$0xff]
  %v2606 = vld [vmem:[%s7 + $0x260] sm:$0xff]
  %v2607 = vld [vmem:[%s7 + $0x268] sm:$0xff]
  %v2608 = vld [vmem:[%s7 + $0x270] sm:$0xff]
  %v2609 = vld [vmem:[%s7 + $0x278] sm:$0xff]
  %v2610 = vld [vmem:[%s7 + $0x280] sm:$0xff]
  %v2611 = vld [vmem:[%s7 + $0x288] sm:$0xff]
  %v2612 = vld [vmem:[%s7 + $0x290] sm:$0xff]
  %v2613 = vld [vmem:[%s7 + $0x298] sm:$0xff]
  %v2614 = vld [vmem:[%s7 + $0x2a0] sm:$0xff]
  %v2615 = vld [vmem:[%s7 + $0x2a8] sm:$0xff]
  %v2616 = vld [vmem:[%s7 + $0x2b0] sm:$0xff]
  %v2617 = vld [vmem:[%s7 + $0x2b8] sm:$0xff]
  %v2618 = vld [vmem:[%s7 + $0x2c0] sm:$0xff]
  %v2619 = vld [vmem:[%s7 + $0x2c8] sm:$0xff]
  %v2620 = vld [vmem:[%s7 + $0x2d0] sm:$0xff]
  %v2621 = vld [vmem:[%s7 + $0x2d8] sm:$0xff]
  %v2622 = vld [vmem:[%s7 + $0x2e0] sm:$0xff]
  %v2623 = vld [vmem:[%s7 + $0x2e8] sm:$0xff]
  %v2624 = vld [vmem:[%s7 + $0x2f0] sm:$0xff]
  %v2625 = vld [vmem:[%s7 + $0x2f8] sm:$0xff]
  %v2626 = vld [vmem:[%s7 + $0x300] sm:$0xff]
  %v2627 = vld [vmem:[%s7 + $0x308] sm:$0xff]
  %v2628 = vld [vmem:[%s7 + $0x310] sm:$0xff]
  %v2629 = vld [vmem:[%s7 + $0x318] sm:$0xff]
  %v2630 = vld [vmem:[%s7 + $0x320] sm:$0xff]
  %v2631 = vld [vmem:[%s7 + $0x328] sm:$0xff]
  %v2632 = vld [vmem:[%s7 + $0x330] sm:$0xff]
  %v2633 = vld [vmem:[%s7 + $0x338] sm:$0xff]
  %v2634 = vld [vmem:[%s7 + $0x340] sm:$0xff]
  %v2635 = vld [vmem:[%s7 + $0x348] sm:$0xff]
  %v2636 = vld [vmem:[%s7 + $0x350] sm:$0xff]
  %v2637 = vld [vmem:[%s7 + $0x358] sm:$0xff]
  %v2638 = vld [vmem:[%s7 + $0x360] sm:$0xff]
  %v2639 = vld [vmem:[%s7 + $0x368] sm:$0xff]
  %v2640 = vld [vmem:[%s7 + $0x370] sm:$0xff]
  %v2641 = vld [vmem:[%s7 + $0x378] sm:$0xff]
  %v2642 = vld [vmem:[%s7 + $0x380] sm:$0xff]
  %v2643 = vld [vmem:[%s7 + $0x388] sm:$0xff]
  %v2644 = vld [vmem:[%s7 + $0x390] sm:$0xff]
  %v2645 = vld [vmem:[%s7 + $0x398] sm:$0xff]
  %v2646 = vld [vmem:[%s7 + $0x3a0] sm:$0xff]
  %v2647 = vld [vmem:[%s7 + $0x3a8] sm:$0xff]
  %v2648 = vld [vmem:[%s7 + $0x3b0] sm:$0xff]
  %v2649 = vld [vmem:[%s7 + $0x3b8] sm:$0xff]
  %v2650 = vld [vmem:[%s7 + $0x3c0] sm:$0xff]
  %v2651 = vld [vmem:[%s7 + $0x3c8] sm:$0xff]
  %v2652 = vld [vmem:[%s7 + $0x3d0] sm:$0xff]
  %v2653 = vld [vmem:[%s7 + $0x3d8] sm:$0xff]
  %v2654 = vld [vmem:[%s7 + $0x3e0] sm:$0xff]
  %v2655 = vld [vmem:[%s7 + $0x3e8] sm:$0xff]
  %v2656 = vld [vmem:[%s7 + $0x3f0] sm:$0xff]
  %v2657 = vld [vmem:[%s7 + $0x3f8] sm:$0xff]
  %2658 = vmatprep.subr.mxu0 0.0
  %v2659 = vand.u32 %v2530, 4294901760
  %2660 = vmatpush1.msra.mxu0 %v2659
  %2661 = vmatprep.subr.mxu0 0.0
  %v2662 = vand.u32 %v2531, 4294901760
  %2663 = vmatpush1.msra.mxu0 %v2662
  %2664 = vmatprep.subr.mxu0 0.0
  %v2665 = vand.u32 %v2532, 4294901760
  %2666 = vmatpush1.msra.mxu0 %v2665
  %2667 = vmatprep.subr.mxu0 0.0
  %v2668 = vand.u32 %v2533, 4294901760
  %2669 = vmatpush1.msra.mxu0 %v2668
  %2670 = vmatprep.subr.mxu0 0.0
  %v2671 = vand.u32 %v2534, 4294901760
  %2672 = vmatpush1.msra.mxu0 %v2671
  %2673 = vmatprep.subr.mxu0 0.0
  %v2674 = vand.u32 %v2535, 4294901760
  %2675 = vmatpush1.msra.mxu0 %v2674
  %2676 = vmatprep.subr.mxu0 0.0
  %v2677 = vand.u32 %v2536, 4294901760
  %2678 = vmatpush1.msra.mxu0 %v2677
  %2679 = vmatprep.subr.mxu0 0.0
  %v2680 = vand.u32 %v2537, 4294901760
  %2681 = vmatpush1.msra.mxu0 %v2680
  %2682 = vmatprep.subr.mxu0 0.0
  %v2683 = vand.u32 %v2538, 4294901760
  %2684 = vmatpush1.msra.mxu0 %v2683
  %2685 = vmatprep.subr.mxu0 0.0
  %v2686 = vand.u32 %v2539, 4294901760
  %2687 = vmatpush1.msra.mxu0 %v2686
  %2688 = vmatprep.subr.mxu0 0.0
  %v2689 = vand.u32 %v2540, 4294901760
  %2690 = vmatpush1.msra.mxu0 %v2689
  %2691 = vmatprep.subr.mxu0 0.0
  %v2692 = vand.u32 %v2541, 4294901760
  %2693 = vmatpush1.msra.mxu0 %v2692
  %2694 = vmatprep.subr.mxu0 0.0
  %v2695 = vand.u32 %v2542, 4294901760
  %2696 = vmatpush1.msra.mxu0 %v2695
  %2697 = vmatprep.subr.mxu0 0.0
  %v2698 = vand.u32 %v2543, 4294901760
  %2699 = vmatpush1.msra.mxu0 %v2698
  %2700 = vmatprep.subr.mxu0 0.0
  %v2701 = vand.u32 %v2544, 4294901760
  %2702 = vmatpush1.msra.mxu0 %v2701
  %2703 = vmatprep.subr.mxu0 0.0
  %v2704 = vand.u32 %v2545, 4294901760
  %2705 = vmatpush1.msra.mxu0 %v2704
  %2706 = vmatprep.subr.mxu0 0.0
  %v2707 = vand.u32 %v2546, 4294901760
  %2708 = vmatpush1.msra.mxu0 %v2707
  %2709 = vmatprep.subr.mxu0 0.0
  %v2710 = vand.u32 %v2547, 4294901760
  %2711 = vmatpush1.msra.mxu0 %v2710
  %2712 = vmatprep.subr.mxu0 0.0
  %v2713 = vand.u32 %v2548, 4294901760
  %2714 = vmatpush1.msra.mxu0 %v2713
  %2715 = vmatprep.subr.mxu0 0.0
  %v2716 = vand.u32 %v2549, 4294901760
  %2717 = vmatpush1.msra.mxu0 %v2716
  %2718 = vmatprep.subr.mxu0 0.0
  %v2719 = vand.u32 %v2550, 4294901760
  %2720 = vmatpush1.msra.mxu0 %v2719
  %2721 = vmatprep.subr.mxu0 0.0
  %v2722 = vand.u32 %v2551, 4294901760
  %2723 = vmatpush1.msra.mxu0 %v2722
  %2724 = vmatprep.subr.mxu0 0.0
  %v2725 = vand.u32 %v2552, 4294901760
  %2726 = vmatpush1.msra.mxu0 %v2725
  %2727 = vmatprep.subr.mxu0 0.0
  %v2728 = vand.u32 %v2553, 4294901760
  %2729 = vmatpush1.msra.mxu0 %v2728
  %2730 = vmatprep.subr.mxu0 0.0
  %v2731 = vand.u32 %v2554, 4294901760
  %2732 = vmatpush1.msra.mxu0 %v2731
  %2733 = vmatprep.subr.mxu0 0.0
  %v2734 = vand.u32 %v2555, 4294901760
  %2735 = vmatpush1.msra.mxu0 %v2734
  %2736 = vmatprep.subr.mxu0 0.0
  %v2737 = vand.u32 %v2556, 4294901760
  %2738 = vmatpush1.msra.mxu0 %v2737
  %2739 = vmatprep.subr.mxu0 0.0
  %v2740 = vand.u32 %v2557, 4294901760
  %2741 = vmatpush1.msra.mxu0 %v2740
  %2742 = vmatprep.subr.mxu0 0.0
  %v2743 = vand.u32 %v2558, 4294901760
  %2744 = vmatpush1.msra.mxu0 %v2743
  %2745 = vmatprep.subr.mxu0 0.0
  %v2746 = vand.u32 %v2559, 4294901760
  %2747 = vmatpush1.msra.mxu0 %v2746
  %2748 = vmatprep.subr.mxu0 0.0
  %v2749 = vand.u32 %v2560, 4294901760
  %2750 = vmatpush1.msra.mxu0 %v2749
  %2751 = vmatprep.subr.mxu0 0.0
  %v2752 = vand.u32 %v2561, 4294901760
  %2753 = vmatpush1.msra.mxu0 %v2752
  %v2754 = vand.u32 %v2523, 4294901760
  %v2755 = vsub.f32 %v2523, %v2754
  %v2756 = vand.u32 %v2755, 4294901760
  %v2757 = vsub.f32 %v2755, %v2756
  %v2758 = vand.u32 %v2757, 4294901760
  %2759 = vmatprep.mubr.f32.mxu0 %v2758
  %v2760 = vand.u32 %v2522, 4294901760
  %v2761 = vsub.f32 %v2522, %v2760
  %v2762 = vand.u32 %v2761, 4294901760
  %v2763 = vsub.f32 %v2761, %v2762
  %v2764 = vand.u32 %v2763, 4294901760
  %2765 = vmatmul.mubr.f32.gmra.mrb[0].mxu0 %v2764
  %v2766 = vpop.f32.mrb[0].mxu0
  %v2767 = vadd.f32 0.0, %v2766
  %v2768 = vpop.f32.mrb[0].mxu0
  %2769 = vdwg.mxu0
  %2770 = vmatprep.subr.mxu0 0.0
  %v2771 = vand.u32 %v2530, 4294901760
  %v2772 = vsub.f32 %v2530, %v2771
  %v2773 = vand.u32 %v2772, 4294901760
  %v2774 = vsub.f32 %v2772, %v2773
  %v2775 = vand.u32 %v2774, 4294901760
  %2776 = vmatpush1.msra.mxu0 %v2775
  %2777 = vmatprep.subr.mxu0 0.0
  %v2778 = vand.u32 %v2531, 4294901760
  %v2779 = vsub.f32 %v2531, %v2778
  %v2780 = vand.u32 %v2779, 4294901760
  %v2781 = vsub.f32 %v2779, %v2780
  %v2782 = vand.u32 %v2781, 4294901760
  %2783 = vmatpush1.msra.mxu0 %v2782
  %2784 = vmatprep.subr.mxu0 0.0
  %v2785 = vand.u32 %v2532, 4294901760
  %v2786 = vsub.f32 %v2532, %v2785
  %v2787 = vand.u32 %v2786, 4294901760
  %v2788 = vsub.f32 %v2786, %v2787
  %v2789 = vand.u32 %v2788, 4294901760
  %2790 = vmatpush1.msra.mxu0 %v2789
  %2791 = vmatprep.subr.mxu0 0.0
  %v2792 = vand.u32 %v2533, 4294901760
  %v2793 = vsub.f32 %v2533, %v2792
  %v2794 = vand.u32 %v2793, 4294901760
  %v2795 = vsub.f32 %v2793, %v2794
  %v2796 = vand.u32 %v2795, 4294901760
  %2797 = vmatpush1.msra.mxu0 %v2796
  %2798 = vmatprep.subr.mxu0 0.0
  %v2799 = vand.u32 %v2534, 4294901760
  %v2800 = vsub.f32 %v2534, %v2799
  %v2801 = vand.u32 %v2800, 4294901760
  %v2802 = vsub.f32 %v2800, %v2801
  %v2803 = vand.u32 %v2802, 4294901760
  %2804 = vmatpush1.msra.mxu0 %v2803
  %2805 = vmatprep.subr.mxu0 0.0
  %v2806 = vand.u32 %v2535, 4294901760
  %v2807 = vsub.f32 %v2535, %v2806
  %v2808 = vand.u32 %v2807, 4294901760
  %v2809 = vsub.f32 %v2807, %v2808
  %v2810 = vand.u32 %v2809, 4294901760
  %2811 = vmatpush1.msra.mxu0 %v2810
  %2812 = vmatprep.subr.mxu0 0.0
  %v2813 = vand.u32 %v2536, 4294901760
  %v2814 = vsub.f32 %v2536, %v2813
  %v2815 = vand.u32 %v2814, 4294901760
  %v2816 = vsub.f32 %v2814, %v2815
  %v2817 = vand.u32 %v2816, 4294901760
  %2818 = vmatpush1.msra.mxu0 %v2817
  %2819 = vmatprep.subr.mxu0 0.0
  %v2820 = vand.u32 %v2537, 4294901760
  %v2821 = vsub.f32 %v2537, %v2820
  %v2822 = vand.u32 %v2821, 4294901760
  %v2823 = vsub.f32 %v2821, %v2822
  %v2824 = vand.u32 %v2823, 4294901760
  %2825 = vmatpush1.msra.mxu0 %v2824
  %2826 = vmatprep.subr.mxu0 0.0
  %v2827 = vand.u32 %v2538, 4294901760
  %v2828 = vsub.f32 %v2538, %v2827
  %v2829 = vand.u32 %v2828, 4294901760
  %v2830 = vsub.f32 %v2828, %v2829
  %v2831 = vand.u32 %v2830, 4294901760
  %2832 = vmatpush1.msra.mxu0 %v2831
  %2833 = vmatprep.subr.mxu0 0.0
  %v2834 = vand.u32 %v2539, 4294901760
  %v2835 = vsub.f32 %v2539, %v2834
  %v2836 = vand.u32 %v2835, 4294901760
  %v2837 = vsub.f32 %v2835, %v2836
  %v2838 = vand.u32 %v2837, 4294901760
  %2839 = vmatpush1.msra.mxu0 %v2838
  %2840 = vmatprep.subr.mxu0 0.0
  %v2841 = vand.u32 %v2540, 4294901760
  %v2842 = vsub.f32 %v2540, %v2841
  %v2843 = vand.u32 %v2842, 4294901760
  %v2844 = vsub.f32 %v2842, %v2843
  %v2845 = vand.u32 %v2844, 4294901760
  %2846 = vmatpush1.msra.mxu0 %v2845
  %2847 = vmatprep.subr.mxu0 0.0
  %v2848 = vand.u32 %v2541, 4294901760
  %v2849 = vsub.f32 %v2541, %v2848
  %v2850 = vand.u32 %v2849, 4294901760
  %v2851 = vsub.f32 %v2849, %v2850
  %v2852 = vand.u32 %v2851, 4294901760
  %2853 = vmatpush1.msra.mxu0 %v2852
  %2854 = vmatprep.subr.mxu0 0.0
  %v2855 = vand.u32 %v2542, 4294901760
  %v2856 = vsub.f32 %v2542, %v2855
  %v2857 = vand.u32 %v2856, 4294901760
  %v2858 = vsub.f32 %v2856, %v2857
  %v2859 = vand.u32 %v2858, 4294901760
  %2860 = vmatpush1.msra.mxu0 %v2859
  %2861 = vmatprep.subr.mxu0 0.0
  %v2862 = vand.u32 %v2543, 4294901760
  %v2863 = vsub.f32 %v2543, %v2862
  %v2864 = vand.u32 %v2863, 4294901760
  %v2865 = vsub.f32 %v2863, %v2864
  %v2866 = vand.u32 %v2865, 4294901760
  %2867 = vmatpush1.msra.mxu0 %v2866
  %2868 = vmatprep.subr.mxu0 0.0
  %v2869 = vand.u32 %v2544, 4294901760
  %v2870 = vsub.f32 %v2544, %v2869
  %v2871 = vand.u32 %v2870, 4294901760
  %v2872 = vsub.f32 %v2870, %v2871
  %v2873 = vand.u32 %v2872, 4294901760
  %2874 = vmatpush1.msra.mxu0 %v2873
  %2875 = vmatprep.subr.mxu0 0.0
  %v2876 = vand.u32 %v2545, 4294901760
  %v2877 = vsub.f32 %v2545, %v2876
  %v2878 = vand.u32 %v2877, 4294901760
  %v2879 = vsub.f32 %v2877, %v2878
  %v2880 = vand.u32 %v2879, 4294901760
  %2881 = vmatpush1.msra.mxu0 %v2880
  %2882 = vmatprep.subr.mxu0 0.0
  %v2883 = vand.u32 %v2546, 4294901760
  %v2884 = vsub.f32 %v2546, %v2883
  %v2885 = vand.u32 %v2884, 4294901760
  %v2886 = vsub.f32 %v2884, %v2885
  %v2887 = vand.u32 %v2886, 4294901760
  %2888 = vmatpush1.msra.mxu0 %v2887
  %2889 = vmatprep.subr.mxu0 0.0
  %v2890 = vand.u32 %v2547, 4294901760
  %v2891 = vsub.f32 %v2547, %v2890
  %v2892 = vand.u32 %v2891, 4294901760
  %v2893 = vsub.f32 %v2891, %v2892
  %v2894 = vand.u32 %v2893, 4294901760
  %2895 = vmatpush1.msra.mxu0 %v2894
  %2896 = vmatprep.subr.mxu0 0.0
  %v2897 = vand.u32 %v2548, 4294901760
  %v2898 = vsub.f32 %v2548, %v2897
  %v2899 = vand.u32 %v2898, 4294901760
  %v2900 = vsub.f32 %v2898, %v2899
  %v2901 = vand.u32 %v2900, 4294901760
  %2902 = vmatpush1.msra.mxu0 %v2901
  %2903 = vmatprep.subr.mxu0 0.0
  %v2904 = vand.u32 %v2549, 4294901760
  %v2905 = vsub.f32 %v2549, %v2904
  %v2906 = vand.u32 %v2905, 4294901760
  %v2907 = vsub.f32 %v2905, %v2906
  %v2908 = vand.u32 %v2907, 4294901760
  %2909 = vmatpush1.msra.mxu0 %v2908
  %2910 = vmatprep.subr.mxu0 0.0
  %v2911 = vand.u32 %v2550, 4294901760
  %v2912 = vsub.f32 %v2550, %v2911
  %v2913 = vand.u32 %v2912, 4294901760
  %v2914 = vsub.f32 %v2912, %v2913
  %v2915 = vand.u32 %v2914, 4294901760
  %2916 = vmatpush1.msra.mxu0 %v2915
  %2917 = vmatprep.subr.mxu0 0.0
  %v2918 = vand.u32 %v2551, 4294901760
  %v2919 = vsub.f32 %v2551, %v2918
  %v2920 = vand.u32 %v2919, 4294901760
  %v2921 = vsub.f32 %v2919, %v2920
  %v2922 = vand.u32 %v2921, 4294901760
  %2923 = vmatpush1.msra.mxu0 %v2922
  %2924 = vmatprep.subr.mxu0 0.0
  %v2925 = vand.u32 %v2552, 4294901760
  %v2926 = vsub.f32 %v2552, %v2925
  %v2927 = vand.u32 %v2926, 4294901760
  %v2928 = vsub.f32 %v2926, %v2927
  %v2929 = vand.u32 %v2928, 4294901760
  %2930 = vmatpush1.msra.mxu0 %v2929
  %2931 = vmatprep.subr.mxu0 0.0
  %v2932 = vand.u32 %v2553, 4294901760
  %v2933 = vsub.f32 %v2553, %v2932
  %v2934 = vand.u32 %v2933, 4294901760
  %v2935 = vsub.f32 %v2933, %v2934
  %v2936 = vand.u32 %v2935, 4294901760
  %2937 = vmatpush1.msra.mxu0 %v2936
  %2938 = vmatprep.subr.mxu0 0.0
  %v2939 = vand.u32 %v2554, 4294901760
  %v2940 = vsub.f32 %v2554, %v2939
  %v2941 = vand.u32 %v2940, 4294901760
  %v2942 = vsub.f32 %v2940, %v2941
  %v2943 = vand.u32 %v2942, 4294901760
  %2944 = vmatpush1.msra.mxu0 %v2943
  %2945 = vmatprep.subr.mxu0 0.0
  %v2946 = vand.u32 %v2555, 4294901760
  %v2947 = vsub.f32 %v2555, %v2946
  %v2948 = vand.u32 %v2947, 4294901760
  %v2949 = vsub.f32 %v2947, %v2948
  %v2950 = vand.u32 %v2949, 4294901760
  %2951 = vmatpush1.msra.mxu0 %v2950
  %2952 = vmatprep.subr.mxu0 0.0
  %v2953 = vand.u32 %v2556, 4294901760
  %v2954 = vsub.f32 %v2556, %v2953
  %v2955 = vand.u32 %v2954, 4294901760
  %v2956 = vsub.f32 %v2954, %v2955
  %v2957 = vand.u32 %v2956, 4294901760
  %2958 = vmatpush1.msra.mxu0 %v2957
  %2959 = vmatprep.subr.mxu0 0.0
  %v2960 = vand.u32 %v2557, 4294901760
  %v2961 = vsub.f32 %v2557, %v2960
  %v2962 = vand.u32 %v2961, 4294901760
  %v2963 = vsub.f32 %v2961, %v2962
  %v2964 = vand.u32 %v2963, 4294901760
  %2965 = vmatpush1.msra.mxu0 %v2964
  %2966 = vmatprep.subr.mxu0 0.0
  %v2967 = vand.u32 %v2558, 4294901760
  %v2968 = vsub.f32 %v2558, %v2967
  %v2969 = vand.u32 %v2968, 4294901760
  %v2970 = vsub.f32 %v2968, %v2969
  %v2971 = vand.u32 %v2970, 4294901760
  %2972 = vmatpush1.msra.mxu0 %v2971
  %2973 = vmatprep.subr.mxu0 0.0
  %v2974 = vand.u32 %v2559, 4294901760
  %v2975 = vsub.f32 %v2559, %v2974
  %v2976 = vand.u32 %v2975, 4294901760
  %v2977 = vsub.f32 %v2975, %v2976
  %v2978 = vand.u32 %v2977, 4294901760
  %2979 = vmatpush1.msra.mxu0 %v2978
  %2980 = vmatprep.subr.mxu0 0.0
  %v2981 = vand.u32 %v2560, 4294901760
  %v2982 = vsub.f32 %v2560, %v2981
  %v2983 = vand.u32 %v2982, 4294901760
  %v2984 = vsub.f32 %v2982, %v2983
  %v2985 = vand.u32 %v2984, 4294901760
  %2986 = vmatpush1.msra.mxu0 %v2985
  %2987 = vmatprep.subr.mxu0 0.0
  %v2988 = vand.u32 %v2561, 4294901760
  %v2989 = vsub.f32 %v2561, %v2988
  %v2990 = vand.u32 %v2989, 4294901760
  %v2991 = vsub.f32 %v2989, %v2990
  %v2992 = vand.u32 %v2991, 4294901760
  %2993 = vmatpush1.msra.mxu0 %v2992
  %v2994 = vand.u32 %v2523, 4294901760
  %2995 = vmatprep.mubr.f32.mxu0 %v2994
  %v2996 = vand.u32 %v2522, 4294901760
  %2997 = vmatmul.mubr.f32.gmra.mrb[0].mxu0 %v2996
  %v2998 = vpop.f32.mrb[0].mxu0
  %v2999 = vadd.f32 %v2767, %v2998
  %v3000 = vpop.f32.mrb[0].mxu0
  %3001 = vdwg.mxu0
  %3002 = vmatprep.subr.mxu0 0.0
  %v3003 = vand.u32 %v2530, 4294901760
  %v3004 = vsub.f32 %v2530, %v3003
  %3005 = vmatpush1.msra.mxu0 %v3004
  %3006 = vmatprep.subr.mxu0 0.0
  %v3007 = vand.u32 %v2531, 4294901760
  %v3008 = vsub.f32 %v2531, %v3007
  %3009 = vmatpush1.msra.mxu0 %v3008
  %3010 = vmatprep.subr.mxu0 0.0
  %v3011 = vand.u32 %v2532, 4294901760
  %v3012 = vsub.f32 %v2532, %v3011
  %3013 = vmatpush1.msra.mxu0 %v3012
  %3014 = vmatprep.subr.mxu0 0.0
  %v3015 = vand.u32 %v2533, 4294901760
  %v3016 = vsub.f32 %v2533, %v3015
  %3017 = vmatpush1.msra.mxu0 %v3016
  %3018 = vmatprep.subr.mxu0 0.0
  %v3019 = vand.u32 %v2534, 4294901760
  %v3020 = vsub.f32 %v2534, %v3019
  %3021 = vmatpush1.msra.mxu0 %v3020
  %3022 = vmatprep.subr.mxu0 0.0
  %v3023 = vand.u32 %v2535, 4294901760
  %v3024 = vsub.f32 %v2535, %v3023
  %3025 = vmatpush1.msra.mxu0 %v3024
  %3026 = vmatprep.subr.mxu0 0.0
  %v3027 = vand.u32 %v2536, 4294901760
  %v3028 = vsub.f32 %v2536, %v3027
  %3029 = vmatpush1.msra.mxu0 %v3028
  %3030 = vmatprep.subr.mxu0 0.0
  %v3031 = vand.u32 %v2537, 4294901760
  %v3032 = vsub.f32 %v2537, %v3031
  %3033 = vmatpush1.msra.mxu0 %v3032
  %3034 = vmatprep.subr.mxu0 0.0
  %v3035 = vand.u32 %v2538, 4294901760
  %v3036 = vsub.f32 %v2538, %v3035
  %3037 = vmatpush1.msra.mxu0 %v3036
  %3038 = vmatprep.subr.mxu0 0.0
  %v3039 = vand.u32 %v2539, 4294901760
  %v3040 = vsub.f32 %v2539, %v3039
  %3041 = vmatpush1.msra.mxu0 %v3040
  %3042 = vmatprep.subr.mxu0 0.0
  %v3043 = vand.u32 %v2540, 4294901760
  %v3044 = vsub.f32 %v2540, %v3043
  %3045 = vmatpush1.msra.mxu0 %v3044
  %3046 = vmatprep.subr.mxu0 0.0
  %v3047 = vand.u32 %v2541, 4294901760
  %v3048 = vsub.f32 %v2541, %v3047
  %3049 = vmatpush1.msra.mxu0 %v3048
  %3050 = vmatprep.subr.mxu0 0.0
  %v3051 = vand.u32 %v2542, 4294901760
  %v3052 = vsub.f32 %v2542, %v3051
  %3053 = vmatpush1.msra.mxu0 %v3052
  %3054 = vmatprep.subr.mxu0 0.0
  %v3055 = vand.u32 %v2543, 4294901760
  %v3056 = vsub.f32 %v2543, %v3055
  %3057 = vmatpush1.msra.mxu0 %v3056
  %3058 = vmatprep.subr.mxu0 0.0
  %v3059 = vand.u32 %v2544, 4294901760
  %v3060 = vsub.f32 %v2544, %v3059
  %3061 = vmatpush1.msra.mxu0 %v3060
  %3062 = vmatprep.subr.mxu0 0.0
  %v3063 = vand.u32 %v2545, 4294901760
  %v3064 = vsub.f32 %v2545, %v3063
  %3065 = vmatpush1.msra.mxu0 %v3064
  %3066 = vmatprep.subr.mxu0 0.0
  %v3067 = vand.u32 %v2546, 4294901760
  %v3068 = vsub.f32 %v2546, %v3067
  %3069 = vmatpush1.msra.mxu0 %v3068
  %3070 = vmatprep.subr.mxu0 0.0
  %v3071 = vand.u32 %v2547, 4294901760
  %v3072 = vsub.f32 %v2547, %v3071
  %3073 = vmatpush1.msra.mxu0 %v3072
  %3074 = vmatprep.subr.mxu0 0.0
  %v3075 = vand.u32 %v2548, 4294901760
  %v3076 = vsub.f32 %v2548, %v3075
  %3077 = vmatpush1.msra.mxu0 %v3076
  %3078 = vmatprep.subr.mxu0 0.0
  %v3079 = vand.u32 %v2549, 4294901760
  %v3080 = vsub.f32 %v2549, %v3079
  %3081 = vmatpush1.msra.mxu0 %v3080
  %3082 = vmatprep.subr.mxu0 0.0
  %v3083 = vand.u32 %v2550, 4294901760
  %v3084 = vsub.f32 %v2550, %v3083
  %3085 = vmatpush1.msra.mxu0 %v3084
  %3086 = vmatprep.subr.mxu0 0.0
  %v3087 = vand.u32 %v2551, 4294901760
  %v3088 = vsub.f32 %v2551, %v3087
  %3089 = vmatpush1.msra.mxu0 %v3088
  %3090 = vmatprep.subr.mxu0 0.0
  %v3091 = vand.u32 %v2552, 4294901760
  %v3092 = vsub.f32 %v2552, %v3091
  %3093 = vmatpush1.msra.mxu0 %v3092
  %3094 = vmatprep.subr.mxu0 0.0
  %v3095 = vand.u32 %v2553, 4294901760
  %v3096 = vsub.f32 %v2553, %v3095
  %3097 = vmatpush1.msra.mxu0 %v3096
  %3098 = vmatprep.subr.mxu0 0.0
  %v3099 = vand.u32 %v2554, 4294901760
  %v3100 = vsub.f32 %v2554, %v3099
  %3101 = vmatpush1.msra.mxu0 %v3100
  %3102 = vmatprep.subr.mxu0 0.0
  %v3103 = vand.u32 %v2555, 4294901760
  %v3104 = vsub.f32 %v2555, %v3103
  %3105 = vmatpush1.msra.mxu0 %v3104
  %3106 = vmatprep.subr.mxu0 0.0
  %v3107 = vand.u32 %v2556, 4294901760
  %v3108 = vsub.f32 %v2556, %v3107
  %3109 = vmatpush1.msra.mxu0 %v3108
  %3110 = vmatprep.subr.mxu0 0.0
  %v3111 = vand.u32 %v2557, 4294901760
  %v3112 = vsub.f32 %v2557, %v3111
  %3113 = vmatpush1.msra.mxu0 %v3112
  %3114 = vmatprep.subr.mxu0 0.0
  %v3115 = vand.u32 %v2558, 4294901760
  %v3116 = vsub.f32 %v2558, %v3115
  %3117 = vmatpush1.msra.mxu0 %v3116
  %3118 = vmatprep.subr.mxu0 0.0
  %v3119 = vand.u32 %v2559, 4294901760
  %v3120 = vsub.f32 %v2559, %v3119
  %3121 = vmatpush1.msra.mxu0 %v3120
  %3122 = vmatprep.subr.mxu0 0.0
  %v3123 = vand.u32 %v2560, 4294901760
  %v3124 = vsub.f32 %v2560, %v3123
  %3125 = vmatpush1.msra.mxu0 %v3124
  %3126 = vmatprep.subr.mxu0 0.0
  %v3127 = vand.u32 %v2561, 4294901760
  %v3128 = vsub.f32 %v2561, %v3127
  %3129 = vmatpush1.msra.mxu0 %v3128
  %v3130 = vand.u32 %v2523, 4294901760
  %v3131 = vsub.f32 %v2523, %v3130
  %3132 = vmatprep.mubr.f32.mxu0 %v3131
  %v3133 = vand.u32 %v2522, 4294901760
  %v3134 = vsub.f32 %v2522, %v3133
  %3135 = vmatmul.mubr.f32.gmra.mrb[0].mxu0 %v3134
  %v3136 = vpop.f32.mrb[0].mxu0
  %v3137 = vadd.f32 %v2999, %v3136
  %v3138 = vpop.f32.mrb[0].mxu0
  %3139 = vdwg.mxu0
  %3140 = vmatprep.subr.mxu0 0.0
  %v3141 = vand.u32 %v2530, 4294901760
  %3142 = vmatpush1.msra.mxu0 %v3141
  %3143 = vmatprep.subr.mxu0 0.0
  %v3144 = vand.u32 %v2531, 4294901760
  %3145 = vmatpush1.msra.mxu0 %v3144
  %3146 = vmatprep.subr.mxu0 0.0
  %v3147 = vand.u32 %v2532, 4294901760
  %3148 = vmatpush1.msra.mxu0 %v3147
  %3149 = vmatprep.subr.mxu0 0.0
  %v3150 = vand.u32 %v2533, 4294901760
  %3151 = vmatpush1.msra.mxu0 %v3150
  %3152 = vmatprep.subr.mxu0 0.0
  %v3153 = vand.u32 %v2534, 4294901760
  %3154 = vmatpush1.msra.mxu0 %v3153
  %3155 = vmatprep.subr.mxu0 0.0
  %v3156 = vand.u32 %v2535, 4294901760
  %3157 = vmatpush1.msra.mxu0 %v3156
  %3158 = vmatprep.subr.mxu0 0.0
  %v3159 = vand.u32 %v2536, 4294901760
  %3160 = vmatpush1.msra.mxu0 %v3159
  %3161 = vmatprep.subr.mxu0 0.0
  %v3162 = vand.u32 %v2537, 4294901760
  %3163 = vmatpush1.msra.mxu0 %v3162
  %3164 = vmatprep.subr.mxu0 0.0
  %v3165 = vand.u32 %v2538, 4294901760
  %3166 = vmatpush1.msra.mxu0 %v3165
  %3167 = vmatprep.subr.mxu0 0.0
  %v3168 = vand.u32 %v2539, 4294901760
  %3169 = vmatpush1.msra.mxu0 %v3168
  %3170 = vmatprep.subr.mxu0 0.0
  %v3171 = vand.u32 %v2540, 4294901760
  %3172 = vmatpush1.msra.mxu0 %v3171
  %3173 = vmatprep.subr.mxu0 0.0
  %v3174 = vand.u32 %v2541, 4294901760
  %3175 = vmatpush1.msra.mxu0 %v3174
  %3176 = vmatprep.subr.mxu0 0.0
  %v3177 = vand.u32 %v2542, 4294901760
  %3178 = vmatpush1.msra.mxu0 %v3177
  %3179 = vmatprep.subr.mxu0 0.0
  %v3180 = vand.u32 %v2543, 4294901760
  %3181 = vmatpush1.msra.mxu0 %v3180
  %3182 = vmatprep.subr.mxu0 0.0
  %v3183 = vand.u32 %v2544, 4294901760
  %3184 = vmatpush1.msra.mxu0 %v3183
  %3185 = vmatprep.subr.mxu0 0.0
  %v3186 = vand.u32 %v2545, 4294901760
  %3187 = vmatpush1.msra.mxu0 %v3186
  %3188 = vmatprep.subr.mxu0 0.0
  %v3189 = vand.u32 %v2546, 4294901760
  %3190 = vmatpush1.msra.mxu0 %v3189
  %3191 = vmatprep.subr.mxu0 0.0
  %v3192 = vand.u32 %v2547, 4294901760
  %3193 = vmatpush1.msra.mxu0 %v3192
  %3194 = vmatprep.subr.mxu0 0.0
  %v3195 = vand.u32 %v2548, 4294901760
  %3196 = vmatpush1.msra.mxu0 %v3195
  %3197 = vmatprep.subr.mxu0 0.0
  %v3198 = vand.u32 %v2549, 4294901760
  %3199 = vmatpush1.msra.mxu0 %v3198
  %3200 = vmatprep.subr.mxu0 0.0
  %v3201 = vand.u32 %v2550, 4294901760
  %3202 = vmatpush1.msra.mxu0 %v3201
  %3203 = vmatprep.subr.mxu0 0.0
  %v3204 = vand.u32 %v2551, 4294901760
  %3205 = vmatpush1.msra.mxu0 %v3204
  %3206 = vmatprep.subr.mxu0 0.0
  %v3207 = vand.u32 %v2552, 4294901760
  %3208 = vmatpush1.msra.mxu0 %v3207
  %3209 = vmatprep.subr.mxu0 0.0
  %v3210 = vand.u32 %v2553, 4294901760
  %3211 = vmatpush1.msra.mxu0 %v3210
  %3212 = vmatprep.subr.mxu0 0.0
  %v3213 = vand.u32 %v2554, 4294901760
  %3214 = vmatpush1.msra.mxu0 %v3213
  %3215 = vmatprep.subr.mxu0 0.0
  %v3216 = vand.u32 %v2555, 4294901760
  %3217 = vmatpush1.msra.mxu0 %v3216
  %3218 = vmatprep.subr.mxu0 0.0
  %v3219 = vand.u32 %v2556, 4294901760
  %3220 = vmatpush1.msra.mxu0 %v3219
  %3221 = vmatprep.subr.mxu0 0.0
  %v3222 = vand.u32 %v2557, 4294901760
  %3223 = vmatpush1.msra.mxu0 %v3222
  %3224 = vmatprep.subr.mxu0 0.0
  %v3225 = vand.u32 %v2558, 4294901760
  %3226 = vmatpush1.msra.mxu0 %v3225
  %3227 = vmatprep.subr.mxu0 0.0
  %v3228 = vand.u32 %v2559, 4294901760
  %3229 = vmatpush1.msra.mxu0 %v3228
  %3230 = vmatprep.subr.mxu0 0.0
  %v3231 = vand.u32 %v2560, 4294901760
  %3232 = vmatpush1.msra.mxu0 %v3231
  %3233 = vmatprep.subr.mxu0 0.0
  %v3234 = vand.u32 %v2561, 4294901760
  %3235 = vmatpush1.msra.mxu0 %v3234
  %v3236 = vand.u32 %v2523, 4294901760
  %v3237 = vsub.f32 %v2523, %v3236
  %v3238 = vand.u32 %v3237, 4294901760
  %3239 = vmatprep.mubr.f32.mxu0 %v3238
  %v3240 = vand.u32 %v2522, 4294901760
  %v3241 = vsub.f32 %v2522, %v3240
  %v3242 = vand.u32 %v3241, 4294901760
  %3243 = vmatmul.mubr.f32.gmra.mrb[0].mxu0 %v3242
  %v3244 = vpop.f32.mrb[0].mxu0
  %v3245 = vadd.f32 %v3137, %v3244
  %v3246 = vpop.f32.mrb[0].mxu0
  %3247 = vdwg.mxu0
  %3248 = vmatprep.subr.mxu0 0.0
  %v3249 = vand.u32 %v2530, 4294901760
  %v3250 = vsub.f32 %v2530, %v3249
  %v3251 = vand.u32 %v3250, 4294901760
  %3252 = vmatpush1.msra.mxu0 %v3251
  %3253 = vmatprep.subr.mxu0 0.0
  %v3254 = vand.u32 %v2531, 4294901760
  %v3255 = vsub.f32 %v2531, %v3254
  %v3256 = vand.u32 %v3255, 4294901760
  %3257 = vmatpush1.msra.mxu0 %v3256
  %3258 = vmatprep.subr.mxu0 0.0
  %v3259 = vand.u32 %v2532, 4294901760
  %v3260 = vsub.f32 %v2532, %v3259
  %v3261 = vand.u32 %v3260, 4294901760
  %3262 = vmatpush1.msra.mxu0 %v3261
  %3263 = vmatprep.subr.mxu0 0.0
  %v3264 = vand.u32 %v2533, 4294901760
  %v3265 = vsub.f32 %v2533, %v3264
  %v3266 = vand.u32 %v3265, 4294901760
  %3267 = vmatpush1.msra.mxu0 %v3266
  %3268 = vmatprep.subr.mxu0 0.0
  %v3269 = vand.u32 %v2534, 4294901760
  %v3270 = vsub.f32 %v2534, %v3269
  %v3271 = vand.u32 %v3270, 4294901760
  %3272 = vmatpush1.msra.mxu0 %v3271
  %3273 = vmatprep.subr.mxu0 0.0
  %v3274 = vand.u32 %v2535, 4294901760
  %v3275 = vsub.f32 %v2535, %v3274
  %v3276 = vand.u32 %v3275, 4294901760
  %3277 = vmatpush1.msra.mxu0 %v3276
  %3278 = vmatprep.subr.mxu0 0.0
  %v3279 = vand.u32 %v2536, 4294901760
  %v3280 = vsub.f32 %v2536, %v3279
  %v3281 = vand.u32 %v3280, 4294901760
  %3282 = vmatpush1.msra.mxu0 %v3281
  %3283 = vmatprep.subr.mxu0 0.0
  %v3284 = vand.u32 %v2537, 4294901760
  %v3285 = vsub.f32 %v2537, %v3284
  %v3286 = vand.u32 %v3285, 4294901760
  %3287 = vmatpush1.msra.mxu0 %v3286
  %3288 = vmatprep.subr.mxu0 0.0
  %v3289 = vand.u32 %v2538, 4294901760
  %v3290 = vsub.f32 %v2538, %v3289
  %v3291 = vand.u32 %v3290, 4294901760
  %3292 = vmatpush1.msra.mxu0 %v3291
  %3293 = vmatprep.subr.mxu0 0.0
  %v3294 = vand.u32 %v2539, 4294901760
  %v3295 = vsub.f32 %v2539, %v3294
  %v3296 = vand.u32 %v3295, 4294901760
  %3297 = vmatpush1.msra.mxu0 %v3296
  %3298 = vmatprep.subr.mxu0 0.0
  %v3299 = vand.u32 %v2540, 4294901760
  %v3300 = vsub.f32 %v2540, %v3299
  %v3301 = vand.u32 %v3300, 4294901760
  %3302 = vmatpush1.msra.mxu0 %v3301
  %3303 = vmatprep.subr.mxu0 0.0
  %v3304 = vand.u32 %v2541, 4294901760
  %v3305 = vsub.f32 %v2541, %v3304
  %v3306 = vand.u32 %v3305, 4294901760
  %3307 = vmatpush1.msra.mxu0 %v3306
  %3308 = vmatprep.subr.mxu0 0.0
  %v3309 = vand.u32 %v2542, 4294901760
  %v3310 = vsub.f32 %v2542, %v3309
  %v3311 = vand.u32 %v3310, 4294901760
  %3312 = vmatpush1.msra.mxu0 %v3311
  %3313 = vmatprep.subr.mxu0 0.0
  %v3314 = vand.u32 %v2543, 4294901760
  %v3315 = vsub.f32 %v2543, %v3314
  %v3316 = vand.u32 %v3315, 4294901760
  %3317 = vmatpush1.msra.mxu0 %v3316
  %3318 = vmatprep.subr.mxu0 0.0
  %v3319 = vand.u32 %v2544, 4294901760
  %v3320 = vsub.f32 %v2544, %v3319
  %v3321 = vand.u32 %v3320, 4294901760
  %3322 = vmatpush1.msra.mxu0 %v3321
  %3323 = vmatprep.subr.mxu0 0.0
  %v3324 = vand.u32 %v2545, 4294901760
  %v3325 = vsub.f32 %v2545, %v3324
  %v3326 = vand.u32 %v3325, 4294901760
  %3327 = vmatpush1.msra.mxu0 %v3326
  %3328 = vmatprep.subr.mxu0 0.0
  %v3329 = vand.u32 %v2546, 4294901760
  %v3330 = vsub.f32 %v2546, %v3329
  %v3331 = vand.u32 %v3330, 4294901760
  %3332 = vmatpush1.msra.mxu0 %v3331
  %3333 = vmatprep.subr.mxu0 0.0
  %v3334 = vand.u32 %v2547, 4294901760
  %v3335 = vsub.f32 %v2547, %v3334
  %v3336 = vand.u32 %v3335, 4294901760
  %3337 = vmatpush1.msra.mxu0 %v3336
  %3338 = vmatprep.subr.mxu0 0.0
  %v3339 = vand.u32 %v2548, 4294901760
  %v3340 = vsub.f32 %v2548, %v3339
  %v3341 = vand.u32 %v3340, 4294901760
  %3342 = vmatpush1.msra.mxu0 %v3341
  %3343 = vmatprep.subr.mxu0 0.0
  %v3344 = vand.u32 %v2549, 4294901760
  %v3345 = vsub.f32 %v2549, %v3344
  %v3346 = vand.u32 %v3345, 4294901760
  %3347 = vmatpush1.msra.mxu0 %v3346
  %3348 = vmatprep.subr.mxu0 0.0
  %v3349 = vand.u32 %v2550, 4294901760
  %v3350 = vsub.f32 %v2550, %v3349
  %v3351 = vand.u32 %v3350, 4294901760
  %3352 = vmatpush1.msra.mxu0 %v3351
  %3353 = vmatprep.subr.mxu0 0.0
  %v3354 = vand.u32 %v2551, 4294901760
  %v3355 = vsub.f32 %v2551, %v3354
  %v3356 = vand.u32 %v3355, 4294901760
  %3357 = vmatpush1.msra.mxu0 %v3356
  %3358 = vmatprep.subr.mxu0 0.0
  %v3359 = vand.u32 %v2552, 4294901760
  %v3360 = vsub.f32 %v2552, %v3359
  %v3361 = vand.u32 %v3360, 4294901760
  %3362 = vmatpush1.msra.mxu0 %v3361
  %3363 = vmatprep.subr.mxu0 0.0
  %v3364 = vand.u32 %v2553, 4294901760
  %v3365 = vsub.f32 %v2553, %v3364
  %v3366 = vand.u32 %v3365, 4294901760
  %3367 = vmatpush1.msra.mxu0 %v3366
  %3368 = vmatprep.subr.mxu0 0.0
  %v3369 = vand.u32 %v2554, 4294901760
  %v3370 = vsub.f32 %v2554, %v3369
  %v3371 = vand.u32 %v3370, 4294901760
  %3372 = vmatpush1.msra.mxu0 %v3371
  %3373 = vmatprep.subr.mxu0 0.0
  %v3374 = vand.u32 %v2555, 4294901760
  %v3375 = vsub.f32 %v2555, %v3374
  %v3376 = vand.u32 %v3375, 4294901760
  %3377 = vmatpush1.msra.mxu0 %v3376
  %3378 = vmatprep.subr.mxu0 0.0
  %v3379 = vand.u32 %v2556, 4294901760
  %v3380 = vsub.f32 %v2556, %v3379
  %v3381 = vand.u32 %v3380, 4294901760
  %3382 = vmatpush1.msra.mxu0 %v3381
  %3383 = vmatprep.subr.mxu0 0.0
  %v3384 = vand.u32 %v2557, 4294901760
  %v3385 = vsub.f32 %v2557, %v3384
  %v3386 = vand.u32 %v3385, 4294901760
  %3387 = vmatpush1.msra.mxu0 %v3386
  %3388 = vmatprep.subr.mxu0 0.0
  %v3389 = vand.u32 %v2558, 4294901760
  %v3390 = vsub.f32 %v2558, %v3389
  %v3391 = vand.u32 %v3390, 4294901760
  %3392 = vmatpush1.msra.mxu0 %v3391
  %3393 = vmatprep.subr.mxu0 0.0
  %v3394 = vand.u32 %v2559, 4294901760
  %v3395 = vsub.f32 %v2559, %v3394
  %v3396 = vand.u32 %v3395, 4294901760
  %3397 = vmatpush1.msra.mxu0 %v3396
  %3398 = vmatprep.subr.mxu0 0.0
  %v3399 = vand.u32 %v2560, 4294901760
  %v3400 = vsub.f32 %v2560, %v3399
  %v3401 = vand.u32 %v3400, 4294901760
  %3402 = vmatpush1.msra.mxu0 %v3401
  %3403 = vmatprep.subr.mxu0 0.0
  %v3404 = vand.u32 %v2561, 4294901760
  %v3405 = vsub.f32 %v2561, %v3404
  %v3406 = vand.u32 %v3405, 4294901760
  %3407 = vmatpush1.msra.mxu0 %v3406
  %v3408 = vand.u32 %v2523, 4294901760
  %3409 = vmatprep.mubr.f32.mxu0 %v3408
  %v3410 = vand.u32 %v2522, 4294901760
  %3411 = vmatmul.mubr.f32.gmra.mrb[0].mxu0 %v3410
  %v3412 = vpop.f32.mrb[0].mxu0
  %v3413 = vadd.f32 %v3245, %v3412
  %v3414 = vpop.f32.mrb[0].mxu0
  %3415 = vdwg.mxu0
  %3416 = vmatprep.subr.mxu0 0.0
  %v3417 = vand.u32 %v2530, 4294901760
  %3418 = vmatpush1.msra.mxu0 %v3417
  %3419 = vmatprep.subr.mxu0 0.0
  %v3420 = vand.u32 %v2531, 4294901760
  %3421 = vmatpush1.msra.mxu0 %v3420
  %3422 = vmatprep.subr.mxu0 0.0
  %v3423 = vand.u32 %v2532, 4294901760
  %3424 = vmatpush1.msra.mxu0 %v3423
  %3425 = vmatprep.subr.mxu0 0.0
  %v3426 = vand.u32 %v2533, 4294901760
  %3427 = vmatpush1.msra.mxu0 %v3426
  %3428 = vmatprep.subr.mxu0 0.0
  %v3429 = vand.u32 %v2534, 4294901760
  %3430 = vmatpush1.msra.mxu0 %v3429
  %3431 = vmatprep.subr.mxu0 0.0
  %v3432 = vand.u32 %v2535, 4294901760
  %3433 = vmatpush1.msra.mxu0 %v3432
  %3434 = vmatprep.subr.mxu0 0.0
  %v3435 = vand.u32 %v2536, 4294901760
  %3436 = vmatpush1.msra.mxu0 %v3435
  %3437 = vmatprep.subr.mxu0 0.0
  %v3438 = vand.u32 %v2537, 4294901760
  %3439 = vmatpush1.msra.mxu0 %v3438
  %3440 = vmatprep.subr.mxu0 0.0
  %v3441 = vand.u32 %v2538, 4294901760
  %3442 = vmatpush1.msra.mxu0 %v3441
  %3443 = vmatprep.subr.mxu0 0.0
  %v3444 = vand.u32 %v2539, 4294901760
  %3445 = vmatpush1.msra.mxu0 %v3444
  %3446 = vmatprep.subr.mxu0 0.0
  %v3447 = vand.u32 %v2540, 4294901760
  %3448 = vmatpush1.msra.mxu0 %v3447
  %3449 = vmatprep.subr.mxu0 0.0
  %v3450 = vand.u32 %v2541, 4294901760
  %3451 = vmatpush1.msra.mxu0 %v3450
  %3452 = vmatprep.subr.mxu0 0.0
  %v3453 = vand.u32 %v2542, 4294901760
  %3454 = vmatpush1.msra.mxu0 %v3453
  %3455 = vmatprep.subr.mxu0 0.0
  %v3456 = vand.u32 %v2543, 4294901760
  %3457 = vmatpush1.msra.mxu0 %v3456
  %3458 = vmatprep.subr.mxu0 0.0
  %v3459 = vand.u32 %v2544, 4294901760
  %3460 = vmatpush1.msra.mxu0 %v3459
  %3461 = vmatprep.subr.mxu0 0.0
  %v3462 = vand.u32 %v2545, 4294901760
  %3463 = vmatpush1.msra.mxu0 %v3462
  %3464 = vmatprep.subr.mxu0 0.0
  %v3465 = vand.u32 %v2546, 4294901760
  %3466 = vmatpush1.msra.mxu0 %v3465
  %3467 = vmatprep.subr.mxu0 0.0
  %v3468 = vand.u32 %v2547, 4294901760
  %3469 = vmatpush1.msra.mxu0 %v3468
  %3470 = vmatprep.subr.mxu0 0.0
  %v3471 = vand.u32 %v2548, 4294901760
  %3472 = vmatpush1.msra.mxu0 %v3471
  %3473 = vmatprep.subr.mxu0 0.0
  %v3474 = vand.u32 %v2549, 4294901760
  %3475 = vmatpush1.msra.mxu0 %v3474
  %3476 = vmatprep.subr.mxu0 0.0
  %v3477 = vand.u32 %v2550, 4294901760
  %3478 = vmatpush1.msra.mxu0 %v3477
  %3479 = vmatprep.subr.mxu0 0.0
  %v3480 = vand.u32 %v2551, 4294901760
  %3481 = vmatpush1.msra.mxu0 %v3480
  %3482 = vmatprep.subr.mxu0 0.0
  %v3483 = vand.u32 %v2552, 4294901760
  %3484 = vmatpush1.msra.mxu0 %v3483
  %3485 = vmatprep.subr.mxu0 0.0
  %v3486 = vand.u32 %v2553, 4294901760
  %3487 = vmatpush1.msra.mxu0 %v3486
  %3488 = vmatprep.subr.mxu0 0.0
  %v3489 = vand.u32 %v2554, 4294901760
  %3490 = vmatpush1.msra.mxu0 %v3489
  %3491 = vmatprep.subr.mxu0 0.0
  %v3492 = vand.u32 %v2555, 4294901760
  %3493 = vmatpush1.msra.mxu0 %v3492
  %3494 = vmatprep.subr.mxu0 0.0
  %v3495 = vand.u32 %v2556, 4294901760
  %3496 = vmatpush1.msra.mxu0 %v3495
  %3497 = vmatprep.subr.mxu0 0.0
  %v3498 = vand.u32 %v2557, 4294901760
  %3499 = vmatpush1.msra.mxu0 %v3498
  %3500 = vmatprep.subr.mxu0 0.0
  %v3501 = vand.u32 %v2558, 4294901760
  %3502 = vmatpush1.msra.mxu0 %v3501
  %3503 = vmatprep.subr.mxu0 0.0
  %v3504 = vand.u32 %v2559, 4294901760
  %3505 = vmatpush1.msra.mxu0 %v3504
  %3506 = vmatprep.subr.mxu0 0.0
  %v3507 = vand.u32 %v2560, 4294901760
  %3508 = vmatpush1.msra.mxu0 %v3507
  %3509 = vmatprep.subr.mxu0 0.0
  %v3510 = vand.u32 %v2561, 4294901760
  %3511 = vmatpush1.msra.mxu0 %v3510
  %v3512 = vand.u32 %v2523, 4294901760
  %3513 = vmatprep.mubr.f32.mxu0 %v3512
  %v3514 = vand.u32 %v2522, 4294901760
  %3515 = vmatmul.mubr.f32.gmra.mrb[0].mxu0 %v3514
  %v3516 = vpop.f32.mrb[0].mxu0
  %v3517 = vadd.f32 %v3413, %v3516
  %v3518 = vpop.f32.mrb[0].mxu0
  %3519 = vdwg.mxu0
  %3520 = vmatprep.subr.mxu0 0.0
  %v3521 = vand.u32 %v2562, 4294901760
  %3522 = vmatpush1.msra.mxu0 %v3521
  %3523 = vmatprep.subr.mxu0 0.0
  %v3524 = vand.u32 %v2563, 4294901760
  %3525 = vmatpush1.msra.mxu0 %v3524
  %3526 = vmatprep.subr.mxu0 0.0
  %v3527 = vand.u32 %v2564, 4294901760
  %3528 = vmatpush1.msra.mxu0 %v3527
  %3529 = vmatprep.subr.mxu0 0.0
  %v3530 = vand.u32 %v2565, 4294901760
  %3531 = vmatpush1.msra.mxu0 %v3530
  %3532 = vmatprep.subr.mxu0 0.0
  %v3533 = vand.u32 %v2566, 4294901760
  %3534 = vmatpush1.msra.mxu0 %v3533
  %3535 = vmatprep.subr.mxu0 0.0
  %v3536 = vand.u32 %v2567, 4294901760
  %3537 = vmatpush1.msra.mxu0 %v3536
  %3538 = vmatprep.subr.mxu0 0.0
  %v3539 = vand.u32 %v2568, 4294901760
  %3540 = vmatpush1.msra.mxu0 %v3539
  %3541 = vmatprep.subr.mxu0 0.0
  %v3542 = vand.u32 %v2569, 4294901760
  %3543 = vmatpush1.msra.mxu0 %v3542
  %3544 = vmatprep.subr.mxu0 0.0
  %v3545 = vand.u32 %v2570, 4294901760
  %3546 = vmatpush1.msra.mxu0 %v3545
  %3547 = vmatprep.subr.mxu0 0.0
  %v3548 = vand.u32 %v2571, 4294901760
  %3549 = vmatpush1.msra.mxu0 %v3548
  %3550 = vmatprep.subr.mxu0 0.0
  %v3551 = vand.u32 %v2572, 4294901760
  %3552 = vmatpush1.msra.mxu0 %v3551
  %3553 = vmatprep.subr.mxu0 0.0
  %v3554 = vand.u32 %v2573, 4294901760
  %3555 = vmatpush1.msra.mxu0 %v3554
  %3556 = vmatprep.subr.mxu0 0.0
  %v3557 = vand.u32 %v2574, 4294901760
  %3558 = vmatpush1.msra.mxu0 %v3557
  %3559 = vmatprep.subr.mxu0 0.0
  %v3560 = vand.u32 %v2575, 4294901760
  %3561 = vmatpush1.msra.mxu0 %v3560
  %3562 = vmatprep.subr.mxu0 0.0
  %v3563 = vand.u32 %v2576, 4294901760
  %3564 = vmatpush1.msra.mxu0 %v3563
  %3565 = vmatprep.subr.mxu0 0.0
  %v3566 = vand.u32 %v2577, 4294901760
  %3567 = vmatpush1.msra.mxu0 %v3566
  %3568 = vmatprep.subr.mxu0 0.0
  %v3569 = vand.u32 %v2578, 4294901760
  %3570 = vmatpush1.msra.mxu0 %v3569
  %3571 = vmatprep.subr.mxu0 0.0
  %v3572 = vand.u32 %v2579, 4294901760
  %3573 = vmatpush1.msra.mxu0 %v3572
  %3574 = vmatprep.subr.mxu0 0.0
  %v3575 = vand.u32 %v2580, 4294901760
  %3576 = vmatpush1.msra.mxu0 %v3575
  %3577 = vmatprep.subr.mxu0 0.0
  %v3578 = vand.u32 %v2581, 4294901760
  %3579 = vmatpush1.msra.mxu0 %v3578
  %3580 = vmatprep.subr.mxu0 0.0
  %v3581 = vand.u32 %v2582, 4294901760
  %3582 = vmatpush1.msra.mxu0 %v3581
  %3583 = vmatprep.subr.mxu0 0.0
  %v3584 = vand.u32 %v2583, 4294901760
  %3585 = vmatpush1.msra.mxu0 %v3584
  %3586 = vmatprep.subr.mxu0 0.0
  %v3587 = vand.u32 %v2584, 4294901760
  %3588 = vmatpush1.msra.mxu0 %v3587
  %3589 = vmatprep.subr.mxu0 0.0
  %v3590 = vand.u32 %v2585, 4294901760
  %3591 = vmatpush1.msra.mxu0 %v3590
  %3592 = vmatprep.subr.mxu0 0.0
  %v3593 = vand.u32 %v2586, 4294901760
  %3594 = vmatpush1.msra.mxu0 %v3593
  %3595 = vmatprep.subr.mxu0 0.0
  %v3596 = vand.u32 %v2587, 4294901760
  %3597 = vmatpush1.msra.mxu0 %v3596
  %3598 = vmatprep.subr.mxu0 0.0
  %v3599 = vand.u32 %v2588, 4294901760
  %3600 = vmatpush1.msra.mxu0 %v3599
  %3601 = vmatprep.subr.mxu0 0.0
  %v3602 = vand.u32 %v2589, 4294901760
  %3603 = vmatpush1.msra.mxu0 %v3602
  %3604 = vmatprep.subr.mxu0 0.0
  %v3605 = vand.u32 %v2590, 4294901760
  %3606 = vmatpush1.msra.mxu0 %v3605
  %3607 = vmatprep.subr.mxu0 0.0
  %v3608 = vand.u32 %v2591, 4294901760
  %3609 = vmatpush1.msra.mxu0 %v3608
  %3610 = vmatprep.subr.mxu0 0.0
  %v3611 = vand.u32 %v2592, 4294901760
  %3612 = vmatpush1.msra.mxu0 %v3611
  %3613 = vmatprep.subr.mxu0 0.0
  %v3614 = vand.u32 %v2593, 4294901760
  %3615 = vmatpush1.msra.mxu0 %v3614
  %v3616 = vand.u32 %v2525, 4294901760
  %v3617 = vsub.f32 %v2525, %v3616
  %v3618 = vand.u32 %v3617, 4294901760
  %v3619 = vsub.f32 %v3617, %v3618
  %v3620 = vand.u32 %v3619, 4294901760
  %3621 = vmatprep.mubr.f32.mxu0 %v3620
  %v3622 = vand.u32 %v2524, 4294901760
  %v3623 = vsub.f32 %v2524, %v3622
  %v3624 = vand.u32 %v3623, 4294901760
  %v3625 = vsub.f32 %v3623, %v3624
  %v3626 = vand.u32 %v3625, 4294901760
  %3627 = vmatmul.mubr.f32.gmra.mrb[0].mxu0 %v3626
  %v3628 = vpop.f32.mrb[0].mxu0
  %v3629 = vadd.f32 %v3517, %v3628
  %v3630 = vpop.f32.mrb[0].mxu0
  %3631 = vdwg.mxu0
  %3632 = vmatprep.subr.mxu0 0.0
  %v3633 = vand.u32 %v2562, 4294901760
  %v3634 = vsub.f32 %v2562, %v3633
  %v3635 = vand.u32 %v3634, 4294901760
  %v3636 = vsub.f32 %v3634, %v3635
  %v3637 = vand.u32 %v3636, 4294901760
  %3638 = vmatpush1.msra.mxu0 %v3637
  %3639 = vmatprep.subr.mxu0 0.0
  %v3640 = vand.u32 %v2563, 4294901760
  %v3641 = vsub.f32 %v2563, %v3640
  %v3642 = vand.u32 %v3641, 4294901760
  %v3643 = vsub.f32 %v3641, %v3642
  %v3644 = vand.u32 %v3643, 4294901760
  %3645 = vmatpush1.msra.mxu0 %v3644
  %3646 = vmatprep.subr.mxu0 0.0
  %v3647 = vand.u32 %v2564, 4294901760
  %v3648 = vsub.f32 %v2564, %v3647
  %v3649 = vand.u32 %v3648, 4294901760
  %v3650 = vsub.f32 %v3648, %v3649
  %v3651 = vand.u32 %v3650, 4294901760
  %3652 = vmatpush1.msra.mxu0 %v3651
  %3653 = vmatprep.subr.mxu0 0.0
  %v3654 = vand.u32 %v2565, 4294901760
  %v3655 = vsub.f32 %v2565, %v3654
  %v3656 = vand.u32 %v3655, 4294901760
  %v3657 = vsub.f32 %v3655, %v3656
  %v3658 = vand.u32 %v3657, 4294901760
  %3659 = vmatpush1.msra.mxu0 %v3658
  %3660 = vmatprep.subr.mxu0 0.0
  %v3661 = vand.u32 %v2566, 4294901760
  %v3662 = vsub.f32 %v2566, %v3661
  %v3663 = vand.u32 %v3662, 4294901760
  %v3664 = vsub.f32 %v3662, %v3663
  %v3665 = vand.u32 %v3664, 4294901760
  %3666 = vmatpush1.msra.mxu0 %v3665
  %3667 = vmatprep.subr.mxu0 0.0
  %v3668 = vand.u32 %v2567, 4294901760
  %v3669 = vsub.f32 %v2567, %v3668
  %v3670 = vand.u32 %v3669, 4294901760
  %v3671 = vsub.f32 %v3669, %v3670
  %v3672 = vand.u32 %v3671, 4294901760
  %3673 = vmatpush1.msra.mxu0 %v3672
  %3674 = vmatprep.subr.mxu0 0.0
  %v3675 = vand.u32 %v2568, 4294901760
  %v3676 = vsub.f32 %v2568, %v3675
  %v3677 = vand.u32 %v3676, 4294901760
  %v3678 = vsub.f32 %v3676, %v3677
  %v3679 = vand.u32 %v3678, 4294901760
  %3680 = vmatpush1.msra.mxu0 %v3679
  %3681 = vmatprep.subr.mxu0 0.0
  %v3682 = vand.u32 %v2569, 4294901760
  %v3683 = vsub.f32 %v2569, %v3682
  %v3684 = vand.u32 %v3683, 4294901760
  %v3685 = vsub.f32 %v3683, %v3684
  %v3686 = vand.u32 %v3685, 4294901760
  %3687 = vmatpush1.msra.mxu0 %v3686
  %3688 = vmatprep.subr.mxu0 0.0
  %v3689 = vand.u32 %v2570, 4294901760
  %v3690 = vsub.f32 %v2570, %v3689
  %v3691 = vand.u32 %v3690, 4294901760
  %v3692 = vsub.f32 %v3690, %v3691
  %v3693 = vand.u32 %v3692, 4294901760
  %3694 = vmatpush1.msra.mxu0 %v3693
  %3695 = vmatprep.subr.mxu0 0.0
  %v3696 = vand.u32 %v2571, 4294901760
  %v3697 = vsub.f32 %v2571, %v3696
  %v3698 = vand.u32 %v3697, 4294901760
  %v3699 = vsub.f32 %v3697, %v3698
  %v3700 = vand.u32 %v3699, 4294901760
  %3701 = vmatpush1.msra.mxu0 %v3700
  %3702 = vmatprep.subr.mxu0 0.0
  %v3703 = vand.u32 %v2572, 4294901760
  %v3704 = vsub.f32 %v2572, %v3703
  %v3705 = vand.u32 %v3704, 4294901760
  %v3706 = vsub.f32 %v3704, %v3705
  %v3707 = vand.u32 %v3706, 4294901760
  %3708 = vmatpush1.msra.mxu0 %v3707
  %3709 = vmatprep.subr.mxu0 0.0
  %v3710 = vand.u32 %v2573, 4294901760
  %v3711 = vsub.f32 %v2573, %v3710
  %v3712 = vand.u32 %v3711, 4294901760
  %v3713 = vsub.f32 %v3711, %v3712
  %v3714 = vand.u32 %v3713, 4294901760
  %3715 = vmatpush1.msra.mxu0 %v3714
  %3716 = vmatprep.subr.mxu0 0.0
  %v3717 = vand.u32 %v2574, 4294901760
  %v3718 = vsub.f32 %v2574, %v3717
  %v3719 = vand.u32 %v3718, 4294901760
  %v3720 = vsub.f32 %v3718, %v3719
  %v3721 = vand.u32 %v3720, 4294901760
  %3722 = vmatpush1.msra.mxu0 %v3721
  %3723 = vmatprep.subr.mxu0 0.0
  %v3724 = vand.u32 %v2575, 4294901760
  %v3725 = vsub.f32 %v2575, %v3724
  %v3726 = vand.u32 %v3725, 4294901760
  %v3727 = vsub.f32 %v3725, %v3726
  %v3728 = vand.u32 %v3727, 4294901760
  %3729 = vmatpush1.msra.mxu0 %v3728
  %3730 = vmatprep.subr.mxu0 0.0
  %v3731 = vand.u32 %v2576, 4294901760
  %v3732 = vsub.f32 %v2576, %v3731
  %v3733 = vand.u32 %v3732, 4294901760
  %v3734 = vsub.f32 %v3732, %v3733
  %v3735 = vand.u32 %v3734, 4294901760
  %3736 = vmatpush1.msra.mxu0 %v3735
  %3737 = vmatprep.subr.mxu0 0.0
  %v3738 = vand.u32 %v2577, 4294901760
  %v3739 = vsub.f32 %v2577, %v3738
  %v3740 = vand.u32 %v3739, 4294901760
  %v3741 = vsub.f32 %v3739, %v3740
  %v3742 = vand.u32 %v3741, 4294901760
  %3743 = vmatpush1.msra.mxu0 %v3742
  %3744 = vmatprep.subr.mxu0 0.0
  %v3745 = vand.u32 %v2578, 4294901760
  %v3746 = vsub.f32 %v2578, %v3745
  %v3747 = vand.u32 %v3746, 4294901760
  %v3748 = vsub.f32 %v3746, %v3747
  %v3749 = vand.u32 %v3748, 4294901760
  %3750 = vmatpush1.msra.mxu0 %v3749
  %3751 = vmatprep.subr.mxu0 0.0
  %v3752 = vand.u32 %v2579, 4294901760
  %v3753 = vsub.f32 %v2579, %v3752
  %v3754 = vand.u32 %v3753, 4294901760
  %v3755 = vsub.f32 %v3753, %v3754
  %v3756 = vand.u32 %v3755, 4294901760
  %3757 = vmatpush1.msra.mxu0 %v3756
  %3758 = vmatprep.subr.mxu0 0.0
  %v3759 = vand.u32 %v2580, 4294901760
  %v3760 = vsub.f32 %v2580, %v3759
  %v3761 = vand.u32 %v3760, 4294901760
  %v3762 = vsub.f32 %v3760, %v3761
  %v3763 = vand.u32 %v3762, 4294901760
  %3764 = vmatpush1.msra.mxu0 %v3763
  %3765 = vmatprep.subr.mxu0 0.0
  %v3766 = vand.u32 %v2581, 4294901760
  %v3767 = vsub.f32 %v2581, %v3766
  %v3768 = vand.u32 %v3767, 4294901760
  %v3769 = vsub.f32 %v3767, %v3768
  %v3770 = vand.u32 %v3769, 4294901760
  %3771 = vmatpush1.msra.mxu0 %v3770
  %3772 = vmatprep.subr.mxu0 0.0
  %v3773 = vand.u32 %v2582, 4294901760
  %v3774 = vsub.f32 %v2582, %v3773
  %v3775 = vand.u32 %v3774, 4294901760
  %v3776 = vsub.f32 %v3774, %v3775
  %v3777 = vand.u32 %v3776, 4294901760
  %3778 = vmatpush1.msra.mxu0 %v3777
  %3779 = vmatprep.subr.mxu0 0.0
  %v3780 = vand.u32 %v2583, 4294901760
  %v3781 = vsub.f32 %v2583, %v3780
  %v3782 = vand.u32 %v3781, 4294901760
  %v3783 = vsub.f32 %v3781, %v3782
  %v3784 = vand.u32 %v3783, 4294901760
  %3785 = vmatpush1.msra.mxu0 %v3784
  %3786 = vmatprep.subr.mxu0 0.0
  %v3787 = vand.u32 %v2584, 4294901760
  %v3788 = vsub.f32 %v2584, %v3787
  %v3789 = vand.u32 %v3788, 4294901760
  %v3790 = vsub.f32 %v3788, %v3789
  %v3791 = vand.u32 %v3790, 4294901760
  %3792 = vmatpush1.msra.mxu0 %v3791
  %3793 = vmatprep.subr.mxu0 0.0
  %v3794 = vand.u32 %v2585, 4294901760
  %v3795 = vsub.f32 %v2585, %v3794
  %v3796 = vand.u32 %v3795, 4294901760
  %v3797 = vsub.f32 %v3795, %v3796
  %v3798 = vand.u32 %v3797, 4294901760
  %3799 = vmatpush1.msra.mxu0 %v3798
  %3800 = vmatprep.subr.mxu0 0.0
  %v3801 = vand.u32 %v2586, 4294901760
  %v3802 = vsub.f32 %v2586, %v3801
  %v3803 = vand.u32 %v3802, 4294901760
  %v3804 = vsub.f32 %v3802, %v3803
  %v3805 = vand.u32 %v3804, 4294901760
  %3806 = vmatpush1.msra.mxu0 %v3805
  %3807 = vmatprep.subr.mxu0 0.0
  %v3808 = vand.u32 %v2587, 4294901760
  %v3809 = vsub.f32 %v2587, %v3808
  %v3810 = vand.u32 %v3809, 4294901760
  %v3811 = vsub.f32 %v3809, %v3810
  %v3812 = vand.u32 %v3811, 4294901760
  %3813 = vmatpush1.msra.mxu0 %v3812
  %3814 = vmatprep.subr.mxu0 0.0
  %v3815 = vand.u32 %v2588, 4294901760
  %v3816 = vsub.f32 %v2588, %v3815
  %v3817 = vand.u32 %v3816, 4294901760
  %v3818 = vsub.f32 %v3816, %v3817
  %v3819 = vand.u32 %v3818, 4294901760
  %3820 = vmatpush1.msra.mxu0 %v3819
  %3821 = vmatprep.subr.mxu0 0.0
  %v3822 = vand.u32 %v2589, 4294901760
  %v3823 = vsub.f32 %v2589, %v3822
  %v3824 = vand.u32 %v3823, 4294901760
  %v3825 = vsub.f32 %v3823, %v3824
  %v3826 = vand.u32 %v3825, 4294901760
  %3827 = vmatpush1.msra.mxu0 %v3826
  %3828 = vmatprep.subr.mxu0 0.0
  %v3829 = vand.u32 %v2590, 4294901760
  %v3830 = vsub.f32 %v2590, %v3829
  %v3831 = vand.u32 %v3830, 4294901760
  %v3832 = vsub.f32 %v3830, %v3831
  %v3833 = vand.u32 %v3832, 4294901760
  %3834 = vmatpush1.msra.mxu0 %v3833
  %3835 = vmatprep.subr.mxu0 0.0
  %v3836 = vand.u32 %v2591, 4294901760
  %v3837 = vsub.f32 %v2591, %v3836
  %v3838 = vand.u32 %v3837, 4294901760
  %v3839 = vsub.f32 %v3837, %v3838
  %v3840 = vand.u32 %v3839, 4294901760
  %3841 = vmatpush1.msra.mxu0 %v3840
  %3842 = vmatprep.subr.mxu0 0.0
  %v3843 = vand.u32 %v2592, 4294901760
  %v3844 = vsub.f32 %v2592, %v3843
  %v3845 = vand.u32 %v3844, 4294901760
  %v3846 = vsub.f32 %v3844, %v3845
  %v3847 = vand.u32 %v3846, 4294901760
  %3848 = vmatpush1.msra.mxu0 %v3847
  %3849 = vmatprep.subr.mxu0 0.0
  %v3850 = vand.u32 %v2593, 4294901760
  %v3851 = vsub.f32 %v2593, %v3850
  %v3852 = vand.u32 %v3851, 4294901760
  %v3853 = vsub.f32 %v3851, %v3852
  %v3854 = vand.u32 %v3853, 4294901760
  %3855 = vmatpush1.msra.mxu0 %v3854
  %v3856 = vand.u32 %v2525, 4294901760
  %3857 = vmatprep.mubr.f32.mxu0 %v3856
  %v3858 = vand.u32 %v2524, 4294901760
  %3859 = vmatmul.mubr.f32.gmra.mrb[0].mxu0 %v3858
  %v3860 = vpop.f32.mrb[0].mxu0
  %v3861 = vadd.f32 %v3629, %v3860
  %v3862 = vpop.f32.mrb[0].mxu0
  %3863 = vdwg.mxu0
  %3864 = vmatprep.subr.mxu0 0.0
  %v3865 = vand.u32 %v2562, 4294901760
  %v3866 = vsub.f32 %v2562, %v3865
  %3867 = vmatpush1.msra.mxu0 %v3866
  %3868 = vmatprep.subr.mxu0 0.0
  %v3869 = vand.u32 %v2563, 4294901760
  %v3870 = vsub.f32 %v2563, %v3869
  %3871 = vmatpush1.msra.mxu0 %v3870
  %3872 = vmatprep.subr.mxu0 0.0
  %v3873 = vand.u32 %v2564, 4294901760
  %v3874 = vsub.f32 %v2564, %v3873
  %3875 = vmatpush1.msra.mxu0 %v3874
  %3876 = vmatprep.subr.mxu0 0.0
  %v3877 = vand.u32 %v2565, 4294901760
  %v3878 = vsub.f32 %v2565, %v3877
  %3879 = vmatpush1.msra.mxu0 %v3878
  %3880 = vmatprep.subr.mxu0 0.0
  %v3881 = vand.u32 %v2566, 4294901760
  %v3882 = vsub.f32 %v2566, %v3881
  %3883 = vmatpush1.msra.mxu0 %v3882
  %3884 = vmatprep.subr.mxu0 0.0
  %v3885 = vand.u32 %v2567, 4294901760
  %v3886 = vsub.f32 %v2567, %v3885
  %3887 = vmatpush1.msra.mxu0 %v3886
  %3888 = vmatprep.subr.mxu0 0.0
  %v3889 = vand.u32 %v2568, 4294901760
  %v3890 = vsub.f32 %v2568, %v3889
  %3891 = vmatpush1.msra.mxu0 %v3890
  %3892 = vmatprep.subr.mxu0 0.0
  %v3893 = vand.u32 %v2569, 4294901760
  %v3894 = vsub.f32 %v2569, %v3893
  %3895 = vmatpush1.msra.mxu0 %v3894
  %3896 = vmatprep.subr.mxu0 0.0
  %v3897 = vand.u32 %v2570, 4294901760
  %v3898 = vsub.f32 %v2570, %v3897
  %3899 = vmatpush1.msra.mxu0 %v3898
  %3900 = vmatprep.subr.mxu0 0.0
  %v3901 = vand.u32 %v2571, 4294901760
  %v3902 = vsub.f32 %v2571, %v3901
  %3903 = vmatpush1.msra.mxu0 %v3902
  %3904 = vmatprep.subr.mxu0 0.0
  %v3905 = vand.u32 %v2572, 4294901760
  %v3906 = vsub.f32 %v2572, %v3905
  %3907 = vmatpush1.msra.mxu0 %v3906
  %3908 = vmatprep.subr.mxu0 0.0
  %v3909 = vand.u32 %v2573, 4294901760
  %v3910 = vsub.f32 %v2573, %v3909
  %3911 = vmatpush1.msra.mxu0 %v3910
  %3912 = vmatprep.subr.mxu0 0.0
  %v3913 = vand.u32 %v2574, 4294901760
  %v3914 = vsub.f32 %v2574, %v3913
  %3915 = vmatpush1.msra.mxu0 %v3914
  %3916 = vmatprep.subr.mxu0 0.0
  %v3917 = vand.u32 %v2575, 4294901760
  %v3918 = vsub.f32 %v2575, %v3917
  %3919 = vmatpush1.msra.mxu0 %v3918
  %3920 = vmatprep.subr.mxu0 0.0
  %v3921 = vand.u32 %v2576, 4294901760
  %v3922 = vsub.f32 %v2576, %v3921
  %3923 = vmatpush1.msra.mxu0 %v3922
  %3924 = vmatprep.subr.mxu0 0.0
  %v3925 = vand.u32 %v2577, 4294901760
  %v3926 = vsub.f32 %v2577, %v3925
  %3927 = vmatpush1.msra.mxu0 %v3926
  %3928 = vmatprep.subr.mxu0 0.0
  %v3929 = vand.u32 %v2578, 4294901760
  %v3930 = vsub.f32 %v2578, %v3929
  %3931 = vmatpush1.msra.mxu0 %v3930
  %3932 = vmatprep.subr.mxu0 0.0
  %v3933 = vand.u32 %v2579, 4294901760
  %v3934 = vsub.f32 %v2579, %v3933
  %3935 = vmatpush1.msra.mxu0 %v3934
  %3936 = vmatprep.subr.mxu0 0.0
  %v3937 = vand.u32 %v2580, 4294901760
  %v3938 = vsub.f32 %v2580, %v3937
  %3939 = vmatpush1.msra.mxu0 %v3938
  %3940 = vmatprep.subr.mxu0 0.0
  %v3941 = vand.u32 %v2581, 4294901760
  %v3942 = vsub.f32 %v2581, %v3941
  %3943 = vmatpush1.msra.mxu0 %v3942
  %3944 = vmatprep.subr.mxu0 0.0
  %v3945 = vand.u32 %v2582, 4294901760
  %v3946 = vsub.f32 %v2582, %v3945
  %3947 = vmatpush1.msra.mxu0 %v3946
  %3948 = vmatprep.subr.mxu0 0.0
  %v3949 = vand.u32 %v2583, 4294901760
  %v3950 = vsub.f32 %v2583, %v3949
  %3951 = vmatpush1.msra.mxu0 %v3950
  %3952 = vmatprep.subr.mxu0 0.0
  %v3953 = vand.u32 %v2584, 4294901760
  %v3954 = vsub.f32 %v2584, %v3953
  %3955 = vmatpush1.msra.mxu0 %v3954
  %3956 = vmatprep.subr.mxu0 0.0
  %v3957 = vand.u32 %v2585, 4294901760
  %v3958 = vsub.f32 %v2585, %v3957
  %3959 = vmatpush1.msra.mxu0 %v3958
  %3960 = vmatprep.subr.mxu0 0.0
  %v3961 = vand.u32 %v2586, 4294901760
  %v3962 = vsub.f32 %v2586, %v3961
  %3963 = vmatpush1.msra.mxu0 %v3962
  %3964 = vmatprep.subr.mxu0 0.0
  %v3965 = vand.u32 %v2587, 4294901760
  %v3966 = vsub.f32 %v2587, %v3965
  %3967 = vmatpush1.msra.mxu0 %v3966
  %3968 = vmatprep.subr.mxu0 0.0
  %v3969 = vand.u32 %v2588, 4294901760
  %v3970 = vsub.f32 %v2588, %v3969
  %3971 = vmatpush1.msra.mxu0 %v3970
  %3972 = vmatprep.subr.mxu0 0.0
  %v3973 = vand.u32 %v2589, 4294901760
  %v3974 = vsub.f32 %v2589, %v3973
  %3975 = vmatpush1.msra.mxu0 %v3974
  %3976 = vmatprep.subr.mxu0 0.0
  %v3977 = vand.u32 %v2590, 4294901760
  %v3978 = vsub.f32 %v2590, %v3977
  %3979 = vmatpush1.msra.mxu0 %v3978
  %3980 = vmatprep.subr.mxu0 0.0
  %v3981 = vand.u32 %v2591, 4294901760
  %v3982 = vsub.f32 %v2591, %v3981
  %3983 = vmatpush1.msra.mxu0 %v3982
  %3984 = vmatprep.subr.mxu0 0.0
  %v3985 = vand.u32 %v2592, 4294901760
  %v3986 = vsub.f32 %v2592, %v3985
  %3987 = vmatpush1.msra.mxu0 %v3986
  %3988 = vmatprep.subr.mxu0 0.0
  %v3989 = vand.u32 %v2593, 4294901760
  %v3990 = vsub.f32 %v2593, %v3989
  %3991 = vmatpush1.msra.mxu0 %v3990
  %v3992 = vand.u32 %v2525, 4294901760
  %v3993 = vsub.f32 %v2525, %v3992
  %3994 = vmatprep.mubr.f32.mxu0 %v3993
  %v3995 = vand.u32 %v2524, 4294901760
  %v3996 = vsub.f32 %v2524, %v3995
  %3997 = vmatmul.mubr.f32.gmra.mrb[0].mxu0 %v3996
  %v3998 = vpop.f32.mrb[0].mxu0
  %v3999 = vadd.f32 %v3861, %v3998
  %v4000 = vpop.f32.mrb[0].mxu0
  %4001 = vdwg.mxu0
  %4002 = vmatprep.subr.mxu0 0.0
  %v4003 = vand.u32 %v2562, 4294901760
  %4004 = vmatpush1.msra.mxu0 %v4003
  %4005 = vmatprep.subr.mxu0 0.0
  %v4006 = vand.u32 %v2563, 4294901760
  %4007 = vmatpush1.msra.mxu0 %v4006
  %4008 = vmatprep.subr.mxu0 0.0
  %v4009 = vand.u32 %v2564, 4294901760
  %4010 = vmatpush1.msra.mxu0 %v4009
  %4011 = vmatprep.subr.mxu0 0.0
  %v4012 = vand.u32 %v2565, 4294901760
  %4013 = vmatpush1.msra.mxu0 %v4012
  %4014 = vmatprep.subr.mxu0 0.0
  %v4015 = vand.u32 %v2566, 4294901760
  %4016 = vmatpush1.msra.mxu0 %v4015
  %4017 = vmatprep.subr.mxu0 0.0
  %v4018 = vand.u32 %v2567, 4294901760
  %4019 = vmatpush1.msra.mxu0 %v4018
  %4020 = vmatprep.subr.mxu0 0.0
  %v4021 = vand.u32 %v2568, 4294901760
  %4022 = vmatpush1.msra.mxu0 %v4021
  %4023 = vmatprep.subr.mxu0 0.0
  %v4024 = vand.u32 %v2569, 4294901760
  %4025 = vmatpush1.msra.mxu0 %v4024
  %4026 = vmatprep.subr.mxu0 0.0
  %v4027 = vand.u32 %v2570, 4294901760
  %4028 = vmatpush1.msra.mxu0 %v4027
  %4029 = vmatprep.subr.mxu0 0.0
  %v4030 = vand.u32 %v2571, 4294901760
  %4031 = vmatpush1.msra.mxu0 %v4030
  %4032 = vmatprep.subr.mxu0 0.0
  %v4033 = vand.u32 %v2572, 4294901760
  %4034 = vmatpush1.msra.mxu0 %v4033
  %4035 = vmatprep.subr.mxu0 0.0
  %v4036 = vand.u32 %v2573, 4294901760
  %4037 = vmatpush1.msra.mxu0 %v4036
  %4038 = vmatprep.subr.mxu0 0.0
  %v4039 = vand.u32 %v2574, 4294901760
  %4040 = vmatpush1.msra.mxu0 %v4039
  %4041 = vmatprep.subr.mxu0 0.0
  %v4042 = vand.u32 %v2575, 4294901760
  %4043 = vmatpush1.msra.mxu0 %v4042
  %4044 = vmatprep.subr.mxu0 0.0
  %v4045 = vand.u32 %v2576, 4294901760
  %4046 = vmatpush1.msra.mxu0 %v4045
  %4047 = vmatprep.subr.mxu0 0.0
  %v4048 = vand.u32 %v2577, 4294901760
  %4049 = vmatpush1.msra.mxu0 %v4048
  %4050 = vmatprep.subr.mxu0 0.0
  %v4051 = vand.u32 %v2578, 4294901760
  %4052 = vmatpush1.msra.mxu0 %v4051
  %4053 = vmatprep.subr.mxu0 0.0
  %v4054 = vand.u32 %v2579, 4294901760
  %4055 = vmatpush1.msra.mxu0 %v4054
  %4056 = vmatprep.subr.mxu0 0.0
  %v4057 = vand.u32 %v2580, 4294901760
  %4058 = vmatpush1.msra.mxu0 %v4057
  %4059 = vmatprep.subr.mxu0 0.0
  %v4060 = vand.u32 %v2581, 4294901760
  %4061 = vmatpush1.msra.mxu0 %v4060
  %4062 = vmatprep.subr.mxu0 0.0
  %v4063 = vand.u32 %v2582, 4294901760
  %4064 = vmatpush1.msra.mxu0 %v4063
  %4065 = vmatprep.subr.mxu0 0.0
  %v4066 = vand.u32 %v2583, 4294901760
  %4067 = vmatpush1.msra.mxu0 %v4066
  %4068 = vmatprep.subr.mxu0 0.0
  %v4069 = vand.u32 %v2584, 4294901760
  %4070 = vmatpush1.msra.mxu0 %v4069
  %4071 = vmatprep.subr.mxu0 0.0
  %v4072 = vand.u32 %v2585, 4294901760
  %4073 = vmatpush1.msra.mxu0 %v4072
  %4074 = vmatprep.subr.mxu0 0.0
  %v4075 = vand.u32 %v2586, 4294901760
  %4076 = vmatpush1.msra.mxu0 %v4075
  %4077 = vmatprep.subr.mxu0 0.0
  %v4078 = vand.u32 %v2587, 4294901760
  %4079 = vmatpush1.msra.mxu0 %v4078
  %4080 = vmatprep.subr.mxu0 0.0
  %v4081 = vand.u32 %v2588, 4294901760
  %4082 = vmatpush1.msra.mxu0 %v4081
  %4083 = vmatprep.subr.mxu0 0.0
  %v4084 = vand.u32 %v2589, 4294901760
  %4085 = vmatpush1.msra.mxu0 %v4084
  %4086 = vmatprep.subr.mxu0 0.0
  %v4087 = vand.u32 %v2590, 4294901760
  %4088 = vmatpush1.msra.mxu0 %v4087
  %4089 = vmatprep.subr.mxu0 0.0
  %v4090 = vand.u32 %v2591, 4294901760
  %4091 = vmatpush1.msra.mxu0 %v4090
  %4092 = vmatprep.subr.mxu0 0.0
  %v4093 = vand.u32 %v2592, 4294901760
  %4094 = vmatpush1.msra.mxu0 %v4093
  %4095 = vmatprep.subr.mxu0 0.0
  %v4096 = vand.u32 %v2593, 4294901760
  %4097 = vmatpush1.msra.mxu0 %v4096
  %v4098 = vand.u32 %v2525, 4294901760
  %v4099 = vsub.f32 %v2525, %v4098
  %v4100 = vand.u32 %v4099, 4294901760
  %4101 = vmatprep.mubr.f32.mxu0 %v4100
  %v4102 = vand.u32 %v2524, 4294901760
  %v4103 = vsub.f32 %v2524, %v4102
  %v4104 = vand.u32 %v4103, 4294901760
  %4105 = vmatmul.mubr.f32.gmra.mrb[0].mxu0 %v4104
  %v4106 = vpop.f32.mrb[0].mxu0
  %v4107 = vadd.f32 %v3999, %v4106
  %v4108 = vpop.f32.mrb[0].mxu0
  %4109 = vdwg.mxu0
  %4110 = vmatprep.subr.mxu0 0.0
  %v4111 = vand.u32 %v2562, 4294901760
  %v4112 = vsub.f32 %v2562, %v4111
  %v4113 = vand.u32 %v4112, 4294901760
  %4114 = vmatpush1.msra.mxu0 %v4113
  %4115 = vmatprep.subr.mxu0 0.0
  %v4116 = vand.u32 %v2563, 4294901760
  %v4117 = vsub.f32 %v2563, %v4116
  %v4118 = vand.u32 %v4117, 4294901760
  %4119 = vmatpush1.msra.mxu0 %v4118
  %4120 = vmatprep.subr.mxu0 0.0
  %v4121 = vand.u32 %v2564, 4294901760
  %v4122 = vsub.f32 %v2564, %v4121
  %v4123 = vand.u32 %v4122, 4294901760
  %4124 = vmatpush1.msra.mxu0 %v4123
  %4125 = vmatprep.subr.mxu0 0.0
  %v4126 = vand.u32 %v2565, 4294901760
  %v4127 = vsub.f32 %v2565, %v4126
  %v4128 = vand.u32 %v4127, 4294901760
  %4129 = vmatpush1.msra.mxu0 %v4128
  %4130 = vmatprep.subr.mxu0 0.0
  %v4131 = vand.u32 %v2566, 4294901760
  %v4132 = vsub.f32 %v2566, %v4131
  %v4133 = vand.u32 %v4132, 4294901760
  %4134 = vmatpush1.msra.mxu0 %v4133
  %4135 = vmatprep.subr.mxu0 0.0
  %v4136 = vand.u32 %v2567, 4294901760
  %v4137 = vsub.f32 %v2567, %v4136
  %v4138 = vand.u32 %v4137, 4294901760
  %4139 = vmatpush1.msra.mxu0 %v4138
  %4140 = vmatprep.subr.mxu0 0.0
  %v4141 = vand.u32 %v2568, 4294901760
  %v4142 = vsub.f32 %v2568, %v4141
  %v4143 = vand.u32 %v4142, 4294901760
  %4144 = vmatpush1.msra.mxu0 %v4143
  %4145 = vmatprep.subr.mxu0 0.0
  %v4146 = vand.u32 %v2569, 4294901760
  %v4147 = vsub.f32 %v2569, %v4146
  %v4148 = vand.u32 %v4147, 4294901760
  %4149 = vmatpush1.msra.mxu0 %v4148
  %4150 = vmatprep.subr.mxu0 0.0
  %v4151 = vand.u32 %v2570, 4294901760
  %v4152 = vsub.f32 %v2570, %v4151
  %v4153 = vand.u32 %v4152, 4294901760
  %4154 = vmatpush1.msra.mxu0 %v4153
  %4155 = vmatprep.subr.mxu0 0.0
  %v4156 = vand.u32 %v2571, 4294901760
  %v4157 = vsub.f32 %v2571, %v4156
  %v4158 = vand.u32 %v4157, 4294901760
  %4159 = vmatpush1.msra.mxu0 %v4158
  %4160 = vmatprep.subr.mxu0 0.0
  %v4161 = vand.u32 %v2572, 4294901760
  %v4162 = vsub.f32 %v2572, %v4161
  %v4163 = vand.u32 %v4162, 4294901760
  %4164 = vmatpush1.msra.mxu0 %v4163
  %4165 = vmatprep.subr.mxu0 0.0
  %v4166 = vand.u32 %v2573, 4294901760
  %v4167 = vsub.f32 %v2573, %v4166
  %v4168 = vand.u32 %v4167, 4294901760
  %4169 = vmatpush1.msra.mxu0 %v4168
  %4170 = vmatprep.subr.mxu0 0.0
  %v4171 = vand.u32 %v2574, 4294901760
  %v4172 = vsub.f32 %v2574, %v4171
  %v4173 = vand.u32 %v4172, 4294901760
  %4174 = vmatpush1.msra.mxu0 %v4173
  %4175 = vmatprep.subr.mxu0 0.0
  %v4176 = vand.u32 %v2575, 4294901760
  %v4177 = vsub.f32 %v2575, %v4176
  %v4178 = vand.u32 %v4177, 4294901760
  %4179 = vmatpush1.msra.mxu0 %v4178
  %4180 = vmatprep.subr.mxu0 0.0
  %v4181 = vand.u32 %v2576, 4294901760
  %v4182 = vsub.f32 %v2576, %v4181
  %v4183 = vand.u32 %v4182, 4294901760
  %4184 = vmatpush1.msra.mxu0 %v4183
  %4185 = vmatprep.subr.mxu0 0.0
  %v4186 = vand.u32 %v2577, 4294901760
  %v4187 = vsub.f32 %v2577, %v4186
  %v4188 = vand.u32 %v4187, 4294901760
  %4189 = vmatpush1.msra.mxu0 %v4188
  %4190 = vmatprep.subr.mxu0 0.0
  %v4191 = vand.u32 %v2578, 4294901760
  %v4192 = vsub.f32 %v2578, %v4191
  %v4193 = vand.u32 %v4192, 4294901760
  %4194 = vmatpush1.msra.mxu0 %v4193
  %4195 = vmatprep.subr.mxu0 0.0
  %v4196 = vand.u32 %v2579, 4294901760
  %v4197 = vsub.f32 %v2579, %v4196
  %v4198 = vand.u32 %v4197, 4294901760
  %4199 = vmatpush1.msra.mxu0 %v4198
  %4200 = vmatprep.subr.mxu0 0.0
  %v4201 = vand.u32 %v2580, 4294901760
  %v4202 = vsub.f32 %v2580, %v4201
  %v4203 = vand.u32 %v4202, 4294901760
  %4204 = vmatpush1.msra.mxu0 %v4203
  %4205 = vmatprep.subr.mxu0 0.0
  %v4206 = vand.u32 %v2581, 4294901760
  %v4207 = vsub.f32 %v2581, %v4206
  %v4208 = vand.u32 %v4207, 4294901760
  %4209 = vmatpush1.msra.mxu0 %v4208
  %4210 = vmatprep.subr.mxu0 0.0
  %v4211 = vand.u32 %v2582, 4294901760
  %v4212 = vsub.f32 %v2582, %v4211
  %v4213 = vand.u32 %v4212, 4294901760
  %4214 = vmatpush1.msra.mxu0 %v4213
  %4215 = vmatprep.subr.mxu0 0.0
  %v4216 = vand.u32 %v2583, 4294901760
  %v4217 = vsub.f32 %v2583, %v4216
  %v4218 = vand.u32 %v4217, 4294901760
  %4219 = vmatpush1.msra.mxu0 %v4218
  %4220 = vmatprep.subr.mxu0 0.0
  %v4221 = vand.u32 %v2584, 4294901760
  %v4222 = vsub.f32 %v2584, %v4221
  %v4223 = vand.u32 %v4222, 4294901760
  %4224 = vmatpush1.msra.mxu0 %v4223
  %4225 = vmatprep.subr.mxu0 0.0
  %v4226 = vand.u32 %v2585, 4294901760
  %v4227 = vsub.f32 %v2585, %v4226
  %v4228 = vand.u32 %v4227, 4294901760
  %4229 = vmatpush1.msra.mxu0 %v4228
  %4230 = vmatprep.subr.mxu0 0.0
  %v4231 = vand.u32 %v2586, 4294901760
  %v4232 = vsub.f32 %v2586, %v4231
  %v4233 = vand.u32 %v4232, 4294901760
  %4234 = vmatpush1.msra.mxu0 %v4233
  %4235 = vmatprep.subr.mxu0 0.0
  %v4236 = vand.u32 %v2587, 4294901760
  %v4237 = vsub.f32 %v2587, %v4236
  %v4238 = vand.u32 %v4237, 4294901760
  %4239 = vmatpush1.msra.mxu0 %v4238
  %4240 = vmatprep.subr.mxu0 0.0
  %v4241 = vand.u32 %v2588, 4294901760
  %v4242 = vsub.f32 %v2588, %v4241
  %v4243 = vand.u32 %v4242, 4294901760
  %4244 = vmatpush1.msra.mxu0 %v4243
  %4245 = vmatprep.subr.mxu0 0.0
  %v4246 = vand.u32 %v2589, 4294901760
  %v4247 = vsub.f32 %v2589, %v4246
  %v4248 = vand.u32 %v4247, 4294901760
  %4249 = vmatpush1.msra.mxu0 %v4248
  %4250 = vmatprep.subr.mxu0 0.0
  %v4251 = vand.u32 %v2590, 4294901760
  %v4252 = vsub.f32 %v2590, %v4251
  %v4253 = vand.u32 %v4252, 4294901760
  %4254 = vmatpush1.msra.mxu0 %v4253
  %4255 = vmatprep.subr.mxu0 0.0
  %v4256 = vand.u32 %v2591, 4294901760
  %v4257 = vsub.f32 %v2591, %v4256
  %v4258 = vand.u32 %v4257, 4294901760
  %4259 = vmatpush1.msra.mxu0 %v4258
  %4260 = vmatprep.subr.mxu0 0.0
  %v4261 = vand.u32 %v2592, 4294901760
  %v4262 = vsub.f32 %v2592, %v4261
  %v4263 = vand.u32 %v4262, 4294901760
  %4264 = vmatpush1.msra.mxu0 %v4263
  %4265 = vmatprep.subr.mxu0 0.0
  %v4266 = vand.u32 %v2593, 4294901760
  %v4267 = vsub.f32 %v2593, %v4266
  %v4268 = vand.u32 %v4267, 4294901760
  %4269 = vmatpush1.msra.mxu0 %v4268
  %v4270 = vand.u32 %v2525, 4294901760
  %4271 = vmatprep.mubr.f32.mxu0 %v4270
  %v4272 = vand.u32 %v2524, 4294901760
  %4273 = vmatmul.mubr.f32.gmra.mrb[0].mxu0 %v4272
  %v4274 = vpop.f32.mrb[0].mxu0
  %v4275 = vadd.f32 %v4107, %v4274
  %v4276 = vpop.f32.mrb[0].mxu0
  %4277 = vdwg.mxu0
  %4278 = vmatprep.subr.mxu0 0.0
  %v4279 = vand.u32 %v2562, 4294901760
  %4280 = vmatpush1.msra.mxu0 %v4279
  %4281 = vmatprep.subr.mxu0 0.0
  %v4282 = vand.u32 %v2563, 4294901760
  %4283 = vmatpush1.msra.mxu0 %v4282
  %4284 = vmatprep.subr.mxu0 0.0
  %v4285 = vand.u32 %v2564, 4294901760
  %4286 = vmatpush1.msra.mxu0 %v4285
  %4287 = vmatprep.subr.mxu0 0.0
  %v4288 = vand.u32 %v2565, 4294901760
  %4289 = vmatpush1.msra.mxu0 %v4288
  %4290 = vmatprep.subr.mxu0 0.0
  %v4291 = vand.u32 %v2566, 4294901760
  %4292 = vmatpush1.msra.mxu0 %v4291
  %4293 = vmatprep.subr.mxu0 0.0
  %v4294 = vand.u32 %v2567, 4294901760
  %4295 = vmatpush1.msra.mxu0 %v4294
  %4296 = vmatprep.subr.mxu0 0.0
  %v4297 = vand.u32 %v2568, 4294901760
  %4298 = vmatpush1.msra.mxu0 %v4297
  %4299 = vmatprep.subr.mxu0 0.0
  %v4300 = vand.u32 %v2569, 4294901760
  %4301 = vmatpush1.msra.mxu0 %v4300
  %4302 = vmatprep.subr.mxu0 0.0
  %v4303 = vand.u32 %v2570, 4294901760
  %4304 = vmatpush1.msra.mxu0 %v4303
  %4305 = vmatprep.subr.mxu0 0.0
  %v4306 = vand.u32 %v2571, 4294901760
  %4307 = vmatpush1.msra.mxu0 %v4306
  %4308 = vmatprep.subr.mxu0 0.0
  %v4309 = vand.u32 %v2572, 4294901760
  %4310 = vmatpush1.msra.mxu0 %v4309
  %4311 = vmatprep.subr.mxu0 0.0
  %v4312 = vand.u32 %v2573, 4294901760
  %4313 = vmatpush1.msra.mxu0 %v4312
  %4314 = vmatprep.subr.mxu0 0.0
  %v4315 = vand.u32 %v2574, 4294901760
  %4316 = vmatpush1.msra.mxu0 %v4315
  %4317 = vmatprep.subr.mxu0 0.0
  %v4318 = vand.u32 %v2575, 4294901760
  %4319 = vmatpush1.msra.mxu0 %v4318
  %4320 = vmatprep.subr.mxu0 0.0
  %v4321 = vand.u32 %v2576, 4294901760
  %4322 = vmatpush1.msra.mxu0 %v4321
  %4323 = vmatprep.subr.mxu0 0.0
  %v4324 = vand.u32 %v2577, 4294901760
  %4325 = vmatpush1.msra.mxu0 %v4324
  %4326 = vmatprep.subr.mxu0 0.0
  %v4327 = vand.u32 %v2578, 4294901760
  %4328 = vmatpush1.msra.mxu0 %v4327
  %4329 = vmatprep.subr.mxu0 0.0
  %v4330 = vand.u32 %v2579, 4294901760
  %4331 = vmatpush1.msra.mxu0 %v4330
  %4332 = vmatprep.subr.mxu0 0.0
  %v4333 = vand.u32 %v2580, 4294901760
  %4334 = vmatpush1.msra.mxu0 %v4333
  %4335 = vmatprep.subr.mxu0 0.0
  %v4336 = vand.u32 %v2581, 4294901760
  %4337 = vmatpush1.msra.mxu0 %v4336
  %4338 = vmatprep.subr.mxu0 0.0
  %v4339 = vand.u32 %v2582, 4294901760
  %4340 = vmatpush1.msra.mxu0 %v4339
  %4341 = vmatprep.subr.mxu0 0.0
  %v4342 = vand.u32 %v2583, 4294901760
  %4343 = vmatpush1.msra.mxu0 %v4342
  %4344 = vmatprep.subr.mxu0 0.0
  %v4345 = vand.u32 %v2584, 4294901760
  %4346 = vmatpush1.msra.mxu0 %v4345
  %4347 = vmatprep.subr.mxu0 0.0
  %v4348 = vand.u32 %v2585, 4294901760
  %4349 = vmatpush1.msra.mxu0 %v4348
  %4350 = vmatprep.subr.mxu0 0.0
  %v4351 = vand.u32 %v2586, 4294901760
  %4352 = vmatpush1.msra.mxu0 %v4351
  %4353 = vmatprep.subr.mxu0 0.0
  %v4354 = vand.u32 %v2587, 4294901760
  %4355 = vmatpush1.msra.mxu0 %v4354
  %4356 = vmatprep.subr.mxu0 0.0
  %v4357 = vand.u32 %v2588, 4294901760
  %4358 = vmatpush1.msra.mxu0 %v4357
  %4359 = vmatprep.subr.mxu0 0.0
  %v4360 = vand.u32 %v2589, 4294901760
  %4361 = vmatpush1.msra.mxu0 %v4360
  %4362 = vmatprep.subr.mxu0 0.0
  %v4363 = vand.u32 %v2590, 4294901760
  %4364 = vmatpush1.msra.mxu0 %v4363
  %4365 = vmatprep.subr.mxu0 0.0
  %v4366 = vand.u32 %v2591, 4294901760
  %4367 = vmatpush1.msra.mxu0 %v4366
  %4368 = vmatprep.subr.mxu0 0.0
  %v4369 = vand.u32 %v2592, 4294901760
  %4370 = vmatpush1.msra.mxu0 %v4369
  %4371 = vmatprep.subr.mxu0 0.0
  %v4372 = vand.u32 %v2593, 4294901760
  %4373 = vmatpush1.msra.mxu0 %v4372
  %v4374 = vand.u32 %v2525, 4294901760
  %4375 = vmatprep.mubr.f32.mxu0 %v4374
  %v4376 = vand.u32 %v2524, 4294901760
  %4377 = vmatmul.mubr.f32.gmra.mrb[0].mxu0 %v4376
  %v4378 = vpop.f32.mrb[0].mxu0
  %v4379 = vadd.f32 %v4275, %v4378
  %v4380 = vpop.f32.mrb[0].mxu0
  %4381 = vdwg.mxu0
  %4382 = vmatprep.subr.mxu0 0.0
  %v4383 = vand.u32 %v2594, 4294901760
  %4384 = vmatpush1.msra.mxu0 %v4383
  %4385 = vmatprep.subr.mxu0 0.0
  %v4386 = vand.u32 %v2595, 4294901760
  %4387 = vmatpush1.msra.mxu0 %v4386
  %4388 = vmatprep.subr.mxu0 0.0
  %v4389 = vand.u32 %v2596, 4294901760
  %4390 = vmatpush1.msra.mxu0 %v4389
  %4391 = vmatprep.subr.mxu0 0.0
  %v4392 = vand.u32 %v2597, 4294901760
  %4393 = vmatpush1.msra.mxu0 %v4392
  %4394 = vmatprep.subr.mxu0 0.0
  %v4395 = vand.u32 %v2598, 4294901760
  %4396 = vmatpush1.msra.mxu0 %v4395
  %4397 = vmatprep.subr.mxu0 0.0
  %v4398 = vand.u32 %v2599, 4294901760
  %4399 = vmatpush1.msra.mxu0 %v4398
  %4400 = vmatprep.subr.mxu0 0.0
  %v4401 = vand.u32 %v2600, 4294901760
  %4402 = vmatpush1.msra.mxu0 %v4401
  %4403 = vmatprep.subr.mxu0 0.0
  %v4404 = vand.u32 %v2601, 4294901760
  %4405 = vmatpush1.msra.mxu0 %v4404
  %4406 = vmatprep.subr.mxu0 0.0
  %v4407 = vand.u32 %v2602, 4294901760
  %4408 = vmatpush1.msra.mxu0 %v4407
  %4409 = vmatprep.subr.mxu0 0.0
  %v4410 = vand.u32 %v2603, 4294901760
  %4411 = vmatpush1.msra.mxu0 %v4410
  %4412 = vmatprep.subr.mxu0 0.0
  %v4413 = vand.u32 %v2604, 4294901760
  %4414 = vmatpush1.msra.mxu0 %v4413
  %4415 = vmatprep.subr.mxu0 0.0
  %v4416 = vand.u32 %v2605, 4294901760
  %4417 = vmatpush1.msra.mxu0 %v4416
  %4418 = vmatprep.subr.mxu0 0.0
  %v4419 = vand.u32 %v2606, 4294901760
  %4420 = vmatpush1.msra.mxu0 %v4419
  %4421 = vmatprep.subr.mxu0 0.0
  %v4422 = vand.u32 %v2607, 4294901760
  %4423 = vmatpush1.msra.mxu0 %v4422
  %4424 = vmatprep.subr.mxu0 0.0
  %v4425 = vand.u32 %v2608, 4294901760
  %4426 = vmatpush1.msra.mxu0 %v4425
  %4427 = vmatprep.subr.mxu0 0.0
  %v4428 = vand.u32 %v2609, 4294901760
  %4429 = vmatpush1.msra.mxu0 %v4428
  %4430 = vmatprep.subr.mxu0 0.0
  %v4431 = vand.u32 %v2610, 4294901760
  %4432 = vmatpush1.msra.mxu0 %v4431
  %4433 = vmatprep.subr.mxu0 0.0
  %v4434 = vand.u32 %v2611, 4294901760
  %4435 = vmatpush1.msra.mxu0 %v4434
  %4436 = vmatprep.subr.mxu0 0.0
  %v4437 = vand.u32 %v2612, 4294901760
  %4438 = vmatpush1.msra.mxu0 %v4437
  %4439 = vmatprep.subr.mxu0 0.0
  %v4440 = vand.u32 %v2613, 4294901760
  %4441 = vmatpush1.msra.mxu0 %v4440
  %4442 = vmatprep.subr.mxu0 0.0
  %v4443 = vand.u32 %v2614, 4294901760
  %4444 = vmatpush1.msra.mxu0 %v4443
  %4445 = vmatprep.subr.mxu0 0.0
  %v4446 = vand.u32 %v2615, 4294901760
  %4447 = vmatpush1.msra.mxu0 %v4446
  %4448 = vmatprep.subr.mxu0 0.0
  %v4449 = vand.u32 %v2616, 4294901760
  %4450 = vmatpush1.msra.mxu0 %v4449
  %4451 = vmatprep.subr.mxu0 0.0
  %v4452 = vand.u32 %v2617, 4294901760
  %4453 = vmatpush1.msra.mxu0 %v4452
  %4454 = vmatprep.subr.mxu0 0.0
  %v4455 = vand.u32 %v2618, 4294901760
  %4456 = vmatpush1.msra.mxu0 %v4455
  %4457 = vmatprep.subr.mxu0 0.0
  %v4458 = vand.u32 %v2619, 4294901760
  %4459 = vmatpush1.msra.mxu0 %v4458
  %4460 = vmatprep.subr.mxu0 0.0
  %v4461 = vand.u32 %v2620, 4294901760
  %4462 = vmatpush1.msra.mxu0 %v4461
  %4463 = vmatprep.subr.mxu0 0.0
  %v4464 = vand.u32 %v2621, 4294901760
  %4465 = vmatpush1.msra.mxu0 %v4464
  %4466 = vmatprep.subr.mxu0 0.0
  %v4467 = vand.u32 %v2622, 4294901760
  %4468 = vmatpush1.msra.mxu0 %v4467
  %4469 = vmatprep.subr.mxu0 0.0
  %v4470 = vand.u32 %v2623, 4294901760
  %4471 = vmatpush1.msra.mxu0 %v4470
  %4472 = vmatprep.subr.mxu0 0.0
  %v4473 = vand.u32 %v2624, 4294901760
  %4474 = vmatpush1.msra.mxu0 %v4473
  %4475 = vmatprep.subr.mxu0 0.0
  %v4476 = vand.u32 %v2625, 4294901760
  %4477 = vmatpush1.msra.mxu0 %v4476
  %v4478 = vand.u32 %v2527, 4294901760
  %v4479 = vsub.f32 %v2527, %v4478
  %v4480 = vand.u32 %v4479, 4294901760
  %v4481 = vsub.f32 %v4479, %v4480
  %v4482 = vand.u32 %v4481, 4294901760
  %4483 = vmatprep.mubr.f32.mxu0 %v4482
  %v4484 = vand.u32 %v2526, 4294901760
  %v4485 = vsub.f32 %v2526, %v4484
  %v4486 = vand.u32 %v4485, 4294901760
  %v4487 = vsub.f32 %v4485, %v4486
  %v4488 = vand.u32 %v4487, 4294901760
  %4489 = vmatmul.mubr.f32.gmra.mrb[0].mxu0 %v4488
  %v4490 = vpop.f32.mrb[0].mxu0
  %v4491 = vadd.f32 %v4379, %v4490
  %v4492 = vpop.f32.mrb[0].mxu0
  %4493 = vdwg.mxu0
  %4494 = vmatprep.subr.mxu0 0.0
  %v4495 = vand.u32 %v2594, 4294901760
  %v4496 = vsub.f32 %v2594, %v4495
  %v4497 = vand.u32 %v4496, 4294901760
  %v4498 = vsub.f32 %v4496, %v4497
  %v4499 = vand.u32 %v4498, 4294901760
  %4500 = vmatpush1.msra.mxu0 %v4499
  %4501 = vmatprep.subr.mxu0 0.0
  %v4502 = vand.u32 %v2595, 4294901760
  %v4503 = vsub.f32 %v2595, %v4502
  %v4504 = vand.u32 %v4503, 4294901760
  %v4505 = vsub.f32 %v4503, %v4504
  %v4506 = vand.u32 %v4505, 4294901760
  %4507 = vmatpush1.msra.mxu0 %v4506
  %4508 = vmatprep.subr.mxu0 0.0
  %v4509 = vand.u32 %v2596, 4294901760
  %v4510 = vsub.f32 %v2596, %v4509
  %v4511 = vand.u32 %v4510, 4294901760
  %v4512 = vsub.f32 %v4510, %v4511
  %v4513 = vand.u32 %v4512, 4294901760
  %4514 = vmatpush1.msra.mxu0 %v4513
  %4515 = vmatprep.subr.mxu0 0.0
  %v4516 = vand.u32 %v2597, 4294901760
  %v4517 = vsub.f32 %v2597, %v4516
  %v4518 = vand.u32 %v4517, 4294901760
  %v4519 = vsub.f32 %v4517, %v4518
  %v4520 = vand.u32 %v4519, 4294901760
  %4521 = vmatpush1.msra.mxu0 %v4520
  %4522 = vmatprep.subr.mxu0 0.0
  %v4523 = vand.u32 %v2598, 4294901760
  %v4524 = vsub.f32 %v2598, %v4523
  %v4525 = vand.u32 %v4524, 4294901760
  %v4526 = vsub.f32 %v4524, %v4525
  %v4527 = vand.u32 %v4526, 4294901760
  %4528 = vmatpush1.msra.mxu0 %v4527
  %4529 = vmatprep.subr.mxu0 0.0
  %v4530 = vand.u32 %v2599, 4294901760
  %v4531 = vsub.f32 %v2599, %v4530
  %v4532 = vand.u32 %v4531, 4294901760
  %v4533 = vsub.f32 %v4531, %v4532
  %v4534 = vand.u32 %v4533, 4294901760
  %4535 = vmatpush1.msra.mxu0 %v4534
  %4536 = vmatprep.subr.mxu0 0.0
  %v4537 = vand.u32 %v2600, 4294901760
  %v4538 = vsub.f32 %v2600, %v4537
  %v4539 = vand.u32 %v4538, 4294901760
  %v4540 = vsub.f32 %v4538, %v4539
  %v4541 = vand.u32 %v4540, 4294901760
  %4542 = vmatpush1.msra.mxu0 %v4541
  %4543 = vmatprep.subr.mxu0 0.0
  %v4544 = vand.u32 %v2601, 4294901760
  %v4545 = vsub.f32 %v2601, %v4544
  %v4546 = vand.u32 %v4545, 4294901760
  %v4547 = vsub.f32 %v4545, %v4546
  %v4548 = vand.u32 %v4547, 4294901760
  %4549 = vmatpush1.msra.mxu0 %v4548
  %4550 = vmatprep.subr.mxu0 0.0
  %v4551 = vand.u32 %v2602, 4294901760
  %v4552 = vsub.f32 %v2602, %v4551
  %v4553 = vand.u32 %v4552, 4294901760
  %v4554 = vsub.f32 %v4552, %v4553
  %v4555 = vand.u32 %v4554, 4294901760
  %4556 = vmatpush1.msra.mxu0 %v4555
  %4557 = vmatprep.subr.mxu0 0.0
  %v4558 = vand.u32 %v2603, 4294901760
  %v4559 = vsub.f32 %v2603, %v4558
  %v4560 = vand.u32 %v4559, 4294901760
  %v4561 = vsub.f32 %v4559, %v4560
  %v4562 = vand.u32 %v4561, 4294901760
  %4563 = vmatpush1.msra.mxu0 %v4562
  %4564 = vmatprep.subr.mxu0 0.0
  %v4565 = vand.u32 %v2604, 4294901760
  %v4566 = vsub.f32 %v2604, %v4565
  %v4567 = vand.u32 %v4566, 4294901760
  %v4568 = vsub.f32 %v4566, %v4567
  %v4569 = vand.u32 %v4568, 4294901760
  %4570 = vmatpush1.msra.mxu0 %v4569
  %4571 = vmatprep.subr.mxu0 0.0
  %v4572 = vand.u32 %v2605, 4294901760
  %v4573 = vsub.f32 %v2605, %v4572
  %v4574 = vand.u32 %v4573, 4294901760
  %v4575 = vsub.f32 %v4573, %v4574
  %v4576 = vand.u32 %v4575, 4294901760
  %4577 = vmatpush1.msra.mxu0 %v4576
  %4578 = vmatprep.subr.mxu0 0.0
  %v4579 = vand.u32 %v2606, 4294901760
  %v4580 = vsub.f32 %v2606, %v4579
  %v4581 = vand.u32 %v4580, 4294901760
  %v4582 = vsub.f32 %v4580, %v4581
  %v4583 = vand.u32 %v4582, 4294901760
  %4584 = vmatpush1.msra.mxu0 %v4583
  %4585 = vmatprep.subr.mxu0 0.0
  %v4586 = vand.u32 %v2607, 4294901760
  %v4587 = vsub.f32 %v2607, %v4586
  %v4588 = vand.u32 %v4587, 4294901760
  %v4589 = vsub.f32 %v4587, %v4588
  %v4590 = vand.u32 %v4589, 4294901760
  %4591 = vmatpush1.msra.mxu0 %v4590
  %4592 = vmatprep.subr.mxu0 0.0
  %v4593 = vand.u32 %v2608, 4294901760
  %v4594 = vsub.f32 %v2608, %v4593
  %v4595 = vand.u32 %v4594, 4294901760
  %v4596 = vsub.f32 %v4594, %v4595
  %v4597 = vand.u32 %v4596, 4294901760
  %4598 = vmatpush1.msra.mxu0 %v4597
  %4599 = vmatprep.subr.mxu0 0.0
  %v4600 = vand.u32 %v2609, 4294901760
  %v4601 = vsub.f32 %v2609, %v4600
  %v4602 = vand.u32 %v4601, 4294901760
  %v4603 = vsub.f32 %v4601, %v4602
  %v4604 = vand.u32 %v4603, 4294901760
  %4605 = vmatpush1.msra.mxu0 %v4604
  %4606 = vmatprep.subr.mxu0 0.0
  %v4607 = vand.u32 %v2610, 4294901760
  %v4608 = vsub.f32 %v2610, %v4607
  %v4609 = vand.u32 %v4608, 4294901760
  %v4610 = vsub.f32 %v4608, %v4609
  %v4611 = vand.u32 %v4610, 4294901760
  %4612 = vmatpush1.msra.mxu0 %v4611
  %4613 = vmatprep.subr.mxu0 0.0
  %v4614 = vand.u32 %v2611, 4294901760
  %v4615 = vsub.f32 %v2611, %v4614
  %v4616 = vand.u32 %v4615, 4294901760
  %v4617 = vsub.f32 %v4615, %v4616
  %v4618 = vand.u32 %v4617, 4294901760
  %4619 = vmatpush1.msra.mxu0 %v4618
  %4620 = vmatprep.subr.mxu0 0.0
  %v4621 = vand.u32 %v2612, 4294901760
  %v4622 = vsub.f32 %v2612, %v4621
  %v4623 = vand.u32 %v4622, 4294901760
  %v4624 = vsub.f32 %v4622, %v4623
  %v4625 = vand.u32 %v4624, 4294901760
  %4626 = vmatpush1.msra.mxu0 %v4625
  %4627 = vmatprep.subr.mxu0 0.0
  %v4628 = vand.u32 %v2613, 4294901760
  %v4629 = vsub.f32 %v2613, %v4628
  %v4630 = vand.u32 %v4629, 4294901760
  %v4631 = vsub.f32 %v4629, %v4630
  %v4632 = vand.u32 %v4631, 4294901760
  %4633 = vmatpush1.msra.mxu0 %v4632
  %4634 = vmatprep.subr.mxu0 0.0
  %v4635 = vand.u32 %v2614, 4294901760
  %v4636 = vsub.f32 %v2614, %v4635
  %v4637 = vand.u32 %v4636, 4294901760
  %v4638 = vsub.f32 %v4636, %v4637
  %v4639 = vand.u32 %v4638, 4294901760
  %4640 = vmatpush1.msra.mxu0 %v4639
  %4641 = vmatprep.subr.mxu0 0.0
  %v4642 = vand.u32 %v2615, 4294901760
  %v4643 = vsub.f32 %v2615, %v4642
  %v4644 = vand.u32 %v4643, 4294901760
  %v4645 = vsub.f32 %v4643, %v4644
  %v4646 = vand.u32 %v4645, 4294901760
  %4647 = vmatpush1.msra.mxu0 %v4646
  %4648 = vmatprep.subr.mxu0 0.0
  %v4649 = vand.u32 %v2616, 4294901760
  %v4650 = vsub.f32 %v2616, %v4649
  %v4651 = vand.u32 %v4650, 4294901760
  %v4652 = vsub.f32 %v4650, %v4651
  %v4653 = vand.u32 %v4652, 4294901760
  %4654 = vmatpush1.msra.mxu0 %v4653
  %4655 = vmatprep.subr.mxu0 0.0
  %v4656 = vand.u32 %v2617, 4294901760
  %v4657 = vsub.f32 %v2617, %v4656
  %v4658 = vand.u32 %v4657, 4294901760
  %v4659 = vsub.f32 %v4657, %v4658
  %v4660 = vand.u32 %v4659, 4294901760
  %4661 = vmatpush1.msra.mxu0 %v4660
  %4662 = vmatprep.subr.mxu0 0.0
  %v4663 = vand.u32 %v2618, 4294901760
  %v4664 = vsub.f32 %v2618, %v4663
  %v4665 = vand.u32 %v4664, 4294901760
  %v4666 = vsub.f32 %v4664, %v4665
  %v4667 = vand.u32 %v4666, 4294901760
  %4668 = vmatpush1.msra.mxu0 %v4667
  %4669 = vmatprep.subr.mxu0 0.0
  %v4670 = vand.u32 %v2619, 4294901760
  %v4671 = vsub.f32 %v2619, %v4670
  %v4672 = vand.u32 %v4671, 4294901760
  %v4673 = vsub.f32 %v4671, %v4672
  %v4674 = vand.u32 %v4673, 4294901760
  %4675 = vmatpush1.msra.mxu0 %v4674
  %4676 = vmatprep.subr.mxu0 0.0
  %v4677 = vand.u32 %v2620, 4294901760
  %v4678 = vsub.f32 %v2620, %v4677
  %v4679 = vand.u32 %v4678, 4294901760
  %v4680 = vsub.f32 %v4678, %v4679
  %v4681 = vand.u32 %v4680, 4294901760
  %4682 = vmatpush1.msra.mxu0 %v4681
  %4683 = vmatprep.subr.mxu0 0.0
  %v4684 = vand.u32 %v2621, 4294901760
  %v4685 = vsub.f32 %v2621, %v4684
  %v4686 = vand.u32 %v4685, 4294901760
  %v4687 = vsub.f32 %v4685, %v4686
  %v4688 = vand.u32 %v4687, 4294901760
  %4689 = vmatpush1.msra.mxu0 %v4688
  %4690 = vmatprep.subr.mxu0 0.0
  %v4691 = vand.u32 %v2622, 4294901760
  %v4692 = vsub.f32 %v2622, %v4691
  %v4693 = vand.u32 %v4692, 4294901760
  %v4694 = vsub.f32 %v4692, %v4693
  %v4695 = vand.u32 %v4694, 4294901760
  %4696 = vmatpush1.msra.mxu0 %v4695
  %4697 = vmatprep.subr.mxu0 0.0
  %v4698 = vand.u32 %v2623, 4294901760
  %v4699 = vsub.f32 %v2623, %v4698
  %v4700 = vand.u32 %v4699, 4294901760
  %v4701 = vsub.f32 %v4699, %v4700
  %v4702 = vand.u32 %v4701, 4294901760
  %4703 = vmatpush1.msra.mxu0 %v4702
  %4704 = vmatprep.subr.mxu0 0.0
  %v4705 = vand.u32 %v2624, 4294901760
  %v4706 = vsub.f32 %v2624, %v4705
  %v4707 = vand.u32 %v4706, 4294901760
  %v4708 = vsub.f32 %v4706, %v4707
  %v4709 = vand.u32 %v4708, 4294901760
  %4710 = vmatpush1.msra.mxu0 %v4709
  %4711 = vmatprep.subr.mxu0 0.0
  %v4712 = vand.u32 %v2625, 4294901760
  %v4713 = vsub.f32 %v2625, %v4712
  %v4714 = vand.u32 %v4713, 4294901760
  %v4715 = vsub.f32 %v4713, %v4714
  %v4716 = vand.u32 %v4715, 4294901760
  %4717 = vmatpush1.msra.mxu0 %v4716
  %v4718 = vand.u32 %v2527, 4294901760
  %4719 = vmatprep.mubr.f32.mxu0 %v4718
  %v4720 = vand.u32 %v2526, 4294901760
  %4721 = vmatmul.mubr.f32.gmra.mrb[0].mxu0 %v4720
  %v4722 = vpop.f32.mrb[0].mxu0
  %v4723 = vadd.f32 %v4491, %v4722
  %v4724 = vpop.f32.mrb[0].mxu0
  %4725 = vdwg.mxu0
  %4726 = vmatprep.subr.mxu0 0.0
  %v4727 = vand.u32 %v2594, 4294901760
  %v4728 = vsub.f32 %v2594, %v4727
  %4729 = vmatpush1.msra.mxu0 %v4728
  %4730 = vmatprep.subr.mxu0 0.0
  %v4731 = vand.u32 %v2595, 4294901760
  %v4732 = vsub.f32 %v2595, %v4731
  %4733 = vmatpush1.msra.mxu0 %v4732
  %4734 = vmatprep.subr.mxu0 0.0
  %v4735 = vand.u32 %v2596, 4294901760
  %v4736 = vsub.f32 %v2596, %v4735
  %4737 = vmatpush1.msra.mxu0 %v4736
  %4738 = vmatprep.subr.mxu0 0.0
  %v4739 = vand.u32 %v2597, 4294901760
  %v4740 = vsub.f32 %v2597, %v4739
  %4741 = vmatpush1.msra.mxu0 %v4740
  %4742 = vmatprep.subr.mxu0 0.0
  %v4743 = vand.u32 %v2598, 4294901760
  %v4744 = vsub.f32 %v2598, %v4743
  %4745 = vmatpush1.msra.mxu0 %v4744
  %4746 = vmatprep.subr.mxu0 0.0
  %v4747 = vand.u32 %v2599, 4294901760
  %v4748 = vsub.f32 %v2599, %v4747
  %4749 = vmatpush1.msra.mxu0 %v4748
  %4750 = vmatprep.subr.mxu0 0.0
  %v4751 = vand.u32 %v2600, 4294901760
  %v4752 = vsub.f32 %v2600, %v4751
  %4753 = vmatpush1.msra.mxu0 %v4752
  %4754 = vmatprep.subr.mxu0 0.0
  %v4755 = vand.u32 %v2601, 4294901760
  %v4756 = vsub.f32 %v2601, %v4755
  %4757 = vmatpush1.msra.mxu0 %v4756
  %4758 = vmatprep.subr.mxu0 0.0
  %v4759 = vand.u32 %v2602, 4294901760
  %v4760 = vsub.f32 %v2602, %v4759
  %4761 = vmatpush1.msra.mxu0 %v4760
  %4762 = vmatprep.subr.mxu0 0.0
  %v4763 = vand.u32 %v2603, 4294901760
  %v4764 = vsub.f32 %v2603, %v4763
  %4765 = vmatpush1.msra.mxu0 %v4764
  %4766 = vmatprep.subr.mxu0 0.0
  %v4767 = vand.u32 %v2604, 4294901760
  %v4768 = vsub.f32 %v2604, %v4767
  %4769 = vmatpush1.msra.mxu0 %v4768
  %4770 = vmatprep.subr.mxu0 0.0
  %v4771 = vand.u32 %v2605, 4294901760
  %v4772 = vsub.f32 %v2605, %v4771
  %4773 = vmatpush1.msra.mxu0 %v4772
  %4774 = vmatprep.subr.mxu0 0.0
  %v4775 = vand.u32 %v2606, 4294901760
  %v4776 = vsub.f32 %v2606, %v4775
  %4777 = vmatpush1.msra.mxu0 %v4776
  %4778 = vmatprep.subr.mxu0 0.0
  %v4779 = vand.u32 %v2607, 4294901760
  %v4780 = vsub.f32 %v2607, %v4779
  %4781 = vmatpush1.msra.mxu0 %v4780
  %4782 = vmatprep.subr.mxu0 0.0
  %v4783 = vand.u32 %v2608, 4294901760
  %v4784 = vsub.f32 %v2608, %v4783
  %4785 = vmatpush1.msra.mxu0 %v4784
  %4786 = vmatprep.subr.mxu0 0.0
  %v4787 = vand.u32 %v2609, 4294901760
  %v4788 = vsub.f32 %v2609, %v4787
  %4789 = vmatpush1.msra.mxu0 %v4788
  %4790 = vmatprep.subr.mxu0 0.0
  %v4791 = vand.u32 %v2610, 4294901760
  %v4792 = vsub.f32 %v2610, %v4791
  %4793 = vmatpush1.msra.mxu0 %v4792
  %4794 = vmatprep.subr.mxu0 0.0
  %v4795 = vand.u32 %v2611, 4294901760
  %v4796 = vsub.f32 %v2611, %v4795
  %4797 = vmatpush1.msra.mxu0 %v4796
  %4798 = vmatprep.subr.mxu0 0.0
  %v4799 = vand.u32 %v2612, 4294901760
  %v4800 = vsub.f32 %v2612, %v4799
  %4801 = vmatpush1.msra.mxu0 %v4800
  %4802 = vmatprep.subr.mxu0 0.0
  %v4803 = vand.u32 %v2613, 4294901760
  %v4804 = vsub.f32 %v2613, %v4803
  %4805 = vmatpush1.msra.mxu0 %v4804
  %4806 = vmatprep.subr.mxu0 0.0
  %v4807 = vand.u32 %v2614, 4294901760
  %v4808 = vsub.f32 %v2614, %v4807
  %4809 = vmatpush1.msra.mxu0 %v4808
  %4810 = vmatprep.subr.mxu0 0.0
  %v4811 = vand.u32 %v2615, 4294901760
  %v4812 = vsub.f32 %v2615, %v4811
  %4813 = vmatpush1.msra.mxu0 %v4812
  %4814 = vmatprep.subr.mxu0 0.0
  %v4815 = vand.u32 %v2616, 4294901760
  %v4816 = vsub.f32 %v2616, %v4815
  %4817 = vmatpush1.msra.mxu0 %v4816
  %4818 = vmatprep.subr.mxu0 0.0
  %v4819 = vand.u32 %v2617, 4294901760
  %v4820 = vsub.f32 %v2617, %v4819
  %4821 = vmatpush1.msra.mxu0 %v4820
  %4822 = vmatprep.subr.mxu0 0.0
  %v4823 = vand.u32 %v2618, 4294901760
  %v4824 = vsub.f32 %v2618, %v4823
  %4825 = vmatpush1.msra.mxu0 %v4824
  %4826 = vmatprep.subr.mxu0 0.0
  %v4827 = vand.u32 %v2619, 4294901760
  %v4828 = vsub.f32 %v2619, %v4827
  %4829 = vmatpush1.msra.mxu0 %v4828
  %4830 = vmatprep.subr.mxu0 0.0
  %v4831 = vand.u32 %v2620, 4294901760
  %v4832 = vsub.f32 %v2620, %v4831
  %4833 = vmatpush1.msra.mxu0 %v4832
  %4834 = vmatprep.subr.mxu0 0.0
  %v4835 = vand.u32 %v2621, 4294901760
  %v4836 = vsub.f32 %v2621, %v4835
  %4837 = vmatpush1.msra.mxu0 %v4836
  %4838 = vmatprep.subr.mxu0 0.0
  %v4839 = vand.u32 %v2622, 4294901760
  %v4840 = vsub.f32 %v2622, %v4839
  %4841 = vmatpush1.msra.mxu0 %v4840
  %4842 = vmatprep.subr.mxu0 0.0
  %v4843 = vand.u32 %v2623, 4294901760
  %v4844 = vsub.f32 %v2623, %v4843
  %4845 = vmatpush1.msra.mxu0 %v4844
  %4846 = vmatprep.subr.mxu0 0.0
  %v4847 = vand.u32 %v2624, 4294901760
  %v4848 = vsub.f32 %v2624, %v4847
  %4849 = vmatpush1.msra.mxu0 %v4848
  %4850 = vmatprep.subr.mxu0 0.0
  %v4851 = vand.u32 %v2625, 4294901760
  %v4852 = vsub.f32 %v2625, %v4851
  %4853 = vmatpush1.msra.mxu0 %v4852
  %v4854 = vand.u32 %v2527, 4294901760
  %v4855 = vsub.f32 %v2527, %v4854
  %4856 = vmatprep.mubr.f32.mxu0 %v4855
  %v4857 = vand.u32 %v2526, 4294901760
  %v4858 = vsub.f32 %v2526, %v4857
  %4859 = vmatmul.mubr.f32.gmra.mrb[0].mxu0 %v4858
  %v4860 = vpop.f32.mrb[0].mxu0
  %v4861 = vadd.f32 %v4723, %v4860
  %v4862 = vpop.f32.mrb[0].mxu0
  %4863 = vdwg.mxu0
  %4864 = vmatprep.subr.mxu0 0.0
  %v4865 = vand.u32 %v2594, 4294901760
  %4866 = vmatpush1.msra.mxu0 %v4865
  %4867 = vmatprep.subr.mxu0 0.0
  %v4868 = vand.u32 %v2595, 4294901760
  %4869 = vmatpush1.msra.mxu0 %v4868
  %4870 = vmatprep.subr.mxu0 0.0
  %v4871 = vand.u32 %v2596, 4294901760
  %4872 = vmatpush1.msra.mxu0 %v4871
  %4873 = vmatprep.subr.mxu0 0.0
  %v4874 = vand.u32 %v2597, 4294901760
  %4875 = vmatpush1.msra.mxu0 %v4874
  %4876 = vmatprep.subr.mxu0 0.0
  %v4877 = vand.u32 %v2598, 4294901760
  %4878 = vmatpush1.msra.mxu0 %v4877
  %4879 = vmatprep.subr.mxu0 0.0
  %v4880 = vand.u32 %v2599, 4294901760
  %4881 = vmatpush1.msra.mxu0 %v4880
  %4882 = vmatprep.subr.mxu0 0.0
  %v4883 = vand.u32 %v2600, 4294901760
  %4884 = vmatpush1.msra.mxu0 %v4883
  %4885 = vmatprep.subr.mxu0 0.0
  %v4886 = vand.u32 %v2601, 4294901760
  %4887 = vmatpush1.msra.mxu0 %v4886
  %4888 = vmatprep.subr.mxu0 0.0
  %v4889 = vand.u32 %v2602, 4294901760
  %4890 = vmatpush1.msra.mxu0 %v4889
  %4891 = vmatprep.subr.mxu0 0.0
  %v4892 = vand.u32 %v2603, 4294901760
  %4893 = vmatpush1.msra.mxu0 %v4892
  %4894 = vmatprep.subr.mxu0 0.0
  %v4895 = vand.u32 %v2604, 4294901760
  %4896 = vmatpush1.msra.mxu0 %v4895
  %4897 = vmatprep.subr.mxu0 0.0
  %v4898 = vand.u32 %v2605, 4294901760
  %4899 = vmatpush1.msra.mxu0 %v4898
  %4900 = vmatprep.subr.mxu0 0.0
  %v4901 = vand.u32 %v2606, 4294901760
  %4902 = vmatpush1.msra.mxu0 %v4901
  %4903 = vmatprep.subr.mxu0 0.0
  %v4904 = vand.u32 %v2607, 4294901760
  %4905 = vmatpush1.msra.mxu0 %v4904
  %4906 = vmatprep.subr.mxu0 0.0
  %v4907 = vand.u32 %v2608, 4294901760
  %4908 = vmatpush1.msra.mxu0 %v4907
  %4909 = vmatprep.subr.mxu0 0.0
  %v4910 = vand.u32 %v2609, 4294901760
  %4911 = vmatpush1.msra.mxu0 %v4910
  %4912 = vmatprep.subr.mxu0 0.0
  %v4913 = vand.u32 %v2610, 4294901760
  %4914 = vmatpush1.msra.mxu0 %v4913
  %4915 = vmatprep.subr.mxu0 0.0
  %v4916 = vand.u32 %v2611, 4294901760
  %4917 = vmatpush1.msra.mxu0 %v4916
  %4918 = vmatprep.subr.mxu0 0.0
  %v4919 = vand.u32 %v2612, 4294901760
  %4920 = vmatpush1.msra.mxu0 %v4919
  %4921 = vmatprep.subr.mxu0 0.0
  %v4922 = vand.u32 %v2613, 4294901760
  %4923 = vmatpush1.msra.mxu0 %v4922
  %4924 = vmatprep.subr.mxu0 0.0
  %v4925 = vand.u32 %v2614, 4294901760
  %4926 = vmatpush1.msra.mxu0 %v4925
  %4927 = vmatprep.subr.mxu0 0.0
  %v4928 = vand.u32 %v2615, 4294901760
  %4929 = vmatpush1.msra.mxu0 %v4928
  %4930 = vmatprep.subr.mxu0 0.0
  %v4931 = vand.u32 %v2616, 4294901760
  %4932 = vmatpush1.msra.mxu0 %v4931
  %4933 = vmatprep.subr.mxu0 0.0
  %v4934 = vand.u32 %v2617, 4294901760
  %4935 = vmatpush1.msra.mxu0 %v4934
  %4936 = vmatprep.subr.mxu0 0.0
  %v4937 = vand.u32 %v2618, 4294901760
  %4938 = vmatpush1.msra.mxu0 %v4937
  %4939 = vmatprep.subr.mxu0 0.0
  %v4940 = vand.u32 %v2619, 4294901760
  %4941 = vmatpush1.msra.mxu0 %v4940
  %4942 = vmatprep.subr.mxu0 0.0
  %v4943 = vand.u32 %v2620, 4294901760
  %4944 = vmatpush1.msra.mxu0 %v4943
  %4945 = vmatprep.subr.mxu0 0.0
  %v4946 = vand.u32 %v2621, 4294901760
  %4947 = vmatpush1.msra.mxu0 %v4946
  %4948 = vmatprep.subr.mxu0 0.0
  %v4949 = vand.u32 %v2622, 4294901760
  %4950 = vmatpush1.msra.mxu0 %v4949
  %4951 = vmatprep.subr.mxu0 0.0
  %v4952 = vand.u32 %v2623, 4294901760
  %4953 = vmatpush1.msra.mxu0 %v4952
  %4954 = vmatprep.subr.mxu0 0.0
  %v4955 = vand.u32 %v2624, 4294901760
  %4956 = vmatpush1.msra.mxu0 %v4955
  %4957 = vmatprep.subr.mxu0 0.0
  %v4958 = vand.u32 %v2625, 4294901760
  %4959 = vmatpush1.msra.mxu0 %v4958
  %v4960 = vand.u32 %v2527, 4294901760
  %v4961 = vsub.f32 %v2527, %v4960
  %v4962 = vand.u32 %v4961, 4294901760
  %4963 = vmatprep.mubr.f32.mxu0 %v4962
  %v4964 = vand.u32 %v2526, 4294901760
  %v4965 = vsub.f32 %v2526, %v4964
  %v4966 = vand.u32 %v4965, 4294901760
  %4967 = vmatmul.mubr.f32.gmra.mrb[0].mxu0 %v4966
  %v4968 = vpop.f32.mrb[0].mxu0
  %v4969 = vadd.f32 %v4861, %v4968
  %v4970 = vpop.f32.mrb[0].mxu0
  %4971 = vdwg.mxu0
  %4972 = vmatprep.subr.mxu0 0.0
  %v4973 = vand.u32 %v2594, 4294901760
  %v4974 = vsub.f32 %v2594, %v4973
  %v4975 = vand.u32 %v4974, 4294901760
  %4976 = vmatpush1.msra.mxu0 %v4975
  %4977 = vmatprep.subr.mxu0 0.0
  %v4978 = vand.u32 %v2595, 4294901760
  %v4979 = vsub.f32 %v2595, %v4978
  %v4980 = vand.u32 %v4979, 4294901760
  %4981 = vmatpush1.msra.mxu0 %v4980
  %4982 = vmatprep.subr.mxu0 0.0
  %v4983 = vand.u32 %v2596, 4294901760
  %v4984 = vsub.f32 %v2596, %v4983
  %v4985 = vand.u32 %v4984, 4294901760
  %4986 = vmatpush1.msra.mxu0 %v4985
  %4987 = vmatprep.subr.mxu0 0.0
  %v4988 = vand.u32 %v2597, 4294901760
  %v4989 = vsub.f32 %v2597, %v4988
  %v4990 = vand.u32 %v4989, 4294901760
  %4991 = vmatpush1.msra.mxu0 %v4990
  %4992 = vmatprep.subr.mxu0 0.0
  %v4993 = vand.u32 %v2598, 4294901760
  %v4994 = vsub.f32 %v2598, %v4993
  %v4995 = vand.u32 %v4994, 4294901760
  %4996 = vmatpush1.msra.mxu0 %v4995
  %4997 = vmatprep.subr.mxu0 0.0
  %v4998 = vand.u32 %v2599, 4294901760
  %v4999 = vsub.f32 %v2599, %v4998
  %v5000 = vand.u32 %v4999, 4294901760
  %5001 = vmatpush1.msra.mxu0 %v5000
  %5002 = vmatprep.subr.mxu0 0.0
  %v5003 = vand.u32 %v2600, 4294901760
  %v5004 = vsub.f32 %v2600, %v5003
  %v5005 = vand.u32 %v5004, 4294901760
  %5006 = vmatpush1.msra.mxu0 %v5005
  %5007 = vmatprep.subr.mxu0 0.0
  %v5008 = vand.u32 %v2601, 4294901760
  %v5009 = vsub.f32 %v2601, %v5008
  %v5010 = vand.u32 %v5009, 4294901760
  %5011 = vmatpush1.msra.mxu0 %v5010
  %5012 = vmatprep.subr.mxu0 0.0
  %v5013 = vand.u32 %v2602, 4294901760
  %v5014 = vsub.f32 %v2602, %v5013
  %v5015 = vand.u32 %v5014, 4294901760
  %5016 = vmatpush1.msra.mxu0 %v5015
  %5017 = vmatprep.subr.mxu0 0.0
  %v5018 = vand.u32 %v2603, 4294901760
  %v5019 = vsub.f32 %v2603, %v5018
  %v5020 = vand.u32 %v5019, 4294901760
  %5021 = vmatpush1.msra.mxu0 %v5020
  %5022 = vmatprep.subr.mxu0 0.0
  %v5023 = vand.u32 %v2604, 4294901760
  %v5024 = vsub.f32 %v2604, %v5023
  %v5025 = vand.u32 %v5024, 4294901760
  %5026 = vmatpush1.msra.mxu0 %v5025
  %5027 = vmatprep.subr.mxu0 0.0
  %v5028 = vand.u32 %v2605, 4294901760
  %v5029 = vsub.f32 %v2605, %v5028
  %v5030 = vand.u32 %v5029, 4294901760
  %5031 = vmatpush1.msra.mxu0 %v5030
  %5032 = vmatprep.subr.mxu0 0.0
  %v5033 = vand.u32 %v2606, 4294901760
  %v5034 = vsub.f32 %v2606, %v5033
  %v5035 = vand.u32 %v5034, 4294901760
  %5036 = vmatpush1.msra.mxu0 %v5035
  %5037 = vmatprep.subr.mxu0 0.0
  %v5038 = vand.u32 %v2607, 4294901760
  %v5039 = vsub.f32 %v2607, %v5038
  %v5040 = vand.u32 %v5039, 4294901760
  %5041 = vmatpush1.msra.mxu0 %v5040
  %5042 = vmatprep.subr.mxu0 0.0
  %v5043 = vand.u32 %v2608, 4294901760
  %v5044 = vsub.f32 %v2608, %v5043
  %v5045 = vand.u32 %v5044, 4294901760
  %5046 = vmatpush1.msra.mxu0 %v5045
  %5047 = vmatprep.subr.mxu0 0.0
  %v5048 = vand.u32 %v2609, 4294901760
  %v5049 = vsub.f32 %v2609, %v5048
  %v5050 = vand.u32 %v5049, 4294901760
  %5051 = vmatpush1.msra.mxu0 %v5050
  %5052 = vmatprep.subr.mxu0 0.0
  %v5053 = vand.u32 %v2610, 4294901760
  %v5054 = vsub.f32 %v2610, %v5053
  %v5055 = vand.u32 %v5054, 4294901760
  %5056 = vmatpush1.msra.mxu0 %v5055
  %5057 = vmatprep.subr.mxu0 0.0
  %v5058 = vand.u32 %v2611, 4294901760
  %v5059 = vsub.f32 %v2611, %v5058
  %v5060 = vand.u32 %v5059, 4294901760
  %5061 = vmatpush1.msra.mxu0 %v5060
  %5062 = vmatprep.subr.mxu0 0.0
  %v5063 = vand.u32 %v2612, 4294901760
  %v5064 = vsub.f32 %v2612, %v5063
  %v5065 = vand.u32 %v5064, 4294901760
  %5066 = vmatpush1.msra.mxu0 %v5065
  %5067 = vmatprep.subr.mxu0 0.0
  %v5068 = vand.u32 %v2613, 4294901760
  %v5069 = vsub.f32 %v2613, %v5068
  %v5070 = vand.u32 %v5069, 4294901760
  %5071 = vmatpush1.msra.mxu0 %v5070
  %5072 = vmatprep.subr.mxu0 0.0
  %v5073 = vand.u32 %v2614, 4294901760
  %v5074 = vsub.f32 %v2614, %v5073
  %v5075 = vand.u32 %v5074, 4294901760
  %5076 = vmatpush1.msra.mxu0 %v5075
  %5077 = vmatprep.subr.mxu0 0.0
  %v5078 = vand.u32 %v2615, 4294901760
  %v5079 = vsub.f32 %v2615, %v5078
  %v5080 = vand.u32 %v5079, 4294901760
  %5081 = vmatpush1.msra.mxu0 %v5080
  %5082 = vmatprep.subr.mxu0 0.0
  %v5083 = vand.u32 %v2616, 4294901760
  %v5084 = vsub.f32 %v2616, %v5083
  %v5085 = vand.u32 %v5084, 4294901760
  %5086 = vmatpush1.msra.mxu0 %v5085
  %5087 = vmatprep.subr.mxu0 0.0
  %v5088 = vand.u32 %v2617, 4294901760
  %v5089 = vsub.f32 %v2617, %v5088
  %v5090 = vand.u32 %v5089, 4294901760
  %5091 = vmatpush1.msra.mxu0 %v5090
  %5092 = vmatprep.subr.mxu0 0.0
  %v5093 = vand.u32 %v2618, 4294901760
  %v5094 = vsub.f32 %v2618, %v5093
  %v5095 = vand.u32 %v5094, 4294901760
  %5096 = vmatpush1.msra.mxu0 %v5095
  %5097 = vmatprep.subr.mxu0 0.0
  %v5098 = vand.u32 %v2619, 4294901760
  %v5099 = vsub.f32 %v2619, %v5098
  %v5100 = vand.u32 %v5099, 4294901760
  %5101 = vmatpush1.msra.mxu0 %v5100
  %5102 = vmatprep.subr.mxu0 0.0
  %v5103 = vand.u32 %v2620, 4294901760
  %v5104 = vsub.f32 %v2620, %v5103
  %v5105 = vand.u32 %v5104, 4294901760
  %5106 = vmatpush1.msra.mxu0 %v5105
  %5107 = vmatprep.subr.mxu0 0.0
  %v5108 = vand.u32 %v2621, 4294901760
  %v5109 = vsub.f32 %v2621, %v5108
  %v5110 = vand.u32 %v5109, 4294901760
  %5111 = vmatpush1.msra.mxu0 %v5110
  %5112 = vmatprep.subr.mxu0 0.0
  %v5113 = vand.u32 %v2622, 4294901760
  %v5114 = vsub.f32 %v2622, %v5113
  %v5115 = vand.u32 %v5114, 4294901760
  %5116 = vmatpush1.msra.mxu0 %v5115
  %5117 = vmatprep.subr.mxu0 0.0
  %v5118 = vand.u32 %v2623, 4294901760
  %v5119 = vsub.f32 %v2623, %v5118
  %v5120 = vand.u32 %v5119, 4294901760
  %5121 = vmatpush1.msra.mxu0 %v5120
  %5122 = vmatprep.subr.mxu0 0.0
  %v5123 = vand.u32 %v2624, 4294901760
  %v5124 = vsub.f32 %v2624, %v5123
  %v5125 = vand.u32 %v5124, 4294901760
  %5126 = vmatpush1.msra.mxu0 %v5125
  %5127 = vmatprep.subr.mxu0 0.0
  %v5128 = vand.u32 %v2625, 4294901760
  %v5129 = vsub.f32 %v2625, %v5128
  %v5130 = vand.u32 %v5129, 4294901760
  %5131 = vmatpush1.msra.mxu0 %v5130
  %v5132 = vand.u32 %v2527, 4294901760
  %5133 = vmatprep.mubr.f32.mxu0 %v5132
  %v5134 = vand.u32 %v2526, 4294901760
  %5135 = vmatmul.mubr.f32.gmra.mrb[0].mxu0 %v5134
  %v5136 = vpop.f32.mrb[0].mxu0
  %v5137 = vadd.f32 %v4969, %v5136
  %v5138 = vpop.f32.mrb[0].mxu0
  %5139 = vdwg.mxu0
  %5140 = vmatprep.subr.mxu0 0.0
  %v5141 = vand.u32 %v2594, 4294901760
  %5142 = vmatpush1.msra.mxu0 %v5141
  %5143 = vmatprep.subr.mxu0 0.0
  %v5144 = vand.u32 %v2595, 4294901760
  %5145 = vmatpush1.msra.mxu0 %v5144
  %5146 = vmatprep.subr.mxu0 0.0
  %v5147 = vand.u32 %v2596, 4294901760
  %5148 = vmatpush1.msra.mxu0 %v5147
  %5149 = vmatprep.subr.mxu0 0.0
  %v5150 = vand.u32 %v2597, 4294901760
  %5151 = vmatpush1.msra.mxu0 %v5150
  %5152 = vmatprep.subr.mxu0 0.0
  %v5153 = vand.u32 %v2598, 4294901760
  %5154 = vmatpush1.msra.mxu0 %v5153
  %5155 = vmatprep.subr.mxu0 0.0
  %v5156 = vand.u32 %v2599, 4294901760
  %5157 = vmatpush1.msra.mxu0 %v5156
  %5158 = vmatprep.subr.mxu0 0.0
  %v5159 = vand.u32 %v2600, 4294901760
  %5160 = vmatpush1.msra.mxu0 %v5159
  %5161 = vmatprep.subr.mxu0 0.0
  %v5162 = vand.u32 %v2601, 4294901760
  %5163 = vmatpush1.msra.mxu0 %v5162
  %5164 = vmatprep.subr.mxu0 0.0
  %v5165 = vand.u32 %v2602, 4294901760
  %5166 = vmatpush1.msra.mxu0 %v5165
  %5167 = vmatprep.subr.mxu0 0.0
  %v5168 = vand.u32 %v2603, 4294901760
  %5169 = vmatpush1.msra.mxu0 %v5168
  %5170 = vmatprep.subr.mxu0 0.0
  %v5171 = vand.u32 %v2604, 4294901760
  %5172 = vmatpush1.msra.mxu0 %v5171
  %5173 = vmatprep.subr.mxu0 0.0
  %v5174 = vand.u32 %v2605, 4294901760
  %5175 = vmatpush1.msra.mxu0 %v5174
  %5176 = vmatprep.subr.mxu0 0.0
  %v5177 = vand.u32 %v2606, 4294901760
  %5178 = vmatpush1.msra.mxu0 %v5177
  %5179 = vmatprep.subr.mxu0 0.0
  %v5180 = vand.u32 %v2607, 4294901760
  %5181 = vmatpush1.msra.mxu0 %v5180
  %5182 = vmatprep.subr.mxu0 0.0
  %v5183 = vand.u32 %v2608, 4294901760
  %5184 = vmatpush1.msra.mxu0 %v5183
  %5185 = vmatprep.subr.mxu0 0.0
  %v5186 = vand.u32 %v2609, 4294901760
  %5187 = vmatpush1.msra.mxu0 %v5186
  %5188 = vmatprep.subr.mxu0 0.0
  %v5189 = vand.u32 %v2610, 4294901760
  %5190 = vmatpush1.msra.mxu0 %v5189
  %5191 = vmatprep.subr.mxu0 0.0
  %v5192 = vand.u32 %v2611, 4294901760
  %5193 = vmatpush1.msra.mxu0 %v5192
  %5194 = vmatprep.subr.mxu0 0.0
  %v5195 = vand.u32 %v2612, 4294901760
  %5196 = vmatpush1.msra.mxu0 %v5195
  %5197 = vmatprep.subr.mxu0 0.0
  %v5198 = vand.u32 %v2613, 4294901760
  %5199 = vmatpush1.msra.mxu0 %v5198
  %5200 = vmatprep.subr.mxu0 0.0
  %v5201 = vand.u32 %v2614, 4294901760
  %5202 = vmatpush1.msra.mxu0 %v5201
  %5203 = vmatprep.subr.mxu0 0.0
  %v5204 = vand.u32 %v2615, 4294901760
  %5205 = vmatpush1.msra.mxu0 %v5204
  %5206 = vmatprep.subr.mxu0 0.0
  %v5207 = vand.u32 %v2616, 4294901760
  %5208 = vmatpush1.msra.mxu0 %v5207
  %5209 = vmatprep.subr.mxu0 0.0
  %v5210 = vand.u32 %v2617, 4294901760
  %5211 = vmatpush1.msra.mxu0 %v5210
  %5212 = vmatprep.subr.mxu0 0.0
  %v5213 = vand.u32 %v2618, 4294901760
  %5214 = vmatpush1.msra.mxu0 %v5213
  %5215 = vmatprep.subr.mxu0 0.0
  %v5216 = vand.u32 %v2619, 4294901760
  %5217 = vmatpush1.msra.mxu0 %v5216
  %5218 = vmatprep.subr.mxu0 0.0
  %v5219 = vand.u32 %v2620, 4294901760
  %5220 = vmatpush1.msra.mxu0 %v5219
  %5221 = vmatprep.subr.mxu0 0.0
  %v5222 = vand.u32 %v2621, 4294901760
  %5223 = vmatpush1.msra.mxu0 %v5222
  %5224 = vmatprep.subr.mxu0 0.0
  %v5225 = vand.u32 %v2622, 4294901760
  %5226 = vmatpush1.msra.mxu0 %v5225
  %5227 = vmatprep.subr.mxu0 0.0
  %v5228 = vand.u32 %v2623, 4294901760
  %5229 = vmatpush1.msra.mxu0 %v5228
  %5230 = vmatprep.subr.mxu0 0.0
  %v5231 = vand.u32 %v2624, 4294901760
  %5232 = vmatpush1.msra.mxu0 %v5231
  %5233 = vmatprep.subr.mxu0 0.0
  %v5234 = vand.u32 %v2625, 4294901760
  %5235 = vmatpush1.msra.mxu0 %v5234
  %v5236 = vand.u32 %v2527, 4294901760
  %5237 = vmatprep.mubr.f32.mxu0 %v5236
  %v5238 = vand.u32 %v2526, 4294901760
  %5239 = vmatmul.mubr.f32.gmra.mrb[0].mxu0 %v5238
  %v5240 = vpop.f32.mrb[0].mxu0
  %v5241 = vadd.f32 %v5137, %v5240
  %v5242 = vpop.f32.mrb[0].mxu0
  %5243 = vdwg.mxu0
  %5244 = vmatprep.subr.mxu0 0.0
  %v5245 = vand.u32 %v2626, 4294901760
  %5246 = vmatpush1.msra.mxu0 %v5245
  %5247 = vmatprep.subr.mxu0 0.0
  %v5248 = vand.u32 %v2627, 4294901760
  %5249 = vmatpush1.msra.mxu0 %v5248
  %5250 = vmatprep.subr.mxu0 0.0
  %v5251 = vand.u32 %v2628, 4294901760
  %5252 = vmatpush1.msra.mxu0 %v5251
  %5253 = vmatprep.subr.mxu0 0.0
  %v5254 = vand.u32 %v2629, 4294901760
  %5255 = vmatpush1.msra.mxu0 %v5254
  %5256 = vmatprep.subr.mxu0 0.0
  %v5257 = vand.u32 %v2630, 4294901760
  %5258 = vmatpush1.msra.mxu0 %v5257
  %5259 = vmatprep.subr.mxu0 0.0
  %v5260 = vand.u32 %v2631, 4294901760
  %5261 = vmatpush1.msra.mxu0 %v5260
  %5262 = vmatprep.subr.mxu0 0.0
  %v5263 = vand.u32 %v2632, 4294901760
  %5264 = vmatpush1.msra.mxu0 %v5263
  %5265 = vmatprep.subr.mxu0 0.0
  %v5266 = vand.u32 %v2633, 4294901760
  %5267 = vmatpush1.msra.mxu0 %v5266
  %5268 = vmatprep.subr.mxu0 0.0
  %v5269 = vand.u32 %v2634, 4294901760
  %5270 = vmatpush1.msra.mxu0 %v5269
  %5271 = vmatprep.subr.mxu0 0.0
  %v5272 = vand.u32 %v2635, 4294901760
  %5273 = vmatpush1.msra.mxu0 %v5272
  %5274 = vmatprep.subr.mxu0 0.0
  %v5275 = vand.u32 %v2636, 4294901760
  %5276 = vmatpush1.msra.mxu0 %v5275
  %5277 = vmatprep.subr.mxu0 0.0
  %v5278 = vand.u32 %v2637, 4294901760
  %5279 = vmatpush1.msra.mxu0 %v5278
  %5280 = vmatprep.subr.mxu0 0.0
  %v5281 = vand.u32 %v2638, 4294901760
  %5282 = vmatpush1.msra.mxu0 %v5281
  %5283 = vmatprep.subr.mxu0 0.0
  %v5284 = vand.u32 %v2639, 4294901760
  %5285 = vmatpush1.msra.mxu0 %v5284
  %5286 = vmatprep.subr.mxu0 0.0
  %v5287 = vand.u32 %v2640, 4294901760
  %5288 = vmatpush1.msra.mxu0 %v5287
  %5289 = vmatprep.subr.mxu0 0.0
  %v5290 = vand.u32 %v2641, 4294901760
  %5291 = vmatpush1.msra.mxu0 %v5290
  %5292 = vmatprep.subr.mxu0 0.0
  %v5293 = vand.u32 %v2642, 4294901760
  %5294 = vmatpush1.msra.mxu0 %v5293
  %5295 = vmatprep.subr.mxu0 0.0
  %v5296 = vand.u32 %v2643, 4294901760
  %5297 = vmatpush1.msra.mxu0 %v5296
  %5298 = vmatprep.subr.mxu0 0.0
  %v5299 = vand.u32 %v2644, 4294901760
  %5300 = vmatpush1.msra.mxu0 %v5299
  %5301 = vmatprep.subr.mxu0 0.0
  %v5302 = vand.u32 %v2645, 4294901760
  %5303 = vmatpush1.msra.mxu0 %v5302
  %5304 = vmatprep.subr.mxu0 0.0
  %v5305 = vand.u32 %v2646, 4294901760
  %5306 = vmatpush1.msra.mxu0 %v5305
  %5307 = vmatprep.subr.mxu0 0.0
  %v5308 = vand.u32 %v2647, 4294901760
  %5309 = vmatpush1.msra.mxu0 %v5308
  %5310 = vmatprep.subr.mxu0 0.0
  %v5311 = vand.u32 %v2648, 4294901760
  %5312 = vmatpush1.msra.mxu0 %v5311
  %5313 = vmatprep.subr.mxu0 0.0
  %v5314 = vand.u32 %v2649, 4294901760
  %5315 = vmatpush1.msra.mxu0 %v5314
  %5316 = vmatprep.subr.mxu0 0.0
  %v5317 = vand.u32 %v2650, 4294901760
  %5318 = vmatpush1.msra.mxu0 %v5317
  %5319 = vmatprep.subr.mxu0 0.0
  %v5320 = vand.u32 %v2651, 4294901760
  %5321 = vmatpush1.msra.mxu0 %v5320
  %5322 = vmatprep.subr.mxu0 0.0
  %v5323 = vand.u32 %v2652, 4294901760
  %5324 = vmatpush1.msra.mxu0 %v5323
  %5325 = vmatprep.subr.mxu0 0.0
  %v5326 = vand.u32 %v2653, 4294901760
  %5327 = vmatpush1.msra.mxu0 %v5326
  %5328 = vmatprep.subr.mxu0 0.0
  %v5329 = vand.u32 %v2654, 4294901760
  %5330 = vmatpush1.msra.mxu0 %v5329
  %5331 = vmatprep.subr.mxu0 0.0
  %v5332 = vand.u32 %v2655, 4294901760
  %5333 = vmatpush1.msra.mxu0 %v5332
  %5334 = vmatprep.subr.mxu0 0.0
  %v5335 = vand.u32 %v2656, 4294901760
  %5336 = vmatpush1.msra.mxu0 %v5335
  %5337 = vmatprep.subr.mxu0 0.0
  %v5338 = vand.u32 %v2657, 4294901760
  %5339 = vmatpush1.msra.mxu0 %v5338
  %v5340 = vand.u32 %v2529, 4294901760
  %v5341 = vsub.f32 %v2529, %v5340
  %v5342 = vand.u32 %v5341, 4294901760
  %v5343 = vsub.f32 %v5341, %v5342
  %v5344 = vand.u32 %v5343, 4294901760
  %5345 = vmatprep.mubr.f32.mxu0 %v5344
  %v5346 = vand.u32 %v2528, 4294901760
  %v5347 = vsub.f32 %v2528, %v5346
  %v5348 = vand.u32 %v5347, 4294901760
  %v5349 = vsub.f32 %v5347, %v5348
  %v5350 = vand.u32 %v5349, 4294901760
  %5351 = vmatmul.mubr.f32.gmra.mrb[0].mxu0 %v5350
  %v5352 = vpop.f32.mrb[0].mxu0
  %v5353 = vadd.f32 %v5241, %v5352
  %v5354 = vpop.f32.mrb[0].mxu0
  %5355 = vdwg.mxu0
  %5356 = vmatprep.subr.mxu0 0.0
  %v5357 = vand.u32 %v2626, 4294901760
  %v5358 = vsub.f32 %v2626, %v5357
  %v5359 = vand.u32 %v5358, 4294901760
  %v5360 = vsub.f32 %v5358, %v5359
  %v5361 = vand.u32 %v5360, 4294901760
  %5362 = vmatpush1.msra.mxu0 %v5361
  %5363 = vmatprep.subr.mxu0 0.0
  %v5364 = vand.u32 %v2627, 4294901760
  %v5365 = vsub.f32 %v2627, %v5364
  %v5366 = vand.u32 %v5365, 4294901760
  %v5367 = vsub.f32 %v5365, %v5366
  %v5368 = vand.u32 %v5367, 4294901760
  %5369 = vmatpush1.msra.mxu0 %v5368
  %5370 = vmatprep.subr.mxu0 0.0
  %v5371 = vand.u32 %v2628, 4294901760
  %v5372 = vsub.f32 %v2628, %v5371
  %v5373 = vand.u32 %v5372, 4294901760
  %v5374 = vsub.f32 %v5372, %v5373
  %v5375 = vand.u32 %v5374, 4294901760
  %5376 = vmatpush1.msra.mxu0 %v5375
  %5377 = vmatprep.subr.mxu0 0.0
  %v5378 = vand.u32 %v2629, 4294901760
  %v5379 = vsub.f32 %v2629, %v5378
  %v5380 = vand.u32 %v5379, 4294901760
  %v5381 = vsub.f32 %v5379, %v5380
  %v5382 = vand.u32 %v5381, 4294901760
  %5383 = vmatpush1.msra.mxu0 %v5382
  %5384 = vmatprep.subr.mxu0 0.0
  %v5385 = vand.u32 %v2630, 4294901760
  %v5386 = vsub.f32 %v2630, %v5385
  %v5387 = vand.u32 %v5386, 4294901760
  %v5388 = vsub.f32 %v5386, %v5387
  %v5389 = vand.u32 %v5388, 4294901760
  %5390 = vmatpush1.msra.mxu0 %v5389
  %5391 = vmatprep.subr.mxu0 0.0
  %v5392 = vand.u32 %v2631, 4294901760
  %v5393 = vsub.f32 %v2631, %v5392
  %v5394 = vand.u32 %v5393, 4294901760
  %v5395 = vsub.f32 %v5393, %v5394
  %v5396 = vand.u32 %v5395, 4294901760
  %5397 = vmatpush1.msra.mxu0 %v5396
  %5398 = vmatprep.subr.mxu0 0.0
  %v5399 = vand.u32 %v2632, 4294901760
  %v5400 = vsub.f32 %v2632, %v5399
  %v5401 = vand.u32 %v5400, 4294901760
  %v5402 = vsub.f32 %v5400, %v5401
  %v5403 = vand.u32 %v5402, 4294901760
  %5404 = vmatpush1.msra.mxu0 %v5403
  %5405 = vmatprep.subr.mxu0 0.0
  %v5406 = vand.u32 %v2633, 4294901760
  %v5407 = vsub.f32 %v2633, %v5406
  %v5408 = vand.u32 %v5407, 4294901760
  %v5409 = vsub.f32 %v5407, %v5408
  %v5410 = vand.u32 %v5409, 4294901760
  %5411 = vmatpush1.msra.mxu0 %v5410
  %5412 = vmatprep.subr.mxu0 0.0
  %v5413 = vand.u32 %v2634, 4294901760
  %v5414 = vsub.f32 %v2634, %v5413
  %v5415 = vand.u32 %v5414, 4294901760
  %v5416 = vsub.f32 %v5414, %v5415
  %v5417 = vand.u32 %v5416, 4294901760
  %5418 = vmatpush1.msra.mxu0 %v5417
  %5419 = vmatprep.subr.mxu0 0.0
  %v5420 = vand.u32 %v2635, 4294901760
  %v5421 = vsub.f32 %v2635, %v5420
  %v5422 = vand.u32 %v5421, 4294901760
  %v5423 = vsub.f32 %v5421, %v5422
  %v5424 = vand.u32 %v5423, 4294901760
  %5425 = vmatpush1.msra.mxu0 %v5424
  %5426 = vmatprep.subr.mxu0 0.0
  %v5427 = vand.u32 %v2636, 4294901760
  %v5428 = vsub.f32 %v2636, %v5427
  %v5429 = vand.u32 %v5428, 4294901760
  %v5430 = vsub.f32 %v5428, %v5429
  %v5431 = vand.u32 %v5430, 4294901760
  %5432 = vmatpush1.msra.mxu0 %v5431
  %5433 = vmatprep.subr.mxu0 0.0
  %v5434 = vand.u32 %v2637, 4294901760
  %v5435 = vsub.f32 %v2637, %v5434
  %v5436 = vand.u32 %v5435, 4294901760
  %v5437 = vsub.f32 %v5435, %v5436
  %v5438 = vand.u32 %v5437, 4294901760
  %5439 = vmatpush1.msra.mxu0 %v5438
  %5440 = vmatprep.subr.mxu0 0.0
  %v5441 = vand.u32 %v2638, 4294901760
  %v5442 = vsub.f32 %v2638, %v5441
  %v5443 = vand.u32 %v5442, 4294901760
  %v5444 = vsub.f32 %v5442, %v5443
  %v5445 = vand.u32 %v5444, 4294901760
  %5446 = vmatpush1.msra.mxu0 %v5445
  %5447 = vmatprep.subr.mxu0 0.0
  %v5448 = vand.u32 %v2639, 4294901760
  %v5449 = vsub.f32 %v2639, %v5448
  %v5450 = vand.u32 %v5449, 4294901760
  %v5451 = vsub.f32 %v5449, %v5450
  %v5452 = vand.u32 %v5451, 4294901760
  %5453 = vmatpush1.msra.mxu0 %v5452
  %5454 = vmatprep.subr.mxu0 0.0
  %v5455 = vand.u32 %v2640, 4294901760
  %v5456 = vsub.f32 %v2640, %v5455
  %v5457 = vand.u32 %v5456, 4294901760
  %v5458 = vsub.f32 %v5456, %v5457
  %v5459 = vand.u32 %v5458, 4294901760
  %5460 = vmatpush1.msra.mxu0 %v5459
  %5461 = vmatprep.subr.mxu0 0.0
  %v5462 = vand.u32 %v2641, 4294901760
  %v5463 = vsub.f32 %v2641, %v5462
  %v5464 = vand.u32 %v5463, 4294901760
  %v5465 = vsub.f32 %v5463, %v5464
  %v5466 = vand.u32 %v5465, 4294901760
  %5467 = vmatpush1.msra.mxu0 %v5466
  %5468 = vmatprep.subr.mxu0 0.0
  %v5469 = vand.u32 %v2642, 4294901760
  %v5470 = vsub.f32 %v2642, %v5469
  %v5471 = vand.u32 %v5470, 4294901760
  %v5472 = vsub.f32 %v5470, %v5471
  %v5473 = vand.u32 %v5472, 4294901760
  %5474 = vmatpush1.msra.mxu0 %v5473
  %5475 = vmatprep.subr.mxu0 0.0
  %v5476 = vand.u32 %v2643, 4294901760
  %v5477 = vsub.f32 %v2643, %v5476
  %v5478 = vand.u32 %v5477, 4294901760
  %v5479 = vsub.f32 %v5477, %v5478
  %v5480 = vand.u32 %v5479, 4294901760
  %5481 = vmatpush1.msra.mxu0 %v5480
  %5482 = vmatprep.subr.mxu0 0.0
  %v5483 = vand.u32 %v2644, 4294901760
  %v5484 = vsub.f32 %v2644, %v5483
  %v5485 = vand.u32 %v5484, 4294901760
  %v5486 = vsub.f32 %v5484, %v5485
  %v5487 = vand.u32 %v5486, 4294901760
  %5488 = vmatpush1.msra.mxu0 %v5487
  %5489 = vmatprep.subr.mxu0 0.0
  %v5490 = vand.u32 %v2645, 4294901760
  %v5491 = vsub.f32 %v2645, %v5490
  %v5492 = vand.u32 %v5491, 4294901760
  %v5493 = vsub.f32 %v5491, %v5492
  %v5494 = vand.u32 %v5493, 4294901760
  %5495 = vmatpush1.msra.mxu0 %v5494
  %5496 = vmatprep.subr.mxu0 0.0
  %v5497 = vand.u32 %v2646, 4294901760
  %v5498 = vsub.f32 %v2646, %v5497
  %v5499 = vand.u32 %v5498, 4294901760
  %v5500 = vsub.f32 %v5498, %v5499
  %v5501 = vand.u32 %v5500, 4294901760
  %5502 = vmatpush1.msra.mxu0 %v5501
  %5503 = vmatprep.subr.mxu0 0.0
  %v5504 = vand.u32 %v2647, 4294901760
  %v5505 = vsub.f32 %v2647, %v5504
  %v5506 = vand.u32 %v5505, 4294901760
  %v5507 = vsub.f32 %v5505, %v5506
  %v5508 = vand.u32 %v5507, 4294901760
  %5509 = vmatpush1.msra.mxu0 %v5508
  %5510 = vmatprep.subr.mxu0 0.0
  %v5511 = vand.u32 %v2648, 4294901760
  %v5512 = vsub.f32 %v2648, %v5511
  %v5513 = vand.u32 %v5512, 4294901760
  %v5514 = vsub.f32 %v5512, %v5513
  %v5515 = vand.u32 %v5514, 4294901760
  %5516 = vmatpush1.msra.mxu0 %v5515
  %5517 = vmatprep.subr.mxu0 0.0
  %v5518 = vand.u32 %v2649, 4294901760
  %v5519 = vsub.f32 %v2649, %v5518
  %v5520 = vand.u32 %v5519, 4294901760
  %v5521 = vsub.f32 %v5519, %v5520
  %v5522 = vand.u32 %v5521, 4294901760
  %5523 = vmatpush1.msra.mxu0 %v5522
  %5524 = vmatprep.subr.mxu0 0.0
  %v5525 = vand.u32 %v2650, 4294901760
  %v5526 = vsub.f32 %v2650, %v5525
  %v5527 = vand.u32 %v5526, 4294901760
  %v5528 = vsub.f32 %v5526, %v5527
  %v5529 = vand.u32 %v5528, 4294901760
  %5530 = vmatpush1.msra.mxu0 %v5529
  %5531 = vmatprep.subr.mxu0 0.0
  %v5532 = vand.u32 %v2651, 4294901760
  %v5533 = vsub.f32 %v2651, %v5532
  %v5534 = vand.u32 %v5533, 4294901760
  %v5535 = vsub.f32 %v5533, %v5534
  %v5536 = vand.u32 %v5535, 4294901760
  %5537 = vmatpush1.msra.mxu0 %v5536
  %5538 = vmatprep.subr.mxu0 0.0
  %v5539 = vand.u32 %v2652, 4294901760
  %v5540 = vsub.f32 %v2652, %v5539
  %v5541 = vand.u32 %v5540, 4294901760
  %v5542 = vsub.f32 %v5540, %v5541
  %v5543 = vand.u32 %v5542, 4294901760
  %5544 = vmatpush1.msra.mxu0 %v5543
  %5545 = vmatprep.subr.mxu0 0.0
  %v5546 = vand.u32 %v2653, 4294901760
  %v5547 = vsub.f32 %v2653, %v5546
  %v5548 = vand.u32 %v5547, 4294901760
  %v5549 = vsub.f32 %v5547, %v5548
  %v5550 = vand.u32 %v5549, 4294901760
  %5551 = vmatpush1.msra.mxu0 %v5550
  %5552 = vmatprep.subr.mxu0 0.0
  %v5553 = vand.u32 %v2654, 4294901760
  %v5554 = vsub.f32 %v2654, %v5553
  %v5555 = vand.u32 %v5554, 4294901760
  %v5556 = vsub.f32 %v5554, %v5555
  %v5557 = vand.u32 %v5556, 4294901760
  %5558 = vmatpush1.msra.mxu0 %v5557
  %5559 = vmatprep.subr.mxu0 0.0
  %v5560 = vand.u32 %v2655, 4294901760
  %v5561 = vsub.f32 %v2655, %v5560
  %v5562 = vand.u32 %v5561, 4294901760
  %v5563 = vsub.f32 %v5561, %v5562
  %v5564 = vand.u32 %v5563, 4294901760
  %5565 = vmatpush1.msra.mxu0 %v5564
  %5566 = vmatprep.subr.mxu0 0.0
  %v5567 = vand.u32 %v2656, 4294901760
  %v5568 = vsub.f32 %v2656, %v5567
  %v5569 = vand.u32 %v5568, 4294901760
  %v5570 = vsub.f32 %v5568, %v5569
  %v5571 = vand.u32 %v5570, 4294901760
  %5572 = vmatpush1.msra.mxu0 %v5571
  %5573 = vmatprep.subr.mxu0 0.0
  %v5574 = vand.u32 %v2657, 4294901760
  %v5575 = vsub.f32 %v2657, %v5574
  %v5576 = vand.u32 %v5575, 4294901760
  %v5577 = vsub.f32 %v5575, %v5576
  %v5578 = vand.u32 %v5577, 4294901760
  %5579 = vmatpush1.msra.mxu0 %v5578
  %v5580 = vand.u32 %v2529, 4294901760
  %5581 = vmatprep.mubr.f32.mxu0 %v5580
  %v5582 = vand.u32 %v2528, 4294901760
  %5583 = vmatmul.mubr.f32.gmra.mrb[0].mxu0 %v5582
  %v5584 = vpop.f32.mrb[0].mxu0
  %v5585 = vadd.f32 %v5353, %v5584
  %v5586 = vpop.f32.mrb[0].mxu0
  %5587 = vdwg.mxu0
  %5588 = vmatprep.subr.mxu0 0.0
  %v5589 = vand.u32 %v2626, 4294901760
  %v5590 = vsub.f32 %v2626, %v5589
  %5591 = vmatpush1.msra.mxu0 %v5590
  %5592 = vmatprep.subr.mxu0 0.0
  %v5593 = vand.u32 %v2627, 4294901760
  %v5594 = vsub.f32 %v2627, %v5593
  %5595 = vmatpush1.msra.mxu0 %v5594
  %5596 = vmatprep.subr.mxu0 0.0
  %v5597 = vand.u32 %v2628, 4294901760
  %v5598 = vsub.f32 %v2628, %v5597
  %5599 = vmatpush1.msra.mxu0 %v5598
  %5600 = vmatprep.subr.mxu0 0.0
  %v5601 = vand.u32 %v2629, 4294901760
  %v5602 = vsub.f32 %v2629, %v5601
  %5603 = vmatpush1.msra.mxu0 %v5602
  %5604 = vmatprep.subr.mxu0 0.0
  %v5605 = vand.u32 %v2630, 4294901760
  %v5606 = vsub.f32 %v2630, %v5605
  %5607 = vmatpush1.msra.mxu0 %v5606
  %5608 = vmatprep.subr.mxu0 0.0
  %v5609 = vand.u32 %v2631, 4294901760
  %v5610 = vsub.f32 %v2631, %v5609
  %5611 = vmatpush1.msra.mxu0 %v5610
  %5612 = vmatprep.subr.mxu0 0.0
  %v5613 = vand.u32 %v2632, 4294901760
  %v5614 = vsub.f32 %v2632, %v5613
  %5615 = vmatpush1.msra.mxu0 %v5614
  %5616 = vmatprep.subr.mxu0 0.0
  %v5617 = vand.u32 %v2633, 4294901760
  %v5618 = vsub.f32 %v2633, %v5617
  %5619 = vmatpush1.msra.mxu0 %v5618
  %5620 = vmatprep.subr.mxu0 0.0
  %v5621 = vand.u32 %v2634, 4294901760
  %v5622 = vsub.f32 %v2634, %v5621
  %5623 = vmatpush1.msra.mxu0 %v5622
  %5624 = vmatprep.subr.mxu0 0.0
  %v5625 = vand.u32 %v2635, 4294901760
  %v5626 = vsub.f32 %v2635, %v5625
  %5627 = vmatpush1.msra.mxu0 %v5626
  %5628 = vmatprep.subr.mxu0 0.0
  %v5629 = vand.u32 %v2636, 4294901760
  %v5630 = vsub.f32 %v2636, %v5629
  %5631 = vmatpush1.msra.mxu0 %v5630
  %5632 = vmatprep.subr.mxu0 0.0
  %v5633 = vand.u32 %v2637, 4294901760
  %v5634 = vsub.f32 %v2637, %v5633
  %5635 = vmatpush1.msra.mxu0 %v5634
  %5636 = vmatprep.subr.mxu0 0.0
  %v5637 = vand.u32 %v2638, 4294901760
  %v5638 = vsub.f32 %v2638, %v5637
  %5639 = vmatpush1.msra.mxu0 %v5638
  %5640 = vmatprep.subr.mxu0 0.0
  %v5641 = vand.u32 %v2639, 4294901760
  %v5642 = vsub.f32 %v2639, %v5641
  %5643 = vmatpush1.msra.mxu0 %v5642
  %5644 = vmatprep.subr.mxu0 0.0
  %v5645 = vand.u32 %v2640, 4294901760
  %v5646 = vsub.f32 %v2640, %v5645
  %5647 = vmatpush1.msra.mxu0 %v5646
  %5648 = vmatprep.subr.mxu0 0.0
  %v5649 = vand.u32 %v2641, 4294901760
  %v5650 = vsub.f32 %v2641, %v5649
  %5651 = vmatpush1.msra.mxu0 %v5650
  %5652 = vmatprep.subr.mxu0 0.0
  %v5653 = vand.u32 %v2642, 4294901760
  %v5654 = vsub.f32 %v2642, %v5653
  %5655 = vmatpush1.msra.mxu0 %v5654
  %5656 = vmatprep.subr.mxu0 0.0
  %v5657 = vand.u32 %v2643, 4294901760
  %v5658 = vsub.f32 %v2643, %v5657
  %5659 = vmatpush1.msra.mxu0 %v5658
  %5660 = vmatprep.subr.mxu0 0.0
  %v5661 = vand.u32 %v2644, 4294901760
  %v5662 = vsub.f32 %v2644, %v5661
  %5663 = vmatpush1.msra.mxu0 %v5662
  %5664 = vmatprep.subr.mxu0 0.0
  %v5665 = vand.u32 %v2645, 4294901760
  %v5666 = vsub.f32 %v2645, %v5665
  %5667 = vmatpush1.msra.mxu0 %v5666
  %5668 = vmatprep.subr.mxu0 0.0
  %v5669 = vand.u32 %v2646, 4294901760
  %v5670 = vsub.f32 %v2646, %v5669
  %5671 = vmatpush1.msra.mxu0 %v5670
  %5672 = vmatprep.subr.mxu0 0.0
  %v5673 = vand.u32 %v2647, 4294901760
  %v5674 = vsub.f32 %v2647, %v5673
  %5675 = vmatpush1.msra.mxu0 %v5674
  %5676 = vmatprep.subr.mxu0 0.0
  %v5677 = vand.u32 %v2648, 4294901760
  %v5678 = vsub.f32 %v2648, %v5677
  %5679 = vmatpush1.msra.mxu0 %v5678
  %5680 = vmatprep.subr.mxu0 0.0
  %v5681 = vand.u32 %v2649, 4294901760
  %v5682 = vsub.f32 %v2649, %v5681
  %5683 = vmatpush1.msra.mxu0 %v5682
  %5684 = vmatprep.subr.mxu0 0.0
  %v5685 = vand.u32 %v2650, 4294901760
  %v5686 = vsub.f32 %v2650, %v5685
  %5687 = vmatpush1.msra.mxu0 %v5686
  %5688 = vmatprep.subr.mxu0 0.0
  %v5689 = vand.u32 %v2651, 4294901760
  %v5690 = vsub.f32 %v2651, %v5689
  %5691 = vmatpush1.msra.mxu0 %v5690
  %5692 = vmatprep.subr.mxu0 0.0
  %v5693 = vand.u32 %v2652, 4294901760
  %v5694 = vsub.f32 %v2652, %v5693
  %5695 = vmatpush1.msra.mxu0 %v5694
  %5696 = vmatprep.subr.mxu0 0.0
  %v5697 = vand.u32 %v2653, 4294901760
  %v5698 = vsub.f32 %v2653, %v5697
  %5699 = vmatpush1.msra.mxu0 %v5698
  %5700 = vmatprep.subr.mxu0 0.0
  %v5701 = vand.u32 %v2654, 4294901760
  %v5702 = vsub.f32 %v2654, %v5701
  %5703 = vmatpush1.msra.mxu0 %v5702
  %5704 = vmatprep.subr.mxu0 0.0
  %v5705 = vand.u32 %v2655, 4294901760
  %v5706 = vsub.f32 %v2655, %v5705
  %5707 = vmatpush1.msra.mxu0 %v5706
  %5708 = vmatprep.subr.mxu0 0.0
  %v5709 = vand.u32 %v2656, 4294901760
  %v5710 = vsub.f32 %v2656, %v5709
  %5711 = vmatpush1.msra.mxu0 %v5710
  %5712 = vmatprep.subr.mxu0 0.0
  %v5713 = vand.u32 %v2657, 4294901760
  %v5714 = vsub.f32 %v2657, %v5713
  %5715 = vmatpush1.msra.mxu0 %v5714
  %v5716 = vand.u32 %v2529, 4294901760
  %v5717 = vsub.f32 %v2529, %v5716
  %5718 = vmatprep.mubr.f32.mxu0 %v5717
  %v5719 = vand.u32 %v2528, 4294901760
  %v5720 = vsub.f32 %v2528, %v5719
  %5721 = vmatmul.mubr.f32.gmra.mrb[0].mxu0 %v5720
  %v5722 = vpop.f32.mrb[0].mxu0
  %v5723 = vadd.f32 %v5585, %v5722
  %v5724 = vpop.f32.mrb[0].mxu0
  %5725 = vdwg.mxu0
  %5726 = vmatprep.subr.mxu0 0.0
  %v5727 = vand.u32 %v2626, 4294901760
  %5728 = vmatpush1.msra.mxu0 %v5727
  %5729 = vmatprep.subr.mxu0 0.0
  %v5730 = vand.u32 %v2627, 4294901760
  %5731 = vmatpush1.msra.mxu0 %v5730
  %5732 = vmatprep.subr.mxu0 0.0
  %v5733 = vand.u32 %v2628, 4294901760
  %5734 = vmatpush1.msra.mxu0 %v5733
  %5735 = vmatprep.subr.mxu0 0.0
  %v5736 = vand.u32 %v2629, 4294901760
  %5737 = vmatpush1.msra.mxu0 %v5736
  %5738 = vmatprep.subr.mxu0 0.0
  %v5739 = vand.u32 %v2630, 4294901760
  %5740 = vmatpush1.msra.mxu0 %v5739
  %5741 = vmatprep.subr.mxu0 0.0
  %v5742 = vand.u32 %v2631, 4294901760
  %5743 = vmatpush1.msra.mxu0 %v5742
  %5744 = vmatprep.subr.mxu0 0.0
  %v5745 = vand.u32 %v2632, 4294901760
  %5746 = vmatpush1.msra.mxu0 %v5745
  %5747 = vmatprep.subr.mxu0 0.0
  %v5748 = vand.u32 %v2633, 4294901760
  %5749 = vmatpush1.msra.mxu0 %v5748
  %5750 = vmatprep.subr.mxu0 0.0
  %v5751 = vand.u32 %v2634, 4294901760
  %5752 = vmatpush1.msra.mxu0 %v5751
  %5753 = vmatprep.subr.mxu0 0.0
  %v5754 = vand.u32 %v2635, 4294901760
  %5755 = vmatpush1.msra.mxu0 %v5754
  %5756 = vmatprep.subr.mxu0 0.0
  %v5757 = vand.u32 %v2636, 4294901760
  %5758 = vmatpush1.msra.mxu0 %v5757
  %5759 = vmatprep.subr.mxu0 0.0
  %v5760 = vand.u32 %v2637, 4294901760
  %5761 = vmatpush1.msra.mxu0 %v5760
  %5762 = vmatprep.subr.mxu0 0.0
  %v5763 = vand.u32 %v2638, 4294901760
  %5764 = vmatpush1.msra.mxu0 %v5763
  %5765 = vmatprep.subr.mxu0 0.0
  %v5766 = vand.u32 %v2639, 4294901760
  %5767 = vmatpush1.msra.mxu0 %v5766
  %5768 = vmatprep.subr.mxu0 0.0
  %v5769 = vand.u32 %v2640, 4294901760
  %5770 = vmatpush1.msra.mxu0 %v5769
  %5771 = vmatprep.subr.mxu0 0.0
  %v5772 = vand.u32 %v2641, 4294901760
  %5773 = vmatpush1.msra.mxu0 %v5772
  %5774 = vmatprep.subr.mxu0 0.0
  %v5775 = vand.u32 %v2642, 4294901760
  %5776 = vmatpush1.msra.mxu0 %v5775
  %5777 = vmatprep.subr.mxu0 0.0
  %v5778 = vand.u32 %v2643, 4294901760
  %5779 = vmatpush1.msra.mxu0 %v5778
  %5780 = vmatprep.subr.mxu0 0.0
  %v5781 = vand.u32 %v2644, 4294901760
  %5782 = vmatpush1.msra.mxu0 %v5781
  %5783 = vmatprep.subr.mxu0 0.0
  %v5784 = vand.u32 %v2645, 4294901760
  %5785 = vmatpush1.msra.mxu0 %v5784
  %5786 = vmatprep.subr.mxu0 0.0
  %v5787 = vand.u32 %v2646, 4294901760
  %5788 = vmatpush1.msra.mxu0 %v5787
  %5789 = vmatprep.subr.mxu0 0.0
  %v5790 = vand.u32 %v2647, 4294901760
  %5791 = vmatpush1.msra.mxu0 %v5790
  %5792 = vmatprep.subr.mxu0 0.0
  %v5793 = vand.u32 %v2648, 4294901760
  %5794 = vmatpush1.msra.mxu0 %v5793
  %5795 = vmatprep.subr.mxu0 0.0
  %v5796 = vand.u32 %v2649, 4294901760
  %5797 = vmatpush1.msra.mxu0 %v5796
  %5798 = vmatprep.subr.mxu0 0.0
  %v5799 = vand.u32 %v2650, 4294901760
  %5800 = vmatpush1.msra.mxu0 %v5799
  %5801 = vmatprep.subr.mxu0 0.0
  %v5802 = vand.u32 %v2651, 4294901760
  %5803 = vmatpush1.msra.mxu0 %v5802
  %5804 = vmatprep.subr.mxu0 0.0
  %v5805 = vand.u32 %v2652, 4294901760
  %5806 = vmatpush1.msra.mxu0 %v5805
  %5807 = vmatprep.subr.mxu0 0.0
  %v5808 = vand.u32 %v2653, 4294901760
  %5809 = vmatpush1.msra.mxu0 %v5808
  %5810 = vmatprep.subr.mxu0 0.0
  %v5811 = vand.u32 %v2654, 4294901760
  %5812 = vmatpush1.msra.mxu0 %v5811
  %5813 = vmatprep.subr.mxu0 0.0
  %v5814 = vand.u32 %v2655, 4294901760
  %5815 = vmatpush1.msra.mxu0 %v5814
  %5816 = vmatprep.subr.mxu0 0.0
  %v5817 = vand.u32 %v2656, 4294901760
  %5818 = vmatpush1.msra.mxu0 %v5817
  %5819 = vmatprep.subr.mxu0 0.0
  %v5820 = vand.u32 %v2657, 4294901760
  %5821 = vmatpush1.msra.mxu0 %v5820
  %v5822 = vand.u32 %v2529, 4294901760
  %v5823 = vsub.f32 %v2529, %v5822
  %v5824 = vand.u32 %v5823, 4294901760
  %5825 = vmatprep.mubr.f32.mxu0 %v5824
  %v5826 = vand.u32 %v2528, 4294901760
  %v5827 = vsub.f32 %v2528, %v5826
  %v5828 = vand.u32 %v5827, 4294901760
  %5829 = vmatmul.mubr.f32.gmra.mrb[0].mxu0 %v5828
  %v5830 = vpop.f32.mrb[0].mxu0
  %v5831 = vadd.f32 %v5723, %v5830
  %v5832 = vpop.f32.mrb[0].mxu0
  %5833 = vdwg.mxu0
  %5834 = vmatprep.subr.mxu0 0.0
  %v5835 = vand.u32 %v2626, 4294901760
  %v5836 = vsub.f32 %v2626, %v5835
  %v5837 = vand.u32 %v5836, 4294901760
  %5838 = vmatpush1.msra.mxu0 %v5837
  %5839 = vmatprep.subr.mxu0 0.0
  %v5840 = vand.u32 %v2627, 4294901760
  %v5841 = vsub.f32 %v2627, %v5840
  %v5842 = vand.u32 %v5841, 4294901760
  %5843 = vmatpush1.msra.mxu0 %v5842
  %5844 = vmatprep.subr.mxu0 0.0
  %v5845 = vand.u32 %v2628, 4294901760
  %v5846 = vsub.f32 %v2628, %v5845
  %v5847 = vand.u32 %v5846, 4294901760
  %5848 = vmatpush1.msra.mxu0 %v5847
  %5849 = vmatprep.subr.mxu0 0.0
  %v5850 = vand.u32 %v2629, 4294901760
  %v5851 = vsub.f32 %v2629, %v5850
  %v5852 = vand.u32 %v5851, 4294901760
  %5853 = vmatpush1.msra.mxu0 %v5852
  %5854 = vmatprep.subr.mxu0 0.0
  %v5855 = vand.u32 %v2630, 4294901760
  %v5856 = vsub.f32 %v2630, %v5855
  %v5857 = vand.u32 %v5856, 4294901760
  %5858 = vmatpush1.msra.mxu0 %v5857
  %5859 = vmatprep.subr.mxu0 0.0
  %v5860 = vand.u32 %v2631, 4294901760
  %v5861 = vsub.f32 %v2631, %v5860
  %v5862 = vand.u32 %v5861, 4294901760
  %5863 = vmatpush1.msra.mxu0 %v5862
  %5864 = vmatprep.subr.mxu0 0.0
  %v5865 = vand.u32 %v2632, 4294901760
  %v5866 = vsub.f32 %v2632, %v5865
  %v5867 = vand.u32 %v5866, 4294901760
  %5868 = vmatpush1.msra.mxu0 %v5867
  %5869 = vmatprep.subr.mxu0 0.0
  %v5870 = vand.u32 %v2633, 4294901760
  %v5871 = vsub.f32 %v2633, %v5870
  %v5872 = vand.u32 %v5871, 4294901760
  %5873 = vmatpush1.msra.mxu0 %v5872
  %5874 = vmatprep.subr.mxu0 0.0
  %v5875 = vand.u32 %v2634, 4294901760
  %v5876 = vsub.f32 %v2634, %v5875
  %v5877 = vand.u32 %v5876, 4294901760
  %5878 = vmatpush1.msra.mxu0 %v5877
  %5879 = vmatprep.subr.mxu0 0.0
  %v5880 = vand.u32 %v2635, 4294901760
  %v5881 = vsub.f32 %v2635, %v5880
  %v5882 = vand.u32 %v5881, 4294901760
  %5883 = vmatpush1.msra.mxu0 %v5882
  %5884 = vmatprep.subr.mxu0 0.0
  %v5885 = vand.u32 %v2636, 4294901760
  %v5886 = vsub.f32 %v2636, %v5885
  %v5887 = vand.u32 %v5886, 4294901760
  %5888 = vmatpush1.msra.mxu0 %v5887
  %5889 = vmatprep.subr.mxu0 0.0
  %v5890 = vand.u32 %v2637, 4294901760
  %v5891 = vsub.f32 %v2637, %v5890
  %v5892 = vand.u32 %v5891, 4294901760
  %5893 = vmatpush1.msra.mxu0 %v5892
  %5894 = vmatprep.subr.mxu0 0.0
  %v5895 = vand.u32 %v2638, 4294901760
  %v5896 = vsub.f32 %v2638, %v5895
  %v5897 = vand.u32 %v5896, 4294901760
  %5898 = vmatpush1.msra.mxu0 %v5897
  %5899 = vmatprep.subr.mxu0 0.0
  %v5900 = vand.u32 %v2639, 4294901760
  %v5901 = vsub.f32 %v2639, %v5900
  %v5902 = vand.u32 %v5901, 4294901760
  %5903 = vmatpush1.msra.mxu0 %v5902
  %5904 = vmatprep.subr.mxu0 0.0
  %v5905 = vand.u32 %v2640, 4294901760
  %v5906 = vsub.f32 %v2640, %v5905
  %v5907 = vand.u32 %v5906, 4294901760
  %5908 = vmatpush1.msra.mxu0 %v5907
  %5909 = vmatprep.subr.mxu0 0.0
  %v5910 = vand.u32 %v2641, 4294901760
  %v5911 = vsub.f32 %v2641, %v5910
  %v5912 = vand.u32 %v5911, 4294901760
  %5913 = vmatpush1.msra.mxu0 %v5912
  %5914 = vmatprep.subr.mxu0 0.0
  %v5915 = vand.u32 %v2642, 4294901760
  %v5916 = vsub.f32 %v2642, %v5915
  %v5917 = vand.u32 %v5916, 4294901760
  %5918 = vmatpush1.msra.mxu0 %v5917
  %5919 = vmatprep.subr.mxu0 0.0
  %v5920 = vand.u32 %v2643, 4294901760
  %v5921 = vsub.f32 %v2643, %v5920
  %v5922 = vand.u32 %v5921, 4294901760
  %5923 = vmatpush1.msra.mxu0 %v5922
  %5924 = vmatprep.subr.mxu0 0.0
  %v5925 = vand.u32 %v2644, 4294901760
  %v5926 = vsub.f32 %v2644, %v5925
  %v5927 = vand.u32 %v5926, 4294901760
  %5928 = vmatpush1.msra.mxu0 %v5927
  %5929 = vmatprep.subr.mxu0 0.0
  %v5930 = vand.u32 %v2645, 4294901760
  %v5931 = vsub.f32 %v2645, %v5930
  %v5932 = vand.u32 %v5931, 4294901760
  %5933 = vmatpush1.msra.mxu0 %v5932
  %5934 = vmatprep.subr.mxu0 0.0
  %v5935 = vand.u32 %v2646, 4294901760
  %v5936 = vsub.f32 %v2646, %v5935
  %v5937 = vand.u32 %v5936, 4294901760
  %5938 = vmatpush1.msra.mxu0 %v5937
  %5939 = vmatprep.subr.mxu0 0.0
  %v5940 = vand.u32 %v2647, 4294901760
  %v5941 = vsub.f32 %v2647, %v5940
  %v5942 = vand.u32 %v5941, 4294901760
  %5943 = vmatpush1.msra.mxu0 %v5942
  %5944 = vmatprep.subr.mxu0 0.0
  %v5945 = vand.u32 %v2648, 4294901760
  %v5946 = vsub.f32 %v2648, %v5945
  %v5947 = vand.u32 %v5946, 4294901760
  %5948 = vmatpush1.msra.mxu0 %v5947
  %5949 = vmatprep.subr.mxu0 0.0
  %v5950 = vand.u32 %v2649, 4294901760
  %v5951 = vsub.f32 %v2649, %v5950
  %v5952 = vand.u32 %v5951, 4294901760
  %5953 = vmatpush1.msra.mxu0 %v5952
  %5954 = vmatprep.subr.mxu0 0.0
  %v5955 = vand.u32 %v2650, 4294901760
  %v5956 = vsub.f32 %v2650, %v5955
  %v5957 = vand.u32 %v5956, 4294901760
  %5958 = vmatpush1.msra.mxu0 %v5957
  %5959 = vmatprep.subr.mxu0 0.0
  %v5960 = vand.u32 %v2651, 4294901760
  %v5961 = vsub.f32 %v2651, %v5960
  %v5962 = vand.u32 %v5961, 4294901760
  %5963 = vmatpush1.msra.mxu0 %v5962
  %5964 = vmatprep.subr.mxu0 0.0
  %v5965 = vand.u32 %v2652, 4294901760
  %v5966 = vsub.f32 %v2652, %v5965
  %v5967 = vand.u32 %v5966, 4294901760
  %5968 = vmatpush1.msra.mxu0 %v5967
  %5969 = vmatprep.subr.mxu0 0.0
  %v5970 = vand.u32 %v2653, 4294901760
  %v5971 = vsub.f32 %v2653, %v5970
  %v5972 = vand.u32 %v5971, 4294901760
  %5973 = vmatpush1.msra.mxu0 %v5972
  %5974 = vmatprep.subr.mxu0 0.0
  %v5975 = vand.u32 %v2654, 4294901760
  %v5976 = vsub.f32 %v2654, %v5975
  %v5977 = vand.u32 %v5976, 4294901760
  %5978 = vmatpush1.msra.mxu0 %v5977
  %5979 = vmatprep.subr.mxu0 0.0
  %v5980 = vand.u32 %v2655, 4294901760
  %v5981 = vsub.f32 %v2655, %v5980
  %v5982 = vand.u32 %v5981, 4294901760
  %5983 = vmatpush1.msra.mxu0 %v5982
  %5984 = vmatprep.subr.mxu0 0.0
  %v5985 = vand.u32 %v2656, 4294901760
  %v5986 = vsub.f32 %v2656, %v5985
  %v5987 = vand.u32 %v5986, 4294901760
  %5988 = vmatpush1.msra.mxu0 %v5987
  %5989 = vmatprep.subr.mxu0 0.0
  %v5990 = vand.u32 %v2657, 4294901760
  %v5991 = vsub.f32 %v2657, %v5990
  %v5992 = vand.u32 %v5991, 4294901760
  %5993 = vmatpush1.msra.mxu0 %v5992
  %v5994 = vand.u32 %v2529, 4294901760
  %5995 = vmatprep.mubr.f32.mxu0 %v5994
  %v5996 = vand.u32 %v2528, 4294901760
  %5997 = vmatmul.mubr.f32.gmra.mrb[0].mxu0 %v5996
  %v5998 = vpop.f32.mrb[0].mxu0
  %v5999 = vadd.f32 %v5831, %v5998
  %v6000 = vpop.f32.mrb[0].mxu0
  %6001 = vdwg.mxu0
  %6002 = vmatprep.subr.mxu0 0.0
  %v6003 = vand.u32 %v2626, 4294901760
  %6004 = vmatpush1.msra.mxu0 %v6003
  %6005 = vmatprep.subr.mxu0 0.0
  %v6006 = vand.u32 %v2627, 4294901760
  %6007 = vmatpush1.msra.mxu0 %v6006
  %6008 = vmatprep.subr.mxu0 0.0
  %v6009 = vand.u32 %v2628, 4294901760
  %6010 = vmatpush1.msra.mxu0 %v6009
  %6011 = vmatprep.subr.mxu0 0.0
  %v6012 = vand.u32 %v2629, 4294901760
  %6013 = vmatpush1.msra.mxu0 %v6012
  %6014 = vmatprep.subr.mxu0 0.0
  %v6015 = vand.u32 %v2630, 4294901760
  %6016 = vmatpush1.msra.mxu0 %v6015
  %6017 = vmatprep.subr.mxu0 0.0
  %v6018 = vand.u32 %v2631, 4294901760
  %6019 = vmatpush1.msra.mxu0 %v6018
  %6020 = vmatprep.subr.mxu0 0.0
  %v6021 = vand.u32 %v2632, 4294901760
  %6022 = vmatpush1.msra.mxu0 %v6021
  %6023 = vmatprep.subr.mxu0 0.0
  %v6024 = vand.u32 %v2633, 4294901760
  %6025 = vmatpush1.msra.mxu0 %v6024
  %6026 = vmatprep.subr.mxu0 0.0
  %v6027 = vand.u32 %v2634, 4294901760
  %6028 = vmatpush1.msra.mxu0 %v6027
  %6029 = vmatprep.subr.mxu0 0.0
  %v6030 = vand.u32 %v2635, 4294901760
  %6031 = vmatpush1.msra.mxu0 %v6030
  %6032 = vmatprep.subr.mxu0 0.0
  %v6033 = vand.u32 %v2636, 4294901760
  %6034 = vmatpush1.msra.mxu0 %v6033
  %6035 = vmatprep.subr.mxu0 0.0
  %v6036 = vand.u32 %v2637, 4294901760
  %6037 = vmatpush1.msra.mxu0 %v6036
  %6038 = vmatprep.subr.mxu0 0.0
  %v6039 = vand.u32 %v2638, 4294901760
  %6040 = vmatpush1.msra.mxu0 %v6039
  %6041 = vmatprep.subr.mxu0 0.0
  %v6042 = vand.u32 %v2639, 4294901760
  %6043 = vmatpush1.msra.mxu0 %v6042
  %6044 = vmatprep.subr.mxu0 0.0
  %v6045 = vand.u32 %v2640, 4294901760
  %6046 = vmatpush1.msra.mxu0 %v6045
  %6047 = vmatprep.subr.mxu0 0.0
  %v6048 = vand.u32 %v2641, 4294901760
  %6049 = vmatpush1.msra.mxu0 %v6048
  %6050 = vmatprep.subr.mxu0 0.0
  %v6051 = vand.u32 %v2642, 4294901760
  %6052 = vmatpush1.msra.mxu0 %v6051
  %6053 = vmatprep.subr.mxu0 0.0
  %v6054 = vand.u32 %v2643, 4294901760
  %6055 = vmatpush1.msra.mxu0 %v6054
  %6056 = vmatprep.subr.mxu0 0.0
  %v6057 = vand.u32 %v2644, 4294901760
  %6058 = vmatpush1.msra.mxu0 %v6057
  %6059 = vmatprep.subr.mxu0 0.0
  %v6060 = vand.u32 %v2645, 4294901760
  %6061 = vmatpush1.msra.mxu0 %v6060
  %6062 = vmatprep.subr.mxu0 0.0
  %v6063 = vand.u32 %v2646, 4294901760
  %6064 = vmatpush1.msra.mxu0 %v6063
  %6065 = vmatprep.subr.mxu0 0.0
  %v6066 = vand.u32 %v2647, 4294901760
  %6067 = vmatpush1.msra.mxu0 %v6066
  %6068 = vmatprep.subr.mxu0 0.0
  %v6069 = vand.u32 %v2648, 4294901760
  %6070 = vmatpush1.msra.mxu0 %v6069
  %6071 = vmatprep.subr.mxu0 0.0
  %v6072 = vand.u32 %v2649, 4294901760
  %6073 = vmatpush1.msra.mxu0 %v6072
  %6074 = vmatprep.subr.mxu0 0.0
  %v6075 = vand.u32 %v2650, 4294901760
  %6076 = vmatpush1.msra.mxu0 %v6075
  %6077 = vmatprep.subr.mxu0 0.0
  %v6078 = vand.u32 %v2651, 4294901760
  %6079 = vmatpush1.msra.mxu0 %v6078
  %6080 = vmatprep.subr.mxu0 0.0
  %v6081 = vand.u32 %v2652, 4294901760
  %6082 = vmatpush1.msra.mxu0 %v6081
  %6083 = vmatprep.subr.mxu0 0.0
  %v6084 = vand.u32 %v2653, 4294901760
  %6085 = vmatpush1.msra.mxu0 %v6084
  %6086 = vmatprep.subr.mxu0 0.0
  %v6087 = vand.u32 %v2654, 4294901760
  %6088 = vmatpush1.msra.mxu0 %v6087
  %6089 = vmatprep.subr.mxu0 0.0
  %v6090 = vand.u32 %v2655, 4294901760
  %6091 = vmatpush1.msra.mxu0 %v6090
  %6092 = vmatprep.subr.mxu0 0.0
  %v6093 = vand.u32 %v2656, 4294901760
  %6094 = vmatpush1.msra.mxu0 %v6093
  %6095 = vmatprep.subr.mxu0 0.0
  %v6096 = vand.u32 %v2657, 4294901760
  %6097 = vmatpush1.msra.mxu0 %v6096
  %v6098 = vand.u32 %v2529, 4294901760
  %6099 = vmatprep.mubr.f32.mxu0 %v6098
  %v6100 = vand.u32 %v2528, 4294901760
  %6101 = vmatmul.mubr.f32.gmra.mrb[0].mxu0 %v6100
  %v6102 = vpop.f32.mrb[0].mxu0
  %v6103 = vadd.f32 %v5999, %v6102
  %v6104 = vpop.f32.mrb[0].mxu0
  %6105 = vdwg.mxu0
  %v6106 = vld [vmem:[%s2] sm:$0xff]
  %v6107 = vld [vmem:[%s2 + $0x8] sm:$0xff]
  %v6108 = vld [vmem:[%s2 + $0x10] sm:$0xff]
  %v6109 = vld [vmem:[%s2 + $0x18] sm:$0xff]
  %v6110 = vld [vmem:[%s2 + $0x20] sm:$0xff]
  %v6111 = vld [vmem:[%s2 + $0x28] sm:$0xff]
  %v6112 = vld [vmem:[%s3] sm:$0x1]
  %v6114 = vlaneseq
  %v6115 = vshrl.u32 %v6114, 7
  %v6116 = vsub.s32 0, %v6115
  %v6117 = vrot.slane %v6112, %v6116
  %6119 = vmatprep.subr.mxu0 0.0
  %v6120 = vand.u32 %v6106, 4294901760
  %6121 = vmatpush1.msra.mxu0 %v6120
  %6122 = vmatprep.subr.mxu0 0.0
  %v6123 = vand.u32 %v6107, 4294901760
  %6124 = vmatpush1.msra.mxu0 %v6123
  %6125 = vmatprep.subr.mxu0 0.0
  %v6126 = vand.u32 %v6108, 4294901760
  %6127 = vmatpush1.msra.mxu0 %v6126
  %6128 = vmatprep.subr.mxu0 0.0
  %v6129 = vand.u32 %v6109, 4294901760
  %6130 = vmatpush1.msra.mxu0 %v6129
  %6131 = vmatprep.subr.mxu0 0.0
  %v6132 = vand.u32 %v6110, 4294901760
  %6133 = vmatpush1.msra.mxu0 %v6132
  %6134 = vmatprep.subr.mxu0 0.0
  %v6135 = vand.u32 %v6111, 4294901760
  %6136 = vmatpush1.msra.mxu0 %v6135
  %6137 = vmatprep.subr.mxu0 0.0
  %6138 = vmatpush1.msra.mxu0 0.0
  %6139 = vmatprep.subr.mxu0 0.0
  %6140 = vmatpush1.msra.mxu0 0.0
  %6141 = vmatprep.subr.mxu0 0.0
  %6142 = vmatpush1.msra.mxu0 0.0
  %6143 = vmatprep.subr.mxu0 0.0
  %6144 = vmatpush1.msra.mxu0 0.0
  %6145 = vmatprep.subr.mxu0 0.0
  %6146 = vmatpush1.msra.mxu0 0.0
  %6147 = vmatprep.subr.mxu0 0.0
  %6148 = vmatpush1.msra.mxu0 0.0
  %6149 = vmatprep.subr.mxu0 0.0
  %6150 = vmatpush1.msra.mxu0 0.0
  %6151 = vmatprep.subr.mxu0 0.0
  %6152 = vmatpush1.msra.mxu0 0.0
  %6153 = vmatprep.subr.mxu0 0.0
  %6154 = vmatpush1.msra.mxu0 0.0
  %6155 = vmatprep.subr.mxu0 0.0
  %6156 = vmatpush1.msra.mxu0 0.0
  %6157 = vmatprep.subr.mxu0 0.0
  %6158 = vmatpush1.msra.mxu0 0.0
  %6159 = vmatprep.subr.mxu0 0.0
  %6160 = vmatpush1.msra.mxu0 0.0
  %6161 = vmatprep.subr.mxu0 0.0
  %6162 = vmatpush1.msra.mxu0 0.0
  %6163 = vmatprep.subr.mxu0 0.0
  %6164 = vmatpush1.msra.mxu0 0.0
  %6165 = vmatprep.subr.mxu0 0.0
  %6166 = vmatpush1.msra.mxu0 0.0
  %6167 = vmatprep.subr.mxu0 0.0
  %6168 = vmatpush1.msra.mxu0 0.0
  %6169 = vmatprep.subr.mxu0 0.0
  %6170 = vmatpush1.msra.mxu0 0.0
  %6171 = vmatprep.subr.mxu0 0.0
  %6172 = vmatpush1.msra.mxu0 0.0
  %6173 = vmatprep.subr.mxu0 0.0
  %6174 = vmatpush1.msra.mxu0 0.0
  %6175 = vmatprep.subr.mxu0 0.0
  %6176 = vmatpush1.msra.mxu0 0.0
  %6177 = vmatprep.subr.mxu0 0.0
  %6178 = vmatpush1.msra.mxu0 0.0
  %6179 = vmatprep.subr.mxu0 0.0
  %6180 = vmatpush1.msra.mxu0 0.0
  %6181 = vmatprep.subr.mxu0 0.0
  %6182 = vmatpush1.msra.mxu0 0.0
  %6183 = vmatprep.subr.mxu0 0.0
  %6184 = vmatpush1.msra.mxu0 0.0
  %6185 = vmatprep.subr.mxu0 0.0
  %6186 = vmatpush1.msra.mxu0 0.0
  %6187 = vmatprep.subr.mxu0 0.0
  %6188 = vmatpush1.msra.mxu0 0.0
  %6189 = vmatprep.mubr.f32.mxu0 0.0
  %v6190 = vand.u32 %v96, 4294901760
  %v6191 = vsub.f32 %v96, %v6190
  %v6192 = vand.u32 %v6191, 4294901760
  %v6193 = vsub.f32 %v6191, %v6192
  %v6194 = vand.u32 %v6193, 4294901760
  %6195 = vmatmul.mubr.f32.gmra.mrb[0].mxu0 %v6194
  %v6196 = vpop.f32.mrb[0].mxu0
  %v6197 = vadd.f32 %v6117, %v6196
  %v6198 = vpop.f32.mrb[0].mxu0
  %6199 = vdwg.mxu0
  %6200 = vmatprep.subr.mxu0 0.0
  %v6201 = vand.u32 %v6106, 4294901760
  %v6202 = vsub.f32 %v6106, %v6201
  %v6203 = vand.u32 %v6202, 4294901760
  %v6204 = vsub.f32 %v6202, %v6203
  %v6205 = vand.u32 %v6204, 4294901760
  %6206 = vmatpush1.msra.mxu0 %v6205
  %6207 = vmatprep.subr.mxu0 0.0
  %v6208 = vand.u32 %v6107, 4294901760
  %v6209 = vsub.f32 %v6107, %v6208
  %v6210 = vand.u32 %v6209, 4294901760
  %v6211 = vsub.f32 %v6209, %v6210
  %v6212 = vand.u32 %v6211, 4294901760
  %6213 = vmatpush1.msra.mxu0 %v6212
  %6214 = vmatprep.subr.mxu0 0.0
  %v6215 = vand.u32 %v6108, 4294901760
  %v6216 = vsub.f32 %v6108, %v6215
  %v6217 = vand.u32 %v6216, 4294901760
  %v6218 = vsub.f32 %v6216, %v6217
  %v6219 = vand.u32 %v6218, 4294901760
  %6220 = vmatpush1.msra.mxu0 %v6219
  %6221 = vmatprep.subr.mxu0 0.0
  %v6222 = vand.u32 %v6109, 4294901760
  %v6223 = vsub.f32 %v6109, %v6222
  %v6224 = vand.u32 %v6223, 4294901760
  %v6225 = vsub.f32 %v6223, %v6224
  %v6226 = vand.u32 %v6225, 4294901760
  %6227 = vmatpush1.msra.mxu0 %v6226
  %6228 = vmatprep.subr.mxu0 0.0
  %v6229 = vand.u32 %v6110, 4294901760
  %v6230 = vsub.f32 %v6110, %v6229
  %v6231 = vand.u32 %v6230, 4294901760
  %v6232 = vsub.f32 %v6230, %v6231
  %v6233 = vand.u32 %v6232, 4294901760
  %6234 = vmatpush1.msra.mxu0 %v6233
  %6235 = vmatprep.subr.mxu0 0.0
  %v6236 = vand.u32 %v6111, 4294901760
  %v6237 = vsub.f32 %v6111, %v6236
  %v6238 = vand.u32 %v6237, 4294901760
  %v6239 = vsub.f32 %v6237, %v6238
  %v6240 = vand.u32 %v6239, 4294901760
  %6241 = vmatpush1.msra.mxu0 %v6240
  %6242 = vmatprep.subr.mxu0 0.0
  %6243 = vmatpush1.msra.mxu0 0.0
  %6244 = vmatprep.subr.mxu0 0.0
  %6245 = vmatpush1.msra.mxu0 0.0
  %6246 = vmatprep.subr.mxu0 0.0
  %6247 = vmatpush1.msra.mxu0 0.0
  %6248 = vmatprep.subr.mxu0 0.0
  %6249 = vmatpush1.msra.mxu0 0.0
  %6250 = vmatprep.subr.mxu0 0.0
  %6251 = vmatpush1.msra.mxu0 0.0
  %6252 = vmatprep.subr.mxu0 0.0
  %6253 = vmatpush1.msra.mxu0 0.0
  %6254 = vmatprep.subr.mxu0 0.0
  %6255 = vmatpush1.msra.mxu0 0.0
  %6256 = vmatprep.subr.mxu0 0.0
  %6257 = vmatpush1.msra.mxu0 0.0
  %6258 = vmatprep.subr.mxu0 0.0
  %6259 = vmatpush1.msra.mxu0 0.0
  %6260 = vmatprep.subr.mxu0 0.0
  %6261 = vmatpush1.msra.mxu0 0.0
  %6262 = vmatprep.subr.mxu0 0.0
  %6263 = vmatpush1.msra.mxu0 0.0
  %6264 = vmatprep.subr.mxu0 0.0
  %6265 = vmatpush1.msra.mxu0 0.0
  %6266 = vmatprep.subr.mxu0 0.0
  %6267 = vmatpush1.msra.mxu0 0.0
  %6268 = vmatprep.subr.mxu0 0.0
  %6269 = vmatpush1.msra.mxu0 0.0
  %6270 = vmatprep.subr.mxu0 0.0
  %6271 = vmatpush1.msra.mxu0 0.0
  %6272 = vmatprep.subr.mxu0 0.0
  %6273 = vmatpush1.msra.mxu0 0.0
  %6274 = vmatprep.subr.mxu0 0.0
  %6275 = vmatpush1.msra.mxu0 0.0
  %6276 = vmatprep.subr.mxu0 0.0
  %6277 = vmatpush1.msra.mxu0 0.0
  %6278 = vmatprep.subr.mxu0 0.0
  %6279 = vmatpush1.msra.mxu0 0.0
  %6280 = vmatprep.subr.mxu0 0.0
  %6281 = vmatpush1.msra.mxu0 0.0
  %6282 = vmatprep.subr.mxu0 0.0
  %6283 = vmatpush1.msra.mxu0 0.0
  %6284 = vmatprep.subr.mxu0 0.0
  %6285 = vmatpush1.msra.mxu0 0.0
  %6286 = vmatprep.subr.mxu0 0.0
  %6287 = vmatpush1.msra.mxu0 0.0
  %6288 = vmatprep.subr.mxu0 0.0
  %6289 = vmatpush1.msra.mxu0 0.0
  %6290 = vmatprep.subr.mxu0 0.0
  %6291 = vmatpush1.msra.mxu0 0.0
  %6292 = vmatprep.subr.mxu0 0.0
  %6293 = vmatpush1.msra.mxu0 0.0
  %6294 = vmatprep.mubr.f32.mxu0 0.0
  %v6295 = vand.u32 %v96, 4294901760
  %6296 = vmatmul.mubr.f32.gmra.mrb[0].mxu0 %v6295
  %v6297 = vpop.f32.mrb[0].mxu0
  %v6298 = vadd.f32 %v6197, %v6297
  %v6299 = vpop.f32.mrb[0].mxu0
  %6300 = vdwg.mxu0
  %6301 = vmatprep.subr.mxu0 0.0
  %v6302 = vand.u32 %v6106, 4294901760
  %v6303 = vsub.f32 %v6106, %v6302
  %6304 = vmatpush1.msra.mxu0 %v6303
  %6305 = vmatprep.subr.mxu0 0.0
  %v6306 = vand.u32 %v6107, 4294901760
  %v6307 = vsub.f32 %v6107, %v6306
  %6308 = vmatpush1.msra.mxu0 %v6307
  %6309 = vmatprep.subr.mxu0 0.0
  %v6310 = vand.u32 %v6108, 4294901760
  %v6311 = vsub.f32 %v6108, %v6310
  %6312 = vmatpush1.msra.mxu0 %v6311
  %6313 = vmatprep.subr.mxu0 0.0
  %v6314 = vand.u32 %v6109, 4294901760
  %v6315 = vsub.f32 %v6109, %v6314
  %6316 = vmatpush1.msra.mxu0 %v6315
  %6317 = vmatprep.subr.mxu0 0.0
  %v6318 = vand.u32 %v6110, 4294901760
  %v6319 = vsub.f32 %v6110, %v6318
  %6320 = vmatpush1.msra.mxu0 %v6319
  %6321 = vmatprep.subr.mxu0 0.0
  %v6322 = vand.u32 %v6111, 4294901760
  %v6323 = vsub.f32 %v6111, %v6322
  %6324 = vmatpush1.msra.mxu0 %v6323
  %6325 = vmatprep.subr.mxu0 0.0
  %6326 = vmatpush1.msra.mxu0 0.0
  %6327 = vmatprep.subr.mxu0 0.0
  %6328 = vmatpush1.msra.mxu0 0.0
  %6329 = vmatprep.subr.mxu0 0.0
  %6330 = vmatpush1.msra.mxu0 0.0
  %6331 = vmatprep.subr.mxu0 0.0
  %6332 = vmatpush1.msra.mxu0 0.0
  %6333 = vmatprep.subr.mxu0 0.0
  %6334 = vmatpush1.msra.mxu0 0.0
  %6335 = vmatprep.subr.mxu0 0.0
  %6336 = vmatpush1.msra.mxu0 0.0
  %6337 = vmatprep.subr.mxu0 0.0
  %6338 = vmatpush1.msra.mxu0 0.0
  %6339 = vmatprep.subr.mxu0 0.0
  %6340 = vmatpush1.msra.mxu0 0.0
  %6341 = vmatprep.subr.mxu0 0.0
  %6342 = vmatpush1.msra.mxu0 0.0
  %6343 = vmatprep.subr.mxu0 0.0
  %6344 = vmatpush1.msra.mxu0 0.0
  %6345 = vmatprep.subr.mxu0 0.0
  %6346 = vmatpush1.msra.mxu0 0.0
  %6347 = vmatprep.subr.mxu0 0.0
  %6348 = vmatpush1.msra.mxu0 0.0
  %6349 = vmatprep.subr.mxu0 0.0
  %6350 = vmatpush1.msra.mxu0 0.0
  %6351 = vmatprep.subr.mxu0 0.0
  %6352 = vmatpush1.msra.mxu0 0.0
  %6353 = vmatprep.subr.mxu0 0.0
  %6354 = vmatpush1.msra.mxu0 0.0
  %6355 = vmatprep.subr.mxu0 0.0
  %6356 = vmatpush1.msra.mxu0 0.0
  %6357 = vmatprep.subr.mxu0 0.0
  %6358 = vmatpush1.msra.mxu0 0.0
  %6359 = vmatprep.subr.mxu0 0.0
  %6360 = vmatpush1.msra.mxu0 0.0
  %6361 = vmatprep.subr.mxu0 0.0
  %6362 = vmatpush1.msra.mxu0 0.0
  %6363 = vmatprep.subr.mxu0 0.0
  %6364 = vmatpush1.msra.mxu0 0.0
  %6365 = vmatprep.subr.mxu0 0.0
  %6366 = vmatpush1.msra.mxu0 0.0
  %6367 = vmatprep.subr.mxu0 0.0
  %6368 = vmatpush1.msra.mxu0 0.0
  %6369 = vmatprep.subr.mxu0 0.0
  %6370 = vmatpush1.msra.mxu0 0.0
  %6371 = vmatprep.subr.mxu0 0.0
  %6372 = vmatpush1.msra.mxu0 0.0
  %6373 = vmatprep.subr.mxu0 0.0
  %6374 = vmatpush1.msra.mxu0 0.0
  %6375 = vmatprep.subr.mxu0 0.0
  %6376 = vmatpush1.msra.mxu0 0.0
  %6377 = vmatprep.mubr.f32.mxu0 0.0
  %v6378 = vand.u32 %v96, 4294901760
  %v6379 = vsub.f32 %v96, %v6378
  %6380 = vmatmul.mubr.f32.gmra.mrb[0].mxu0 %v6379
  %v6381 = vpop.f32.mrb[0].mxu0
  %v6382 = vadd.f32 %v6298, %v6381
  %v6383 = vpop.f32.mrb[0].mxu0
  %6384 = vdwg.mxu0
  %6385 = vmatprep.subr.mxu0 0.0
  %v6386 = vand.u32 %v6106, 4294901760
  %6387 = vmatpush1.msra.mxu0 %v6386
  %6388 = vmatprep.subr.mxu0 0.0
  %v6389 = vand.u32 %v6107, 4294901760
  %6390 = vmatpush1.msra.mxu0 %v6389
  %6391 = vmatprep.subr.mxu0 0.0
  %v6392 = vand.u32 %v6108, 4294901760
  %6393 = vmatpush1.msra.mxu0 %v6392
  %6394 = vmatprep.subr.mxu0 0.0
  %v6395 = vand.u32 %v6109, 4294901760
  %6396 = vmatpush1.msra.mxu0 %v6395
  %6397 = vmatprep.subr.mxu0 0.0
  %v6398 = vand.u32 %v6110, 4294901760
  %6399 = vmatpush1.msra.mxu0 %v6398
  %6400 = vmatprep.subr.mxu0 0.0
  %v6401 = vand.u32 %v6111, 4294901760
  %6402 = vmatpush1.msra.mxu0 %v6401
  %6403 = vmatprep.subr.mxu0 0.0
  %6404 = vmatpush1.msra.mxu0 0.0
  %6405 = vmatprep.subr.mxu0 0.0
  %6406 = vmatpush1.msra.mxu0 0.0
  %6407 = vmatprep.subr.mxu0 0.0
  %6408 = vmatpush1.msra.mxu0 0.0
  %6409 = vmatprep.subr.mxu0 0.0
  %6410 = vmatpush1.msra.mxu0 0.0
  %6411 = vmatprep.subr.mxu0 0.0
  %6412 = vmatpush1.msra.mxu0 0.0
  %6413 = vmatprep.subr.mxu0 0.0
  %6414 = vmatpush1.msra.mxu0 0.0
  %6415 = vmatprep.subr.mxu0 0.0
  %6416 = vmatpush1.msra.mxu0 0.0
  %6417 = vmatprep.subr.mxu0 0.0
  %6418 = vmatpush1.msra.mxu0 0.0
  %6419 = vmatprep.subr.mxu0 0.0
  %6420 = vmatpush1.msra.mxu0 0.0
  %6421 = vmatprep.subr.mxu0 0.0
  %6422 = vmatpush1.msra.mxu0 0.0
  %6423 = vmatprep.subr.mxu0 0.0
  %6424 = vmatpush1.msra.mxu0 0.0
  %6425 = vmatprep.subr.mxu0 0.0
  %6426 = vmatpush1.msra.mxu0 0.0
  %6427 = vmatprep.subr.mxu0 0.0
  %6428 = vmatpush1.msra.mxu0 0.0
  %6429 = vmatprep.subr.mxu0 0.0
  %6430 = vmatpush1.msra.mxu0 0.0
  %6431 = vmatprep.subr.mxu0 0.0
  %6432 = vmatpush1.msra.mxu0 0.0
  %6433 = vmatprep.subr.mxu0 0.0
  %6434 = vmatpush1.msra.mxu0 0.0
  %6435 = vmatprep.subr.mxu0 0.0
  %6436 = vmatpush1.msra.mxu0 0.0
  %6437 = vmatprep.subr.mxu0 0.0
  %6438 = vmatpush1.msra.mxu0 0.0
  %6439 = vmatprep.subr.mxu0 0.0
  %6440 = vmatpush1.msra.mxu0 0.0
  %6441 = vmatprep.subr.mxu0 0.0
  %6442 = vmatpush1.msra.mxu0 0.0
  %6443 = vmatprep.subr.mxu0 0.0
  %6444 = vmatpush1.msra.mxu0 0.0
  %6445 = vmatprep.subr.mxu0 0.0
  %6446 = vmatpush1.msra.mxu0 0.0
  %6447 = vmatprep.subr.mxu0 0.0
  %6448 = vmatpush1.msra.mxu0 0.0
  %6449 = vmatprep.subr.mxu0 0.0
  %6450 = vmatpush1.msra.mxu0 0.0
  %6451 = vmatprep.subr.mxu0 0.0
  %6452 = vmatpush1.msra.mxu0 0.0
  %6453 = vmatprep.subr.mxu0 0.0
  %6454 = vmatpush1.msra.mxu0 0.0
  %6455 = vmatprep.mubr.f32.mxu0 0.0
  %v6456 = vand.u32 %v96, 4294901760
  %v6457 = vsub.f32 %v96, %v6456
  %v6458 = vand.u32 %v6457, 4294901760
  %6459 = vmatmul.mubr.f32.gmra.mrb[0].mxu0 %v6458
  %v6460 = vpop.f32.mrb[0].mxu0
  %v6461 = vadd.f32 %v6382, %v6460
  %v6462 = vpop.f32.mrb[0].mxu0
  %6463 = vdwg.mxu0
  %6464 = vmatprep.subr.mxu0 0.0
  %v6465 = vand.u32 %v6106, 4294901760
  %v6466 = vsub.f32 %v6106, %v6465
  %v6467 = vand.u32 %v6466, 4294901760
  %6468 = vmatpush1.msra.mxu0 %v6467
  %6469 = vmatprep.subr.mxu0 0.0
  %v6470 = vand.u32 %v6107, 4294901760
  %v6471 = vsub.f32 %v6107, %v6470
  %v6472 = vand.u32 %v6471, 4294901760
  %6473 = vmatpush1.msra.mxu0 %v6472
  %6474 = vmatprep.subr.mxu0 0.0
  %v6475 = vand.u32 %v6108, 4294901760
  %v6476 = vsub.f32 %v6108, %v6475
  %v6477 = vand.u32 %v6476, 4294901760
  %6478 = vmatpush1.msra.mxu0 %v6477
  %6479 = vmatprep.subr.mxu0 0.0
  %v6480 = vand.u32 %v6109, 4294901760
  %v6481 = vsub.f32 %v6109, %v6480
  %v6482 = vand.u32 %v6481, 4294901760
  %6483 = vmatpush1.msra.mxu0 %v6482
  %6484 = vmatprep.subr.mxu0 0.0
  %v6485 = vand.u32 %v6110, 4294901760
  %v6486 = vsub.f32 %v6110, %v6485
  %v6487 = vand.u32 %v6486, 4294901760
  %6488 = vmatpush1.msra.mxu0 %v6487
  %6489 = vmatprep.subr.mxu0 0.0
  %v6490 = vand.u32 %v6111, 4294901760
  %v6491 = vsub.f32 %v6111, %v6490
  %v6492 = vand.u32 %v6491, 4294901760
  %6493 = vmatpush1.msra.mxu0 %v6492
  %6494 = vmatprep.subr.mxu0 0.0
  %6495 = vmatpush1.msra.mxu0 0.0
  %6496 = vmatprep.subr.mxu0 0.0
  %6497 = vmatpush1.msra.mxu0 0.0
  %6498 = vmatprep.subr.mxu0 0.0
  %6499 = vmatpush1.msra.mxu0 0.0
  %6500 = vmatprep.subr.mxu0 0.0
  %6501 = vmatpush1.msra.mxu0 0.0
  %6502 = vmatprep.subr.mxu0 0.0
  %6503 = vmatpush1.msra.mxu0 0.0
  %6504 = vmatprep.subr.mxu0 0.0
  %6505 = vmatpush1.msra.mxu0 0.0
  %6506 = vmatprep.subr.mxu0 0.0
  %6507 = vmatpush1.msra.mxu0 0.0
  %6508 = vmatprep.subr.mxu0 0.0
  %6509 = vmatpush1.msra.mxu0 0.0
  %6510 = vmatprep.subr.mxu0 0.0
  %6511 = vmatpush1.msra.mxu0 0.0
  %6512 = vmatprep.subr.mxu0 0.0
  %6513 = vmatpush1.msra.mxu0 0.0
  %6514 = vmatprep.subr.mxu0 0.0
  %6515 = vmatpush1.msra.mxu0 0.0
  %6516 = vmatprep.subr.mxu0 0.0
  %6517 = vmatpush1.msra.mxu0 0.0
  %6518 = vmatprep.subr.mxu0 0.0
  %6519 = vmatpush1.msra.mxu0 0.0
  %6520 = vmatprep.subr.mxu0 0.0
  %6521 = vmatpush1.msra.mxu0 0.0
  %6522 = vmatprep.subr.mxu0 0.0
  %6523 = vmatpush1.msra.mxu0 0.0
  %6524 = vmatprep.subr.mxu0 0.0
  %6525 = vmatpush1.msra.mxu0 0.0
  %6526 = vmatprep.subr.mxu0 0.0
  %6527 = vmatpush1.msra.mxu0 0.0
  %6528 = vmatprep.subr.mxu0 0.0
  %6529 = vmatpush1.msra.mxu0 0.0
  %6530 = vmatprep.subr.mxu0 0.0
  %6531 = vmatpush1.msra.mxu0 0.0
  %6532 = vmatprep.subr.mxu0 0.0
  %6533 = vmatpush1.msra.mxu0 0.0
  %6534 = vmatprep.subr.mxu0 0.0
  %6535 = vmatpush1.msra.mxu0 0.0
  %6536 = vmatprep.subr.mxu0 0.0
  %6537 = vmatpush1.msra.mxu0 0.0
  %6538 = vmatprep.subr.mxu0 0.0
  %6539 = vmatpush1.msra.mxu0 0.0
  %6540 = vmatprep.subr.mxu0 0.0
  %6541 = vmatpush1.msra.mxu0 0.0
  %6542 = vmatprep.subr.mxu0 0.0
  %6543 = vmatpush1.msra.mxu0 0.0
  %6544 = vmatprep.subr.mxu0 0.0
  %6545 = vmatpush1.msra.mxu0 0.0
  %6546 = vmatprep.mubr.f32.mxu0 0.0
  %v6547 = vand.u32 %v96, 4294901760
  %6548 = vmatmul.mubr.f32.gmra.mrb[0].mxu0 %v6547
  %v6549 = vpop.f32.mrb[0].mxu0
  %v6550 = vadd.f32 %v6461, %v6549
  %v6551 = vpop.f32.mrb[0].mxu0
  %6552 = vdwg.mxu0
  %6553 = vmatprep.subr.mxu0 0.0
  %v6554 = vand.u32 %v6106, 4294901760
  %6555 = vmatpush1.msra.mxu0 %v6554
  %6556 = vmatprep.subr.mxu0 0.0
  %v6557 = vand.u32 %v6107, 4294901760
  %6558 = vmatpush1.msra.mxu0 %v6557
  %6559 = vmatprep.subr.mxu0 0.0
  %v6560 = vand.u32 %v6108, 4294901760
  %6561 = vmatpush1.msra.mxu0 %v6560
  %6562 = vmatprep.subr.mxu0 0.0
  %v6563 = vand.u32 %v6109, 4294901760
  %6564 = vmatpush1.msra.mxu0 %v6563
  %6565 = vmatprep.subr.mxu0 0.0
  %v6566 = vand.u32 %v6110, 4294901760
  %6567 = vmatpush1.msra.mxu0 %v6566
  %6568 = vmatprep.subr.mxu0 0.0
  %v6569 = vand.u32 %v6111, 4294901760
  %6570 = vmatpush1.msra.mxu0 %v6569
  %6571 = vmatprep.subr.mxu0 0.0
  %6572 = vmatpush1.msra.mxu0 0.0
  %6573 = vmatprep.subr.mxu0 0.0
  %6574 = vmatpush1.msra.mxu0 0.0
  %6575 = vmatprep.subr.mxu0 0.0
  %6576 = vmatpush1.msra.mxu0 0.0
  %6577 = vmatprep.subr.mxu0 0.0
  %6578 = vmatpush1.msra.mxu0 0.0
  %6579 = vmatprep.subr.mxu0 0.0
  %6580 = vmatpush1.msra.mxu0 0.0
  %6581 = vmatprep.subr.mxu0 0.0
  %6582 = vmatpush1.msra.mxu0 0.0
  %6583 = vmatprep.subr.mxu0 0.0
  %6584 = vmatpush1.msra.mxu0 0.0
  %6585 = vmatprep.subr.mxu0 0.0
  %6586 = vmatpush1.msra.mxu0 0.0
  %6587 = vmatprep.subr.mxu0 0.0
  %6588 = vmatpush1.msra.mxu0 0.0
  %6589 = vmatprep.subr.mxu0 0.0
  %6590 = vmatpush1.msra.mxu0 0.0
  %6591 = vmatprep.subr.mxu0 0.0
  %6592 = vmatpush1.msra.mxu0 0.0
  %6593 = vmatprep.subr.mxu0 0.0
  %6594 = vmatpush1.msra.mxu0 0.0
  %6595 = vmatprep.subr.mxu0 0.0
  %6596 = vmatpush1.msra.mxu0 0.0
  %6597 = vmatprep.subr.mxu0 0.0
  %6598 = vmatpush1.msra.mxu0 0.0
  %6599 = vmatprep.subr.mxu0 0.0
  %6600 = vmatpush1.msra.mxu0 0.0
  %6601 = vmatprep.subr.mxu0 0.0
  %6602 = vmatpush1.msra.mxu0 0.0
  %6603 = vmatprep.subr.mxu0 0.0
  %6604 = vmatpush1.msra.mxu0 0.0
  %6605 = vmatprep.subr.mxu0 0.0
  %6606 = vmatpush1.msra.mxu0 0.0
  %6607 = vmatprep.subr.mxu0 0.0
  %6608 = vmatpush1.msra.mxu0 0.0
  %6609 = vmatprep.subr.mxu0 0.0
  %6610 = vmatpush1.msra.mxu0 0.0
  %6611 = vmatprep.subr.mxu0 0.0
  %6612 = vmatpush1.msra.mxu0 0.0
  %6613 = vmatprep.subr.mxu0 0.0
  %6614 = vmatpush1.msra.mxu0 0.0
  %6615 = vmatprep.subr.mxu0 0.0
  %6616 = vmatpush1.msra.mxu0 0.0
  %6617 = vmatprep.subr.mxu0 0.0
  %6618 = vmatpush1.msra.mxu0 0.0
  %6619 = vmatprep.subr.mxu0 0.0
  %6620 = vmatpush1.msra.mxu0 0.0
  %6621 = vmatprep.subr.mxu0 0.0
  %6622 = vmatpush1.msra.mxu0 0.0
  %6623 = vmatprep.mubr.f32.mxu0 0.0
  %v6624 = vand.u32 %v96, 4294901760
  %6625 = vmatmul.mubr.f32.gmra.mrb[0].mxu0 %v6624
  %v6626 = vpop.f32.mrb[0].mxu0
  %v6627 = vadd.f32 %v6550, %v6626
  %v6628 = vpop.f32.mrb[0].mxu0
  %6629 = vdwg.mxu0
  %v6630 = vadd.f32 %v6627, %v6103
  %v6631 = vtanh.pop %v6630
  %v6632 = vld [vmem:[%s8] sm:$0xff]
  %v6633 = vld [vmem:[%s8 + $0x8] sm:$0xff]
  %v6634 = vld [vmem:[%s8 + $0x10] sm:$0xff]
  %v6635 = vld [vmem:[%s8 + $0x18] sm:$0xff]
  %v6636 = vld [vmem:[%s9] sm:$0x1]
  %v6638 = vlaneseq
  %v6639 = vshrl.u32 %v6638, 7
  %v6640 = vsub.s32 0, %v6639
  %v6641 = vrot.slane %v6636, %v6640
  %vm6643 = vcmask 261120
  %v6645 = vsel %vm6643, %v6631, 0
  %6647 = vmatprep.subr.mxu0 0.0
  %v6648 = vand.u32 %v6632, 4294901760
  %6649 = vmatpush1.msra.mxu0 %v6648
  %6650 = vmatprep.subr.mxu0 0.0
  %v6651 = vand.u32 %v6633, 4294901760
  %6652 = vmatpush1.msra.mxu0 %v6651
  %6653 = vmatprep.subr.mxu0 0.0
  %v6654 = vand.u32 %v6634, 4294901760
  %6655 = vmatpush1.msra.mxu0 %v6654
  %6656 = vmatprep.subr.mxu0 0.0
  %v6657 = vand.u32 %v6635, 4294901760
  %6658 = vmatpush1.msra.mxu0 %v6657
  %6659 = vmatprep.subr.mxu0 0.0
  %6660 = vmatpush1.msra.mxu0 0.0
  %6661 = vmatprep.subr.mxu0 0.0
  %6662 = vmatpush1.msra.mxu0 0.0
  %6663 = vmatprep.subr.mxu0 0.0
  %6664 = vmatpush1.msra.mxu0 0.0
  %6665 = vmatprep.subr.mxu0 0.0
  %6666 = vmatpush1.msra.mxu0 0.0
  %6667 = vmatprep.subr.mxu0 0.0
  %6668 = vmatpush1.msra.mxu0 0.0
  %6669 = vmatprep.subr.mxu0 0.0
  %6670 = vmatpush1.msra.mxu0 0.0
  %6671 = vmatprep.subr.mxu0 0.0
  %6672 = vmatpush1.msra.mxu0 0.0
  %6673 = vmatprep.subr.mxu0 0.0
  %6674 = vmatpush1.msra.mxu0 0.0
  %6675 = vmatprep.subr.mxu0 0.0
  %6676 = vmatpush1.msra.mxu0 0.0
  %6677 = vmatprep.subr.mxu0 0.0
  %6678 = vmatpush1.msra.mxu0 0.0
  %6679 = vmatprep.subr.mxu0 0.0
  %6680 = vmatpush1.msra.mxu0 0.0
  %6681 = vmatprep.subr.mxu0 0.0
  %6682 = vmatpush1.msra.mxu0 0.0
  %6683 = vmatprep.subr.mxu0 0.0
  %6684 = vmatpush1.msra.mxu0 0.0
  %6685 = vmatprep.subr.mxu0 0.0
  %6686 = vmatpush1.msra.mxu0 0.0
  %6687 = vmatprep.subr.mxu0 0.0
  %6688 = vmatpush1.msra.mxu0 0.0
  %6689 = vmatprep.subr.mxu0 0.0
  %6690 = vmatpush1.msra.mxu0 0.0
  %6691 = vmatprep.subr.mxu0 0.0
  %6692 = vmatpush1.msra.mxu0 0.0
  %6693 = vmatprep.subr.mxu0 0.0
  %6694 = vmatpush1.msra.mxu0 0.0
  %6695 = vmatprep.subr.mxu0 0.0
  %6696 = vmatpush1.msra.mxu0 0.0
  %6697 = vmatprep.subr.mxu0 0.0
  %6698 = vmatpush1.msra.mxu0 0.0
  %6699 = vmatprep.subr.mxu0 0.0
  %6700 = vmatpush1.msra.mxu0 0.0
  %6701 = vmatprep.subr.mxu0 0.0
  %6702 = vmatpush1.msra.mxu0 0.0
  %6703 = vmatprep.subr.mxu0 0.0
  %6704 = vmatpush1.msra.mxu0 0.0
  %6705 = vmatprep.subr.mxu0 0.0
  %6706 = vmatpush1.msra.mxu0 0.0
  %6707 = vmatprep.subr.mxu0 0.0
  %6708 = vmatpush1.msra.mxu0 0.0
  %6709 = vmatprep.subr.mxu0 0.0
  %6710 = vmatpush1.msra.mxu0 0.0
  %6711 = vmatprep.subr.mxu0 0.0
  %6712 = vmatpush1.msra.mxu0 0.0
  %6713 = vmatprep.subr.mxu0 0.0
  %6714 = vmatpush1.msra.mxu0 0.0
  %6715 = vmatprep.mubr.f32.mxu0 0.0
  %v6716 = vand.u32 %v6645, 4294901760
  %v6717 = vsub.f32 %v6645, %v6716
  %v6718 = vand.u32 %v6717, 4294901760
  %v6719 = vsub.f32 %v6717, %v6718
  %v6720 = vand.u32 %v6719, 4294901760
  %6721 = vmatmul.mubr.f32.gmra.mrb[0].mxu0 %v6720
  %v6722 = vpop.f32.mrb[0].mxu0
  %v6723 = vadd.f32 %v6641, %v6722
  %v6724 = vpop.f32.mrb[0].mxu0
  %6725 = vdwg.mxu0
  %6726 = vmatprep.subr.mxu0 0.0
  %v6727 = vand.u32 %v6632, 4294901760
  %v6728 = vsub.f32 %v6632, %v6727
  %v6729 = vand.u32 %v6728, 4294901760
  %v6730 = vsub.f32 %v6728, %v6729
  %v6731 = vand.u32 %v6730, 4294901760
  %6732 = vmatpush1.msra.mxu0 %v6731
  %6733 = vmatprep.subr.mxu0 0.0
  %v6734 = vand.u32 %v6633, 4294901760
  %v6735 = vsub.f32 %v6633, %v6734
  %v6736 = vand.u32 %v6735, 4294901760
  %v6737 = vsub.f32 %v6735, %v6736
  %v6738 = vand.u32 %v6737, 4294901760
  %6739 = vmatpush1.msra.mxu0 %v6738
  %6740 = vmatprep.subr.mxu0 0.0
  %v6741 = vand.u32 %v6634, 4294901760
  %v6742 = vsub.f32 %v6634, %v6741
  %v6743 = vand.u32 %v6742, 4294901760
  %v6744 = vsub.f32 %v6742, %v6743
  %v6745 = vand.u32 %v6744, 4294901760
  %6746 = vmatpush1.msra.mxu0 %v6745
  %6747 = vmatprep.subr.mxu0 0.0
  %v6748 = vand.u32 %v6635, 4294901760
  %v6749 = vsub.f32 %v6635, %v6748
  %v6750 = vand.u32 %v6749, 4294901760
  %v6751 = vsub.f32 %v6749, %v6750
  %v6752 = vand.u32 %v6751, 4294901760
  %6753 = vmatpush1.msra.mxu0 %v6752
  %6754 = vmatprep.subr.mxu0 0.0
  %6755 = vmatpush1.msra.mxu0 0.0
  %6756 = vmatprep.subr.mxu0 0.0
  %6757 = vmatpush1.msra.mxu0 0.0
  %6758 = vmatprep.subr.mxu0 0.0
  %6759 = vmatpush1.msra.mxu0 0.0
  %6760 = vmatprep.subr.mxu0 0.0
  %6761 = vmatpush1.msra.mxu0 0.0
  %6762 = vmatprep.subr.mxu0 0.0
  %6763 = vmatpush1.msra.mxu0 0.0
  %6764 = vmatprep.subr.mxu0 0.0
  %6765 = vmatpush1.msra.mxu0 0.0
  %6766 = vmatprep.subr.mxu0 0.0
  %6767 = vmatpush1.msra.mxu0 0.0
  %6768 = vmatprep.subr.mxu0 0.0
  %6769 = vmatpush1.msra.mxu0 0.0
  %6770 = vmatprep.subr.mxu0 0.0
  %6771 = vmatpush1.msra.mxu0 0.0
  %6772 = vmatprep.subr.mxu0 0.0
  %6773 = vmatpush1.msra.mxu0 0.0
  %6774 = vmatprep.subr.mxu0 0.0
  %6775 = vmatpush1.msra.mxu0 0.0
  %6776 = vmatprep.subr.mxu0 0.0
  %6777 = vmatpush1.msra.mxu0 0.0
  %6778 = vmatprep.subr.mxu0 0.0
  %6779 = vmatpush1.msra.mxu0 0.0
  %6780 = vmatprep.subr.mxu0 0.0
  %6781 = vmatpush1.msra.mxu0 0.0
  %6782 = vmatprep.subr.mxu0 0.0
  %6783 = vmatpush1.msra.mxu0 0.0
  %6784 = vmatprep.subr.mxu0 0.0
  %6785 = vmatpush1.msra.mxu0 0.0
  %6786 = vmatprep.subr.mxu0 0.0
  %6787 = vmatpush1.msra.mxu0 0.0
  %6788 = vmatprep.subr.mxu0 0.0
  %6789 = vmatpush1.msra.mxu0 0.0
  %6790 = vmatprep.subr.mxu0 0.0
  %6791 = vmatpush1.msra.mxu0 0.0
  %6792 = vmatprep.subr.mxu0 0.0
  %6793 = vmatpush1.msra.mxu0 0.0
  %6794 = vmatprep.subr.mxu0 0.0
  %6795 = vmatpush1.msra.mxu0 0.0
  %6796 = vmatprep.subr.mxu0 0.0
  %6797 = vmatpush1.msra.mxu0 0.0
  %6798 = vmatprep.subr.mxu0 0.0
  %6799 = vmatpush1.msra.mxu0 0.0
  %6800 = vmatprep.subr.mxu0 0.0
  %6801 = vmatpush1.msra.mxu0 0.0
  %6802 = vmatprep.subr.mxu0 0.0
  %6803 = vmatpush1.msra.mxu0 0.0
  %6804 = vmatprep.subr.mxu0 0.0
  %6805 = vmatpush1.msra.mxu0 0.0
  %6806 = vmatprep.subr.mxu0 0.0
  %6807 = vmatpush1.msra.mxu0 0.0
  %6808 = vmatprep.subr.mxu0 0.0
  %6809 = vmatpush1.msra.mxu0 0.0
  %6810 = vmatprep.mubr.f32.mxu0 0.0
  %v6811 = vand.u32 %v6645, 4294901760
  %6812 = vmatmul.mubr.f32.gmra.mrb[0].mxu0 %v6811
  %v6813 = vpop.f32.mrb[0].mxu0
  %v6814 = vadd.f32 %v6723, %v6813
  %v6815 = vpop.f32.mrb[0].mxu0
  %6816 = vdwg.mxu0
  %6817 = vmatprep.subr.mxu0 0.0
  %v6818 = vand.u32 %v6632, 4294901760
  %v6819 = vsub.f32 %v6632, %v6818
  %6820 = vmatpush1.msra.mxu0 %v6819
  %6821 = vmatprep.subr.mxu0 0.0
  %v6822 = vand.u32 %v6633, 4294901760
  %v6823 = vsub.f32 %v6633, %v6822
  %6824 = vmatpush1.msra.mxu0 %v6823
  %6825 = vmatprep.subr.mxu0 0.0
  %v6826 = vand.u32 %v6634, 4294901760
  %v6827 = vsub.f32 %v6634, %v6826
  %6828 = vmatpush1.msra.mxu0 %v6827
  %6829 = vmatprep.subr.mxu0 0.0
  %v6830 = vand.u32 %v6635, 4294901760
  %v6831 = vsub.f32 %v6635, %v6830
  %6832 = vmatpush1.msra.mxu0 %v6831
  %6833 = vmatprep.subr.mxu0 0.0
  %6834 = vmatpush1.msra.mxu0 0.0
  %6835 = vmatprep.subr.mxu0 0.0
  %6836 = vmatpush1.msra.mxu0 0.0
  %6837 = vmatprep.subr.mxu0 0.0
  %6838 = vmatpush1.msra.mxu0 0.0
  %6839 = vmatprep.subr.mxu0 0.0
  %6840 = vmatpush1.msra.mxu0 0.0
  %6841 = vmatprep.subr.mxu0 0.0
  %6842 = vmatpush1.msra.mxu0 0.0
  %6843 = vmatprep.subr.mxu0 0.0
  %6844 = vmatpush1.msra.mxu0 0.0
  %6845 = vmatprep.subr.mxu0 0.0
  %6846 = vmatpush1.msra.mxu0 0.0
  %6847 = vmatprep.subr.mxu0 0.0
  %6848 = vmatpush1.msra.mxu0 0.0
  %6849 = vmatprep.subr.mxu0 0.0
  %6850 = vmatpush1.msra.mxu0 0.0
  %6851 = vmatprep.subr.mxu0 0.0
  %6852 = vmatpush1.msra.mxu0 0.0
  %6853 = vmatprep.subr.mxu0 0.0
  %6854 = vmatpush1.msra.mxu0 0.0
  %6855 = vmatprep.subr.mxu0 0.0
  %6856 = vmatpush1.msra.mxu0 0.0
  %6857 = vmatprep.subr.mxu0 0.0
  %6858 = vmatpush1.msra.mxu0 0.0
  %6859 = vmatprep.subr.mxu0 0.0
  %6860 = vmatpush1.msra.mxu0 0.0
  %6861 = vmatprep.subr.mxu0 0.0
  %6862 = vmatpush1.msra.mxu0 0.0
  %6863 = vmatprep.subr.mxu0 0.0
  %6864 = vmatpush1.msra.mxu0 0.0
  %6865 = vmatprep.subr.mxu0 0.0
  %6866 = vmatpush1.msra.mxu0 0.0
  %6867 = vmatprep.subr.mxu0 0.0
  %6868 = vmatpush1.msra.mxu0 0.0
  %6869 = vmatprep.subr.mxu0 0.0
  %6870 = vmatpush1.msra.mxu0 0.0
  %6871 = vmatprep.subr.mxu0 0.0
  %6872 = vmatpush1.msra.mxu0 0.0
  %6873 = vmatprep.subr.mxu0 0.0
  %6874 = vmatpush1.msra.mxu0 0.0
  %6875 = vmatprep.subr.mxu0 0.0
  %6876 = vmatpush1.msra.mxu0 0.0
  %6877 = vmatprep.subr.mxu0 0.0
  %6878 = vmatpush1.msra.mxu0 0.0
  %6879 = vmatprep.subr.mxu0 0.0
  %6880 = vmatpush1.msra.mxu0 0.0
  %6881 = vmatprep.subr.mxu0 0.0
  %6882 = vmatpush1.msra.mxu0 0.0
  %6883 = vmatprep.subr.mxu0 0.0
  %6884 = vmatpush1.msra.mxu0 0.0
  %6885 = vmatprep.subr.mxu0 0.0
  %6886 = vmatpush1.msra.mxu0 0.0
  %6887 = vmatprep.subr.mxu0 0.0
  %6888 = vmatpush1.msra.mxu0 0.0
  %6889 = vmatprep.mubr.f32.mxu0 0.0
  %v6890 = vand.u32 %v6645, 4294901760
  %v6891 = vsub.f32 %v6645, %v6890
  %6892 = vmatmul.mubr.f32.gmra.mrb[0].mxu0 %v6891
  %v6893 = vpop.f32.mrb[0].mxu0
  %v6894 = vadd.f32 %v6814, %v6893
  %v6895 = vpop.f32.mrb[0].mxu0
  %6896 = vdwg.mxu0
  %6897 = vmatprep.subr.mxu0 0.0
  %v6898 = vand.u32 %v6632, 4294901760
  %6899 = vmatpush1.msra.mxu0 %v6898
  %6900 = vmatprep.subr.mxu0 0.0
  %v6901 = vand.u32 %v6633, 4294901760
  %6902 = vmatpush1.msra.mxu0 %v6901
  %6903 = vmatprep.subr.mxu0 0.0
  %v6904 = vand.u32 %v6634, 4294901760
  %6905 = vmatpush1.msra.mxu0 %v6904
  %6906 = vmatprep.subr.mxu0 0.0
  %v6907 = vand.u32 %v6635, 4294901760
  %6908 = vmatpush1.msra.mxu0 %v6907
  %6909 = vmatprep.subr.mxu0 0.0
  %6910 = vmatpush1.msra.mxu0 0.0
  %6911 = vmatprep.subr.mxu0 0.0
  %6912 = vmatpush1.msra.mxu0 0.0
  %6913 = vmatprep.subr.mxu0 0.0
  %6914 = vmatpush1.msra.mxu0 0.0
  %6915 = vmatprep.subr.mxu0 0.0
  %6916 = vmatpush1.msra.mxu0 0.0
  %6917 = vmatprep.subr.mxu0 0.0
  %6918 = vmatpush1.msra.mxu0 0.0
  %6919 = vmatprep.subr.mxu0 0.0
  %6920 = vmatpush1.msra.mxu0 0.0
  %6921 = vmatprep.subr.mxu0 0.0
  %6922 = vmatpush1.msra.mxu0 0.0
  %6923 = vmatprep.subr.mxu0 0.0
  %6924 = vmatpush1.msra.mxu0 0.0
  %6925 = vmatprep.subr.mxu0 0.0
  %6926 = vmatpush1.msra.mxu0 0.0
  %6927 = vmatprep.subr.mxu0 0.0
  %6928 = vmatpush1.msra.mxu0 0.0
  %6929 = vmatprep.subr.mxu0 0.0
  %6930 = vmatpush1.msra.mxu0 0.0
  %6931 = vmatprep.subr.mxu0 0.0
  %6932 = vmatpush1.msra.mxu0 0.0
  %6933 = vmatprep.subr.mxu0 0.0
  %6934 = vmatpush1.msra.mxu0 0.0
  %6935 = vmatprep.subr.mxu0 0.0
  %6936 = vmatpush1.msra.mxu0 0.0
  %6937 = vmatprep.subr.mxu0 0.0
  %6938 = vmatpush1.msra.mxu0 0.0
  %6939 = vmatprep.subr.mxu0 0.0
  %6940 = vmatpush1.msra.mxu0 0.0
  %6941 = vmatprep.subr.mxu0 0.0
  %6942 = vmatpush1.msra.mxu0 0.0
  %6943 = vmatprep.subr.mxu0 0.0
  %6944 = vmatpush1.msra.mxu0 0.0
  %6945 = vmatprep.subr.mxu0 0.0
  %6946 = vmatpush1.msra.mxu0 0.0
  %6947 = vmatprep.subr.mxu0 0.0
  %6948 = vmatpush1.msra.mxu0 0.0
  %6949 = vmatprep.subr.mxu0 0.0
  %6950 = vmatpush1.msra.mxu0 0.0
  %6951 = vmatprep.subr.mxu0 0.0
  %6952 = vmatpush1.msra.mxu0 0.0
  %6953 = vmatprep.subr.mxu0 0.0
  %6954 = vmatpush1.msra.mxu0 0.0
  %6955 = vmatprep.subr.mxu0 0.0
  %6956 = vmatpush1.msra.mxu0 0.0
  %6957 = vmatprep.subr.mxu0 0.0
  %6958 = vmatpush1.msra.mxu0 0.0
  %6959 = vmatprep.subr.mxu0 0.0
  %6960 = vmatpush1.msra.mxu0 0.0
  %6961 = vmatprep.subr.mxu0 0.0
  %6962 = vmatpush1.msra.mxu0 0.0
  %6963 = vmatprep.subr.mxu0 0.0
  %6964 = vmatpush1.msra.mxu0 0.0
  %6965 = vmatprep.mubr.f32.mxu0 0.0
  %v6966 = vand.u32 %v6645, 4294901760
  %v6967 = vsub.f32 %v6645, %v6966
  %v6968 = vand.u32 %v6967, 4294901760
  %6969 = vmatmul.mubr.f32.gmra.mrb[0].mxu0 %v6968
  %v6970 = vpop.f32.mrb[0].mxu0
  %v6971 = vadd.f32 %v6894, %v6970
  %v6972 = vpop.f32.mrb[0].mxu0
  %6973 = vdwg.mxu0
  %6974 = vmatprep.subr.mxu0 0.0
  %v6975 = vand.u32 %v6632, 4294901760
  %v6976 = vsub.f32 %v6632, %v6975
  %v6977 = vand.u32 %v6976, 4294901760
  %6978 = vmatpush1.msra.mxu0 %v6977
  %6979 = vmatprep.subr.mxu0 0.0
  %v6980 = vand.u32 %v6633, 4294901760
  %v6981 = vsub.f32 %v6633, %v6980
  %v6982 = vand.u32 %v6981, 4294901760
  %6983 = vmatpush1.msra.mxu0 %v6982
  %6984 = vmatprep.subr.mxu0 0.0
  %v6985 = vand.u32 %v6634, 4294901760
  %v6986 = vsub.f32 %v6634, %v6985
  %v6987 = vand.u32 %v6986, 4294901760
  %6988 = vmatpush1.msra.mxu0 %v6987
  %6989 = vmatprep.subr.mxu0 0.0
  %v6990 = vand.u32 %v6635, 4294901760
  %v6991 = vsub.f32 %v6635, %v6990
  %v6992 = vand.u32 %v6991, 4294901760
  %6993 = vmatpush1.msra.mxu0 %v6992
  %6994 = vmatprep.subr.mxu0 0.0
  %6995 = vmatpush1.msra.mxu0 0.0
  %6996 = vmatprep.subr.mxu0 0.0
  %6997 = vmatpush1.msra.mxu0 0.0
  %6998 = vmatprep.subr.mxu0 0.0
  %6999 = vmatpush1.msra.mxu0 0.0
  %7000 = vmatprep.subr.mxu0 0.0
  %7001 = vmatpush1.msra.mxu0 0.0
  %7002 = vmatprep.subr.mxu0 0.0
  %7003 = vmatpush1.msra.mxu0 0.0
  %7004 = vmatprep.subr.mxu0 0.0
  %7005 = vmatpush1.msra.mxu0 0.0
  %7006 = vmatprep.subr.mxu0 0.0
  %7007 = vmatpush1.msra.mxu0 0.0
  %7008 = vmatprep.subr.mxu0 0.0
  %7009 = vmatpush1.msra.mxu0 0.0
  %7010 = vmatprep.subr.mxu0 0.0
  %7011 = vmatpush1.msra.mxu0 0.0
  %7012 = vmatprep.subr.mxu0 0.0
  %7013 = vmatpush1.msra.mxu0 0.0
  %7014 = vmatprep.subr.mxu0 0.0
  %7015 = vmatpush1.msra.mxu0 0.0
  %7016 = vmatprep.subr.mxu0 0.0
  %7017 = vmatpush1.msra.mxu0 0.0
  %7018 = vmatprep.subr.mxu0 0.0
  %7019 = vmatpush1.msra.mxu0 0.0
  %7020 = vmatprep.subr.mxu0 0.0
  %7021 = vmatpush1.msra.mxu0 0.0
  %7022 = vmatprep.subr.mxu0 0.0
  %7023 = vmatpush1.msra.mxu0 0.0
  %7024 = vmatprep.subr.mxu0 0.0
  %7025 = vmatpush1.msra.mxu0 0.0
  %7026 = vmatprep.subr.mxu0 0.0
  %7027 = vmatpush1.msra.mxu0 0.0
  %7028 = vmatprep.subr.mxu0 0.0
  %7029 = vmatpush1.msra.mxu0 0.0
  %7030 = vmatprep.subr.mxu0 0.0
  %7031 = vmatpush1.msra.mxu0 0.0
  %7032 = vmatprep.subr.mxu0 0.0
  %7033 = vmatpush1.msra.mxu0 0.0
  %7034 = vmatprep.subr.mxu0 0.0
  %7035 = vmatpush1.msra.mxu0 0.0
  %7036 = vmatprep.subr.mxu0 0.0
  %7037 = vmatpush1.msra.mxu0 0.0
  %7038 = vmatprep.subr.mxu0 0.0
  %7039 = vmatpush1.msra.mxu0 0.0
  %7040 = vmatprep.subr.mxu0 0.0
  %7041 = vmatpush1.msra.mxu0 0.0
  %7042 = vmatprep.subr.mxu0 0.0
  %7043 = vmatpush1.msra.mxu0 0.0
  %7044 = vmatprep.subr.mxu0 0.0
  %7045 = vmatpush1.msra.mxu0 0.0
  %7046 = vmatprep.subr.mxu0 0.0
  %7047 = vmatpush1.msra.mxu0 0.0
  %7048 = vmatprep.subr.mxu0 0.0
  %7049 = vmatpush1.msra.mxu0 0.0
  %7050 = vmatprep.mubr.f32.mxu0 0.0
  %v7051 = vand.u32 %v6645, 4294901760
  %7052 = vmatmul.mubr.f32.gmra.mrb[0].mxu0 %v7051
  %v7053 = vpop.f32.mrb[0].mxu0
  %v7054 = vadd.f32 %v6971, %v7053
  %v7055 = vpop.f32.mrb[0].mxu0
  %7056 = vdwg.mxu0
  %7057 = vmatprep.subr.mxu0 0.0
  %v7058 = vand.u32 %v6632, 4294901760
  %7059 = vmatpush1.msra.mxu0 %v7058
  %7060 = vmatprep.subr.mxu0 0.0
  %v7061 = vand.u32 %v6633, 4294901760
  %7062 = vmatpush1.msra.mxu0 %v7061
  %7063 = vmatprep.subr.mxu0 0.0
  %v7064 = vand.u32 %v6634, 4294901760
  %7065 = vmatpush1.msra.mxu0 %v7064
  %7066 = vmatprep.subr.mxu0 0.0
  %v7067 = vand.u32 %v6635, 4294901760
  %7068 = vmatpush1.msra.mxu0 %v7067
  %7069 = vmatprep.subr.mxu0 0.0
  %7070 = vmatpush1.msra.mxu0 0.0
  %7071 = vmatprep.subr.mxu0 0.0
  %7072 = vmatpush1.msra.mxu0 0.0
  %7073 = vmatprep.subr.mxu0 0.0
  %7074 = vmatpush1.msra.mxu0 0.0
  %7075 = vmatprep.subr.mxu0 0.0
  %7076 = vmatpush1.msra.mxu0 0.0
  %7077 = vmatprep.subr.mxu0 0.0
  %7078 = vmatpush1.msra.mxu0 0.0
  %7079 = vmatprep.subr.mxu0 0.0
  %7080 = vmatpush1.msra.mxu0 0.0
  %7081 = vmatprep.subr.mxu0 0.0
  %7082 = vmatpush1.msra.mxu0 0.0
  %7083 = vmatprep.subr.mxu0 0.0
  %7084 = vmatpush1.msra.mxu0 0.0
  %7085 = vmatprep.subr.mxu0 0.0
  %7086 = vmatpush1.msra.mxu0 0.0
  %7087 = vmatprep.subr.mxu0 0.0
  %7088 = vmatpush1.msra.mxu0 0.0
  %7089 = vmatprep.subr.mxu0 0.0
  %7090 = vmatpush1.msra.mxu0 0.0
  %7091 = vmatprep.subr.mxu0 0.0
  %7092 = vmatpush1.msra.mxu0 0.0
  %7093 = vmatprep.subr.mxu0 0.0
  %7094 = vmatpush1.msra.mxu0 0.0
  %7095 = vmatprep.subr.mxu0 0.0
  %7096 = vmatpush1.msra.mxu0 0.0
  %7097 = vmatprep.subr.mxu0 0.0
  %7098 = vmatpush1.msra.mxu0 0.0
  %7099 = vmatprep.subr.mxu0 0.0
  %7100 = vmatpush1.msra.mxu0 0.0
  %7101 = vmatprep.subr.mxu0 0.0
  %7102 = vmatpush1.msra.mxu0 0.0
  %7103 = vmatprep.subr.mxu0 0.0
  %7104 = vmatpush1.msra.mxu0 0.0
  %7105 = vmatprep.subr.mxu0 0.0
  %7106 = vmatpush1.msra.mxu0 0.0
  %7107 = vmatprep.subr.mxu0 0.0
  %7108 = vmatpush1.msra.mxu0 0.0
  %7109 = vmatprep.subr.mxu0 0.0
  %7110 = vmatpush1.msra.mxu0 0.0
  %7111 = vmatprep.subr.mxu0 0.0
  %7112 = vmatpush1.msra.mxu0 0.0
  %7113 = vmatprep.subr.mxu0 0.0
  %7114 = vmatpush1.msra.mxu0 0.0
  %7115 = vmatprep.subr.mxu0 0.0
  %7116 = vmatpush1.msra.mxu0 0.0
  %7117 = vmatprep.subr.mxu0 0.0
  %7118 = vmatpush1.msra.mxu0 0.0
  %7119 = vmatprep.subr.mxu0 0.0
  %7120 = vmatpush1.msra.mxu0 0.0
  %7121 = vmatprep.subr.mxu0 0.0
  %7122 = vmatpush1.msra.mxu0 0.0
  %7123 = vmatprep.subr.mxu0 0.0
  %7124 = vmatpush1.msra.mxu0 0.0
  %7125 = vmatprep.mubr.f32.mxu0 0.0
  %v7126 = vand.u32 %v6645, 4294901760
  %7127 = vmatmul.mubr.f32.gmra.mrb[0].mxu0 %v7126
  %v7128 = vpop.f32.mrb[0].mxu0
  %v7129 = vadd.f32 %v7054, %v7128
  %v7130 = vpop.f32.mrb[0].mxu0
  %7131 = vdwg.mxu0
  %vm7132 = vcmask 304128
  %7133 = vst.msk [vmem:[%s12] sm:$0x3] %vm7132, %v7129
  %v7134 = vtanh.pop %v7129
  %v7135 = vld [vmem:[%s10] sm:$0x1]
  %7137 = vset.pattern.permute.xlu0 5
  %7138 = vperm.xlu0 %7137, %v7134
  %v7139 = vpop.permute.xlu0 %7138
  %v7142 = vlaneseq
  %v7143 = vshrl.u32 %v7142, 7
  %v7144 = vsub.s32 0, %v7143
  %v7145 = vrot.slane %v7135, %v7144
  %v7147 = vmul.f32 %v7139, %v7145
  %v7148 = vld [vmem:[%s11] sm:$0x1]
  %v7150 = vlaneseq
  %v7151 = vshrl.u32 %v7150, 7
  %v7152 = vsub.s32 0, %v7151
  %v7153 = vrot.slane %v7148, %v7152
  %v7155 = vadd.f32 %v7147, %v7153
  %v7156 = vmul.f32 %v7155, %v6631
  %v7157 = vld [vmem:[%s6] sm:$0xff]
  %v7158 = vld [vmem:[%s6 + $0x8] sm:$0xff]
  %v7159 = vld [vmem:[%s6 + $0x10] sm:$0xff]
  %v7160 = vld [vmem:[%s6 + $0x18] sm:$0xff]
  %v7161 = vld [vmem:[%s6 + $0x20] sm:$0xff]
  %v7162 = vld [vmem:[%s6 + $0x28] sm:$0xff]
  %v7163 = vld [vmem:[%s6 + $0x30] sm:$0xff]
  %v7164 = vld [vmem:[%s6 + $0x38] sm:$0xff]
  %v7165 = vld [vmem:[%s6 + $0x40] sm:$0xff]
  %v7166 = vld [vmem:[%s6 + $0x48] sm:$0xff]
  %v7167 = vld [vmem:[%s6 + $0x50] sm:$0xff]
  %v7168 = vld [vmem:[%s6 + $0x58] sm:$0xff]
  %v7169 = vld [vmem:[%s6 + $0x60] sm:$0xff]
  %v7170 = vld [vmem:[%s6 + $0x68] sm:$0xff]
  %v7171 = vld [vmem:[%s6 + $0x70] sm:$0xff]
  %v7172 = vld [vmem:[%s6 + $0x78] sm:$0xff]
  %v7173 = vld [vmem:[%s6 + $0x80] sm:$0xff]
  %v7174 = vld [vmem:[%s6 + $0x88] sm:$0xff]
  %v7175 = vld [vmem:[%s6 + $0x90] sm:$0xff]
  %v7176 = vld [vmem:[%s6 + $0x98] sm:$0xff]
  %v7177 = vld [vmem:[%s6 + $0xa0] sm:$0xff]
  %v7178 = vld [vmem:[%s6 + $0xa8] sm:$0xff]
  %v7179 = vld [vmem:[%s6 + $0xb0] sm:$0xff]
  %v7180 = vld [vmem:[%s6 + $0xb8] sm:$0xff]
  %v7181 = vld [vmem:[%s6 + $0xc0] sm:$0xff]
  %v7182 = vld [vmem:[%s6 + $0xc8] sm:$0xff]
  %v7183 = vld [vmem:[%s6 + $0xd0] sm:$0xff]
  %v7184 = vld [vmem:[%s6 + $0xd8] sm:$0xff]
  %v7185 = vld [vmem:[%s6 + $0xe0] sm:$0xff]
  %v7186 = vld [vmem:[%s6 + $0xe8] sm:$0xff]
  %v7187 = vld [vmem:[%s6 + $0xf0] sm:$0xff]
  %v7188 = vld [vmem:[%s6 + $0xf8] sm:$0xff]
  %v7190 = vsel %vm6643, %v7156, 0
  %v7192 = vand.u32 %v7158, 4294901760
  %7193 = vmatprep.subr.mxu0 %v7192
  %v7194 = vand.u32 %v7157, 4294901760
  %7195 = vmatpush1.msra.mxu0 %v7194
  %v7196 = vand.u32 %v7166, 4294901760
  %7197 = vmatprep.subr.mxu0 %v7196
  %v7198 = vand.u32 %v7165, 4294901760
  %7199 = vmatpush1.msra.mxu0 %v7198
  %v7200 = vand.u32 %v7174, 4294901760
  %7201 = vmatprep.subr.mxu0 %v7200
  %v7202 = vand.u32 %v7173, 4294901760
  %7203 = vmatpush1.msra.mxu0 %v7202
  %v7204 = vand.u32 %v7182, 4294901760
  %7205 = vmatprep.subr.mxu0 %v7204
  %v7206 = vand.u32 %v7181, 4294901760
  %7207 = vmatpush1.msra.mxu0 %v7206
  %7208 = vmatprep.subr.mxu0 0.0
  %7209 = vmatpush1.msra.mxu0 0.0
  %7210 = vmatprep.subr.mxu0 0.0
  %7211 = vmatpush1.msra.mxu0 0.0
  %7212 = vmatprep.subr.mxu0 0.0
  %7213 = vmatpush1.msra.mxu0 0.0
  %7214 = vmatprep.subr.mxu0 0.0
  %7215 = vmatpush1.msra.mxu0 0.0
  %7216 = vmatprep.subr.mxu0 0.0
  %7217 = vmatpush1.msra.mxu0 0.0
  %7218 = vmatprep.subr.mxu0 0.0
  %7219 = vmatpush1.msra.mxu0 0.0
  %7220 = vmatprep.subr.mxu0 0.0
  %7221 = vmatpush1.msra.mxu0 0.0
  %7222 = vmatprep.subr.mxu0 0.0
  %7223 = vmatpush1.msra.mxu0 0.0
  %7224 = vmatprep.subr.mxu0 0.0
  %7225 = vmatpush1.msra.mxu0 0.0
  %7226 = vmatprep.subr.mxu0 0.0
  %7227 = vmatpush1.msra.mxu0 0.0
  %7228 = vmatprep.subr.mxu0 0.0
  %7229 = vmatpush1.msra.mxu0 0.0
  %7230 = vmatprep.subr.mxu0 0.0
  %7231 = vmatpush1.msra.mxu0 0.0
  %7232 = vmatprep.subr.mxu0 0.0
  %7233 = vmatpush1.msra.mxu0 0.0
  %7234 = vmatprep.subr.mxu0 0.0
  %7235 = vmatpush1.msra.mxu0 0.0
  %7236 = vmatprep.subr.mxu0 0.0
  %7237 = vmatpush1.msra.mxu0 0.0
  %7238 = vmatprep.subr.mxu0 0.0
  %7239 = vmatpush1.msra.mxu0 0.0
  %7240 = vmatprep.subr.mxu0 0.0
  %7241 = vmatpush1.msra.mxu0 0.0
  %7242 = vmatprep.subr.mxu0 0.0
  %7243 = vmatpush1.msra.mxu0 0.0
  %7244 = vmatprep.subr.mxu0 0.0
  %7245 = vmatpush1.msra.mxu0 0.0
  %7246 = vmatprep.subr.mxu0 0.0
  %7247 = vmatpush1.msra.mxu0 0.0
  %7248 = vmatprep.subr.mxu0 0.0
  %7249 = vmatpush1.msra.mxu0 0.0
  %7250 = vmatprep.subr.mxu0 0.0
  %7251 = vmatpush1.msra.mxu0 0.0
  %7252 = vmatprep.subr.mxu0 0.0
  %7253 = vmatpush1.msra.mxu0 0.0
  %7254 = vmatprep.subr.mxu0 0.0
  %7255 = vmatpush1.msra.mxu0 0.0
  %7256 = vmatprep.subr.mxu0 0.0
  %7257 = vmatpush1.msra.mxu0 0.0
  %7258 = vmatprep.subr.mxu0 0.0
  %7259 = vmatpush1.msra.mxu0 0.0
  %7260 = vmatprep.subr.mxu0 0.0
  %7261 = vmatpush1.msra.mxu0 0.0
  %7262 = vmatprep.subr.mxu0 0.0
  %7263 = vmatpush1.msra.mxu0 0.0
  %7264 = vmatprep.mubr.f32.mxu0 0.0
  %v7265 = vand.u32 %v7190, 4294901760
  %v7266 = vsub.f32 %v7190, %v7265
  %v7267 = vand.u32 %v7266, 4294901760
  %v7268 = vsub.f32 %v7266, %v7267
  %v7269 = vand.u32 %v7268, 4294901760
  %7270 = vmatmul.mubr.f32.gmra.mrb[0].mxu0 %v7269
  %v7271 = vpop.f32.mrb[0].mxu0
  %v7272 = vadd.f32 0.0, %v7271
  %v7273 = vpop.f32.mrb[0].mxu0
  %v7274 = vadd.f32 0.0, %v7273
  %7275 = vdwg.mxu0
  %v7276 = vand.u32 %v7158, 4294901760
  %v7277 = vsub.f32 %v7158, %v7276
  %v7278 = vand.u32 %v7277, 4294901760
  %v7279 = vsub.f32 %v7277, %v7278
  %v7280 = vand.u32 %v7279, 4294901760
  %7281 = vmatprep.subr.mxu0 %v7280
  %v7282 = vand.u32 %v7157, 4294901760
  %v7283 = vsub.f32 %v7157, %v7282
  %v7284 = vand.u32 %v7283, 4294901760
  %v7285 = vsub.f32 %v7283, %v7284
  %v7286 = vand.u32 %v7285, 4294901760
  %7287 = vmatpush1.msra.mxu0 %v7286
  %v7288 = vand.u32 %v7166, 4294901760
  %v7289 = vsub.f32 %v7166, %v7288
  %v7290 = vand.u32 %v7289, 4294901760
  %v7291 = vsub.f32 %v7289, %v7290
  %v7292 = vand.u32 %v7291, 4294901760
  %7293 = vmatprep.subr.mxu0 %v7292
  %v7294 = vand.u32 %v7165, 4294901760
  %v7295 = vsub.f32 %v7165, %v7294
  %v7296 = vand.u32 %v7295, 4294901760
  %v7297 = vsub.f32 %v7295, %v7296
  %v7298 = vand.u32 %v7297, 4294901760
  %7299 = vmatpush1.msra.mxu0 %v7298
  %v7300 = vand.u32 %v7174, 4294901760
  %v7301 = vsub.f32 %v7174, %v7300
  %v7302 = vand.u32 %v7301, 4294901760
  %v7303 = vsub.f32 %v7301, %v7302
  %v7304 = vand.u32 %v7303, 4294901760
  %7305 = vmatprep.subr.mxu0 %v7304
  %v7306 = vand.u32 %v7173, 4294901760
  %v7307 = vsub.f32 %v7173, %v7306
  %v7308 = vand.u32 %v7307, 4294901760
  %v7309 = vsub.f32 %v7307, %v7308
  %v7310 = vand.u32 %v7309, 4294901760
  %7311 = vmatpush1.msra.mxu0 %v7310
  %v7312 = vand.u32 %v7182, 4294901760
  %v7313 = vsub.f32 %v7182, %v7312
  %v7314 = vand.u32 %v7313, 4294901760
  %v7315 = vsub.f32 %v7313, %v7314
  %v7316 = vand.u32 %v7315, 4294901760
  %7317 = vmatprep.subr.mxu0 %v7316
  %v7318 = vand.u32 %v7181, 4294901760
  %v7319 = vsub.f32 %v7181, %v7318
  %v7320 = vand.u32 %v7319, 4294901760
  %v7321 = vsub.f32 %v7319, %v7320
  %v7322 = vand.u32 %v7321, 4294901760
  %7323 = vmatpush1.msra.mxu0 %v7322
  %7324 = vmatprep.subr.mxu0 0.0
  %7325 = vmatpush1.msra.mxu0 0.0
  %7326 = vmatprep.subr.mxu0 0.0
  %7327 = vmatpush1.msra.mxu0 0.0
  %7328 = vmatprep.subr.mxu0 0.0
  %7329 = vmatpush1.msra.mxu0 0.0
  %7330 = vmatprep.subr.mxu0 0.0
  %7331 = vmatpush1.msra.mxu0 0.0
  %7332 = vmatprep.subr.mxu0 0.0
  %7333 = vmatpush1.msra.mxu0 0.0
  %7334 = vmatprep.subr.mxu0 0.0
  %7335 = vmatpush1.msra.mxu0 0.0
  %7336 = vmatprep.subr.mxu0 0.0
  %7337 = vmatpush1.msra.mxu0 0.0
  %7338 = vmatprep.subr.mxu0 0.0
  %7339 = vmatpush1.msra.mxu0 0.0
  %7340 = vmatprep.subr.mxu0 0.0
  %7341 = vmatpush1.msra.mxu0 0.0
  %7342 = vmatprep.subr.mxu0 0.0
  %7343 = vmatpush1.msra.mxu0 0.0
  %7344 = vmatprep.subr.mxu0 0.0
  %7345 = vmatpush1.msra.mxu0 0.0
  %7346 = vmatprep.subr.mxu0 0.0
  %7347 = vmatpush1.msra.mxu0 0.0
  %7348 = vmatprep.subr.mxu0 0.0
  %7349 = vmatpush1.msra.mxu0 0.0
  %7350 = vmatprep.subr.mxu0 0.0
  %7351 = vmatpush1.msra.mxu0 0.0
  %7352 = vmatprep.subr.mxu0 0.0
  %7353 = vmatpush1.msra.mxu0 0.0
  %7354 = vmatprep.subr.mxu0 0.0
  %7355 = vmatpush1.msra.mxu0 0.0
  %7356 = vmatprep.subr.mxu0 0.0
  %7357 = vmatpush1.msra.mxu0 0.0
  %7358 = vmatprep.subr.mxu0 0.0
  %7359 = vmatpush1.msra.mxu0 0.0
  %7360 = vmatprep.subr.mxu0 0.0
  %7361 = vmatpush1.msra.mxu0 0.0
  %7362 = vmatprep.subr.mxu0 0.0
  %7363 = vmatpush1.msra.mxu0 0.0
  %7364 = vmatprep.subr.mxu0 0.0
  %7365 = vmatpush1.msra.mxu0 0.0
  %7366 = vmatprep.subr.mxu0 0.0
  %7367 = vmatpush1.msra.mxu0 0.0
  %7368 = vmatprep.subr.mxu0 0.0
  %7369 = vmatpush1.msra.mxu0 0.0
  %7370 = vmatprep.subr.mxu0 0.0
  %7371 = vmatpush1.msra.mxu0 0.0
  %7372 = vmatprep.subr.mxu0 0.0
  %7373 = vmatpush1.msra.mxu0 0.0
  %7374 = vmatprep.subr.mxu0 0.0
  %7375 = vmatpush1.msra.mxu0 0.0
  %7376 = vmatprep.subr.mxu0 0.0
  %7377 = vmatpush1.msra.mxu0 0.0
  %7378 = vmatprep.subr.mxu0 0.0
  %7379 = vmatpush1.msra.mxu0 0.0
  %7380 = vmatprep.mubr.f32.mxu0 0.0
  %v7381 = vand.u32 %v7190, 4294901760
  %7382 = vmatmul.mubr.f32.gmra.mrb[0].mxu0 %v7381
  %v7383 = vpop.f32.mrb[0].mxu0
  %v7384 = vadd.f32 %v7272, %v7383
  %v7385 = vpop.f32.mrb[0].mxu0
  %v7386 = vadd.f32 %v7274, %v7385
  %7387 = vdwg.mxu0
  %v7388 = vand.u32 %v7158, 4294901760
  %v7389 = vsub.f32 %v7158, %v7388
  %7390 = vmatprep.subr.mxu0 %v7389
  %v7391 = vand.u32 %v7157, 4294901760
  %v7392 = vsub.f32 %v7157, %v7391
  %7393 = vmatpush1.msra.mxu0 %v7392
  %v7394 = vand.u32 %v7166, 4294901760
  %v7395 = vsub.f32 %v7166, %v7394
  %7396 = vmatprep.subr.mxu0 %v7395
  %v7397 = vand.u32 %v7165, 4294901760
  %v7398 = vsub.f32 %v7165, %v7397
  %7399 = vmatpush1.msra.mxu0 %v7398
  %v7400 = vand.u32 %v7174, 4294901760
  %v7401 = vsub.f32 %v7174, %v7400
  %7402 = vmatprep.subr.mxu0 %v7401
  %v7403 = vand.u32 %v7173, 4294901760
  %v7404 = vsub.f32 %v7173, %v7403
  %7405 = vmatpush1.msra.mxu0 %v7404
  %v7406 = vand.u32 %v7182, 4294901760
  %v7407 = vsub.f32 %v7182, %v7406
  %7408 = vmatprep.subr.mxu0 %v7407
  %v7409 = vand.u32 %v7181, 4294901760
  %v7410 = vsub.f32 %v7181, %v7409
  %7411 = vmatpush1.msra.mxu0 %v7410
  %7412 = vmatprep.subr.mxu0 0.0
  %7413 = vmatpush1.msra.mxu0 0.0
  %7414 = vmatprep.subr.mxu0 0.0
  %7415 = vmatpush1.msra.mxu0 0.0
  %7416 = vmatprep.subr.mxu0 0.0
  %7417 = vmatpush1.msra.mxu0 0.0
  %7418 = vmatprep.subr.mxu0 0.0
  %7419 = vmatpush1.msra.mxu0 0.0
  %7420 = vmatprep.subr.mxu0 0.0
  %7421 = vmatpush1.msra.mxu0 0.0
  %7422 = vmatprep.subr.mxu0 0.0
  %7423 = vmatpush1.msra.mxu0 0.0
  %7424 = vmatprep.subr.mxu0 0.0
  %7425 = vmatpush1.msra.mxu0 0.0
  %7426 = vmatprep.subr.mxu0 0.0
  %7427 = vmatpush1.msra.mxu0 0.0
  %7428 = vmatprep.subr.mxu0 0.0
  %7429 = vmatpush1.msra.mxu0 0.0
  %7430 = vmatprep.subr.mxu0 0.0
  %7431 = vmatpush1.msra.mxu0 0.0
  %7432 = vmatprep.subr.mxu0 0.0
  %7433 = vmatpush1.msra.mxu0 0.0
  %7434 = vmatprep.subr.mxu0 0.0
  %7435 = vmatpush1.msra.mxu0 0.0
  %7436 = vmatprep.subr.mxu0 0.0
  %7437 = vmatpush1.msra.mxu0 0.0
  %7438 = vmatprep.subr.mxu0 0.0
  %7439 = vmatpush1.msra.mxu0 0.0
  %7440 = vmatprep.subr.mxu0 0.0
  %7441 = vmatpush1.msra.mxu0 0.0
  %7442 = vmatprep.subr.mxu0 0.0
  %7443 = vmatpush1.msra.mxu0 0.0
  %7444 = vmatprep.subr.mxu0 0.0
  %7445 = vmatpush1.msra.mxu0 0.0
  %7446 = vmatprep.subr.mxu0 0.0
  %7447 = vmatpush1.msra.mxu0 0.0
  %7448 = vmatprep.subr.mxu0 0.0
  %7449 = vmatpush1.msra.mxu0 0.0
  %7450 = vmatprep.subr.mxu0 0.0
  %7451 = vmatpush1.msra.mxu0 0.0
  %7452 = vmatprep.subr.mxu0 0.0
  %7453 = vmatpush1.msra.mxu0 0.0
  %7454 = vmatprep.subr.mxu0 0.0
  %7455 = vmatpush1.msra.mxu0 0.0
  %7456 = vmatprep.subr.mxu0 0.0
  %7457 = vmatpush1.msra.mxu0 0.0
  %7458 = vmatprep.subr.mxu0 0.0
  %7459 = vmatpush1.msra.mxu0 0.0
  %7460 = vmatprep.subr.mxu0 0.0
  %7461 = vmatpush1.msra.mxu0 0.0
  %7462 = vmatprep.subr.mxu0 0.0
  %7463 = vmatpush1.msra.mxu0 0.0
  %7464 = vmatprep.subr.mxu0 0.0
  %7465 = vmatpush1.msra.mxu0 0.0
  %7466 = vmatprep.subr.mxu0 0.0
  %7467 = vmatpush1.msra.mxu0 0.0
  %7468 = vmatprep.mubr.f32.mxu0 0.0
  %v7469 = vand.u32 %v7190, 4294901760
  %v7470 = vsub.f32 %v7190, %v7469
  %7471 = vmatmul.mubr.f32.gmra.mrb[0].mxu0 %v7470
  %v7472 = vpop.f32.mrb[0].mxu0
  %v7473 = vadd.f32 %v7384, %v7472
  %v7474 = vpop.f32.mrb[0].mxu0
  %v7475 = vadd.f32 %v7386, %v7474
  %7476 = vdwg.mxu0
  %v7477 = vand.u32 %v7158, 4294901760
  %7478 = vmatprep.subr.mxu0 %v7477
  %v7479 = vand.u32 %v7157, 4294901760
  %7480 = vmatpush1.msra.mxu0 %v7479
  %v7481 = vand.u32 %v7166, 4294901760
  %7482 = vmatprep.subr.mxu0 %v7481
  %v7483 = vand.u32 %v7165, 4294901760
  %7484 = vmatpush1.msra.mxu0 %v7483
  %v7485 = vand.u32 %v7174, 4294901760
  %7486 = vmatprep.subr.mxu0 %v7485
  %v7487 = vand.u32 %v7173, 4294901760
  %7488 = vmatpush1.msra.mxu0 %v7487
  %v7489 = vand.u32 %v7182, 4294901760
  %7490 = vmatprep.subr.mxu0 %v7489
  %v7491 = vand.u32 %v7181, 4294901760
  %7492 = vmatpush1.msra.mxu0 %v7491
  %7493 = vmatprep.subr.mxu0 0.0
  %7494 = vmatpush1.msra.mxu0 0.0
  %7495 = vmatprep.subr.mxu0 0.0
  %7496 = vmatpush1.msra.mxu0 0.0
  %7497 = vmatprep.subr.mxu0 0.0
  %7498 = vmatpush1.msra.mxu0 0.0
  %7499 = vmatprep.subr.mxu0 0.0
  %7500 = vmatpush1.msra.mxu0 0.0
  %7501 = vmatprep.subr.mxu0 0.0
  %7502 = vmatpush1.msra.mxu0 0.0
  %7503 = vmatprep.subr.mxu0 0.0
  %7504 = vmatpush1.msra.mxu0 0.0
  %7505 = vmatprep.subr.mxu0 0.0
  %7506 = vmatpush1.msra.mxu0 0.0
  %7507 = vmatprep.subr.mxu0 0.0
  %7508 = vmatpush1.msra.mxu0 0.0
  %7509 = vmatprep.subr.mxu0 0.0
  %7510 = vmatpush1.msra.mxu0 0.0
  %7511 = vmatprep.subr.mxu0 0.0
  %7512 = vmatpush1.msra.mxu0 0.0
  %7513 = vmatprep.subr.mxu0 0.0
  %7514 = vmatpush1.msra.mxu0 0.0
  %7515 = vmatprep.subr.mxu0 0.0
  %7516 = vmatpush1.msra.mxu0 0.0
  %7517 = vmatprep.subr.mxu0 0.0
  %7518 = vmatpush1.msra.mxu0 0.0
  %7519 = vmatprep.subr.mxu0 0.0
  %7520 = vmatpush1.msra.mxu0 0.0
  %7521 = vmatprep.subr.mxu0 0.0
  %7522 = vmatpush1.msra.mxu0 0.0
  %7523 = vmatprep.subr.mxu0 0.0
  %7524 = vmatpush1.msra.mxu0 0.0
  %7525 = vmatprep.subr.mxu0 0.0
  %7526 = vmatpush1.msra.mxu0 0.0
  %7527 = vmatprep.subr.mxu0 0.0
  %7528 = vmatpush1.msra.mxu0 0.0
  %7529 = vmatprep.subr.mxu0 0.0
  %7530 = vmatpush1.msra.mxu0 0.0
  %7531 = vmatprep.subr.mxu0 0.0
  %7532 = vmatpush1.msra.mxu0 0.0
  %7533 = vmatprep.subr.mxu0 0.0
  %7534 = vmatpush1.msra.mxu0 0.0
  %7535 = vmatprep.subr.mxu0 0.0
  %7536 = vmatpush1.msra.mxu0 0.0
  %7537 = vmatprep.subr.mxu0 0.0
  %7538 = vmatpush1.msra.mxu0 0.0
  %7539 = vmatprep.subr.mxu0 0.0
  %7540 = vmatpush1.msra.mxu0 0.0
  %7541 = vmatprep.subr.mxu0 0.0
  %7542 = vmatpush1.msra.mxu0 0.0
  %7543 = vmatprep.subr.mxu0 0.0
  %7544 = vmatpush1.msra.mxu0 0.0
  %7545 = vmatprep.subr.mxu0 0.0
  %7546 = vmatpush1.msra.mxu0 0.0
  %7547 = vmatprep.subr.mxu0 0.0
  %7548 = vmatpush1.msra.mxu0 0.0
  %7549 = vmatprep.mubr.f32.mxu0 0.0
  %v7550 = vand.u32 %v7190, 4294901760
  %v7551 = vsub.f32 %v7190, %v7550
  %v7552 = vand.u32 %v7551, 4294901760
  %7553 = vmatmul.mubr.f32.gmra.mrb[0].mxu0 %v7552
  %v7554 = vpop.f32.mrb[0].mxu0
  %v7555 = vadd.f32 %v7473, %v7554
  %v7556 = vpop.f32.mrb[0].mxu0
  %v7557 = vadd.f32 %v7475, %v7556
  %7558 = vdwg.mxu0
  %v7559 = vand.u32 %v7158, 4294901760
  %v7560 = vsub.f32 %v7158, %v7559
  %v7561 = vand.u32 %v7560, 4294901760
  %7562 = vmatprep.subr.mxu0 %v7561
  %v7563 = vand.u32 %v7157, 4294901760
  %v7564 = vsub.f32 %v7157, %v7563
  %v7565 = vand.u32 %v7564, 4294901760
  %7566 = vmatpush1.msra.mxu0 %v7565
  %v7567 = vand.u32 %v7166, 4294901760
  %v7568 = vsub.f32 %v7166, %v7567
  %v7569 = vand.u32 %v7568, 4294901760
  %7570 = vmatprep.subr.mxu0 %v7569
  %v7571 = vand.u32 %v7165, 4294901760
  %v7572 = vsub.f32 %v7165, %v7571
  %v7573 = vand.u32 %v7572, 4294901760
  %7574 = vmatpush1.msra.mxu0 %v7573
  %v7575 = vand.u32 %v7174, 4294901760
  %v7576 = vsub.f32 %v7174, %v7575
  %v7577 = vand.u32 %v7576, 4294901760
  %7578 = vmatprep.subr.mxu0 %v7577
  %v7579 = vand.u32 %v7173, 4294901760
  %v7580 = vsub.f32 %v7173, %v7579
  %v7581 = vand.u32 %v7580, 4294901760
  %7582 = vmatpush1.msra.mxu0 %v7581
  %v7583 = vand.u32 %v7182, 4294901760
  %v7584 = vsub.f32 %v7182, %v7583
  %v7585 = vand.u32 %v7584, 4294901760
  %7586 = vmatprep.subr.mxu0 %v7585
  %v7587 = vand.u32 %v7181, 4294901760
  %v7588 = vsub.f32 %v7181, %v7587
  %v7589 = vand.u32 %v7588, 4294901760
  %7590 = vmatpush1.msra.mxu0 %v7589
  %7591 = vmatprep.subr.mxu0 0.0
  %7592 = vmatpush1.msra.mxu0 0.0
  %7593 = vmatprep.subr.mxu0 0.0
  %7594 = vmatpush1.msra.mxu0 0.0
  %7595 = vmatprep.subr.mxu0 0.0
  %7596 = vmatpush1.msra.mxu0 0.0
  %7597 = vmatprep.subr.mxu0 0.0
  %7598 = vmatpush1.msra.mxu0 0.0
  %7599 = vmatprep.subr.mxu0 0.0
  %7600 = vmatpush1.msra.mxu0 0.0
  %7601 = vmatprep.subr.mxu0 0.0
  %7602 = vmatpush1.msra.mxu0 0.0
  %7603 = vmatprep.subr.mxu0 0.0
  %7604 = vmatpush1.msra.mxu0 0.0
  %7605 = vmatprep.subr.mxu0 0.0
  %7606 = vmatpush1.msra.mxu0 0.0
  %7607 = vmatprep.subr.mxu0 0.0
  %7608 = vmatpush1.msra.mxu0 0.0
  %7609 = vmatprep.subr.mxu0 0.0
  %7610 = vmatpush1.msra.mxu0 0.0
  %7611 = vmatprep.subr.mxu0 0.0
  %7612 = vmatpush1.msra.mxu0 0.0
  %7613 = vmatprep.subr.mxu0 0.0
  %7614 = vmatpush1.msra.mxu0 0.0
  %7615 = vmatprep.subr.mxu0 0.0
  %7616 = vmatpush1.msra.mxu0 0.0
  %7617 = vmatprep.subr.mxu0 0.0
  %7618 = vmatpush1.msra.mxu0 0.0
  %7619 = vmatprep.subr.mxu0 0.0
  %7620 = vmatpush1.msra.mxu0 0.0
  %7621 = vmatprep.subr.mxu0 0.0
  %7622 = vmatpush1.msra.mxu0 0.0
  %7623 = vmatprep.subr.mxu0 0.0
  %7624 = vmatpush1.msra.mxu0 0.0
  %7625 = vmatprep.subr.mxu0 0.0
  %7626 = vmatpush1.msra.mxu0 0.0
  %7627 = vmatprep.subr.mxu0 0.0
  %7628 = vmatpush1.msra.mxu0 0.0
  %7629 = vmatprep.subr.mxu0 0.0
  %7630 = vmatpush1.msra.mxu0 0.0
  %7631 = vmatprep.subr.mxu0 0.0
  %7632 = vmatpush1.msra.mxu0 0.0
  %7633 = vmatprep.subr.mxu0 0.0
  %7634 = vmatpush1.msra.mxu0 0.0
  %7635 = vmatprep.subr.mxu0 0.0
  %7636 = vmatpush1.msra.mxu0 0.0
  %7637 = vmatprep.subr.mxu0 0.0
  %7638 = vmatpush1.msra.mxu0 0.0
  %7639 = vmatprep.subr.mxu0 0.0
  %7640 = vmatpush1.msra.mxu0 0.0
  %7641 = vmatprep.subr.mxu0 0.0
  %7642 = vmatpush1.msra.mxu0 0.0
  %7643 = vmatprep.subr.mxu0 0.0
  %7644 = vmatpush1.msra.mxu0 0.0
  %7645 = vmatprep.subr.mxu0 0.0
  %7646 = vmatpush1.msra.mxu0 0.0
  %7647 = vmatprep.mubr.f32.mxu0 0.0
  %v7648 = vand.u32 %v7190, 4294901760
  %7649 = vmatmul.mubr.f32.gmra.mrb[0].mxu0 %v7648
  %v7650 = vpop.f32.mrb[0].mxu0
  %v7651 = vadd.f32 %v7555, %v7650
  %v7652 = vpop.f32.mrb[0].mxu0
  %v7653 = vadd.f32 %v7557, %v7652
  %7654 = vdwg.mxu0
  %v7655 = vand.u32 %v7158, 4294901760
  %7656 = vmatprep.subr.mxu0 %v7655
  %v7657 = vand.u32 %v7157, 4294901760
  %7658 = vmatpush1.msra.mxu0 %v7657
  %v7659 = vand.u32 %v7166, 4294901760
  %7660 = vmatprep.subr.mxu0 %v7659
  %v7661 = vand.u32 %v7165, 4294901760
  %7662 = vmatpush1.msra.mxu0 %v7661
  %v7663 = vand.u32 %v7174, 4294901760
  %7664 = vmatprep.subr.mxu0 %v7663
  %v7665 = vand.u32 %v7173, 4294901760
  %7666 = vmatpush1.msra.mxu0 %v7665
  %v7667 = vand.u32 %v7182, 4294901760
  %7668 = vmatprep.subr.mxu0 %v7667
  %v7669 = vand.u32 %v7181, 4294901760
  %7670 = vmatpush1.msra.mxu0 %v7669
  %7671 = vmatprep.subr.mxu0 0.0
  %7672 = vmatpush1.msra.mxu0 0.0
  %7673 = vmatprep.subr.mxu0 0.0
  %7674 = vmatpush1.msra.mxu0 0.0
  %7675 = vmatprep.subr.mxu0 0.0
  %7676 = vmatpush1.msra.mxu0 0.0
  %7677 = vmatprep.subr.mxu0 0.0
  %7678 = vmatpush1.msra.mxu0 0.0
  %7679 = vmatprep.subr.mxu0 0.0
  %7680 = vmatpush1.msra.mxu0 0.0
  %7681 = vmatprep.subr.mxu0 0.0
  %7682 = vmatpush1.msra.mxu0 0.0
  %7683 = vmatprep.subr.mxu0 0.0
  %7684 = vmatpush1.msra.mxu0 0.0
  %7685 = vmatprep.subr.mxu0 0.0
  %7686 = vmatpush1.msra.mxu0 0.0
  %7687 = vmatprep.subr.mxu0 0.0
  %7688 = vmatpush1.msra.mxu0 0.0
  %7689 = vmatprep.subr.mxu0 0.0
  %7690 = vmatpush1.msra.mxu0 0.0
  %7691 = vmatprep.subr.mxu0 0.0
  %7692 = vmatpush1.msra.mxu0 0.0
  %7693 = vmatprep.subr.mxu0 0.0
  %7694 = vmatpush1.msra.mxu0 0.0
  %7695 = vmatprep.subr.mxu0 0.0
  %7696 = vmatpush1.msra.mxu0 0.0
  %7697 = vmatprep.subr.mxu0 0.0
  %7698 = vmatpush1.msra.mxu0 0.0
  %7699 = vmatprep.subr.mxu0 0.0
  %7700 = vmatpush1.msra.mxu0 0.0
  %7701 = vmatprep.subr.mxu0 0.0
  %7702 = vmatpush1.msra.mxu0 0.0
  %7703 = vmatprep.subr.mxu0 0.0
  %7704 = vmatpush1.msra.mxu0 0.0
  %7705 = vmatprep.subr.mxu0 0.0
  %7706 = vmatpush1.msra.mxu0 0.0
  %7707 = vmatprep.subr.mxu0 0.0
  %7708 = vmatpush1.msra.mxu0 0.0
  %7709 = vmatprep.subr.mxu0 0.0
  %7710 = vmatpush1.msra.mxu0 0.0
  %7711 = vmatprep.subr.mxu0 0.0
  %7712 = vmatpush1.msra.mxu0 0.0
  %7713 = vmatprep.subr.mxu0 0.0
  %7714 = vmatpush1.msra.mxu0 0.0
  %7715 = vmatprep.subr.mxu0 0.0
  %7716 = vmatpush1.msra.mxu0 0.0
  %7717 = vmatprep.subr.mxu0 0.0
  %7718 = vmatpush1.msra.mxu0 0.0
  %7719 = vmatprep.subr.mxu0 0.0
  %7720 = vmatpush1.msra.mxu0 0.0
  %7721 = vmatprep.subr.mxu0 0.0
  %7722 = vmatpush1.msra.mxu0 0.0
  %7723 = vmatprep.subr.mxu0 0.0
  %7724 = vmatpush1.msra.mxu0 0.0
  %7725 = vmatprep.subr.mxu0 0.0
  %7726 = vmatpush1.msra.mxu0 0.0
  %7727 = vmatprep.mubr.f32.mxu0 0.0
  %v7728 = vand.u32 %v7190, 4294901760
  %7729 = vmatmul.mubr.f32.gmra.mrb[0].mxu0 %v7728
  %v7730 = vpop.f32.mrb[0].mxu0
  %v7731 = vadd.f32 %v7651, %v7730
  %v7732 = vpop.f32.mrb[0].mxu0
  %v7733 = vadd.f32 %v7653, %v7732
  %7734 = vdwg.mxu0
  %v7735 = vand.u32 %v7160, 4294901760
  %7736 = vmatprep.subr.mxu0 %v7735
  %v7737 = vand.u32 %v7159, 4294901760
  %7738 = vmatpush1.msra.mxu0 %v7737
  %v7739 = vand.u32 %v7168, 4294901760
  %7740 = vmatprep.subr.mxu0 %v7739
  %v7741 = vand.u32 %v7167, 4294901760
  %7742 = vmatpush1.msra.mxu0 %v7741
  %v7743 = vand.u32 %v7176, 4294901760
  %7744 = vmatprep.subr.mxu0 %v7743
  %v7745 = vand.u32 %v7175, 4294901760
  %7746 = vmatpush1.msra.mxu0 %v7745
  %v7747 = vand.u32 %v7184, 4294901760
  %7748 = vmatprep.subr.mxu0 %v7747
  %v7749 = vand.u32 %v7183, 4294901760
  %7750 = vmatpush1.msra.mxu0 %v7749
  %7751 = vmatprep.subr.mxu0 0.0
  %7752 = vmatpush1.msra.mxu0 0.0
  %7753 = vmatprep.subr.mxu0 0.0
  %7754 = vmatpush1.msra.mxu0 0.0
  %7755 = vmatprep.subr.mxu0 0.0
  %7756 = vmatpush1.msra.mxu0 0.0
  %7757 = vmatprep.subr.mxu0 0.0
  %7758 = vmatpush1.msra.mxu0 0.0
  %7759 = vmatprep.subr.mxu0 0.0
  %7760 = vmatpush1.msra.mxu0 0.0
  %7761 = vmatprep.subr.mxu0 0.0
  %7762 = vmatpush1.msra.mxu0 0.0
  %7763 = vmatprep.subr.mxu0 0.0
  %7764 = vmatpush1.msra.mxu0 0.0
  %7765 = vmatprep.subr.mxu0 0.0
  %7766 = vmatpush1.msra.mxu0 0.0
  %7767 = vmatprep.subr.mxu0 0.0
  %7768 = vmatpush1.msra.mxu0 0.0
  %7769 = vmatprep.subr.mxu0 0.0
  %7770 = vmatpush1.msra.mxu0 0.0
  %7771 = vmatprep.subr.mxu0 0.0
  %7772 = vmatpush1.msra.mxu0 0.0
  %7773 = vmatprep.subr.mxu0 0.0
  %7774 = vmatpush1.msra.mxu0 0.0
  %7775 = vmatprep.subr.mxu0 0.0
  %7776 = vmatpush1.msra.mxu0 0.0
  %7777 = vmatprep.subr.mxu0 0.0
  %7778 = vmatpush1.msra.mxu0 0.0
  %7779 = vmatprep.subr.mxu0 0.0
  %7780 = vmatpush1.msra.mxu0 0.0
  %7781 = vmatprep.subr.mxu0 0.0
  %7782 = vmatpush1.msra.mxu0 0.0
  %7783 = vmatprep.subr.mxu0 0.0
  %7784 = vmatpush1.msra.mxu0 0.0
  %7785 = vmatprep.subr.mxu0 0.0
  %7786 = vmatpush1.msra.mxu0 0.0
  %7787 = vmatprep.subr.mxu0 0.0
  %7788 = vmatpush1.msra.mxu0 0.0
  %7789 = vmatprep.subr.mxu0 0.0
  %7790 = vmatpush1.msra.mxu0 0.0
  %7791 = vmatprep.subr.mxu0 0.0
  %7792 = vmatpush1.msra.mxu0 0.0
  %7793 = vmatprep.subr.mxu0 0.0
  %7794 = vmatpush1.msra.mxu0 0.0
  %7795 = vmatprep.subr.mxu0 0.0
  %7796 = vmatpush1.msra.mxu0 0.0
  %7797 = vmatprep.subr.mxu0 0.0
  %7798 = vmatpush1.msra.mxu0 0.0
  %7799 = vmatprep.subr.mxu0 0.0
  %7800 = vmatpush1.msra.mxu0 0.0
  %7801 = vmatprep.subr.mxu0 0.0
  %7802 = vmatpush1.msra.mxu0 0.0
  %7803 = vmatprep.subr.mxu0 0.0
  %7804 = vmatpush1.msra.mxu0 0.0
  %7805 = vmatprep.subr.mxu0 0.0
  %7806 = vmatpush1.msra.mxu0 0.0
  %7807 = vmatprep.mubr.f32.mxu0 0.0
  %v7808 = vand.u32 %v7190, 4294901760
  %v7809 = vsub.f32 %v7190, %v7808
  %v7810 = vand.u32 %v7809, 4294901760
  %v7811 = vsub.f32 %v7809, %v7810
  %v7812 = vand.u32 %v7811, 4294901760
  %7813 = vmatmul.mubr.f32.gmra.mrb[0].mxu0 %v7812
  %v7814 = vpop.f32.mrb[0].mxu0
  %v7815 = vadd.f32 0.0, %v7814
  %v7816 = vpop.f32.mrb[0].mxu0
  %v7817 = vadd.f32 0.0, %v7816
  %7818 = vdwg.mxu0
  %v7819 = vand.u32 %v7160, 4294901760
  %v7820 = vsub.f32 %v7160, %v7819
  %v7821 = vand.u32 %v7820, 4294901760
  %v7822 = vsub.f32 %v7820, %v7821
  %v7823 = vand.u32 %v7822, 4294901760
  %7824 = vmatprep.subr.mxu0 %v7823
  %v7825 = vand.u32 %v7159, 4294901760
  %v7826 = vsub.f32 %v7159, %v7825
  %v7827 = vand.u32 %v7826, 4294901760
  %v7828 = vsub.f32 %v7826, %v7827
  %v7829 = vand.u32 %v7828, 4294901760
  %7830 = vmatpush1.msra.mxu0 %v7829
  %v7831 = vand.u32 %v7168, 4294901760
  %v7832 = vsub.f32 %v7168, %v7831
  %v7833 = vand.u32 %v7832, 4294901760
  %v7834 = vsub.f32 %v7832, %v7833
  %v7835 = vand.u32 %v7834, 4294901760
  %7836 = vmatprep.subr.mxu0 %v7835
  %v7837 = vand.u32 %v7167, 4294901760
  %v7838 = vsub.f32 %v7167, %v7837
  %v7839 = vand.u32 %v7838, 4294901760
  %v7840 = vsub.f32 %v7838, %v7839
  %v7841 = vand.u32 %v7840, 4294901760
  %7842 = vmatpush1.msra.mxu0 %v7841
  %v7843 = vand.u32 %v7176, 4294901760
  %v7844 = vsub.f32 %v7176, %v7843
  %v7845 = vand.u32 %v7844, 4294901760
  %v7846 = vsub.f32 %v7844, %v7845
  %v7847 = vand.u32 %v7846, 4294901760
  %7848 = vmatprep.subr.mxu0 %v7847
  %v7849 = vand.u32 %v7175, 4294901760
  %v7850 = vsub.f32 %v7175, %v7849
  %v7851 = vand.u32 %v7850, 4294901760
  %v7852 = vsub.f32 %v7850, %v7851
  %v7853 = vand.u32 %v7852, 4294901760
  %7854 = vmatpush1.msra.mxu0 %v7853
  %v7855 = vand.u32 %v7184, 4294901760
  %v7856 = vsub.f32 %v7184, %v7855
  %v7857 = vand.u32 %v7856, 4294901760
  %v7858 = vsub.f32 %v7856, %v7857
  %v7859 = vand.u32 %v7858, 4294901760
  %7860 = vmatprep.subr.mxu0 %v7859
  %v7861 = vand.u32 %v7183, 4294901760
  %v7862 = vsub.f32 %v7183, %v7861
  %v7863 = vand.u32 %v7862, 4294901760
  %v7864 = vsub.f32 %v7862, %v7863
  %v7865 = vand.u32 %v7864, 4294901760
  %7866 = vmatpush1.msra.mxu0 %v7865
  %7867 = vmatprep.subr.mxu0 0.0
  %7868 = vmatpush1.msra.mxu0 0.0
  %7869 = vmatprep.subr.mxu0 0.0
  %7870 = vmatpush1.msra.mxu0 0.0
  %7871 = vmatprep.subr.mxu0 0.0
  %7872 = vmatpush1.msra.mxu0 0.0
  %7873 = vmatprep.subr.mxu0 0.0
  %7874 = vmatpush1.msra.mxu0 0.0
  %7875 = vmatprep.subr.mxu0 0.0
  %7876 = vmatpush1.msra.mxu0 0.0
  %7877 = vmatprep.subr.mxu0 0.0
  %7878 = vmatpush1.msra.mxu0 0.0
  %7879 = vmatprep.subr.mxu0 0.0
  %7880 = vmatpush1.msra.mxu0 0.0
  %7881 = vmatprep.subr.mxu0 0.0
  %7882 = vmatpush1.msra.mxu0 0.0
  %7883 = vmatprep.subr.mxu0 0.0
  %7884 = vmatpush1.msra.mxu0 0.0
  %7885 = vmatprep.subr.mxu0 0.0
  %7886 = vmatpush1.msra.mxu0 0.0
  %7887 = vmatprep.subr.mxu0 0.0
  %7888 = vmatpush1.msra.mxu0 0.0
  %7889 = vmatprep.subr.mxu0 0.0
  %7890 = vmatpush1.msra.mxu0 0.0
  %7891 = vmatprep.subr.mxu0 0.0
  %7892 = vmatpush1.msra.mxu0 0.0
  %7893 = vmatprep.subr.mxu0 0.0
  %7894 = vmatpush1.msra.mxu0 0.0
  %7895 = vmatprep.subr.mxu0 0.0
  %7896 = vmatpush1.msra.mxu0 0.0
  %7897 = vmatprep.subr.mxu0 0.0
  %7898 = vmatpush1.msra.mxu0 0.0
  %7899 = vmatprep.subr.mxu0 0.0
  %7900 = vmatpush1.msra.mxu0 0.0
  %7901 = vmatprep.subr.mxu0 0.0
  %7902 = vmatpush1.msra.mxu0 0.0
  %7903 = vmatprep.subr.mxu0 0.0
  %7904 = vmatpush1.msra.mxu0 0.0
  %7905 = vmatprep.subr.mxu0 0.0
  %7906 = vmatpush1.msra.mxu0 0.0
  %7907 = vmatprep.subr.mxu0 0.0
  %7908 = vmatpush1.msra.mxu0 0.0
  %7909 = vmatprep.subr.mxu0 0.0
  %7910 = vmatpush1.msra.mxu0 0.0
  %7911 = vmatprep.subr.mxu0 0.0
  %7912 = vmatpush1.msra.mxu0 0.0
  %7913 = vmatprep.subr.mxu0 0.0
  %7914 = vmatpush1.msra.mxu0 0.0
  %7915 = vmatprep.subr.mxu0 0.0
  %7916 = vmatpush1.msra.mxu0 0.0
  %7917 = vmatprep.subr.mxu0 0.0
  %7918 = vmatpush1.msra.mxu0 0.0
  %7919 = vmatprep.subr.mxu0 0.0
  %7920 = vmatpush1.msra.mxu0 0.0
  %7921 = vmatprep.subr.mxu0 0.0
  %7922 = vmatpush1.msra.mxu0 0.0
  %7923 = vmatprep.mubr.f32.mxu0 0.0
  %v7924 = vand.u32 %v7190, 4294901760
  %7925 = vmatmul.mubr.f32.gmra.mrb[0].mxu0 %v7924
  %v7926 = vpop.f32.mrb[0].mxu0
  %v7927 = vadd.f32 %v7815, %v7926
  %v7928 = vpop.f32.mrb[0].mxu0
  %v7929 = vadd.f32 %v7817, %v7928
  %7930 = vdwg.mxu0
  %v7931 = vand.u32 %v7160, 4294901760
  %v7932 = vsub.f32 %v7160, %v7931
  %7933 = vmatprep.subr.mxu0 %v7932
  %v7934 = vand.u32 %v7159, 4294901760
  %v7935 = vsub.f32 %v7159, %v7934
  %7936 = vmatpush1.msra.mxu0 %v7935
  %v7937 = vand.u32 %v7168, 4294901760
  %v7938 = vsub.f32 %v7168, %v7937
  %7939 = vmatprep.subr.mxu0 %v7938
  %v7940 = vand.u32 %v7167, 4294901760
  %v7941 = vsub.f32 %v7167, %v7940
  %7942 = vmatpush1.msra.mxu0 %v7941
  %v7943 = vand.u32 %v7176, 4294901760
  %v7944 = vsub.f32 %v7176, %v7943
  %7945 = vmatprep.subr.mxu0 %v7944
  %v7946 = vand.u32 %v7175, 4294901760
  %v7947 = vsub.f32 %v7175, %v7946
  %7948 = vmatpush1.msra.mxu0 %v7947
  %v7949 = vand.u32 %v7184, 4294901760
  %v7950 = vsub.f32 %v7184, %v7949
  %7951 = vmatprep.subr.mxu0 %v7950
  %v7952 = vand.u32 %v7183, 4294901760
  %v7953 = vsub.f32 %v7183, %v7952
  %7954 = vmatpush1.msra.mxu0 %v7953
  %7955 = vmatprep.subr.mxu0 0.0
  %7956 = vmatpush1.msra.mxu0 0.0
  %7957 = vmatprep.subr.mxu0 0.0
  %7958 = vmatpush1.msra.mxu0 0.0
  %7959 = vmatprep.subr.mxu0 0.0
  %7960 = vmatpush1.msra.mxu0 0.0
  %7961 = vmatprep.subr.mxu0 0.0
  %7962 = vmatpush1.msra.mxu0 0.0
  %7963 = vmatprep.subr.mxu0 0.0
  %7964 = vmatpush1.msra.mxu0 0.0
  %7965 = vmatprep.subr.mxu0 0.0
  %7966 = vmatpush1.msra.mxu0 0.0
  %7967 = vmatprep.subr.mxu0 0.0
  %7968 = vmatpush1.msra.mxu0 0.0
  %7969 = vmatprep.subr.mxu0 0.0
  %7970 = vmatpush1.msra.mxu0 0.0
  %7971 = vmatprep.subr.mxu0 0.0
  %7972 = vmatpush1.msra.mxu0 0.0
  %7973 = vmatprep.subr.mxu0 0.0
  %7974 = vmatpush1.msra.mxu0 0.0
  %7975 = vmatprep.subr.mxu0 0.0
  %7976 = vmatpush1.msra.mxu0 0.0
  %7977 = vmatprep.subr.mxu0 0.0
  %7978 = vmatpush1.msra.mxu0 0.0
  %7979 = vmatprep.subr.mxu0 0.0
  %7980 = vmatpush1.msra.mxu0 0.0
  %7981 = vmatprep.subr.mxu0 0.0
  %7982 = vmatpush1.msra.mxu0 0.0
  %7983 = vmatprep.subr.mxu0 0.0
  %7984 = vmatpush1.msra.mxu0 0.0
  %7985 = vmatprep.subr.mxu0 0.0
  %7986 = vmatpush1.msra.mxu0 0.0
  %7987 = vmatprep.subr.mxu0 0.0
  %7988 = vmatpush1.msra.mxu0 0.0
  %7989 = vmatprep.subr.mxu0 0.0
  %7990 = vmatpush1.msra.mxu0 0.0
  %7991 = vmatprep.subr.mxu0 0.0
  %7992 = vmatpush1.msra.mxu0 0.0
  %7993 = vmatprep.subr.mxu0 0.0
  %7994 = vmatpush1.msra.mxu0 0.0
  %7995 = vmatprep.subr.mxu0 0.0
  %7996 = vmatpush1.msra.mxu0 0.0
  %7997 = vmatprep.subr.mxu0 0.0
  %7998 = vmatpush1.msra.mxu0 0.0
  %7999 = vmatprep.subr.mxu0 0.0
  %8000 = vmatpush1.msra.mxu0 0.0
  %8001 = vmatprep.subr.mxu0 0.0
  %8002 = vmatpush1.msra.mxu0 0.0
  %8003 = vmatprep.subr.mxu0 0.0
  %8004 = vmatpush1.msra.mxu0 0.0
  %8005 = vmatprep.subr.mxu0 0.0
  %8006 = vmatpush1.msra.mxu0 0.0
  %8007 = vmatprep.subr.mxu0 0.0
  %8008 = vmatpush1.msra.mxu0 0.0
  %8009 = vmatprep.subr.mxu0 0.0
  %8010 = vmatpush1.msra.mxu0 0.0
  %8011 = vmatprep.mubr.f32.mxu0 0.0
  %v8012 = vand.u32 %v7190, 4294901760
  %v8013 = vsub.f32 %v7190, %v8012
  %8014 = vmatmul.mubr.f32.gmra.mrb[0].mxu0 %v8013
  %v8015 = vpop.f32.mrb[0].mxu0
  %v8016 = vadd.f32 %v7927, %v8015
  %v8017 = vpop.f32.mrb[0].mxu0
  %v8018 = vadd.f32 %v7929, %v8017
  %8019 = vdwg.mxu0
  %v8020 = vand.u32 %v7160, 4294901760
  %8021 = vmatprep.subr.mxu0 %v8020
  %v8022 = vand.u32 %v7159, 4294901760
  %8023 = vmatpush1.msra.mxu0 %v8022
  %v8024 = vand.u32 %v7168, 4294901760
  %8025 = vmatprep.subr.mxu0 %v8024
  %v8026 = vand.u32 %v7167, 4294901760
  %8027 = vmatpush1.msra.mxu0 %v8026
  %v8028 = vand.u32 %v7176, 4294901760
  %8029 = vmatprep.subr.mxu0 %v8028
  %v8030 = vand.u32 %v7175, 4294901760
  %8031 = vmatpush1.msra.mxu0 %v8030
  %v8032 = vand.u32 %v7184, 4294901760
  %8033 = vmatprep.subr.mxu0 %v8032
  %v8034 = vand.u32 %v7183, 4294901760
  %8035 = vmatpush1.msra.mxu0 %v8034
  %8036 = vmatprep.subr.mxu0 0.0
  %8037 = vmatpush1.msra.mxu0 0.0
  %8038 = vmatprep.subr.mxu0 0.0
  %8039 = vmatpush1.msra.mxu0 0.0
  %8040 = vmatprep.subr.mxu0 0.0
  %8041 = vmatpush1.msra.mxu0 0.0
  %8042 = vmatprep.subr.mxu0 0.0
  %8043 = vmatpush1.msra.mxu0 0.0
  %8044 = vmatprep.subr.mxu0 0.0
  %8045 = vmatpush1.msra.mxu0 0.0
  %8046 = vmatprep.subr.mxu0 0.0
  %8047 = vmatpush1.msra.mxu0 0.0
  %8048 = vmatprep.subr.mxu0 0.0
  %8049 = vmatpush1.msra.mxu0 0.0
  %8050 = vmatprep.subr.mxu0 0.0
  %8051 = vmatpush1.msra.mxu0 0.0
  %8052 = vmatprep.subr.mxu0 0.0
  %8053 = vmatpush1.msra.mxu0 0.0
  %8054 = vmatprep.subr.mxu0 0.0
  %8055 = vmatpush1.msra.mxu0 0.0
  %8056 = vmatprep.subr.mxu0 0.0
  %8057 = vmatpush1.msra.mxu0 0.0
  %8058 = vmatprep.subr.mxu0 0.0
  %8059 = vmatpush1.msra.mxu0 0.0
  %8060 = vmatprep.subr.mxu0 0.0
  %8061 = vmatpush1.msra.mxu0 0.0
  %8062 = vmatprep.subr.mxu0 0.0
  %8063 = vmatpush1.msra.mxu0 0.0
  %8064 = vmatprep.subr.mxu0 0.0
  %8065 = vmatpush1.msra.mxu0 0.0
  %8066 = vmatprep.subr.mxu0 0.0
  %8067 = vmatpush1.msra.mxu0 0.0
  %8068 = vmatprep.subr.mxu0 0.0
  %8069 = vmatpush1.msra.mxu0 0.0
  %8070 = vmatprep.subr.mxu0 0.0
  %8071 = vmatpush1.msra.mxu0 0.0
  %8072 = vmatprep.subr.mxu0 0.0
  %8073 = vmatpush1.msra.mxu0 0.0
  %8074 = vmatprep.subr.mxu0 0.0
  %8075 = vmatpush1.msra.mxu0 0.0
  %8076 = vmatprep.subr.mxu0 0.0
  %8077 = vmatpush1.msra.mxu0 0.0
  %8078 = vmatprep.subr.mxu0 0.0
  %8079 = vmatpush1.msra.mxu0 0.0
  %8080 = vmatprep.subr.mxu0 0.0
  %8081 = vmatpush1.msra.mxu0 0.0
  %8082 = vmatprep.subr.mxu0 0.0
  %8083 = vmatpush1.msra.mxu0 0.0
  %8084 = vmatprep.subr.mxu0 0.0
  %8085 = vmatpush1.msra.mxu0 0.0
  %8086 = vmatprep.subr.mxu0 0.0
  %8087 = vmatpush1.msra.mxu0 0.0
  %8088 = vmatprep.subr.mxu0 0.0
  %8089 = vmatpush1.msra.mxu0 0.0
  %8090 = vmatprep.subr.mxu0 0.0
  %8091 = vmatpush1.msra.mxu0 0.0
  %8092 = vmatprep.mubr.f32.mxu0 0.0
  %v8093 = vand.u32 %v7190, 4294901760
  %v8094 = vsub.f32 %v7190, %v8093
  %v8095 = vand.u32 %v8094, 4294901760
  %8096 = vmatmul.mubr.f32.gmra.mrb[0].mxu0 %v8095
  %v8097 = vpop.f32.mrb[0].mxu0
  %v8098 = vadd.f32 %v8016, %v8097
  %v8099 = vpop.f32.mrb[0].mxu0
  %v8100 = vadd.f32 %v8018, %v8099
  %8101 = vdwg.mxu0
  %v8102 = vand.u32 %v7160, 4294901760
  %v8103 = vsub.f32 %v7160, %v8102
  %v8104 = vand.u32 %v8103, 4294901760
  %8105 = vmatprep.subr.mxu0 %v8104
  %v8106 = vand.u32 %v7159, 4294901760
  %v8107 = vsub.f32 %v7159, %v8106
  %v8108 = vand.u32 %v8107, 4294901760
  %8109 = vmatpush1.msra.mxu0 %v8108
  %v8110 = vand.u32 %v7168, 4294901760
  %v8111 = vsub.f32 %v7168, %v8110
  %v8112 = vand.u32 %v8111, 4294901760
  %8113 = vmatprep.subr.mxu0 %v8112
  %v8114 = vand.u32 %v7167, 4294901760
  %v8115 = vsub.f32 %v7167, %v8114
  %v8116 = vand.u32 %v8115, 4294901760
  %8117 = vmatpush1.msra.mxu0 %v8116
  %v8118 = vand.u32 %v7176, 4294901760
  %v8119 = vsub.f32 %v7176, %v8118
  %v8120 = vand.u32 %v8119, 4294901760
  %8121 = vmatprep.subr.mxu0 %v8120
  %v8122 = vand.u32 %v7175, 4294901760
  %v8123 = vsub.f32 %v7175, %v8122
  %v8124 = vand.u32 %v8123, 4294901760
  %8125 = vmatpush1.msra.mxu0 %v8124
  %v8126 = vand.u32 %v7184, 4294901760
  %v8127 = vsub.f32 %v7184, %v8126
  %v8128 = vand.u32 %v8127, 4294901760
  %8129 = vmatprep.subr.mxu0 %v8128
  %v8130 = vand.u32 %v7183, 4294901760
  %v8131 = vsub.f32 %v7183, %v8130
  %v8132 = vand.u32 %v8131, 4294901760
  %8133 = vmatpush1.msra.mxu0 %v8132
  %8134 = vmatprep.subr.mxu0 0.0
  %8135 = vmatpush1.msra.mxu0 0.0
  %8136 = vmatprep.subr.mxu0 0.0
  %8137 = vmatpush1.msra.mxu0 0.0
  %8138 = vmatprep.subr.mxu0 0.0
  %8139 = vmatpush1.msra.mxu0 0.0
  %8140 = vmatprep.subr.mxu0 0.0
  %8141 = vmatpush1.msra.mxu0 0.0
  %8142 = vmatprep.subr.mxu0 0.0
  %8143 = vmatpush1.msra.mxu0 0.0
  %8144 = vmatprep.subr.mxu0 0.0
  %8145 = vmatpush1.msra.mxu0 0.0
  %8146 = vmatprep.subr.mxu0 0.0
  %8147 = vmatpush1.msra.mxu0 0.0
  %8148 = vmatprep.subr.mxu0 0.0
  %8149 = vmatpush1.msra.mxu0 0.0
  %8150 = vmatprep.subr.mxu0 0.0
  %8151 = vmatpush1.msra.mxu0 0.0
  %8152 = vmatprep.subr.mxu0 0.0
  %8153 = vmatpush1.msra.mxu0 0.0
  %8154 = vmatprep.subr.mxu0 0.0
  %8155 = vmatpush1.msra.mxu0 0.0
  %8156 = vmatprep.subr.mxu0 0.0
  %8157 = vmatpush1.msra.mxu0 0.0
  %8158 = vmatprep.subr.mxu0 0.0
  %8159 = vmatpush1.msra.mxu0 0.0
  %8160 = vmatprep.subr.mxu0 0.0
  %8161 = vmatpush1.msra.mxu0 0.0
  %8162 = vmatprep.subr.mxu0 0.0
  %8163 = vmatpush1.msra.mxu0 0.0
  %8164 = vmatprep.subr.mxu0 0.0
  %8165 = vmatpush1.msra.mxu0 0.0
  %8166 = vmatprep.subr.mxu0 0.0
  %8167 = vmatpush1.msra.mxu0 0.0
  %8168 = vmatprep.subr.mxu0 0.0
  %8169 = vmatpush1.msra.mxu0 0.0
  %8170 = vmatprep.subr.mxu0 0.0
  %8171 = vmatpush1.msra.mxu0 0.0
  %8172 = vmatprep.subr.mxu0 0.0
  %8173 = vmatpush1.msra.mxu0 0.0
  %8174 = vmatprep.subr.mxu0 0.0
  %8175 = vmatpush1.msra.mxu0 0.0
  %8176 = vmatprep.subr.mxu0 0.0
  %8177 = vmatpush1.msra.mxu0 0.0
  %8178 = vmatprep.subr.mxu0 0.0
  %8179 = vmatpush1.msra.mxu0 0.0
  %8180 = vmatprep.subr.mxu0 0.0
  %8181 = vmatpush1.msra.mxu0 0.0
  %8182 = vmatprep.subr.mxu0 0.0
  %8183 = vmatpush1.msra.mxu0 0.0
  %8184 = vmatprep.subr.mxu0 0.0
  %8185 = vmatpush1.msra.mxu0 0.0
  %8186 = vmatprep.subr.mxu0 0.0
  %8187 = vmatpush1.msra.mxu0 0.0
  %8188 = vmatprep.subr.mxu0 0.0
  %8189 = vmatpush1.msra.mxu0 0.0
  %8190 = vmatprep.mubr.f32.mxu0 0.0
  %v8191 = vand.u32 %v7190, 4294901760
  %8192 = vmatmul.mubr.f32.gmra.mrb[0].mxu0 %v8191
  %v8193 = vpop.f32.mrb[0].mxu0
  %v8194 = vadd.f32 %v8098, %v8193
  %v8195 = vpop.f32.mrb[0].mxu0
  %v8196 = vadd.f32 %v8100, %v8195
  %8197 = vdwg.mxu0
  %v8198 = vand.u32 %v7160, 4294901760
  %8199 = vmatprep.subr.mxu0 %v8198
  %v8200 = vand.u32 %v7159, 4294901760
  %8201 = vmatpush1.msra.mxu0 %v8200
  %v8202 = vand.u32 %v7168, 4294901760
  %8203 = vmatprep.subr.mxu0 %v8202
  %v8204 = vand.u32 %v7167, 4294901760
  %8205 = vmatpush1.msra.mxu0 %v8204
  %v8206 = vand.u32 %v7176, 4294901760
  %8207 = vmatprep.subr.mxu0 %v8206
  %v8208 = vand.u32 %v7175, 4294901760
  %8209 = vmatpush1.msra.mxu0 %v8208
  %v8210 = vand.u32 %v7184, 4294901760
  %8211 = vmatprep.subr.mxu0 %v8210
  %v8212 = vand.u32 %v7183, 4294901760
  %8213 = vmatpush1.msra.mxu0 %v8212
  %8214 = vmatprep.subr.mxu0 0.0
  %8215 = vmatpush1.msra.mxu0 0.0
  %8216 = vmatprep.subr.mxu0 0.0
  %8217 = vmatpush1.msra.mxu0 0.0
  %8218 = vmatprep.subr.mxu0 0.0
  %8219 = vmatpush1.msra.mxu0 0.0
  %8220 = vmatprep.subr.mxu0 0.0
  %8221 = vmatpush1.msra.mxu0 0.0
  %8222 = vmatprep.subr.mxu0 0.0
  %8223 = vmatpush1.msra.mxu0 0.0
  %8224 = vmatprep.subr.mxu0 0.0
  %8225 = vmatpush1.msra.mxu0 0.0
  %8226 = vmatprep.subr.mxu0 0.0
  %8227 = vmatpush1.msra.mxu0 0.0
  %8228 = vmatprep.subr.mxu0 0.0
  %8229 = vmatpush1.msra.mxu0 0.0
  %8230 = vmatprep.subr.mxu0 0.0
  %8231 = vmatpush1.msra.mxu0 0.0
  %8232 = vmatprep.subr.mxu0 0.0
  %8233 = vmatpush1.msra.mxu0 0.0
  %8234 = vmatprep.subr.mxu0 0.0
  %8235 = vmatpush1.msra.mxu0 0.0
  %8236 = vmatprep.subr.mxu0 0.0
  %8237 = vmatpush1.msra.mxu0 0.0
  %8238 = vmatprep.subr.mxu0 0.0
  %8239 = vmatpush1.msra.mxu0 0.0
  %8240 = vmatprep.subr.mxu0 0.0
  %8241 = vmatpush1.msra.mxu0 0.0
  %8242 = vmatprep.subr.mxu0 0.0
  %8243 = vmatpush1.msra.mxu0 0.0
  %8244 = vmatprep.subr.mxu0 0.0
  %8245 = vmatpush1.msra.mxu0 0.0
  %8246 = vmatprep.subr.mxu0 0.0
  %8247 = vmatpush1.msra.mxu0 0.0
  %8248 = vmatprep.subr.mxu0 0.0
  %8249 = vmatpush1.msra.mxu0 0.0
  %8250 = vmatprep.subr.mxu0 0.0
  %8251 = vmatpush1.msra.mxu0 0.0
  %8252 = vmatprep.subr.mxu0 0.0
  %8253 = vmatpush1.msra.mxu0 0.0
  %8254 = vmatprep.subr.mxu0 0.0
  %8255 = vmatpush1.msra.mxu0 0.0
  %8256 = vmatprep.subr.mxu0 0.0
  %8257 = vmatpush1.msra.mxu0 0.0
  %8258 = vmatprep.subr.mxu0 0.0
  %8259 = vmatpush1.msra.mxu0 0.0
  %8260 = vmatprep.subr.mxu0 0.0
  %8261 = vmatpush1.msra.mxu0 0.0
  %8262 = vmatprep.subr.mxu0 0.0
  %8263 = vmatpush1.msra.mxu0 0.0
  %8264 = vmatprep.subr.mxu0 0.0
  %8265 = vmatpush1.msra.mxu0 0.0
  %8266 = vmatprep.subr.mxu0 0.0
  %8267 = vmatpush1.msra.mxu0 0.0
  %8268 = vmatprep.subr.mxu0 0.0
  %8269 = vmatpush1.msra.mxu0 0.0
  %8270 = vmatprep.mubr.f32.mxu0 0.0
  %v8271 = vand.u32 %v7190, 4294901760
  %8272 = vmatmul.mubr.f32.gmra.mrb[0].mxu0 %v8271
  %v8273 = vpop.f32.mrb[0].mxu0
  %v8274 = vadd.f32 %v8194, %v8273
  %v8275 = vpop.f32.mrb[0].mxu0
  %v8276 = vadd.f32 %v8196, %v8275
  %8277 = vdwg.mxu0
  %v8278 = vand.u32 %v7162, 4294901760
  %8279 = vmatprep.subr.mxu0 %v8278
  %v8280 = vand.u32 %v7161, 4294901760
  %8281 = vmatpush1.msra.mxu0 %v8280
  %v8282 = vand.u32 %v7170, 4294901760
  %8283 = vmatprep.subr.mxu0 %v8282
  %v8284 = vand.u32 %v7169, 4294901760
  %8285 = vmatpush1.msra.mxu0 %v8284
  %v8286 = vand.u32 %v7178, 4294901760
  %8287 = vmatprep.subr.mxu0 %v8286
  %v8288 = vand.u32 %v7177, 4294901760
  %8289 = vmatpush1.msra.mxu0 %v8288
  %v8290 = vand.u32 %v7186, 4294901760
  %8291 = vmatprep.subr.mxu0 %v8290
  %v8292 = vand.u32 %v7185, 4294901760
  %8293 = vmatpush1.msra.mxu0 %v8292
  %8294 = vmatprep.subr.mxu0 0.0
  %8295 = vmatpush1.msra.mxu0 0.0
  %8296 = vmatprep.subr.mxu0 0.0
  %8297 = vmatpush1.msra.mxu0 0.0
  %8298 = vmatprep.subr.mxu0 0.0
  %8299 = vmatpush1.msra.mxu0 0.0
  %8300 = vmatprep.subr.mxu0 0.0
  %8301 = vmatpush1.msra.mxu0 0.0
  %8302 = vmatprep.subr.mxu0 0.0
  %8303 = vmatpush1.msra.mxu0 0.0
  %8304 = vmatprep.subr.mxu0 0.0
  %8305 = vmatpush1.msra.mxu0 0.0
  %8306 = vmatprep.subr.mxu0 0.0
  %8307 = vmatpush1.msra.mxu0 0.0
  %8308 = vmatprep.subr.mxu0 0.0
  %8309 = vmatpush1.msra.mxu0 0.0
  %8310 = vmatprep.subr.mxu0 0.0
  %8311 = vmatpush1.msra.mxu0 0.0
  %8312 = vmatprep.subr.mxu0 0.0
  %8313 = vmatpush1.msra.mxu0 0.0
  %8314 = vmatprep.subr.mxu0 0.0
  %8315 = vmatpush1.msra.mxu0 0.0
  %8316 = vmatprep.subr.mxu0 0.0
  %8317 = vmatpush1.msra.mxu0 0.0
  %8318 = vmatprep.subr.mxu0 0.0
  %8319 = vmatpush1.msra.mxu0 0.0
  %8320 = vmatprep.subr.mxu0 0.0
  %8321 = vmatpush1.msra.mxu0 0.0
  %8322 = vmatprep.subr.mxu0 0.0
  %8323 = vmatpush1.msra.mxu0 0.0
  %8324 = vmatprep.subr.mxu0 0.0
  %8325 = vmatpush1.msra.mxu0 0.0
  %8326 = vmatprep.subr.mxu0 0.0
  %8327 = vmatpush1.msra.mxu0 0.0
  %8328 = vmatprep.subr.mxu0 0.0
  %8329 = vmatpush1.msra.mxu0 0.0
  %8330 = vmatprep.subr.mxu0 0.0
  %8331 = vmatpush1.msra.mxu0 0.0
  %8332 = vmatprep.subr.mxu0 0.0
  %8333 = vmatpush1.msra.mxu0 0.0
  %8334 = vmatprep.subr.mxu0 0.0
  %8335 = vmatpush1.msra.mxu0 0.0
  %8336 = vmatprep.subr.mxu0 0.0
  %8337 = vmatpush1.msra.mxu0 0.0
  %8338 = vmatprep.subr.mxu0 0.0
  %8339 = vmatpush1.msra.mxu0 0.0
  %8340 = vmatprep.subr.mxu0 0.0
  %8341 = vmatpush1.msra.mxu0 0.0
  %8342 = vmatprep.subr.mxu0 0.0
  %8343 = vmatpush1.msra.mxu0 0.0
  %8344 = vmatprep.subr.mxu0 0.0
  %8345 = vmatpush1.msra.mxu0 0.0
  %8346 = vmatprep.subr.mxu0 0.0
  %8347 = vmatpush1.msra.mxu0 0.0
  %8348 = vmatprep.subr.mxu0 0.0
  %8349 = vmatpush1.msra.mxu0 0.0
  %8350 = vmatprep.mubr.f32.mxu0 0.0
  %v8351 = vand.u32 %v7190, 4294901760
  %v8352 = vsub.f32 %v7190, %v8351
  %v8353 = vand.u32 %v8352, 4294901760
  %v8354 = vsub.f32 %v8352, %v8353
  %v8355 = vand.u32 %v8354, 4294901760
  %8356 = vmatmul.mubr.f32.gmra.mrb[0].mxu0 %v8355
  %v8357 = vpop.f32.mrb[0].mxu0
  %v8358 = vadd.f32 0.0, %v8357
  %v8359 = vpop.f32.mrb[0].mxu0
  %v8360 = vadd.f32 0.0, %v8359
  %8361 = vdwg.mxu0
  %v8362 = vand.u32 %v7162, 4294901760
  %v8363 = vsub.f32 %v7162, %v8362
  %v8364 = vand.u32 %v8363, 4294901760
  %v8365 = vsub.f32 %v8363, %v8364
  %v8366 = vand.u32 %v8365, 4294901760
  %8367 = vmatprep.subr.mxu0 %v8366
  %v8368 = vand.u32 %v7161, 4294901760
  %v8369 = vsub.f32 %v7161, %v8368
  %v8370 = vand.u32 %v8369, 4294901760
  %v8371 = vsub.f32 %v8369, %v8370
  %v8372 = vand.u32 %v8371, 4294901760
  %8373 = vmatpush1.msra.mxu0 %v8372
  %v8374 = vand.u32 %v7170, 4294901760
  %v8375 = vsub.f32 %v7170, %v8374
  %v8376 = vand.u32 %v8375, 4294901760
  %v8377 = vsub.f32 %v8375, %v8376
  %v8378 = vand.u32 %v8377, 4294901760
  %8379 = vmatprep.subr.mxu0 %v8378
  %v8380 = vand.u32 %v7169, 4294901760
  %v8381 = vsub.f32 %v7169, %v8380
  %v8382 = vand.u32 %v8381, 4294901760
  %v8383 = vsub.f32 %v8381, %v8382
  %v8384 = vand.u32 %v8383, 4294901760
  %8385 = vmatpush1.msra.mxu0 %v8384
  %v8386 = vand.u32 %v7178, 4294901760
  %v8387 = vsub.f32 %v7178, %v8386
  %v8388 = vand.u32 %v8387, 4294901760
  %v8389 = vsub.f32 %v8387, %v8388
  %v8390 = vand.u32 %v8389, 4294901760
  %8391 = vmatprep.subr.mxu0 %v8390
  %v8392 = vand.u32 %v7177, 4294901760
  %v8393 = vsub.f32 %v7177, %v8392
  %v8394 = vand.u32 %v8393, 4294901760
  %v8395 = vsub.f32 %v8393, %v8394
  %v8396 = vand.u32 %v8395, 4294901760
  %8397 = vmatpush1.msra.mxu0 %v8396
  %v8398 = vand.u32 %v7186, 4294901760
  %v8399 = vsub.f32 %v7186, %v8398
  %v8400 = vand.u32 %v8399, 4294901760
  %v8401 = vsub.f32 %v8399, %v8400
  %v8402 = vand.u32 %v8401, 4294901760
  %8403 = vmatprep.subr.mxu0 %v8402
  %v8404 = vand.u32 %v7185, 4294901760
  %v8405 = vsub.f32 %v7185, %v8404
  %v8406 = vand.u32 %v8405, 4294901760
  %v8407 = vsub.f32 %v8405, %v8406
  %v8408 = vand.u32 %v8407, 4294901760
  %8409 = vmatpush1.msra.mxu0 %v8408
  %8410 = vmatprep.subr.mxu0 0.0
  %8411 = vmatpush1.msra.mxu0 0.0
  %8412 = vmatprep.subr.mxu0 0.0
  %8413 = vmatpush1.msra.mxu0 0.0
  %8414 = vmatprep.subr.mxu0 0.0
  %8415 = vmatpush1.msra.mxu0 0.0
  %8416 = vmatprep.subr.mxu0 0.0
  %8417 = vmatpush1.msra.mxu0 0.0
  %8418 = vmatprep.subr.mxu0 0.0
  %8419 = vmatpush1.msra.mxu0 0.0
  %8420 = vmatprep.subr.mxu0 0.0
  %8421 = vmatpush1.msra.mxu0 0.0
  %8422 = vmatprep.subr.mxu0 0.0
  %8423 = vmatpush1.msra.mxu0 0.0
  %8424 = vmatprep.subr.mxu0 0.0
  %8425 = vmatpush1.msra.mxu0 0.0
  %8426 = vmatprep.subr.mxu0 0.0
  %8427 = vmatpush1.msra.mxu0 0.0
  %8428 = vmatprep.subr.mxu0 0.0
  %8429 = vmatpush1.msra.mxu0 0.0
  %8430 = vmatprep.subr.mxu0 0.0
  %8431 = vmatpush1.msra.mxu0 0.0
  %8432 = vmatprep.subr.mxu0 0.0
  %8433 = vmatpush1.msra.mxu0 0.0
  %8434 = vmatprep.subr.mxu0 0.0
  %8435 = vmatpush1.msra.mxu0 0.0
  %8436 = vmatprep.subr.mxu0 0.0
  %8437 = vmatpush1.msra.mxu0 0.0
  %8438 = vmatprep.subr.mxu0 0.0
  %8439 = vmatpush1.msra.mxu0 0.0
  %8440 = vmatprep.subr.mxu0 0.0
  %8441 = vmatpush1.msra.mxu0 0.0
  %8442 = vmatprep.subr.mxu0 0.0
  %8443 = vmatpush1.msra.mxu0 0.0
  %8444 = vmatprep.subr.mxu0 0.0
  %8445 = vmatpush1.msra.mxu0 0.0
  %8446 = vmatprep.subr.mxu0 0.0
  %8447 = vmatpush1.msra.mxu0 0.0
  %8448 = vmatprep.subr.mxu0 0.0
  %8449 = vmatpush1.msra.mxu0 0.0
  %8450 = vmatprep.subr.mxu0 0.0
  %8451 = vmatpush1.msra.mxu0 0.0
  %8452 = vmatprep.subr.mxu0 0.0
  %8453 = vmatpush1.msra.mxu0 0.0
  %8454 = vmatprep.subr.mxu0 0.0
  %8455 = vmatpush1.msra.mxu0 0.0
  %8456 = vmatprep.subr.mxu0 0.0
  %8457 = vmatpush1.msra.mxu0 0.0
  %8458 = vmatprep.subr.mxu0 0.0
  %8459 = vmatpush1.msra.mxu0 0.0
  %8460 = vmatprep.subr.mxu0 0.0
  %8461 = vmatpush1.msra.mxu0 0.0
  %8462 = vmatprep.subr.mxu0 0.0
  %8463 = vmatpush1.msra.mxu0 0.0
  %8464 = vmatprep.subr.mxu0 0.0
  %8465 = vmatpush1.msra.mxu0 0.0
  %8466 = vmatprep.mubr.f32.mxu0 0.0
  %v8467 = vand.u32 %v7190, 4294901760
  %8468 = vmatmul.mubr.f32.gmra.mrb[0].mxu0 %v8467
  %v8469 = vpop.f32.mrb[0].mxu0
  %v8470 = vadd.f32 %v8358, %v8469
  %v8471 = vpop.f32.mrb[0].mxu0
  %v8472 = vadd.f32 %v8360, %v8471
  %8473 = vdwg.mxu0
  %v8474 = vand.u32 %v7162, 4294901760
  %v8475 = vsub.f32 %v7162, %v8474
  %8476 = vmatprep.subr.mxu0 %v8475
  %v8477 = vand.u32 %v7161, 4294901760
  %v8478 = vsub.f32 %v7161, %v8477
  %8479 = vmatpush1.msra.mxu0 %v8478
  %v8480 = vand.u32 %v7170, 4294901760
  %v8481 = vsub.f32 %v7170, %v8480
  %8482 = vmatprep.subr.mxu0 %v8481
  %v8483 = vand.u32 %v7169, 4294901760
  %v8484 = vsub.f32 %v7169, %v8483
  %8485 = vmatpush1.msra.mxu0 %v8484
  %v8486 = vand.u32 %v7178, 4294901760
  %v8487 = vsub.f32 %v7178, %v8486
  %8488 = vmatprep.subr.mxu0 %v8487
  %v8489 = vand.u32 %v7177, 4294901760
  %v8490 = vsub.f32 %v7177, %v8489
  %8491 = vmatpush1.msra.mxu0 %v8490
  %v8492 = vand.u32 %v7186, 4294901760
  %v8493 = vsub.f32 %v7186, %v8492
  %8494 = vmatprep.subr.mxu0 %v8493
  %v8495 = vand.u32 %v7185, 4294901760
  %v8496 = vsub.f32 %v7185, %v8495
  %8497 = vmatpush1.msra.mxu0 %v8496
  %8498 = vmatprep.subr.mxu0 0.0
  %8499 = vmatpush1.msra.mxu0 0.0
  %8500 = vmatprep.subr.mxu0 0.0
  %8501 = vmatpush1.msra.mxu0 0.0
  %8502 = vmatprep.subr.mxu0 0.0
  %8503 = vmatpush1.msra.mxu0 0.0
  %8504 = vmatprep.subr.mxu0 0.0
  %8505 = vmatpush1.msra.mxu0 0.0
  %8506 = vmatprep.subr.mxu0 0.0
  %8507 = vmatpush1.msra.mxu0 0.0
  %8508 = vmatprep.subr.mxu0 0.0
  %8509 = vmatpush1.msra.mxu0 0.0
  %8510 = vmatprep.subr.mxu0 0.0
  %8511 = vmatpush1.msra.mxu0 0.0
  %8512 = vmatprep.subr.mxu0 0.0
  %8513 = vmatpush1.msra.mxu0 0.0
  %8514 = vmatprep.subr.mxu0 0.0
  %8515 = vmatpush1.msra.mxu0 0.0
  %8516 = vmatprep.subr.mxu0 0.0
  %8517 = vmatpush1.msra.mxu0 0.0
  %8518 = vmatprep.subr.mxu0 0.0
  %8519 = vmatpush1.msra.mxu0 0.0
  %8520 = vmatprep.subr.mxu0 0.0
  %8521 = vmatpush1.msra.mxu0 0.0
  %8522 = vmatprep.subr.mxu0 0.0
  %8523 = vmatpush1.msra.mxu0 0.0
  %8524 = vmatprep.subr.mxu0 0.0
  %8525 = vmatpush1.msra.mxu0 0.0
  %8526 = vmatprep.subr.mxu0 0.0
  %8527 = vmatpush1.msra.mxu0 0.0
  %8528 = vmatprep.subr.mxu0 0.0
  %8529 = vmatpush1.msra.mxu0 0.0
  %8530 = vmatprep.subr.mxu0 0.0
  %8531 = vmatpush1.msra.mxu0 0.0
  %8532 = vmatprep.subr.mxu0 0.0
  %8533 = vmatpush1.msra.mxu0 0.0
  %8534 = vmatprep.subr.mxu0 0.0
  %8535 = vmatpush1.msra.mxu0 0.0
  %8536 = vmatprep.subr.mxu0 0.0
  %8537 = vmatpush1.msra.mxu0 0.0
  %8538 = vmatprep.subr.mxu0 0.0
  %8539 = vmatpush1.msra.mxu0 0.0
  %8540 = vmatprep.subr.mxu0 0.0
  %8541 = vmatpush1.msra.mxu0 0.0
  %8542 = vmatprep.subr.mxu0 0.0
  %8543 = vmatpush1.msra.mxu0 0.0
  %8544 = vmatprep.subr.mxu0 0.0
  %8545 = vmatpush1.msra.mxu0 0.0
  %8546 = vmatprep.subr.mxu0 0.0
  %8547 = vmatpush1.msra.mxu0 0.0
  %8548 = vmatprep.subr.mxu0 0.0
  %8549 = vmatpush1.msra.mxu0 0.0
  %8550 = vmatprep.subr.mxu0 0.0
  %8551 = vmatpush1.msra.mxu0 0.0
  %8552 = vmatprep.subr.mxu0 0.0
  %8553 = vmatpush1.msra.mxu0 0.0
  %8554 = vmatprep.mubr.f32.mxu0 0.0
  %v8555 = vand.u32 %v7190, 4294901760
  %v8556 = vsub.f32 %v7190, %v8555
  %8557 = vmatmul.mubr.f32.gmra.mrb[0].mxu0 %v8556
  %v8558 = vpop.f32.mrb[0].mxu0
  %v8559 = vadd.f32 %v8470, %v8558
  %v8560 = vpop.f32.mrb[0].mxu0
  %v8561 = vadd.f32 %v8472, %v8560
  %8562 = vdwg.mxu0
  %v8563 = vand.u32 %v7162, 4294901760
  %8564 = vmatprep.subr.mxu0 %v8563
  %v8565 = vand.u32 %v7161, 4294901760
  %8566 = vmatpush1.msra.mxu0 %v8565
  %v8567 = vand.u32 %v7170, 4294901760
  %8568 = vmatprep.subr.mxu0 %v8567
  %v8569 = vand.u32 %v7169, 4294901760
  %8570 = vmatpush1.msra.mxu0 %v8569
  %v8571 = vand.u32 %v7178, 4294901760
  %8572 = vmatprep.subr.mxu0 %v8571
  %v8573 = vand.u32 %v7177, 4294901760
  %8574 = vmatpush1.msra.mxu0 %v8573
  %v8575 = vand.u32 %v7186, 4294901760
  %8576 = vmatprep.subr.mxu0 %v8575
  %v8577 = vand.u32 %v7185, 4294901760
  %8578 = vmatpush1.msra.mxu0 %v8577
  %8579 = vmatprep.subr.mxu0 0.0
  %8580 = vmatpush1.msra.mxu0 0.0
  %8581 = vmatprep.subr.mxu0 0.0
  %8582 = vmatpush1.msra.mxu0 0.0
  %8583 = vmatprep.subr.mxu0 0.0
  %8584 = vmatpush1.msra.mxu0 0.0
  %8585 = vmatprep.subr.mxu0 0.0
  %8586 = vmatpush1.msra.mxu0 0.0
  %8587 = vmatprep.subr.mxu0 0.0
  %8588 = vmatpush1.msra.mxu0 0.0
  %8589 = vmatprep.subr.mxu0 0.0
  %8590 = vmatpush1.msra.mxu0 0.0
  %8591 = vmatprep.subr.mxu0 0.0
  %8592 = vmatpush1.msra.mxu0 0.0
  %8593 = vmatprep.subr.mxu0 0.0
  %8594 = vmatpush1.msra.mxu0 0.0
  %8595 = vmatprep.subr.mxu0 0.0
  %8596 = vmatpush1.msra.mxu0 0.0
  %8597 = vmatprep.subr.mxu0 0.0
  %8598 = vmatpush1.msra.mxu0 0.0
  %8599 = vmatprep.subr.mxu0 0.0
  %8600 = vmatpush1.msra.mxu0 0.0
  %8601 = vmatprep.subr.mxu0 0.0
  %8602 = vmatpush1.msra.mxu0 0.0
  %8603 = vmatprep.subr.mxu0 0.0
  %8604 = vmatpush1.msra.mxu0 0.0
  %8605 = vmatprep.subr.mxu0 0.0
  %8606 = vmatpush1.msra.mxu0 0.0
  %8607 = vmatprep.subr.mxu0 0.0
  %8608 = vmatpush1.msra.mxu0 0.0
  %8609 = vmatprep.subr.mxu0 0.0
  %8610 = vmatpush1.msra.mxu0 0.0
  %8611 = vmatprep.subr.mxu0 0.0
  %8612 = vmatpush1.msra.mxu0 0.0
  %8613 = vmatprep.subr.mxu0 0.0
  %8614 = vmatpush1.msra.mxu0 0.0
  %8615 = vmatprep.subr.mxu0 0.0
  %8616 = vmatpush1.msra.mxu0 0.0
  %8617 = vmatprep.subr.mxu0 0.0
  %8618 = vmatpush1.msra.mxu0 0.0
  %8619 = vmatprep.subr.mxu0 0.0
  %8620 = vmatpush1.msra.mxu0 0.0
  %8621 = vmatprep.subr.mxu0 0.0
  %8622 = vmatpush1.msra.mxu0 0.0
  %8623 = vmatprep.subr.mxu0 0.0
  %8624 = vmatpush1.msra.mxu0 0.0
  %8625 = vmatprep.subr.mxu0 0.0
  %8626 = vmatpush1.msra.mxu0 0.0
  %8627 = vmatprep.subr.mxu0 0.0
  %8628 = vmatpush1.msra.mxu0 0.0
  %8629 = vmatprep.subr.mxu0 0.0
  %8630 = vmatpush1.msra.mxu0 0.0
  %8631 = vmatprep.subr.mxu0 0.0
  %8632 = vmatpush1.msra.mxu0 0.0
  %8633 = vmatprep.subr.mxu0 0.0
  %8634 = vmatpush1.msra.mxu0 0.0
  %8635 = vmatprep.mubr.f32.mxu0 0.0
  %v8636 = vand.u32 %v7190, 4294901760
  %v8637 = vsub.f32 %v7190, %v8636
  %v8638 = vand.u32 %v8637, 4294901760
  %8639 = vmatmul.mubr.f32.gmra.mrb[0].mxu0 %v8638
  %v8640 = vpop.f32.mrb[0].mxu0
  %v8641 = vadd.f32 %v8559, %v8640
  %v8642 = vpop.f32.mrb[0].mxu0
  %v8643 = vadd.f32 %v8561, %v8642
  %8644 = vdwg.mxu0
  %v8645 = vand.u32 %v7162, 4294901760
  %v8646 = vsub.f32 %v7162, %v8645
  %v8647 = vand.u32 %v8646, 4294901760
  %8648 = vmatprep.subr.mxu0 %v8647
  %v8649 = vand.u32 %v7161, 4294901760
  %v8650 = vsub.f32 %v7161, %v8649
  %v8651 = vand.u32 %v8650, 4294901760
  %8652 = vmatpush1.msra.mxu0 %v8651
  %v8653 = vand.u32 %v7170, 4294901760
  %v8654 = vsub.f32 %v7170, %v8653
  %v8655 = vand.u32 %v8654, 4294901760
  %8656 = vmatprep.subr.mxu0 %v8655
  %v8657 = vand.u32 %v7169, 4294901760
  %v8658 = vsub.f32 %v7169, %v8657
  %v8659 = vand.u32 %v8658, 4294901760
  %8660 = vmatpush1.msra.mxu0 %v8659
  %v8661 = vand.u32 %v7178, 4294901760
  %v8662 = vsub.f32 %v7178, %v8661
  %v8663 = vand.u32 %v8662, 4294901760
  %8664 = vmatprep.subr.mxu0 %v8663
  %v8665 = vand.u32 %v7177, 4294901760
  %v8666 = vsub.f32 %v7177, %v8665
  %v8667 = vand.u32 %v8666, 4294901760
  %8668 = vmatpush1.msra.mxu0 %v8667
  %v8669 = vand.u32 %v7186, 4294901760
  %v8670 = vsub.f32 %v7186, %v8669
  %v8671 = vand.u32 %v8670, 4294901760
  %8672 = vmatprep.subr.mxu0 %v8671
  %v8673 = vand.u32 %v7185, 4294901760
  %v8674 = vsub.f32 %v7185, %v8673
  %v8675 = vand.u32 %v8674, 4294901760
  %8676 = vmatpush1.msra.mxu0 %v8675
  %8677 = vmatprep.subr.mxu0 0.0
  %8678 = vmatpush1.msra.mxu0 0.0
  %8679 = vmatprep.subr.mxu0 0.0
  %8680 = vmatpush1.msra.mxu0 0.0
  %8681 = vmatprep.subr.mxu0 0.0
  %8682 = vmatpush1.msra.mxu0 0.0
  %8683 = vmatprep.subr.mxu0 0.0
  %8684 = vmatpush1.msra.mxu0 0.0
  %8685 = vmatprep.subr.mxu0 0.0
  %8686 = vmatpush1.msra.mxu0 0.0
  %8687 = vmatprep.subr.mxu0 0.0
  %8688 = vmatpush1.msra.mxu0 0.0
  %8689 = vmatprep.subr.mxu0 0.0
  %8690 = vmatpush1.msra.mxu0 0.0
  %8691 = vmatprep.subr.mxu0 0.0
  %8692 = vmatpush1.msra.mxu0 0.0
  %8693 = vmatprep.subr.mxu0 0.0
  %8694 = vmatpush1.msra.mxu0 0.0
  %8695 = vmatprep.subr.mxu0 0.0
  %8696 = vmatpush1.msra.mxu0 0.0
  %8697 = vmatprep.subr.mxu0 0.0
  %8698 = vmatpush1.msra.mxu0 0.0
  %8699 = vmatprep.subr.mxu0 0.0
  %8700 = vmatpush1.msra.mxu0 0.0
  %8701 = vmatprep.subr.mxu0 0.0
  %8702 = vmatpush1.msra.mxu0 0.0
  %8703 = vmatprep.subr.mxu0 0.0
  %8704 = vmatpush1.msra.mxu0 0.0
  %8705 = vmatprep.subr.mxu0 0.0
  %8706 = vmatpush1.msra.mxu0 0.0
  %8707 = vmatprep.subr.mxu0 0.0
  %8708 = vmatpush1.msra.mxu0 0.0
  %8709 = vmatprep.subr.mxu0 0.0
  %8710 = vmatpush1.msra.mxu0 0.0
  %8711 = vmatprep.subr.mxu0 0.0
  %8712 = vmatpush1.msra.mxu0 0.0
  %8713 = vmatprep.subr.mxu0 0.0
  %8714 = vmatpush1.msra.mxu0 0.0
  %8715 = vmatprep.subr.mxu0 0.0
  %8716 = vmatpush1.msra.mxu0 0.0
  %8717 = vmatprep.subr.mxu0 0.0
  %8718 = vmatpush1.msra.mxu0 0.0
  %8719 = vmatprep.subr.mxu0 0.0
  %8720 = vmatpush1.msra.mxu0 0.0
  %8721 = vmatprep.subr.mxu0 0.0
  %8722 = vmatpush1.msra.mxu0 0.0
  %8723 = vmatprep.subr.mxu0 0.0
  %8724 = vmatpush1.msra.mxu0 0.0
  %8725 = vmatprep.subr.mxu0 0.0
  %8726 = vmatpush1.msra.mxu0 0.0
  %8727 = vmatprep.subr.mxu0 0.0
  %8728 = vmatpush1.msra.mxu0 0.0
  %8729 = vmatprep.subr.mxu0 0.0
  %8730 = vmatpush1.msra.mxu0 0.0
  %8731 = vmatprep.subr.mxu0 0.0
  %8732 = vmatpush1.msra.mxu0 0.0
  %8733 = vmatprep.mubr.f32.mxu0 0.0
  %v8734 = vand.u32 %v7190, 4294901760
  %8735 = vmatmul.mubr.f32.gmra.mrb[0].mxu0 %v8734
  %v8736 = vpop.f32.mrb[0].mxu0
  %v8737 = vadd.f32 %v8641, %v8736
  %v8738 = vpop.f32.mrb[0].mxu0
  %v8739 = vadd.f32 %v8643, %v8738
  %8740 = vdwg.mxu0
  %v8741 = vand.u32 %v7162, 4294901760
  %8742 = vmatprep.subr.mxu0 %v8741
  %v8743 = vand.u32 %v7161, 4294901760
  %8744 = vmatpush1.msra.mxu0 %v8743
  %v8745 = vand.u32 %v7170, 4294901760
  %8746 = vmatprep.subr.mxu0 %v8745
  %v8747 = vand.u32 %v7169, 4294901760
  %8748 = vmatpush1.msra.mxu0 %v8747
  %v8749 = vand.u32 %v7178, 4294901760
  %8750 = vmatprep.subr.mxu0 %v8749
  %v8751 = vand.u32 %v7177, 4294901760
  %8752 = vmatpush1.msra.mxu0 %v8751
  %v8753 = vand.u32 %v7186, 4294901760
  %8754 = vmatprep.subr.mxu0 %v8753
  %v8755 = vand.u32 %v7185, 4294901760
  %8756 = vmatpush1.msra.mxu0 %v8755
  %8757 = vmatprep.subr.mxu0 0.0
  %8758 = vmatpush1.msra.mxu0 0.0
  %8759 = vmatprep.subr.mxu0 0.0
  %8760 = vmatpush1.msra.mxu0 0.0
  %8761 = vmatprep.subr.mxu0 0.0
  %8762 = vmatpush1.msra.mxu0 0.0
  %8763 = vmatprep.subr.mxu0 0.0
  %8764 = vmatpush1.msra.mxu0 0.0
  %8765 = vmatprep.subr.mxu0 0.0
  %8766 = vmatpush1.msra.mxu0 0.0
  %8767 = vmatprep.subr.mxu0 0.0
  %8768 = vmatpush1.msra.mxu0 0.0
  %8769 = vmatprep.subr.mxu0 0.0
  %8770 = vmatpush1.msra.mxu0 0.0
  %8771 = vmatprep.subr.mxu0 0.0
  %8772 = vmatpush1.msra.mxu0 0.0
  %8773 = vmatprep.subr.mxu0 0.0
  %8774 = vmatpush1.msra.mxu0 0.0
  %8775 = vmatprep.subr.mxu0 0.0
  %8776 = vmatpush1.msra.mxu0 0.0
  %8777 = vmatprep.subr.mxu0 0.0
  %8778 = vmatpush1.msra.mxu0 0.0
  %8779 = vmatprep.subr.mxu0 0.0
  %8780 = vmatpush1.msra.mxu0 0.0
  %8781 = vmatprep.subr.mxu0 0.0
  %8782 = vmatpush1.msra.mxu0 0.0
  %8783 = vmatprep.subr.mxu0 0.0
  %8784 = vmatpush1.msra.mxu0 0.0
  %8785 = vmatprep.subr.mxu0 0.0
  %8786 = vmatpush1.msra.mxu0 0.0
  %8787 = vmatprep.subr.mxu0 0.0
  %8788 = vmatpush1.msra.mxu0 0.0
  %8789 = vmatprep.subr.mxu0 0.0
  %8790 = vmatpush1.msra.mxu0 0.0
  %8791 = vmatprep.subr.mxu0 0.0
  %8792 = vmatpush1.msra.mxu0 0.0
  %8793 = vmatprep.subr.mxu0 0.0
  %8794 = vmatpush1.msra.mxu0 0.0
  %8795 = vmatprep.subr.mxu0 0.0
  %8796 = vmatpush1.msra.mxu0 0.0
  %8797 = vmatprep.subr.mxu0 0.0
  %8798 = vmatpush1.msra.mxu0 0.0
  %8799 = vmatprep.subr.mxu0 0.0
  %8800 = vmatpush1.msra.mxu0 0.0
  %8801 = vmatprep.subr.mxu0 0.0
  %8802 = vmatpush1.msra.mxu0 0.0
  %8803 = vmatprep.subr.mxu0 0.0
  %8804 = vmatpush1.msra.mxu0 0.0
  %8805 = vmatprep.subr.mxu0 0.0
  %8806 = vmatpush1.msra.mxu0 0.0
  %8807 = vmatprep.subr.mxu0 0.0
  %8808 = vmatpush1.msra.mxu0 0.0
  %8809 = vmatprep.subr.mxu0 0.0
  %8810 = vmatpush1.msra.mxu0 0.0
  %8811 = vmatprep.subr.mxu0 0.0
  %8812 = vmatpush1.msra.mxu0 0.0
  %8813 = vmatprep.mubr.f32.mxu0 0.0
  %v8814 = vand.u32 %v7190, 4294901760
  %8815 = vmatmul.mubr.f32.gmra.mrb[0].mxu0 %v8814
  %v8816 = vpop.f32.mrb[0].mxu0
  %v8817 = vadd.f32 %v8737, %v8816
  %v8818 = vpop.f32.mrb[0].mxu0
  %v8819 = vadd.f32 %v8739, %v8818
  %8820 = vdwg.mxu0
  %v8821 = vand.u32 %v7164, 4294901760
  %8822 = vmatprep.subr.mxu0 %v8821
  %v8823 = vand.u32 %v7163, 4294901760
  %8824 = vmatpush1.msra.mxu0 %v8823
  %v8825 = vand.u32 %v7172, 4294901760
  %8826 = vmatprep.subr.mxu0 %v8825
  %v8827 = vand.u32 %v7171, 4294901760
  %8828 = vmatpush1.msra.mxu0 %v8827
  %v8829 = vand.u32 %v7180, 4294901760
  %8830 = vmatprep.subr.mxu0 %v8829
  %v8831 = vand.u32 %v7179, 4294901760
  %8832 = vmatpush1.msra.mxu0 %v8831
  %v8833 = vand.u32 %v7188, 4294901760
  %8834 = vmatprep.subr.mxu0 %v8833
  %v8835 = vand.u32 %v7187, 4294901760
  %8836 = vmatpush1.msra.mxu0 %v8835
  %8837 = vmatprep.subr.mxu0 0.0
  %8838 = vmatpush1.msra.mxu0 0.0
  %8839 = vmatprep.subr.mxu0 0.0
  %8840 = vmatpush1.msra.mxu0 0.0
  %8841 = vmatprep.subr.mxu0 0.0
  %8842 = vmatpush1.msra.mxu0 0.0
  %8843 = vmatprep.subr.mxu0 0.0
  %8844 = vmatpush1.msra.mxu0 0.0
  %8845 = vmatprep.subr.mxu0 0.0
  %8846 = vmatpush1.msra.mxu0 0.0
  %8847 = vmatprep.subr.mxu0 0.0
  %8848 = vmatpush1.msra.mxu0 0.0
  %8849 = vmatprep.subr.mxu0 0.0
  %8850 = vmatpush1.msra.mxu0 0.0
  %8851 = vmatprep.subr.mxu0 0.0
  %8852 = vmatpush1.msra.mxu0 0.0
  %8853 = vmatprep.subr.mxu0 0.0
  %8854 = vmatpush1.msra.mxu0 0.0
  %8855 = vmatprep.subr.mxu0 0.0
  %8856 = vmatpush1.msra.mxu0 0.0
  %8857 = vmatprep.subr.mxu0 0.0
  %8858 = vmatpush1.msra.mxu0 0.0
  %8859 = vmatprep.subr.mxu0 0.0
  %8860 = vmatpush1.msra.mxu0 0.0
  %8861 = vmatprep.subr.mxu0 0.0
  %8862 = vmatpush1.msra.mxu0 0.0
  %8863 = vmatprep.subr.mxu0 0.0
  %8864 = vmatpush1.msra.mxu0 0.0
  %8865 = vmatprep.subr.mxu0 0.0
  %8866 = vmatpush1.msra.mxu0 0.0
  %8867 = vmatprep.subr.mxu0 0.0
  %8868 = vmatpush1.msra.mxu0 0.0
  %8869 = vmatprep.subr.mxu0 0.0
  %8870 = vmatpush1.msra.mxu0 0.0
  %8871 = vmatprep.subr.mxu0 0.0
  %8872 = vmatpush1.msra.mxu0 0.0
  %8873 = vmatprep.subr.mxu0 0.0
  %8874 = vmatpush1.msra.mxu0 0.0
  %8875 = vmatprep.subr.mxu0 0.0
  %8876 = vmatpush1.msra.mxu0 0.0
  %8877 = vmatprep.subr.mxu0 0.0
  %8878 = vmatpush1.msra.mxu0 0.0
  %8879 = vmatprep.subr.mxu0 0.0
  %8880 = vmatpush1.msra.mxu0 0.0
  %8881 = vmatprep.subr.mxu0 0.0
  %8882 = vmatpush1.msra.mxu0 0.0
  %8883 = vmatprep.subr.mxu0 0.0
  %8884 = vmatpush1.msra.mxu0 0.0
  %8885 = vmatprep.subr.mxu0 0.0
  %8886 = vmatpush1.msra.mxu0 0.0
  %8887 = vmatprep.subr.mxu0 0.0
  %8888 = vmatpush1.msra.mxu0 0.0
  %8889 = vmatprep.subr.mxu0 0.0
  %8890 = vmatpush1.msra.mxu0 0.0
  %8891 = vmatprep.subr.mxu0 0.0
  %8892 = vmatpush1.msra.mxu0 0.0
  %8893 = vmatprep.mubr.f32.mxu0 0.0
  %v8894 = vand.u32 %v7190, 4294901760
  %v8895 = vsub.f32 %v7190, %v8894
  %v8896 = vand.u32 %v8895, 4294901760
  %v8897 = vsub.f32 %v8895, %v8896
  %v8898 = vand.u32 %v8897, 4294901760
  %8899 = vmatmul.mubr.f32.gmra.mrb[0].mxu0 %v8898
  %v8900 = vpop.f32.mrb[0].mxu0
  %v8901 = vadd.f32 0.0, %v8900
  %v8902 = vpop.f32.mrb[0].mxu0
  %v8903 = vadd.f32 0.0, %v8902
  %8904 = vdwg.mxu0
  %v8905 = vand.u32 %v7164, 4294901760
  %v8906 = vsub.f32 %v7164, %v8905
  %v8907 = vand.u32 %v8906, 4294901760
  %v8908 = vsub.f32 %v8906, %v8907
  %v8909 = vand.u32 %v8908, 4294901760
  %8910 = vmatprep.subr.mxu0 %v8909
  %v8911 = vand.u32 %v7163, 4294901760
  %v8912 = vsub.f32 %v7163, %v8911
  %v8913 = vand.u32 %v8912, 4294901760
  %v8914 = vsub.f32 %v8912, %v8913
  %v8915 = vand.u32 %v8914, 4294901760
  %8916 = vmatpush1.msra.mxu0 %v8915
  %v8917 = vand.u32 %v7172, 4294901760
  %v8918 = vsub.f32 %v7172, %v8917
  %v8919 = vand.u32 %v8918, 4294901760
  %v8920 = vsub.f32 %v8918, %v8919
  %v8921 = vand.u32 %v8920, 4294901760
  %8922 = vmatprep.subr.mxu0 %v8921
  %v8923 = vand.u32 %v7171, 4294901760
  %v8924 = vsub.f32 %v7171, %v8923
  %v8925 = vand.u32 %v8924, 4294901760
  %v8926 = vsub.f32 %v8924, %v8925
  %v8927 = vand.u32 %v8926, 4294901760
  %8928 = vmatpush1.msra.mxu0 %v8927
  %v8929 = vand.u32 %v7180, 4294901760
  %v8930 = vsub.f32 %v7180, %v8929
  %v8931 = vand.u32 %v8930, 4294901760
  %v8932 = vsub.f32 %v8930, %v8931
  %v8933 = vand.u32 %v8932, 4294901760
  %8934 = vmatprep.subr.mxu0 %v8933
  %v8935 = vand.u32 %v7179, 4294901760
  %v8936 = vsub.f32 %v7179, %v8935
  %v8937 = vand.u32 %v8936, 4294901760
  %v8938 = vsub.f32 %v8936, %v8937
  %v8939 = vand.u32 %v8938, 4294901760
  %8940 = vmatpush1.msra.mxu0 %v8939
  %v8941 = vand.u32 %v7188, 4294901760
  %v8942 = vsub.f32 %v7188, %v8941
  %v8943 = vand.u32 %v8942, 4294901760
  %v8944 = vsub.f32 %v8942, %v8943
  %v8945 = vand.u32 %v8944, 4294901760
  %8946 = vmatprep.subr.mxu0 %v8945
  %v8947 = vand.u32 %v7187, 4294901760
  %v8948 = vsub.f32 %v7187, %v8947
  %v8949 = vand.u32 %v8948, 4294901760
  %v8950 = vsub.f32 %v8948, %v8949
  %v8951 = vand.u32 %v8950, 4294901760
  %8952 = vmatpush1.msra.mxu0 %v8951
  %8953 = vmatprep.subr.mxu0 0.0
  %8954 = vmatpush1.msra.mxu0 0.0
  %8955 = vmatprep.subr.mxu0 0.0
  %8956 = vmatpush1.msra.mxu0 0.0
  %8957 = vmatprep.subr.mxu0 0.0
  %8958 = vmatpush1.msra.mxu0 0.0
  %8959 = vmatprep.subr.mxu0 0.0
  %8960 = vmatpush1.msra.mxu0 0.0
  %8961 = vmatprep.subr.mxu0 0.0
  %8962 = vmatpush1.msra.mxu0 0.0
  %8963 = vmatprep.subr.mxu0 0.0
  %8964 = vmatpush1.msra.mxu0 0.0
  %8965 = vmatprep.subr.mxu0 0.0
  %8966 = vmatpush1.msra.mxu0 0.0
  %8967 = vmatprep.subr.mxu0 0.0
  %8968 = vmatpush1.msra.mxu0 0.0
  %8969 = vmatprep.subr.mxu0 0.0
  %8970 = vmatpush1.msra.mxu0 0.0
  %8971 = vmatprep.subr.mxu0 0.0
  %8972 = vmatpush1.msra.mxu0 0.0
  %8973 = vmatprep.subr.mxu0 0.0
  %8974 = vmatpush1.msra.mxu0 0.0
  %8975 = vmatprep.subr.mxu0 0.0
  %8976 = vmatpush1.msra.mxu0 0.0
  %8977 = vmatprep.subr.mxu0 0.0
  %8978 = vmatpush1.msra.mxu0 0.0
  %8979 = vmatprep.subr.mxu0 0.0
  %8980 = vmatpush1.msra.mxu0 0.0
  %8981 = vmatprep.subr.mxu0 0.0
  %8982 = vmatpush1.msra.mxu0 0.0
  %8983 = vmatprep.subr.mxu0 0.0
  %8984 = vmatpush1.msra.mxu0 0.0
  %8985 = vmatprep.subr.mxu0 0.0
  %8986 = vmatpush1.msra.mxu0 0.0
  %8987 = vmatprep.subr.mxu0 0.0
  %8988 = vmatpush1.msra.mxu0 0.0
  %8989 = vmatprep.subr.mxu0 0.0
  %8990 = vmatpush1.msra.mxu0 0.0
  %8991 = vmatprep.subr.mxu0 0.0
  %8992 = vmatpush1.msra.mxu0 0.0
  %8993 = vmatprep.subr.mxu0 0.0
  %8994 = vmatpush1.msra.mxu0 0.0
  %8995 = vmatprep.subr.mxu0 0.0
  %8996 = vmatpush1.msra.mxu0 0.0
  %8997 = vmatprep.subr.mxu0 0.0
  %8998 = vmatpush1.msra.mxu0 0.0
  %8999 = vmatprep.subr.mxu0 0.0
  %9000 = vmatpush1.msra.mxu0 0.0
  %9001 = vmatprep.subr.mxu0 0.0
  %9002 = vmatpush1.msra.mxu0 0.0
  %9003 = vmatprep.subr.mxu0 0.0
  %9004 = vmatpush1.msra.mxu0 0.0
  %9005 = vmatprep.subr.mxu0 0.0
  %9006 = vmatpush1.msra.mxu0 0.0
  %9007 = vmatprep.subr.mxu0 0.0
  %9008 = vmatpush1.msra.mxu0 0.0
  %9009 = vmatprep.mubr.f32.mxu0 0.0
  %v9010 = vand.u32 %v7190, 4294901760
  %9011 = vmatmul.mubr.f32.gmra.mrb[0].mxu0 %v9010
  %v9012 = vpop.f32.mrb[0].mxu0
  %v9013 = vadd.f32 %v8901, %v9012
  %v9014 = vpop.f32.mrb[0].mxu0
  %v9015 = vadd.f32 %v8903, %v9014
  %9016 = vdwg.mxu0
  %v9017 = vand.u32 %v7164, 4294901760
  %v9018 = vsub.f32 %v7164, %v9017
  %9019 = vmatprep.subr.mxu0 %v9018
  %v9020 = vand.u32 %v7163, 4294901760
  %v9021 = vsub.f32 %v7163, %v9020
  %9022 = vmatpush1.msra.mxu0 %v9021
  %v9023 = vand.u32 %v7172, 4294901760
  %v9024 = vsub.f32 %v7172, %v9023
  %9025 = vmatprep.subr.mxu0 %v9024
  %v9026 = vand.u32 %v7171, 4294901760
  %v9027 = vsub.f32 %v7171, %v9026
  %9028 = vmatpush1.msra.mxu0 %v9027
  %v9029 = vand.u32 %v7180, 4294901760
  %v9030 = vsub.f32 %v7180, %v9029
  %9031 = vmatprep.subr.mxu0 %v9030
  %v9032 = vand.u32 %v7179, 4294901760
  %v9033 = vsub.f32 %v7179, %v9032
  %9034 = vmatpush1.msra.mxu0 %v9033
  %v9035 = vand.u32 %v7188, 4294901760
  %v9036 = vsub.f32 %v7188, %v9035
  %9037 = vmatprep.subr.mxu0 %v9036
  %v9038 = vand.u32 %v7187, 4294901760
  %v9039 = vsub.f32 %v7187, %v9038
  %9040 = vmatpush1.msra.mxu0 %v9039
  %9041 = vmatprep.subr.mxu0 0.0
  %9042 = vmatpush1.msra.mxu0 0.0
  %9043 = vmatprep.subr.mxu0 0.0
  %9044 = vmatpush1.msra.mxu0 0.0
  %9045 = vmatprep.subr.mxu0 0.0
  %9046 = vmatpush1.msra.mxu0 0.0
  %9047 = vmatprep.subr.mxu0 0.0
  %9048 = vmatpush1.msra.mxu0 0.0
  %9049 = vmatprep.subr.mxu0 0.0
  %9050 = vmatpush1.msra.mxu0 0.0
  %9051 = vmatprep.subr.mxu0 0.0
  %9052 = vmatpush1.msra.mxu0 0.0
  %9053 = vmatprep.subr.mxu0 0.0
  %9054 = vmatpush1.msra.mxu0 0.0
  %9055 = vmatprep.subr.mxu0 0.0
  %9056 = vmatpush1.msra.mxu0 0.0
  %9057 = vmatprep.subr.mxu0 0.0
  %9058 = vmatpush1.msra.mxu0 0.0
  %9059 = vmatprep.subr.mxu0 0.0
  %9060 = vmatpush1.msra.mxu0 0.0
  %9061 = vmatprep.subr.mxu0 0.0
  %9062 = vmatpush1.msra.mxu0 0.0
  %9063 = vmatprep.subr.mxu0 0.0
  %9064 = vmatpush1.msra.mxu0 0.0
  %9065 = vmatprep.subr.mxu0 0.0
  %9066 = vmatpush1.msra.mxu0 0.0
  %9067 = vmatprep.subr.mxu0 0.0
  %9068 = vmatpush1.msra.mxu0 0.0
  %9069 = vmatprep.subr.mxu0 0.0
  %9070 = vmatpush1.msra.mxu0 0.0
  %9071 = vmatprep.subr.mxu0 0.0
  %9072 = vmatpush1.msra.mxu0 0.0
  %9073 = vmatprep.subr.mxu0 0.0
  %9074 = vmatpush1.msra.mxu0 0.0
  %9075 = vmatprep.subr.mxu0 0.0
  %9076 = vmatpush1.msra.mxu0 0.0
  %9077 = vmatprep.subr.mxu0 0.0
  %9078 = vmatpush1.msra.mxu0 0.0
  %9079 = vmatprep.subr.mxu0 0.0
  %9080 = vmatpush1.msra.mxu0 0.0
  %9081 = vmatprep.subr.mxu0 0.0
  %9082 = vmatpush1.msra.mxu0 0.0
  %9083 = vmatprep.subr.mxu0 0.0
  %9084 = vmatpush1.msra.mxu0 0.0
  %9085 = vmatprep.subr.mxu0 0.0
  %9086 = vmatpush1.msra.mxu0 0.0
  %9087 = vmatprep.subr.mxu0 0.0
  %9088 = vmatpush1.msra.mxu0 0.0
  %9089 = vmatprep.subr.mxu0 0.0
  %9090 = vmatpush1.msra.mxu0 0.0
  %9091 = vmatprep.subr.mxu0 0.0
  %9092 = vmatpush1.msra.mxu0 0.0
  %9093 = vmatprep.subr.mxu0 0.0
  %9094 = vmatpush1.msra.mxu0 0.0
  %9095 = vmatprep.subr.mxu0 0.0
  %9096 = vmatpush1.msra.mxu0 0.0
  %9097 = vmatprep.mubr.f32.mxu0 0.0
  %v9098 = vand.u32 %v7190, 4294901760
  %v9099 = vsub.f32 %v7190, %v9098
  %9100 = vmatmul.mubr.f32.gmra.mrb[0].mxu0 %v9099
  %v9101 = vpop.f32.mrb[0].mxu0
  %v9102 = vadd.f32 %v9013, %v9101
  %v9103 = vpop.f32.mrb[0].mxu0
  %v9104 = vadd.f32 %v9015, %v9103
  %9105 = vdwg.mxu0
  %v9106 = vand.u32 %v7164, 4294901760
  %9107 = vmatprep.subr.mxu0 %v9106
  %v9108 = vand.u32 %v7163, 4294901760
  %9109 = vmatpush1.msra.mxu0 %v9108
  %v9110 = vand.u32 %v7172, 4294901760
  %9111 = vmatprep.subr.mxu0 %v9110
  %v9112 = vand.u32 %v7171, 4294901760
  %9113 = vmatpush1.msra.mxu0 %v9112
  %v9114 = vand.u32 %v7180, 4294901760
  %9115 = vmatprep.subr.mxu0 %v9114
  %v9116 = vand.u32 %v7179, 4294901760
  %9117 = vmatpush1.msra.mxu0 %v9116
  %v9118 = vand.u32 %v7188, 4294901760
  %9119 = vmatprep.subr.mxu0 %v9118
  %v9120 = vand.u32 %v7187, 4294901760
  %9121 = vmatpush1.msra.mxu0 %v9120
  %9122 = vmatprep.subr.mxu0 0.0
  %9123 = vmatpush1.msra.mxu0 0.0
  %9124 = vmatprep.subr.mxu0 0.0
  %9125 = vmatpush1.msra.mxu0 0.0
  %9126 = vmatprep.subr.mxu0 0.0
  %9127 = vmatpush1.msra.mxu0 0.0
  %9128 = vmatprep.subr.mxu0 0.0
  %9129 = vmatpush1.msra.mxu0 0.0
  %9130 = vmatprep.subr.mxu0 0.0
  %9131 = vmatpush1.msra.mxu0 0.0
  %9132 = vmatprep.subr.mxu0 0.0
  %9133 = vmatpush1.msra.mxu0 0.0
  %9134 = vmatprep.subr.mxu0 0.0
  %9135 = vmatpush1.msra.mxu0 0.0
  %9136 = vmatprep.subr.mxu0 0.0
  %9137 = vmatpush1.msra.mxu0 0.0
  %9138 = vmatprep.subr.mxu0 0.0
  %9139 = vmatpush1.msra.mxu0 0.0
  %9140 = vmatprep.subr.mxu0 0.0
  %9141 = vmatpush1.msra.mxu0 0.0
  %9142 = vmatprep.subr.mxu0 0.0
  %9143 = vmatpush1.msra.mxu0 0.0
  %9144 = vmatprep.subr.mxu0 0.0
  %9145 = vmatpush1.msra.mxu0 0.0
  %9146 = vmatprep.subr.mxu0 0.0
  %9147 = vmatpush1.msra.mxu0 0.0
  %9148 = vmatprep.subr.mxu0 0.0
  %9149 = vmatpush1.msra.mxu0 0.0
  %9150 = vmatprep.subr.mxu0 0.0
  %9151 = vmatpush1.msra.mxu0 0.0
  %9152 = vmatprep.subr.mxu0 0.0
  %9153 = vmatpush1.msra.mxu0 0.0
  %9154 = vmatprep.subr.mxu0 0.0
  %9155 = vmatpush1.msra.mxu0 0.0
  %9156 = vmatprep.subr.mxu0 0.0
  %9157 = vmatpush1.msra.mxu0 0.0
  %9158 = vmatprep.subr.mxu0 0.0
  %9159 = vmatpush1.msra.mxu0 0.0
  %9160 = vmatprep.subr.mxu0 0.0
  %9161 = vmatpush1.msra.mxu0 0.0
  %9162 = vmatprep.subr.mxu0 0.0
  %9163 = vmatpush1.msra.mxu0 0.0
  %9164 = vmatprep.subr.mxu0 0.0
  %9165 = vmatpush1.msra.mxu0 0.0
  %9166 = vmatprep.subr.mxu0 0.0
  %9167 = vmatpush1.msra.mxu0 0.0
  %9168 = vmatprep.subr.mxu0 0.0
  %9169 = vmatpush1.msra.mxu0 0.0
  %9170 = vmatprep.subr.mxu0 0.0
  %9171 = vmatpush1.msra.mxu0 0.0
  %9172 = vmatprep.subr.mxu0 0.0
  %9173 = vmatpush1.msra.mxu0 0.0
  %9174 = vmatprep.subr.mxu0 0.0
  %9175 = vmatpush1.msra.mxu0 0.0
  %9176 = vmatprep.subr.mxu0 0.0
  %9177 = vmatpush1.msra.mxu0 0.0
  %9178 = vmatprep.mubr.f32.mxu0 0.0
  %v9179 = vand.u32 %v7190, 4294901760
  %v9180 = vsub.f32 %v7190, %v9179
  %v9181 = vand.u32 %v9180, 4294901760
  %9182 = vmatmul.mubr.f32.gmra.mrb[0].mxu0 %v9181
  %v9183 = vpop.f32.mrb[0].mxu0
  %v9184 = vadd.f32 %v9102, %v9183
  %v9185 = vpop.f32.mrb[0].mxu0
  %v9186 = vadd.f32 %v9104, %v9185
  %9187 = vdwg.mxu0
  %v9188 = vand.u32 %v7164, 4294901760
  %v9189 = vsub.f32 %v7164, %v9188
  %v9190 = vand.u32 %v9189, 4294901760
  %9191 = vmatprep.subr.mxu0 %v9190
  %v9192 = vand.u32 %v7163, 4294901760
  %v9193 = vsub.f32 %v7163, %v9192
  %v9194 = vand.u32 %v9193, 4294901760
  %9195 = vmatpush1.msra.mxu0 %v9194
  %v9196 = vand.u32 %v7172, 4294901760
  %v9197 = vsub.f32 %v7172, %v9196
  %v9198 = vand.u32 %v9197, 4294901760
  %9199 = vmatprep.subr.mxu0 %v9198
  %v9200 = vand.u32 %v7171, 4294901760
  %v9201 = vsub.f32 %v7171, %v9200
  %v9202 = vand.u32 %v9201, 4294901760
  %9203 = vmatpush1.msra.mxu0 %v9202
  %v9204 = vand.u32 %v7180, 4294901760
  %v9205 = vsub.f32 %v7180, %v9204
  %v9206 = vand.u32 %v9205, 4294901760
  %9207 = vmatprep.subr.mxu0 %v9206
  %v9208 = vand.u32 %v7179, 4294901760
  %v9209 = vsub.f32 %v7179, %v9208
  %v9210 = vand.u32 %v9209, 4294901760
  %9211 = vmatpush1.msra.mxu0 %v9210
  %v9212 = vand.u32 %v7188, 4294901760
  %v9213 = vsub.f32 %v7188, %v9212
  %v9214 = vand.u32 %v9213, 4294901760
  %9215 = vmatprep.subr.mxu0 %v9214
  %v9216 = vand.u32 %v7187, 4294901760
  %v9217 = vsub.f32 %v7187, %v9216
  %v9218 = vand.u32 %v9217, 4294901760
  %9219 = vmatpush1.msra.mxu0 %v9218
  %9220 = vmatprep.subr.mxu0 0.0
  %9221 = vmatpush1.msra.mxu0 0.0
  %9222 = vmatprep.subr.mxu0 0.0
  %9223 = vmatpush1.msra.mxu0 0.0
  %9224 = vmatprep.subr.mxu0 0.0
  %9225 = vmatpush1.msra.mxu0 0.0
  %9226 = vmatprep.subr.mxu0 0.0
  %9227 = vmatpush1.msra.mxu0 0.0
  %9228 = vmatprep.subr.mxu0 0.0
  %9229 = vmatpush1.msra.mxu0 0.0
  %9230 = vmatprep.subr.mxu0 0.0
  %9231 = vmatpush1.msra.mxu0 0.0
  %9232 = vmatprep.subr.mxu0 0.0
  %9233 = vmatpush1.msra.mxu0 0.0
  %9234 = vmatprep.subr.mxu0 0.0
  %9235 = vmatpush1.msra.mxu0 0.0
  %9236 = vmatprep.subr.mxu0 0.0
  %9237 = vmatpush1.msra.mxu0 0.0
  %9238 = vmatprep.subr.mxu0 0.0
  %9239 = vmatpush1.msra.mxu0 0.0
  %9240 = vmatprep.subr.mxu0 0.0
  %9241 = vmatpush1.msra.mxu0 0.0
  %9242 = vmatprep.subr.mxu0 0.0
  %9243 = vmatpush1.msra.mxu0 0.0
  %9244 = vmatprep.subr.mxu0 0.0
  %9245 = vmatpush1.msra.mxu0 0.0
  %9246 = vmatprep.subr.mxu0 0.0
  %9247 = vmatpush1.msra.mxu0 0.0
  %9248 = vmatprep.subr.mxu0 0.0
  %9249 = vmatpush1.msra.mxu0 0.0
  %9250 = vmatprep.subr.mxu0 0.0
  %9251 = vmatpush1.msra.mxu0 0.0
  %9252 = vmatprep.subr.mxu0 0.0
  %9253 = vmatpush1.msra.mxu0 0.0
  %9254 = vmatprep.subr.mxu0 0.0
  %9255 = vmatpush1.msra.mxu0 0.0
  %9256 = vmatprep.subr.mxu0 0.0
  %9257 = vmatpush1.msra.mxu0 0.0
  %9258 = vmatprep.subr.mxu0 0.0
  %9259 = vmatpush1.msra.mxu0 0.0
  %9260 = vmatprep.subr.mxu0 0.0
  %9261 = vmatpush1.msra.mxu0 0.0
  %9262 = vmatprep.subr.mxu0 0.0
  %9263 = vmatpush1.msra.mxu0 0.0
  %9264 = vmatprep.subr.mxu0 0.0
  %9265 = vmatpush1.msra.mxu0 0.0
  %9266 = vmatprep.subr.mxu0 0.0
  %9267 = vmatpush1.msra.mxu0 0.0
  %9268 = vmatprep.subr.mxu0 0.0
  %9269 = vmatpush1.msra.mxu0 0.0
  %9270 = vmatprep.subr.mxu0 0.0
  %9271 = vmatpush1.msra.mxu0 0.0
  %9272 = vmatprep.subr.mxu0 0.0
  %9273 = vmatpush1.msra.mxu0 0.0
  %9274 = vmatprep.subr.mxu0 0.0
  %9275 = vmatpush1.msra.mxu0 0.0
  %9276 = vmatprep.mubr.f32.mxu0 0.0
  %v9277 = vand.u32 %v7190, 4294901760
  %9278 = vmatmul.mubr.f32.gmra.mrb[0].mxu0 %v9277
  %v9279 = vpop.f32.mrb[0].mxu0
  %v9280 = vadd.f32 %v9184, %v9279
  %v9281 = vpop.f32.mrb[0].mxu0
  %v9282 = vadd.f32 %v9186, %v9281
  %9283 = vdwg.mxu0
  %v9284 = vand.u32 %v7164, 4294901760
  %9285 = vmatprep.subr.mxu0 %v9284
  %v9286 = vand.u32 %v7163, 4294901760
  %9287 = vmatpush1.msra.mxu0 %v9286
  %v9288 = vand.u32 %v7172, 4294901760
  %9289 = vmatprep.subr.mxu0 %v9288
  %v9290 = vand.u32 %v7171, 4294901760
  %9291 = vmatpush1.msra.mxu0 %v9290
  %v9292 = vand.u32 %v7180, 4294901760
  %9293 = vmatprep.subr.mxu0 %v9292
  %v9294 = vand.u32 %v7179, 4294901760
  %9295 = vmatpush1.msra.mxu0 %v9294
  %v9296 = vand.u32 %v7188, 4294901760
  %9297 = vmatprep.subr.mxu0 %v9296
  %v9298 = vand.u32 %v7187, 4294901760
  %9299 = vmatpush1.msra.mxu0 %v9298
  %9300 = vmatprep.subr.mxu0 0.0
  %9301 = vmatpush1.msra.mxu0 0.0
  %9302 = vmatprep.subr.mxu0 0.0
  %9303 = vmatpush1.msra.mxu0 0.0
  %9304 = vmatprep.subr.mxu0 0.0
  %9305 = vmatpush1.msra.mxu0 0.0
  %9306 = vmatprep.subr.mxu0 0.0
  %9307 = vmatpush1.msra.mxu0 0.0
  %9308 = vmatprep.subr.mxu0 0.0
  %9309 = vmatpush1.msra.mxu0 0.0
  %9310 = vmatprep.subr.mxu0 0.0
  %9311 = vmatpush1.msra.mxu0 0.0
  %9312 = vmatprep.subr.mxu0 0.0
  %9313 = vmatpush1.msra.mxu0 0.0
  %9314 = vmatprep.subr.mxu0 0.0
  %9315 = vmatpush1.msra.mxu0 0.0
  %9316 = vmatprep.subr.mxu0 0.0
  %9317 = vmatpush1.msra.mxu0 0.0
  %9318 = vmatprep.subr.mxu0 0.0
  %9319 = vmatpush1.msra.mxu0 0.0
  %9320 = vmatprep.subr.mxu0 0.0
  %9321 = vmatpush1.msra.mxu0 0.0
  %9322 = vmatprep.subr.mxu0 0.0
  %9323 = vmatpush1.msra.mxu0 0.0
  %9324 = vmatprep.subr.mxu0 0.0
  %9325 = vmatpush1.msra.mxu0 0.0
  %9326 = vmatprep.subr.mxu0 0.0
  %9327 = vmatpush1.msra.mxu0 0.0
  %9328 = vmatprep.subr.mxu0 0.0
  %9329 = vmatpush1.msra.mxu0 0.0
  %9330 = vmatprep.subr.mxu0 0.0
  %9331 = vmatpush1.msra.mxu0 0.0
  %9332 = vmatprep.subr.mxu0 0.0
  %9333 = vmatpush1.msra.mxu0 0.0
  %9334 = vmatprep.subr.mxu0 0.0
  %9335 = vmatpush1.msra.mxu0 0.0
  %9336 = vmatprep.subr.mxu0 0.0
  %9337 = vmatpush1.msra.mxu0 0.0
  %9338 = vmatprep.subr.mxu0 0.0
  %9339 = vmatpush1.msra.mxu0 0.0
  %9340 = vmatprep.subr.mxu0 0.0
  %9341 = vmatpush1.msra.mxu0 0.0
  %9342 = vmatprep.subr.mxu0 0.0
  %9343 = vmatpush1.msra.mxu0 0.0
  %9344 = vmatprep.subr.mxu0 0.0
  %9345 = vmatpush1.msra.mxu0 0.0
  %9346 = vmatprep.subr.mxu0 0.0
  %9347 = vmatpush1.msra.mxu0 0.0
  %9348 = vmatprep.subr.mxu0 0.0
  %9349 = vmatpush1.msra.mxu0 0.0
  %9350 = vmatprep.subr.mxu0 0.0
  %9351 = vmatpush1.msra.mxu0 0.0
  %9352 = vmatprep.subr.mxu0 0.0
  %9353 = vmatpush1.msra.mxu0 0.0
  %9354 = vmatprep.subr.mxu0 0.0
  %9355 = vmatpush1.msra.mxu0 0.0
  %9356 = vmatprep.mubr.f32.mxu0 0.0
  %v9357 = vand.u32 %v7190, 4294901760
  %9358 = vmatmul.mubr.f32.gmra.mrb[0].mxu0 %v9357
  %v9359 = vpop.f32.mrb[0].mxu0
  %v9360 = vadd.f32 %v9280, %v9359
  %v9361 = vpop.f32.mrb[0].mxu0
  %v9362 = vadd.f32 %v9282, %v9361
  %9363 = vdwg.mxu0
  %v9364 = vld [vmem:[%s5] sm:$0xff]
  %v9365 = vld [vmem:[%s5 + $0x8] sm:$0xff]
  %v9366 = vld [vmem:[%s5 + $0x10] sm:$0xff]
  %v9367 = vld [vmem:[%s5 + $0x18] sm:$0xff]
  %v9368 = vld [vmem:[%s5 + $0x20] sm:$0xff]
  %v9369 = vld [vmem:[%s5 + $0x28] sm:$0xff]
  %v9370 = vld [vmem:[%s5 + $0x30] sm:$0xff]
  %v9371 = vld [vmem:[%s5 + $0x38] sm:$0xff]
  %v9372 = vld [vmem:[%s5 + $0x40] sm:$0xff]
  %v9373 = vld [vmem:[%s5 + $0x48] sm:$0xff]
  %v9374 = vld [vmem:[%s5 + $0x50] sm:$0xff]
  %v9375 = vld [vmem:[%s5 + $0x58] sm:$0xff]
  %v9376 = vld [vmem:[%s5 + $0x60] sm:$0xff]
  %v9377 = vld [vmem:[%s5 + $0x68] sm:$0xff]
  %v9378 = vld [vmem:[%s5 + $0x70] sm:$0xff]
  %v9379 = vld [vmem:[%s5 + $0x78] sm:$0xff]
  %v9380 = vld [vmem:[%s5 + $0x80] sm:$0xff]
  %v9381 = vld [vmem:[%s5 + $0x88] sm:$0xff]
  %v9382 = vld [vmem:[%s5 + $0x90] sm:$0xff]
  %v9383 = vld [vmem:[%s5 + $0x98] sm:$0xff]
  %v9384 = vld [vmem:[%s5 + $0xa0] sm:$0xff]
  %v9385 = vld [vmem:[%s5 + $0xa8] sm:$0xff]
  %v9386 = vld [vmem:[%s5 + $0xb0] sm:$0xff]
  %v9387 = vld [vmem:[%s5 + $0xb8] sm:$0xff]
  %v9388 = vld [vmem:[%s5 + $0xc0] sm:$0xff]
  %v9389 = vld [vmem:[%s5 + $0xc8] sm:$0xff]
  %v9390 = vld [vmem:[%s5 + $0xd0] sm:$0xff]
  %v9391 = vld [vmem:[%s5 + $0xd8] sm:$0xff]
  %v9392 = vld [vmem:[%s5 + $0xe0] sm:$0xff]
  %v9393 = vld [vmem:[%s5 + $0xe8] sm:$0xff]
  %v9394 = vld [vmem:[%s5 + $0xf0] sm:$0xff]
  %v9395 = vld [vmem:[%s5 + $0xf8] sm:$0xff]
  %v9396 = vld [vmem:[%s5 + $0x100] sm:$0xff]
  %v9397 = vld [vmem:[%s5 + $0x108] sm:$0xff]
  %v9398 = vld [vmem:[%s5 + $0x110] sm:$0xff]
  %v9399 = vld [vmem:[%s5 + $0x118] sm:$0xff]
  %v9400 = vld [vmem:[%s5 + $0x120] sm:$0xff]
  %v9401 = vld [vmem:[%s5 + $0x128] sm:$0xff]
  %v9402 = vld [vmem:[%s5 + $0x130] sm:$0xff]
  %v9403 = vld [vmem:[%s5 + $0x138] sm:$0xff]
  %v9404 = vld [vmem:[%s5 + $0x140] sm:$0xff]
  %v9405 = vld [vmem:[%s5 + $0x148] sm:$0xff]
  %v9406 = vld [vmem:[%s5 + $0x150] sm:$0xff]
  %v9407 = vld [vmem:[%s5 + $0x158] sm:$0xff]
  %v9408 = vld [vmem:[%s5 + $0x160] sm:$0xff]
  %v9409 = vld [vmem:[%s5 + $0x168] sm:$0xff]
  %v9410 = vld [vmem:[%s5 + $0x170] sm:$0xff]
  %v9411 = vld [vmem:[%s5 + $0x178] sm:$0xff]
  %v9412 = vand.u32 %v9365, 4294901760
  %9413 = vmatprep.subr.mxu0 %v9412
  %v9414 = vand.u32 %v9364, 4294901760
  %9415 = vmatpush1.msra.mxu0 %v9414
  %v9416 = vand.u32 %v9373, 4294901760
  %9417 = vmatprep.subr.mxu0 %v9416
  %v9418 = vand.u32 %v9372, 4294901760
  %9419 = vmatpush1.msra.mxu0 %v9418
  %v9420 = vand.u32 %v9381, 4294901760
  %9421 = vmatprep.subr.mxu0 %v9420
  %v9422 = vand.u32 %v9380, 4294901760
  %9423 = vmatpush1.msra.mxu0 %v9422
  %v9424 = vand.u32 %v9389, 4294901760
  %9425 = vmatprep.subr.mxu0 %v9424
  %v9426 = vand.u32 %v9388, 4294901760
  %9427 = vmatpush1.msra.mxu0 %v9426
  %v9428 = vand.u32 %v9397, 4294901760
  %9429 = vmatprep.subr.mxu0 %v9428
  %v9430 = vand.u32 %v9396, 4294901760
  %9431 = vmatpush1.msra.mxu0 %v9430
  %v9432 = vand.u32 %v9405, 4294901760
  %9433 = vmatprep.subr.mxu0 %v9432
  %v9434 = vand.u32 %v9404, 4294901760
  %9435 = vmatpush1.msra.mxu0 %v9434
  %9436 = vmatprep.subr.mxu0 0.0
  %9437 = vmatpush1.msra.mxu0 0.0
  %9438 = vmatprep.subr.mxu0 0.0
  %9439 = vmatpush1.msra.mxu0 0.0
  %9440 = vmatprep.subr.mxu0 0.0
  %9441 = vmatpush1.msra.mxu0 0.0
  %9442 = vmatprep.subr.mxu0 0.0
  %9443 = vmatpush1.msra.mxu0 0.0
  %9444 = vmatprep.subr.mxu0 0.0
  %9445 = vmatpush1.msra.mxu0 0.0
  %9446 = vmatprep.subr.mxu0 0.0
  %9447 = vmatpush1.msra.mxu0 0.0
  %9448 = vmatprep.subr.mxu0 0.0
  %9449 = vmatpush1.msra.mxu0 0.0
  %9450 = vmatprep.subr.mxu0 0.0
  %9451 = vmatpush1.msra.mxu0 0.0
  %9452 = vmatprep.subr.mxu0 0.0
  %9453 = vmatpush1.msra.mxu0 0.0
  %9454 = vmatprep.subr.mxu0 0.0
  %9455 = vmatpush1.msra.mxu0 0.0
  %9456 = vmatprep.subr.mxu0 0.0
  %9457 = vmatpush1.msra.mxu0 0.0
  %9458 = vmatprep.subr.mxu0 0.0
  %9459 = vmatpush1.msra.mxu0 0.0
  %9460 = vmatprep.subr.mxu0 0.0
  %9461 = vmatpush1.msra.mxu0 0.0
  %9462 = vmatprep.subr.mxu0 0.0
  %9463 = vmatpush1.msra.mxu0 0.0
  %9464 = vmatprep.subr.mxu0 0.0
  %9465 = vmatpush1.msra.mxu0 0.0
  %9466 = vmatprep.subr.mxu0 0.0
  %9467 = vmatpush1.msra.mxu0 0.0
  %9468 = vmatprep.subr.mxu0 0.0
  %9469 = vmatpush1.msra.mxu0 0.0
  %9470 = vmatprep.subr.mxu0 0.0
  %9471 = vmatpush1.msra.mxu0 0.0
  %9472 = vmatprep.subr.mxu0 0.0
  %9473 = vmatpush1.msra.mxu0 0.0
  %9474 = vmatprep.subr.mxu0 0.0
  %9475 = vmatpush1.msra.mxu0 0.0
  %9476 = vmatprep.subr.mxu0 0.0
  %9477 = vmatpush1.msra.mxu0 0.0
  %9478 = vmatprep.subr.mxu0 0.0
  %9479 = vmatpush1.msra.mxu0 0.0
  %9480 = vmatprep.subr.mxu0 0.0
  %9481 = vmatpush1.msra.mxu0 0.0
  %9482 = vmatprep.subr.mxu0 0.0
  %9483 = vmatpush1.msra.mxu0 0.0
  %9484 = vmatprep.subr.mxu0 0.0
  %9485 = vmatpush1.msra.mxu0 0.0
  %9486 = vmatprep.subr.mxu0 0.0
  %9487 = vmatpush1.msra.mxu0 0.0
  %9488 = vmatprep.mubr.f32.mxu0 0.0
  %v9489 = vand.u32 %v96, 4294901760
  %v9490 = vsub.f32 %v96, %v9489
  %v9491 = vand.u32 %v9490, 4294901760
  %v9492 = vsub.f32 %v9490, %v9491
  %v9493 = vand.u32 %v9492, 4294901760
  %9494 = vmatmul.mubr.f32.gmra.mrb[0].mxu0 %v9493
  %v9495 = vpop.f32.mrb[0].mxu0
  %v9496 = vadd.f32 0.0, %v9495
  %v9497 = vpop.f32.mrb[0].mxu0
  %v9498 = vadd.f32 0.0, %v9497
  %9499 = vdwg.mxu0
  %v9500 = vand.u32 %v9365, 4294901760
  %v9501 = vsub.f32 %v9365, %v9500
  %v9502 = vand.u32 %v9501, 4294901760
  %v9503 = vsub.f32 %v9501, %v9502
  %v9504 = vand.u32 %v9503, 4294901760
  %9505 = vmatprep.subr.mxu0 %v9504
  %v9506 = vand.u32 %v9364, 4294901760
  %v9507 = vsub.f32 %v9364, %v9506
  %v9508 = vand.u32 %v9507, 4294901760
  %v9509 = vsub.f32 %v9507, %v9508
  %v9510 = vand.u32 %v9509, 4294901760
  %9511 = vmatpush1.msra.mxu0 %v9510
  %v9512 = vand.u32 %v9373, 4294901760
  %v9513 = vsub.f32 %v9373, %v9512
  %v9514 = vand.u32 %v9513, 4294901760
  %v9515 = vsub.f32 %v9513, %v9514
  %v9516 = vand.u32 %v9515, 4294901760
  %9517 = vmatprep.subr.mxu0 %v9516
  %v9518 = vand.u32 %v9372, 4294901760
  %v9519 = vsub.f32 %v9372, %v9518
  %v9520 = vand.u32 %v9519, 4294901760
  %v9521 = vsub.f32 %v9519, %v9520
  %v9522 = vand.u32 %v9521, 4294901760
  %9523 = vmatpush1.msra.mxu0 %v9522
  %v9524 = vand.u32 %v9381, 4294901760
  %v9525 = vsub.f32 %v9381, %v9524
  %v9526 = vand.u32 %v9525, 4294901760
  %v9527 = vsub.f32 %v9525, %v9526
  %v9528 = vand.u32 %v9527, 4294901760
  %9529 = vmatprep.subr.mxu0 %v9528
  %v9530 = vand.u32 %v9380, 4294901760
  %v9531 = vsub.f32 %v9380, %v9530
  %v9532 = vand.u32 %v9531, 4294901760
  %v9533 = vsub.f32 %v9531, %v9532
  %v9534 = vand.u32 %v9533, 4294901760
  %9535 = vmatpush1.msra.mxu0 %v9534
  %v9536 = vand.u32 %v9389, 4294901760
  %v9537 = vsub.f32 %v9389, %v9536
  %v9538 = vand.u32 %v9537, 4294901760
  %v9539 = vsub.f32 %v9537, %v9538
  %v9540 = vand.u32 %v9539, 4294901760
  %9541 = vmatprep.subr.mxu0 %v9540
  %v9542 = vand.u32 %v9388, 4294901760
  %v9543 = vsub.f32 %v9388, %v9542
  %v9544 = vand.u32 %v9543, 4294901760
  %v9545 = vsub.f32 %v9543, %v9544
  %v9546 = vand.u32 %v9545, 4294901760
  %9547 = vmatpush1.msra.mxu0 %v9546
  %v9548 = vand.u32 %v9397, 4294901760
  %v9549 = vsub.f32 %v9397, %v9548
  %v9550 = vand.u32 %v9549, 4294901760
  %v9551 = vsub.f32 %v9549, %v9550
  %v9552 = vand.u32 %v9551, 4294901760
  %9553 = vmatprep.subr.mxu0 %v9552
  %v9554 = vand.u32 %v9396, 4294901760
  %v9555 = vsub.f32 %v9396, %v9554
  %v9556 = vand.u32 %v9555, 4294901760
  %v9557 = vsub.f32 %v9555, %v9556
  %v9558 = vand.u32 %v9557, 4294901760
  %9559 = vmatpush1.msra.mxu0 %v9558
  %v9560 = vand.u32 %v9405, 4294901760
  %v9561 = vsub.f32 %v9405, %v9560
  %v9562 = vand.u32 %v9561, 4294901760
  %v9563 = vsub.f32 %v9561, %v9562
  %v9564 = vand.u32 %v9563, 4294901760
  %9565 = vmatprep.subr.mxu0 %v9564
  %v9566 = vand.u32 %v9404, 4294901760
  %v9567 = vsub.f32 %v9404, %v9566
  %v9568 = vand.u32 %v9567, 4294901760
  %v9569 = vsub.f32 %v9567, %v9568
  %v9570 = vand.u32 %v9569, 4294901760
  %9571 = vmatpush1.msra.mxu0 %v9570
  %9572 = vmatprep.subr.mxu0 0.0
  %9573 = vmatpush1.msra.mxu0 0.0
  %9574 = vmatprep.subr.mxu0 0.0
  %9575 = vmatpush1.msra.mxu0 0.0
  %9576 = vmatprep.subr.mxu0 0.0
  %9577 = vmatpush1.msra.mxu0 0.0
  %9578 = vmatprep.subr.mxu0 0.0
  %9579 = vmatpush1.msra.mxu0 0.0
  %9580 = vmatprep.subr.mxu0 0.0
  %9581 = vmatpush1.msra.mxu0 0.0
  %9582 = vmatprep.subr.mxu0 0.0
  %9583 = vmatpush1.msra.mxu0 0.0
  %9584 = vmatprep.subr.mxu0 0.0
  %9585 = vmatpush1.msra.mxu0 0.0
  %9586 = vmatprep.subr.mxu0 0.0
  %9587 = vmatpush1.msra.mxu0 0.0
  %9588 = vmatprep.subr.mxu0 0.0
  %9589 = vmatpush1.msra.mxu0 0.0
  %9590 = vmatprep.subr.mxu0 0.0
  %9591 = vmatpush1.msra.mxu0 0.0
  %9592 = vmatprep.subr.mxu0 0.0
  %9593 = vmatpush1.msra.mxu0 0.0
  %9594 = vmatprep.subr.mxu0 0.0
  %9595 = vmatpush1.msra.mxu0 0.0
  %9596 = vmatprep.subr.mxu0 0.0
  %9597 = vmatpush1.msra.mxu0 0.0
  %9598 = vmatprep.subr.mxu0 0.0
  %9599 = vmatpush1.msra.mxu0 0.0
  %9600 = vmatprep.subr.mxu0 0.0
  %9601 = vmatpush1.msra.mxu0 0.0
  %9602 = vmatprep.subr.mxu0 0.0
  %9603 = vmatpush1.msra.mxu0 0.0
  %9604 = vmatprep.subr.mxu0 0.0
  %9605 = vmatpush1.msra.mxu0 0.0
  %9606 = vmatprep.subr.mxu0 0.0
  %9607 = vmatpush1.msra.mxu0 0.0
  %9608 = vmatprep.subr.mxu0 0.0
  %9609 = vmatpush1.msra.mxu0 0.0
  %9610 = vmatprep.subr.mxu0 0.0
  %9611 = vmatpush1.msra.mxu0 0.0
  %9612 = vmatprep.subr.mxu0 0.0
  %9613 = vmatpush1.msra.mxu0 0.0
  %9614 = vmatprep.subr.mxu0 0.0
  %9615 = vmatpush1.msra.mxu0 0.0
  %9616 = vmatprep.subr.mxu0 0.0
  %9617 = vmatpush1.msra.mxu0 0.0
  %9618 = vmatprep.subr.mxu0 0.0
  %9619 = vmatpush1.msra.mxu0 0.0
  %9620 = vmatprep.subr.mxu0 0.0
  %9621 = vmatpush1.msra.mxu0 0.0
  %9622 = vmatprep.subr.mxu0 0.0
  %9623 = vmatpush1.msra.mxu0 0.0
  %9624 = vmatprep.mubr.f32.mxu0 0.0
  %v9625 = vand.u32 %v96, 4294901760
  %9626 = vmatmul.mubr.f32.gmra.mrb[0].mxu0 %v9625
  %v9627 = vpop.f32.mrb[0].mxu0
  %v9628 = vadd.f32 %v9496, %v9627
  %v9629 = vpop.f32.mrb[0].mxu0
  %v9630 = vadd.f32 %v9498, %v9629
  %9631 = vdwg.mxu0
  %v9632 = vand.u32 %v9365, 4294901760
  %v9633 = vsub.f32 %v9365, %v9632
  %9634 = vmatprep.subr.mxu0 %v9633
  %v9635 = vand.u32 %v9364, 4294901760
  %v9636 = vsub.f32 %v9364, %v9635
  %9637 = vmatpush1.msra.mxu0 %v9636
  %v9638 = vand.u32 %v9373, 4294901760
  %v9639 = vsub.f32 %v9373, %v9638
  %9640 = vmatprep.subr.mxu0 %v9639
  %v9641 = vand.u32 %v9372, 4294901760
  %v9642 = vsub.f32 %v9372, %v9641
  %9643 = vmatpush1.msra.mxu0 %v9642
  %v9644 = vand.u32 %v9381, 4294901760
  %v9645 = vsub.f32 %v9381, %v9644
  %9646 = vmatprep.subr.mxu0 %v9645
  %v9647 = vand.u32 %v9380, 4294901760
  %v9648 = vsub.f32 %v9380, %v9647
  %9649 = vmatpush1.msra.mxu0 %v9648
  %v9650 = vand.u32 %v9389, 4294901760
  %v9651 = vsub.f32 %v9389, %v9650
  %9652 = vmatprep.subr.mxu0 %v9651
  %v9653 = vand.u32 %v9388, 4294901760
  %v9654 = vsub.f32 %v9388, %v9653
  %9655 = vmatpush1.msra.mxu0 %v9654
  %v9656 = vand.u32 %v9397, 4294901760
  %v9657 = vsub.f32 %v9397, %v9656
  %9658 = vmatprep.subr.mxu0 %v9657
  %v9659 = vand.u32 %v9396, 4294901760
  %v9660 = vsub.f32 %v9396, %v9659
  %9661 = vmatpush1.msra.mxu0 %v9660
  %v9662 = vand.u32 %v9405, 4294901760
  %v9663 = vsub.f32 %v9405, %v9662
  %9664 = vmatprep.subr.mxu0 %v9663
  %v9665 = vand.u32 %v9404, 4294901760
  %v9666 = vsub.f32 %v9404, %v9665
  %9667 = vmatpush1.msra.mxu0 %v9666
  %9668 = vmatprep.subr.mxu0 0.0
  %9669 = vmatpush1.msra.mxu0 0.0
  %9670 = vmatprep.subr.mxu0 0.0
  %9671 = vmatpush1.msra.mxu0 0.0
  %9672 = vmatprep.subr.mxu0 0.0
  %9673 = vmatpush1.msra.mxu0 0.0
  %9674 = vmatprep.subr.mxu0 0.0
  %9675 = vmatpush1.msra.mxu0 0.0
  %9676 = vmatprep.subr.mxu0 0.0
  %9677 = vmatpush1.msra.mxu0 0.0
  %9678 = vmatprep.subr.mxu0 0.0
  %9679 = vmatpush1.msra.mxu0 0.0
  %9680 = vmatprep.subr.mxu0 0.0
  %9681 = vmatpush1.msra.mxu0 0.0
  %9682 = vmatprep.subr.mxu0 0.0
  %9683 = vmatpush1.msra.mxu0 0.0
  %9684 = vmatprep.subr.mxu0 0.0
  %9685 = vmatpush1.msra.mxu0 0.0
  %9686 = vmatprep.subr.mxu0 0.0
  %9687 = vmatpush1.msra.mxu0 0.0
  %9688 = vmatprep.subr.mxu0 0.0
  %9689 = vmatpush1.msra.mxu0 0.0
  %9690 = vmatprep.subr.mxu0 0.0
  %9691 = vmatpush1.msra.mxu0 0.0
  %9692 = vmatprep.subr.mxu0 0.0
  %9693 = vmatpush1.msra.mxu0 0.0
  %9694 = vmatprep.subr.mxu0 0.0
  %9695 = vmatpush1.msra.mxu0 0.0
  %9696 = vmatprep.subr.mxu0 0.0
  %9697 = vmatpush1.msra.mxu0 0.0
  %9698 = vmatprep.subr.mxu0 0.0
  %9699 = vmatpush1.msra.mxu0 0.0
  %9700 = vmatprep.subr.mxu0 0.0
  %9701 = vmatpush1.msra.mxu0 0.0
  %9702 = vmatprep.subr.mxu0 0.0
  %9703 = vmatpush1.msra.mxu0 0.0
  %9704 = vmatprep.subr.mxu0 0.0
  %9705 = vmatpush1.msra.mxu0 0.0
  %9706 = vmatprep.subr.mxu0 0.0
  %9707 = vmatpush1.msra.mxu0 0.0
  %9708 = vmatprep.subr.mxu0 0.0
  %9709 = vmatpush1.msra.mxu0 0.0
  %9710 = vmatprep.subr.mxu0 0.0
  %9711 = vmatpush1.msra.mxu0 0.0
  %9712 = vmatprep.subr.mxu0 0.0
  %9713 = vmatpush1.msra.mxu0 0.0
  %9714 = vmatprep.subr.mxu0 0.0
  %9715 = vmatpush1.msra.mxu0 0.0
  %9716 = vmatprep.subr.mxu0 0.0
  %9717 = vmatpush1.msra.mxu0 0.0
  %9718 = vmatprep.subr.mxu0 0.0
  %9719 = vmatpush1.msra.mxu0 0.0
  %9720 = vmatprep.mubr.f32.mxu0 0.0
  %v9721 = vand.u32 %v96, 4294901760
  %v9722 = vsub.f32 %v96, %v9721
  %9723 = vmatmul.mubr.f32.gmra.mrb[0].mxu0 %v9722
  %v9724 = vpop.f32.mrb[0].mxu0
  %v9725 = vadd.f32 %v9628, %v9724
  %v9726 = vpop.f32.mrb[0].mxu0
  %v9727 = vadd.f32 %v9630, %v9726
  %9728 = vdwg.mxu0
  %v9729 = vand.u32 %v9365, 4294901760
  %9730 = vmatprep.subr.mxu0 %v9729
  %v9731 = vand.u32 %v9364, 4294901760
  %9732 = vmatpush1.msra.mxu0 %v9731
  %v9733 = vand.u32 %v9373, 4294901760
  %9734 = vmatprep.subr.mxu0 %v9733
  %v9735 = vand.u32 %v9372, 4294901760
  %9736 = vmatpush1.msra.mxu0 %v9735
  %v9737 = vand.u32 %v9381, 4294901760
  %9738 = vmatprep.subr.mxu0 %v9737
  %v9739 = vand.u32 %v9380, 4294901760
  %9740 = vmatpush1.msra.mxu0 %v9739
  %v9741 = vand.u32 %v9389, 4294901760
  %9742 = vmatprep.subr.mxu0 %v9741
  %v9743 = vand.u32 %v9388, 4294901760
  %9744 = vmatpush1.msra.mxu0 %v9743
  %v9745 = vand.u32 %v9397, 4294901760
  %9746 = vmatprep.subr.mxu0 %v9745
  %v9747 = vand.u32 %v9396, 4294901760
  %9748 = vmatpush1.msra.mxu0 %v9747
  %v9749 = vand.u32 %v9405, 4294901760
  %9750 = vmatprep.subr.mxu0 %v9749
  %v9751 = vand.u32 %v9404, 4294901760
  %9752 = vmatpush1.msra.mxu0 %v9751
  %9753 = vmatprep.subr.mxu0 0.0
  %9754 = vmatpush1.msra.mxu0 0.0
  %9755 = vmatprep.subr.mxu0 0.0
  %9756 = vmatpush1.msra.mxu0 0.0
  %9757 = vmatprep.subr.mxu0 0.0
  %9758 = vmatpush1.msra.mxu0 0.0
  %9759 = vmatprep.subr.mxu0 0.0
  %9760 = vmatpush1.msra.mxu0 0.0
  %9761 = vmatprep.subr.mxu0 0.0
  %9762 = vmatpush1.msra.mxu0 0.0
  %9763 = vmatprep.subr.mxu0 0.0
  %9764 = vmatpush1.msra.mxu0 0.0
  %9765 = vmatprep.subr.mxu0 0.0
  %9766 = vmatpush1.msra.mxu0 0.0
  %9767 = vmatprep.subr.mxu0 0.0
  %9768 = vmatpush1.msra.mxu0 0.0
  %9769 = vmatprep.subr.mxu0 0.0
  %9770 = vmatpush1.msra.mxu0 0.0
  %9771 = vmatprep.subr.mxu0 0.0
  %9772 = vmatpush1.msra.mxu0 0.0
  %9773 = vmatprep.subr.mxu0 0.0
  %9774 = vmatpush1.msra.mxu0 0.0
  %9775 = vmatprep.subr.mxu0 0.0
  %9776 = vmatpush1.msra.mxu0 0.0
  %9777 = vmatprep.subr.mxu0 0.0
  %9778 = vmatpush1.msra.mxu0 0.0
  %9779 = vmatprep.subr.mxu0 0.0
  %9780 = vmatpush1.msra.mxu0 0.0
  %9781 = vmatprep.subr.mxu0 0.0
  %9782 = vmatpush1.msra.mxu0 0.0
  %9783 = vmatprep.subr.mxu0 0.0
  %9784 = vmatpush1.msra.mxu0 0.0
  %9785 = vmatprep.subr.mxu0 0.0
  %9786 = vmatpush1.msra.mxu0 0.0
  %9787 = vmatprep.subr.mxu0 0.0
  %9788 = vmatpush1.msra.mxu0 0.0
  %9789 = vmatprep.subr.mxu0 0.0
  %9790 = vmatpush1.msra.mxu0 0.0
  %9791 = vmatprep.subr.mxu0 0.0
  %9792 = vmatpush1.msra.mxu0 0.0
  %9793 = vmatprep.subr.mxu0 0.0
  %9794 = vmatpush1.msra.mxu0 0.0
  %9795 = vmatprep.subr.mxu0 0.0
  %9796 = vmatpush1.msra.mxu0 0.0
  %9797 = vmatprep.subr.mxu0 0.0
  %9798 = vmatpush1.msra.mxu0 0.0
  %9799 = vmatprep.subr.mxu0 0.0
  %9800 = vmatpush1.msra.mxu0 0.0
  %9801 = vmatprep.subr.mxu0 0.0
  %9802 = vmatpush1.msra.mxu0 0.0
  %9803 = vmatprep.subr.mxu0 0.0
  %9804 = vmatpush1.msra.mxu0 0.0
  %9805 = vmatprep.mubr.f32.mxu0 0.0
  %v9806 = vand.u32 %v96, 4294901760
  %v9807 = vsub.f32 %v96, %v9806
  %v9808 = vand.u32 %v9807, 4294901760
  %9809 = vmatmul.mubr.f32.gmra.mrb[0].mxu0 %v9808
  %v9810 = vpop.f32.mrb[0].mxu0
  %v9811 = vadd.f32 %v9725, %v9810
  %v9812 = vpop.f32.mrb[0].mxu0
  %v9813 = vadd.f32 %v9727, %v9812
  %9814 = vdwg.mxu0
  %v9815 = vand.u32 %v9365, 4294901760
  %v9816 = vsub.f32 %v9365, %v9815
  %v9817 = vand.u32 %v9816, 4294901760
  %9818 = vmatprep.subr.mxu0 %v9817
  %v9819 = vand.u32 %v9364, 4294901760
  %v9820 = vsub.f32 %v9364, %v9819
  %v9821 = vand.u32 %v9820, 4294901760
  %9822 = vmatpush1.msra.mxu0 %v9821
  %v9823 = vand.u32 %v9373, 4294901760
  %v9824 = vsub.f32 %v9373, %v9823
  %v9825 = vand.u32 %v9824, 4294901760
  %9826 = vmatprep.subr.mxu0 %v9825
  %v9827 = vand.u32 %v9372, 4294901760
  %v9828 = vsub.f32 %v9372, %v9827
  %v9829 = vand.u32 %v9828, 4294901760
  %9830 = vmatpush1.msra.mxu0 %v9829
  %v9831 = vand.u32 %v9381, 4294901760
  %v9832 = vsub.f32 %v9381, %v9831
  %v9833 = vand.u32 %v9832, 4294901760
  %9834 = vmatprep.subr.mxu0 %v9833
  %v9835 = vand.u32 %v9380, 4294901760
  %v9836 = vsub.f32 %v9380, %v9835
  %v9837 = vand.u32 %v9836, 4294901760
  %9838 = vmatpush1.msra.mxu0 %v9837
  %v9839 = vand.u32 %v9389, 4294901760
  %v9840 = vsub.f32 %v9389, %v9839
  %v9841 = vand.u32 %v9840, 4294901760
  %9842 = vmatprep.subr.mxu0 %v9841
  %v9843 = vand.u32 %v9388, 4294901760
  %v9844 = vsub.f32 %v9388, %v9843
  %v9845 = vand.u32 %v9844, 4294901760
  %9846 = vmatpush1.msra.mxu0 %v9845
  %v9847 = vand.u32 %v9397, 4294901760
  %v9848 = vsub.f32 %v9397, %v9847
  %v9849 = vand.u32 %v9848, 4294901760
  %9850 = vmatprep.subr.mxu0 %v9849
  %v9851 = vand.u32 %v9396, 4294901760
  %v9852 = vsub.f32 %v9396, %v9851
  %v9853 = vand.u32 %v9852, 4294901760
  %9854 = vmatpush1.msra.mxu0 %v9853
  %v9855 = vand.u32 %v9405, 4294901760
  %v9856 = vsub.f32 %v9405, %v9855
  %v9857 = vand.u32 %v9856, 4294901760
  %9858 = vmatprep.subr.mxu0 %v9857
  %v9859 = vand.u32 %v9404, 4294901760
  %v9860 = vsub.f32 %v9404, %v9859
  %v9861 = vand.u32 %v9860, 4294901760
  %9862 = vmatpush1.msra.mxu0 %v9861
  %9863 = vmatprep.subr.mxu0 0.0
  %9864 = vmatpush1.msra.mxu0 0.0
  %9865 = vmatprep.subr.mxu0 0.0
  %9866 = vmatpush1.msra.mxu0 0.0
  %9867 = vmatprep.subr.mxu0 0.0
  %9868 = vmatpush1.msra.mxu0 0.0
  %9869 = vmatprep.subr.mxu0 0.0
  %9870 = vmatpush1.msra.mxu0 0.0
  %9871 = vmatprep.subr.mxu0 0.0
  %9872 = vmatpush1.msra.mxu0 0.0
  %9873 = vmatprep.subr.mxu0 0.0
  %9874 = vmatpush1.msra.mxu0 0.0
  %9875 = vmatprep.subr.mxu0 0.0
  %9876 = vmatpush1.msra.mxu0 0.0
  %9877 = vmatprep.subr.mxu0 0.0
  %9878 = vmatpush1.msra.mxu0 0.0
  %9879 = vmatprep.subr.mxu0 0.0
  %9880 = vmatpush1.msra.mxu0 0.0
  %9881 = vmatprep.subr.mxu0 0.0
  %9882 = vmatpush1.msra.mxu0 0.0
  %9883 = vmatprep.subr.mxu0 0.0
  %9884 = vmatpush1.msra.mxu0 0.0
  %9885 = vmatprep.subr.mxu0 0.0
  %9886 = vmatpush1.msra.mxu0 0.0
  %9887 = vmatprep.subr.mxu0 0.0
  %9888 = vmatpush1.msra.mxu0 0.0
  %9889 = vmatprep.subr.mxu0 0.0
  %9890 = vmatpush1.msra.mxu0 0.0
  %9891 = vmatprep.subr.mxu0 0.0
  %9892 = vmatpush1.msra.mxu0 0.0
  %9893 = vmatprep.subr.mxu0 0.0
  %9894 = vmatpush1.msra.mxu0 0.0
  %9895 = vmatprep.subr.mxu0 0.0
  %9896 = vmatpush1.msra.mxu0 0.0
  %9897 = vmatprep.subr.mxu0 0.0
  %9898 = vmatpush1.msra.mxu0 0.0
  %9899 = vmatprep.subr.mxu0 0.0
  %9900 = vmatpush1.msra.mxu0 0.0
  %9901 = vmatprep.subr.mxu0 0.0
  %9902 = vmatpush1.msra.mxu0 0.0
  %9903 = vmatprep.subr.mxu0 0.0
  %9904 = vmatpush1.msra.mxu0 0.0
  %9905 = vmatprep.subr.mxu0 0.0
  %9906 = vmatpush1.msra.mxu0 0.0
  %9907 = vmatprep.subr.mxu0 0.0
  %9908 = vmatpush1.msra.mxu0 0.0
  %9909 = vmatprep.subr.mxu0 0.0
  %9910 = vmatpush1.msra.mxu0 0.0
  %9911 = vmatprep.subr.mxu0 0.0
  %9912 = vmatpush1.msra.mxu0 0.0
  %9913 = vmatprep.subr.mxu0 0.0
  %9914 = vmatpush1.msra.mxu0 0.0
  %9915 = vmatprep.mubr.f32.mxu0 0.0
  %v9916 = vand.u32 %v96, 4294901760
  %9917 = vmatmul.mubr.f32.gmra.mrb[0].mxu0 %v9916
  %v9918 = vpop.f32.mrb[0].mxu0
  %v9919 = vadd.f32 %v9811, %v9918
  %v9920 = vpop.f32.mrb[0].mxu0
  %v9921 = vadd.f32 %v9813, %v9920
  %9922 = vdwg.mxu0
  %v9923 = vand.u32 %v9365, 4294901760
  %9924 = vmatprep.subr.mxu0 %v9923
  %v9925 = vand.u32 %v9364, 4294901760
  %9926 = vmatpush1.msra.mxu0 %v9925
  %v9927 = vand.u32 %v9373, 4294901760
  %9928 = vmatprep.subr.mxu0 %v9927
  %v9929 = vand.u32 %v9372, 4294901760
  %9930 = vmatpush1.msra.mxu0 %v9929
  %v9931 = vand.u32 %v9381, 4294901760
  %9932 = vmatprep.subr.mxu0 %v9931
  %v9933 = vand.u32 %v9380, 4294901760
  %9934 = vmatpush1.msra.mxu0 %v9933
  %v9935 = vand.u32 %v9389, 4294901760
  %9936 = vmatprep.subr.mxu0 %v9935
  %v9937 = vand.u32 %v9388, 4294901760
  %9938 = vmatpush1.msra.mxu0 %v9937
  %v9939 = vand.u32 %v9397, 4294901760
  %9940 = vmatprep.subr.mxu0 %v9939
  %v9941 = vand.u32 %v9396, 4294901760
  %9942 = vmatpush1.msra.mxu0 %v9941
  %v9943 = vand.u32 %v9405, 4294901760
  %9944 = vmatprep.subr.mxu0 %v9943
  %v9945 = vand.u32 %v9404, 4294901760
  %9946 = vmatpush1.msra.mxu0 %v9945
  %9947 = vmatprep.subr.mxu0 0.0
  %9948 = vmatpush1.msra.mxu0 0.0
  %9949 = vmatprep.subr.mxu0 0.0
  %9950 = vmatpush1.msra.mxu0 0.0
  %9951 = vmatprep.subr.mxu0 0.0
  %9952 = vmatpush1.msra.mxu0 0.0
  %9953 = vmatprep.subr.mxu0 0.0
  %9954 = vmatpush1.msra.mxu0 0.0
  %9955 = vmatprep.subr.mxu0 0.0
  %9956 = vmatpush1.msra.mxu0 0.0
  %9957 = vmatprep.subr.mxu0 0.0
  %9958 = vmatpush1.msra.mxu0 0.0
  %9959 = vmatprep.subr.mxu0 0.0
  %9960 = vmatpush1.msra.mxu0 0.0
  %9961 = vmatprep.subr.mxu0 0.0
  %9962 = vmatpush1.msra.mxu0 0.0
  %9963 = vmatprep.subr.mxu0 0.0
  %9964 = vmatpush1.msra.mxu0 0.0
  %9965 = vmatprep.subr.mxu0 0.0
  %9966 = vmatpush1.msra.mxu0 0.0
  %9967 = vmatprep.subr.mxu0 0.0
  %9968 = vmatpush1.msra.mxu0 0.0
  %9969 = vmatprep.subr.mxu0 0.0
  %9970 = vmatpush1.msra.mxu0 0.0
  %9971 = vmatprep.subr.mxu0 0.0
  %9972 = vmatpush1.msra.mxu0 0.0
  %9973 = vmatprep.subr.mxu0 0.0
  %9974 = vmatpush1.msra.mxu0 0.0
  %9975 = vmatprep.subr.mxu0 0.0
  %9976 = vmatpush1.msra.mxu0 0.0
  %9977 = vmatprep.subr.mxu0 0.0
  %9978 = vmatpush1.msra.mxu0 0.0
  %9979 = vmatprep.subr.mxu0 0.0
  %9980 = vmatpush1.msra.mxu0 0.0
  %9981 = vmatprep.subr.mxu0 0.0
  %9982 = vmatpush1.msra.mxu0 0.0
  %9983 = vmatprep.subr.mxu0 0.0
  %9984 = vmatpush1.msra.mxu0 0.0
  %9985 = vmatprep.subr.mxu0 0.0
  %9986 = vmatpush1.msra.mxu0 0.0
  %9987 = vmatprep.subr.mxu0 0.0
  %9988 = vmatpush1.msra.mxu0 0.0
  %9989 = vmatprep.subr.mxu0 0.0
  %9990 = vmatpush1.msra.mxu0 0.0
  %9991 = vmatprep.subr.mxu0 0.0
  %9992 = vmatpush1.msra.mxu0 0.0
  %9993 = vmatprep.subr.mxu0 0.0
  %9994 = vmatpush1.msra.mxu0 0.0
  %9995 = vmatprep.subr.mxu0 0.0
  %9996 = vmatpush1.msra.mxu0 0.0
  %9997 = vmatprep.subr.mxu0 0.0
  %9998 = vmatpush1.msra.mxu0 0.0
  %9999 = vmatprep.mubr.f32.mxu0 0.0
  %v10000 = vand.u32 %v96, 4294901760
  %10001 = vmatmul.mubr.f32.gmra.mrb[0].mxu0 %v10000
  %v10002 = vpop.f32.mrb[0].mxu0
  %v10003 = vadd.f32 %v9919, %v10002
  %v10004 = vpop.f32.mrb[0].mxu0
  %v10005 = vadd.f32 %v9921, %v10004
  %10006 = vdwg.mxu0
  %v10007 = vand.u32 %v9367, 4294901760
  %10008 = vmatprep.subr.mxu0 %v10007
  %v10009 = vand.u32 %v9366, 4294901760
  %10010 = vmatpush1.msra.mxu0 %v10009
  %v10011 = vand.u32 %v9375, 4294901760
  %10012 = vmatprep.subr.mxu0 %v10011
  %v10013 = vand.u32 %v9374, 4294901760
  %10014 = vmatpush1.msra.mxu0 %v10013
  %v10015 = vand.u32 %v9383, 4294901760
  %10016 = vmatprep.subr.mxu0 %v10015
  %v10017 = vand.u32 %v9382, 4294901760
  %10018 = vmatpush1.msra.mxu0 %v10017
  %v10019 = vand.u32 %v9391, 4294901760
  %10020 = vmatprep.subr.mxu0 %v10019
  %v10021 = vand.u32 %v9390, 4294901760
  %10022 = vmatpush1.msra.mxu0 %v10021
  %v10023 = vand.u32 %v9399, 4294901760
  %10024 = vmatprep.subr.mxu0 %v10023
  %v10025 = vand.u32 %v9398, 4294901760
  %10026 = vmatpush1.msra.mxu0 %v10025
  %v10027 = vand.u32 %v9407, 4294901760
  %10028 = vmatprep.subr.mxu0 %v10027
  %v10029 = vand.u32 %v9406, 4294901760
  %10030 = vmatpush1.msra.mxu0 %v10029
  %10031 = vmatprep.subr.mxu0 0.0
  %10032 = vmatpush1.msra.mxu0 0.0
  %10033 = vmatprep.subr.mxu0 0.0
  %10034 = vmatpush1.msra.mxu0 0.0
  %10035 = vmatprep.subr.mxu0 0.0
  %10036 = vmatpush1.msra.mxu0 0.0
  %10037 = vmatprep.subr.mxu0 0.0
  %10038 = vmatpush1.msra.mxu0 0.0
  %10039 = vmatprep.subr.mxu0 0.0
  %10040 = vmatpush1.msra.mxu0 0.0
  %10041 = vmatprep.subr.mxu0 0.0
  %10042 = vmatpush1.msra.mxu0 0.0
  %10043 = vmatprep.subr.mxu0 0.0
  %10044 = vmatpush1.msra.mxu0 0.0
  %10045 = vmatprep.subr.mxu0 0.0
  %10046 = vmatpush1.msra.mxu0 0.0
  %10047 = vmatprep.subr.mxu0 0.0
  %10048 = vmatpush1.msra.mxu0 0.0
  %10049 = vmatprep.subr.mxu0 0.0
  %10050 = vmatpush1.msra.mxu0 0.0
  %10051 = vmatprep.subr.mxu0 0.0
  %10052 = vmatpush1.msra.mxu0 0.0
  %10053 = vmatprep.subr.mxu0 0.0
  %10054 = vmatpush1.msra.mxu0 0.0
  %10055 = vmatprep.subr.mxu0 0.0
  %10056 = vmatpush1.msra.mxu0 0.0
  %10057 = vmatprep.subr.mxu0 0.0
  %10058 = vmatpush1.msra.mxu0 0.0
  %10059 = vmatprep.subr.mxu0 0.0
  %10060 = vmatpush1.msra.mxu0 0.0
  %10061 = vmatprep.subr.mxu0 0.0
  %10062 = vmatpush1.msra.mxu0 0.0
  %10063 = vmatprep.subr.mxu0 0.0
  %10064 = vmatpush1.msra.mxu0 0.0
  %10065 = vmatprep.subr.mxu0 0.0
  %10066 = vmatpush1.msra.mxu0 0.0
  %10067 = vmatprep.subr.mxu0 0.0
  %10068 = vmatpush1.msra.mxu0 0.0
  %10069 = vmatprep.subr.mxu0 0.0
  %10070 = vmatpush1.msra.mxu0 0.0
  %10071 = vmatprep.subr.mxu0 0.0
  %10072 = vmatpush1.msra.mxu0 0.0
  %10073 = vmatprep.subr.mxu0 0.0
  %10074 = vmatpush1.msra.mxu0 0.0
  %10075 = vmatprep.subr.mxu0 0.0
  %10076 = vmatpush1.msra.mxu0 0.0
  %10077 = vmatprep.subr.mxu0 0.0
  %10078 = vmatpush1.msra.mxu0 0.0
  %10079 = vmatprep.subr.mxu0 0.0
  %10080 = vmatpush1.msra.mxu0 0.0
  %10081 = vmatprep.subr.mxu0 0.0
  %10082 = vmatpush1.msra.mxu0 0.0
  %10083 = vmatprep.mubr.f32.mxu0 0.0
  %v10084 = vand.u32 %v96, 4294901760
  %v10085 = vsub.f32 %v96, %v10084
  %v10086 = vand.u32 %v10085, 4294901760
  %v10087 = vsub.f32 %v10085, %v10086
  %v10088 = vand.u32 %v10087, 4294901760
  %10089 = vmatmul.mubr.f32.gmra.mrb[0].mxu0 %v10088
  %v10090 = vpop.f32.mrb[0].mxu0
  %v10091 = vadd.f32 0.0, %v10090
  %v10092 = vpop.f32.mrb[0].mxu0
  %v10093 = vadd.f32 0.0, %v10092
  %10094 = vdwg.mxu0
  %v10095 = vand.u32 %v9367, 4294901760
  %v10096 = vsub.f32 %v9367, %v10095
  %v10097 = vand.u32 %v10096, 4294901760
  %v10098 = vsub.f32 %v10096, %v10097
  %v10099 = vand.u32 %v10098, 4294901760
  %10100 = vmatprep.subr.mxu0 %v10099
  %v10101 = vand.u32 %v9366, 4294901760
  %v10102 = vsub.f32 %v9366, %v10101
  %v10103 = vand.u32 %v10102, 4294901760
  %v10104 = vsub.f32 %v10102, %v10103
  %v10105 = vand.u32 %v10104, 4294901760
  %10106 = vmatpush1.msra.mxu0 %v10105
  %v10107 = vand.u32 %v9375, 4294901760
  %v10108 = vsub.f32 %v9375, %v10107
  %v10109 = vand.u32 %v10108, 4294901760
  %v10110 = vsub.f32 %v10108, %v10109
  %v10111 = vand.u32 %v10110, 4294901760
  %10112 = vmatprep.subr.mxu0 %v10111
  %v10113 = vand.u32 %v9374, 4294901760
  %v10114 = vsub.f32 %v9374, %v10113
  %v10115 = vand.u32 %v10114, 4294901760
  %v10116 = vsub.f32 %v10114, %v10115
  %v10117 = vand.u32 %v10116, 4294901760
  %10118 = vmatpush1.msra.mxu0 %v10117
  %v10119 = vand.u32 %v9383, 4294901760
  %v10120 = vsub.f32 %v9383, %v10119
  %v10121 = vand.u32 %v10120, 4294901760
  %v10122 = vsub.f32 %v10120, %v10121
  %v10123 = vand.u32 %v10122, 4294901760
  %10124 = vmatprep.subr.mxu0 %v10123
  %v10125 = vand.u32 %v9382, 4294901760
  %v10126 = vsub.f32 %v9382, %v10125
  %v10127 = vand.u32 %v10126, 4294901760
  %v10128 = vsub.f32 %v10126, %v10127
  %v10129 = vand.u32 %v10128, 4294901760
  %10130 = vmatpush1.msra.mxu0 %v10129
  %v10131 = vand.u32 %v9391, 4294901760
  %v10132 = vsub.f32 %v9391, %v10131
  %v10133 = vand.u32 %v10132, 4294901760
  %v10134 = vsub.f32 %v10132, %v10133
  %v10135 = vand.u32 %v10134, 4294901760
  %10136 = vmatprep.subr.mxu0 %v10135
  %v10137 = vand.u32 %v9390, 4294901760
  %v10138 = vsub.f32 %v9390, %v10137
  %v10139 = vand.u32 %v10138, 4294901760
  %v10140 = vsub.f32 %v10138, %v10139
  %v10141 = vand.u32 %v10140, 4294901760
  %10142 = vmatpush1.msra.mxu0 %v10141
  %v10143 = vand.u32 %v9399, 4294901760
  %v10144 = vsub.f32 %v9399, %v10143
  %v10145 = vand.u32 %v10144, 4294901760
  %v10146 = vsub.f32 %v10144, %v10145
  %v10147 = vand.u32 %v10146, 4294901760
  %10148 = vmatprep.subr.mxu0 %v10147
  %v10149 = vand.u32 %v9398, 4294901760
  %v10150 = vsub.f32 %v9398, %v10149
  %v10151 = vand.u32 %v10150, 4294901760
  %v10152 = vsub.f32 %v10150, %v10151
  %v10153 = vand.u32 %v10152, 4294901760
  %10154 = vmatpush1.msra.mxu0 %v10153
  %v10155 = vand.u32 %v9407, 4294901760
  %v10156 = vsub.f32 %v9407, %v10155
  %v10157 = vand.u32 %v10156, 4294901760
  %v10158 = vsub.f32 %v10156, %v10157
  %v10159 = vand.u32 %v10158, 4294901760
  %10160 = vmatprep.subr.mxu0 %v10159
  %v10161 = vand.u32 %v9406, 4294901760
  %v10162 = vsub.f32 %v9406, %v10161
  %v10163 = vand.u32 %v10162, 4294901760
  %v10164 = vsub.f32 %v10162, %v10163
  %v10165 = vand.u32 %v10164, 4294901760
  %10166 = vmatpush1.msra.mxu0 %v10165
  %10167 = vmatprep.subr.mxu0 0.0
  %10168 = vmatpush1.msra.mxu0 0.0
  %10169 = vmatprep.subr.mxu0 0.0
  %10170 = vmatpush1.msra.mxu0 0.0
  %10171 = vmatprep.subr.mxu0 0.0
  %10172 = vmatpush1.msra.mxu0 0.0
  %10173 = vmatprep.subr.mxu0 0.0
  %10174 = vmatpush1.msra.mxu0 0.0
  %10175 = vmatprep.subr.mxu0 0.0
  %10176 = vmatpush1.msra.mxu0 0.0
  %10177 = vmatprep.subr.mxu0 0.0
  %10178 = vmatpush1.msra.mxu0 0.0
  %10179 = vmatprep.subr.mxu0 0.0
  %10180 = vmatpush1.msra.mxu0 0.0
  %10181 = vmatprep.subr.mxu0 0.0
  %10182 = vmatpush1.msra.mxu0 0.0
  %10183 = vmatprep.subr.mxu0 0.0
  %10184 = vmatpush1.msra.mxu0 0.0
  %10185 = vmatprep.subr.mxu0 0.0
  %10186 = vmatpush1.msra.mxu0 0.0
  %10187 = vmatprep.subr.mxu0 0.0
  %10188 = vmatpush1.msra.mxu0 0.0
  %10189 = vmatprep.subr.mxu0 0.0
  %10190 = vmatpush1.msra.mxu0 0.0
  %10191 = vmatprep.subr.mxu0 0.0
  %10192 = vmatpush1.msra.mxu0 0.0
  %10193 = vmatprep.subr.mxu0 0.0
  %10194 = vmatpush1.msra.mxu0 0.0
  %10195 = vmatprep.subr.mxu0 0.0
  %10196 = vmatpush1.msra.mxu0 0.0
  %10197 = vmatprep.subr.mxu0 0.0
  %10198 = vmatpush1.msra.mxu0 0.0
  %10199 = vmatprep.subr.mxu0 0.0
  %10200 = vmatpush1.msra.mxu0 0.0
  %10201 = vmatprep.subr.mxu0 0.0
  %10202 = vmatpush1.msra.mxu0 0.0
  %10203 = vmatprep.subr.mxu0 0.0
  %10204 = vmatpush1.msra.mxu0 0.0
  %10205 = vmatprep.subr.mxu0 0.0
  %10206 = vmatpush1.msra.mxu0 0.0
  %10207 = vmatprep.subr.mxu0 0.0
  %10208 = vmatpush1.msra.mxu0 0.0
  %10209 = vmatprep.subr.mxu0 0.0
  %10210 = vmatpush1.msra.mxu0 0.0
  %10211 = vmatprep.subr.mxu0 0.0
  %10212 = vmatpush1.msra.mxu0 0.0
  %10213 = vmatprep.subr.mxu0 0.0
  %10214 = vmatpush1.msra.mxu0 0.0
  %10215 = vmatprep.subr.mxu0 0.0
  %10216 = vmatpush1.msra.mxu0 0.0
  %10217 = vmatprep.subr.mxu0 0.0
  %10218 = vmatpush1.msra.mxu0 0.0
  %10219 = vmatprep.mubr.f32.mxu0 0.0
  %v10220 = vand.u32 %v96, 4294901760
  %10221 = vmatmul.mubr.f32.gmra.mrb[0].mxu0 %v10220
  %v10222 = vpop.f32.mrb[0].mxu0
  %v10223 = vadd.f32 %v10091, %v10222
  %v10224 = vpop.f32.mrb[0].mxu0
  %v10225 = vadd.f32 %v10093, %v10224
  %10226 = vdwg.mxu0
  %v10227 = vand.u32 %v9367, 4294901760
  %v10228 = vsub.f32 %v9367, %v10227
  %10229 = vmatprep.subr.mxu0 %v10228
  %v10230 = vand.u32 %v9366, 4294901760
  %v10231 = vsub.f32 %v9366, %v10230
  %10232 = vmatpush1.msra.mxu0 %v10231
  %v10233 = vand.u32 %v9375, 4294901760
  %v10234 = vsub.f32 %v9375, %v10233
  %10235 = vmatprep.subr.mxu0 %v10234
  %v10236 = vand.u32 %v9374, 4294901760
  %v10237 = vsub.f32 %v9374, %v10236
  %10238 = vmatpush1.msra.mxu0 %v10237
  %v10239 = vand.u32 %v9383, 4294901760
  %v10240 = vsub.f32 %v9383, %v10239
  %10241 = vmatprep.subr.mxu0 %v10240
  %v10242 = vand.u32 %v9382, 4294901760
  %v10243 = vsub.f32 %v9382, %v10242
  %10244 = vmatpush1.msra.mxu0 %v10243
  %v10245 = vand.u32 %v9391, 4294901760
  %v10246 = vsub.f32 %v9391, %v10245
  %10247 = vmatprep.subr.mxu0 %v10246
  %v10248 = vand.u32 %v9390, 4294901760
  %v10249 = vsub.f32 %v9390, %v10248
  %10250 = vmatpush1.msra.mxu0 %v10249
  %v10251 = vand.u32 %v9399, 4294901760
  %v10252 = vsub.f32 %v9399, %v10251
  %10253 = vmatprep.subr.mxu0 %v10252
  %v10254 = vand.u32 %v9398, 4294901760
  %v10255 = vsub.f32 %v9398, %v10254
  %10256 = vmatpush1.msra.mxu0 %v10255
  %v10257 = vand.u32 %v9407, 4294901760
  %v10258 = vsub.f32 %v9407, %v10257
  %10259 = vmatprep.subr.mxu0 %v10258
  %v10260 = vand.u32 %v9406, 4294901760
  %v10261 = vsub.f32 %v9406, %v10260
  %10262 = vmatpush1.msra.mxu0 %v10261
  %10263 = vmatprep.subr.mxu0 0.0
  %10264 = vmatpush1.msra.mxu0 0.0
  %10265 = vmatprep.subr.mxu0 0.0
  %10266 = vmatpush1.msra.mxu0 0.0
  %10267 = vmatprep.subr.mxu0 0.0
  %10268 = vmatpush1.msra.mxu0 0.0
  %10269 = vmatprep.subr.mxu0 0.0
  %10270 = vmatpush1.msra.mxu0 0.0
  %10271 = vmatprep.subr.mxu0 0.0
  %10272 = vmatpush1.msra.mxu0 0.0
  %10273 = vmatprep.subr.mxu0 0.0
  %10274 = vmatpush1.msra.mxu0 0.0
  %10275 = vmatprep.subr.mxu0 0.0
  %10276 = vmatpush1.msra.mxu0 0.0
  %10277 = vmatprep.subr.mxu0 0.0
  %10278 = vmatpush1.msra.mxu0 0.0
  %10279 = vmatprep.subr.mxu0 0.0
  %10280 = vmatpush1.msra.mxu0 0.0
  %10281 = vmatprep.subr.mxu0 0.0
  %10282 = vmatpush1.msra.mxu0 0.0
  %10283 = vmatprep.subr.mxu0 0.0
  %10284 = vmatpush1.msra.mxu0 0.0
  %10285 = vmatprep.subr.mxu0 0.0
  %10286 = vmatpush1.msra.mxu0 0.0
  %10287 = vmatprep.subr.mxu0 0.0
  %10288 = vmatpush1.msra.mxu0 0.0
  %10289 = vmatprep.subr.mxu0 0.0
  %10290 = vmatpush1.msra.mxu0 0.0
  %10291 = vmatprep.subr.mxu0 0.0
  %10292 = vmatpush1.msra.mxu0 0.0
  %10293 = vmatprep.subr.mxu0 0.0
  %10294 = vmatpush1.msra.mxu0 0.0
  %10295 = vmatprep.subr.mxu0 0.0
  %10296 = vmatpush1.msra.mxu0 0.0
  %10297 = vmatprep.subr.mxu0 0.0
  %10298 = vmatpush1.msra.mxu0 0.0
  %10299 = vmatprep.subr.mxu0 0.0
  %10300 = vmatpush1.msra.mxu0 0.0
  %10301 = vmatprep.subr.mxu0 0.0
  %10302 = vmatpush1.msra.mxu0 0.0
  %10303 = vmatprep.subr.mxu0 0.0
  %10304 = vmatpush1.msra.mxu0 0.0
  %10305 = vmatprep.subr.mxu0 0.0
  %10306 = vmatpush1.msra.mxu0 0.0
  %10307 = vmatprep.subr.mxu0 0.0
  %10308 = vmatpush1.msra.mxu0 0.0
  %10309 = vmatprep.subr.mxu0 0.0
  %10310 = vmatpush1.msra.mxu0 0.0
  %10311 = vmatprep.subr.mxu0 0.0
  %10312 = vmatpush1.msra.mxu0 0.0
  %10313 = vmatprep.subr.mxu0 0.0
  %10314 = vmatpush1.msra.mxu0 0.0
  %10315 = vmatprep.mubr.f32.mxu0 0.0
  %v10316 = vand.u32 %v96, 4294901760
  %v10317 = vsub.f32 %v96, %v10316
  %10318 = vmatmul.mubr.f32.gmra.mrb[0].mxu0 %v10317
  %v10319 = vpop.f32.mrb[0].mxu0
  %v10320 = vadd.f32 %v10223, %v10319
  %v10321 = vpop.f32.mrb[0].mxu0
  %v10322 = vadd.f32 %v10225, %v10321
  %10323 = vdwg.mxu0
  %v10324 = vand.u32 %v9367, 4294901760
  %10325 = vmatprep.subr.mxu0 %v10324
  %v10326 = vand.u32 %v9366, 4294901760
  %10327 = vmatpush1.msra.mxu0 %v10326
  %v10328 = vand.u32 %v9375, 4294901760
  %10329 = vmatprep.subr.mxu0 %v10328
  %v10330 = vand.u32 %v9374, 4294901760
  %10331 = vmatpush1.msra.mxu0 %v10330
  %v10332 = vand.u32 %v9383, 4294901760
  %10333 = vmatprep.subr.mxu0 %v10332
  %v10334 = vand.u32 %v9382, 4294901760
  %10335 = vmatpush1.msra.mxu0 %v10334
  %v10336 = vand.u32 %v9391, 4294901760
  %10337 = vmatprep.subr.mxu0 %v10336
  %v10338 = vand.u32 %v9390, 4294901760
  %10339 = vmatpush1.msra.mxu0 %v10338
  %v10340 = vand.u32 %v9399, 4294901760
  %10341 = vmatprep.subr.mxu0 %v10340
  %v10342 = vand.u32 %v9398, 4294901760
  %10343 = vmatpush1.msra.mxu0 %v10342
  %v10344 = vand.u32 %v9407, 4294901760
  %10345 = vmatprep.subr.mxu0 %v10344
  %v10346 = vand.u32 %v9406, 4294901760
  %10347 = vmatpush1.msra.mxu0 %v10346
  %10348 = vmatprep.subr.mxu0 0.0
  %10349 = vmatpush1.msra.mxu0 0.0
  %10350 = vmatprep.subr.mxu0 0.0
  %10351 = vmatpush1.msra.mxu0 0.0
  %10352 = vmatprep.subr.mxu0 0.0
  %10353 = vmatpush1.msra.mxu0 0.0
  %10354 = vmatprep.subr.mxu0 0.0
  %10355 = vmatpush1.msra.mxu0 0.0
  %10356 = vmatprep.subr.mxu0 0.0
  %10357 = vmatpush1.msra.mxu0 0.0
  %10358 = vmatprep.subr.mxu0 0.0
  %10359 = vmatpush1.msra.mxu0 0.0
  %10360 = vmatprep.subr.mxu0 0.0
  %10361 = vmatpush1.msra.mxu0 0.0
  %10362 = vmatprep.subr.mxu0 0.0
  %10363 = vmatpush1.msra.mxu0 0.0
  %10364 = vmatprep.subr.mxu0 0.0
  %10365 = vmatpush1.msra.mxu0 0.0
  %10366 = vmatprep.subr.mxu0 0.0
  %10367 = vmatpush1.msra.mxu0 0.0
  %10368 = vmatprep.subr.mxu0 0.0
  %10369 = vmatpush1.msra.mxu0 0.0
  %10370 = vmatprep.subr.mxu0 0.0
  %10371 = vmatpush1.msra.mxu0 0.0
  %10372 = vmatprep.subr.mxu0 0.0
  %10373 = vmatpush1.msra.mxu0 0.0
  %10374 = vmatprep.subr.mxu0 0.0
  %10375 = vmatpush1.msra.mxu0 0.0
  %10376 = vmatprep.subr.mxu0 0.0
  %10377 = vmatpush1.msra.mxu0 0.0
  %10378 = vmatprep.subr.mxu0 0.0
  %10379 = vmatpush1.msra.mxu0 0.0
  %10380 = vmatprep.subr.mxu0 0.0
  %10381 = vmatpush1.msra.mxu0 0.0
  %10382 = vmatprep.subr.mxu0 0.0
  %10383 = vmatpush1.msra.mxu0 0.0
  %10384 = vmatprep.subr.mxu0 0.0
  %10385 = vmatpush1.msra.mxu0 0.0
  %10386 = vmatprep.subr.mxu0 0.0
  %10387 = vmatpush1.msra.mxu0 0.0
  %10388 = vmatprep.subr.mxu0 0.0
  %10389 = vmatpush1.msra.mxu0 0.0
  %10390 = vmatprep.subr.mxu0 0.0
  %10391 = vmatpush1.msra.mxu0 0.0
  %10392 = vmatprep.subr.mxu0 0.0
  %10393 = vmatpush1.msra.mxu0 0.0
  %10394 = vmatprep.subr.mxu0 0.0
  %10395 = vmatpush1.msra.mxu0 0.0
  %10396 = vmatprep.subr.mxu0 0.0
  %10397 = vmatpush1.msra.mxu0 0.0
  %10398 = vmatprep.subr.mxu0 0.0
  %10399 = vmatpush1.msra.mxu0 0.0
  %10400 = vmatprep.mubr.f32.mxu0 0.0
  %v10401 = vand.u32 %v96, 4294901760
  %v10402 = vsub.f32 %v96, %v10401
  %v10403 = vand.u32 %v10402, 4294901760
  %10404 = vmatmul.mubr.f32.gmra.mrb[0].mxu0 %v10403
  %v10405 = vpop.f32.mrb[0].mxu0
  %v10406 = vadd.f32 %v10320, %v10405
  %v10407 = vpop.f32.mrb[0].mxu0
  %v10408 = vadd.f32 %v10322, %v10407
  %10409 = vdwg.mxu0
  %v10410 = vand.u32 %v9367, 4294901760
  %v10411 = vsub.f32 %v9367, %v10410
  %v10412 = vand.u32 %v10411, 4294901760
  %10413 = vmatprep.subr.mxu0 %v10412
  %v10414 = vand.u32 %v9366, 4294901760
  %v10415 = vsub.f32 %v9366, %v10414
  %v10416 = vand.u32 %v10415, 4294901760
  %10417 = vmatpush1.msra.mxu0 %v10416
  %v10418 = vand.u32 %v9375, 4294901760
  %v10419 = vsub.f32 %v9375, %v10418
  %v10420 = vand.u32 %v10419, 4294901760
  %10421 = vmatprep.subr.mxu0 %v10420
  %v10422 = vand.u32 %v9374, 4294901760
  %v10423 = vsub.f32 %v9374, %v10422
  %v10424 = vand.u32 %v10423, 4294901760
  %10425 = vmatpush1.msra.mxu0 %v10424
  %v10426 = vand.u32 %v9383, 4294901760
  %v10427 = vsub.f32 %v9383, %v10426
  %v10428 = vand.u32 %v10427, 4294901760
  %10429 = vmatprep.subr.mxu0 %v10428
  %v10430 = vand.u32 %v9382, 4294901760
  %v10431 = vsub.f32 %v9382, %v10430
  %v10432 = vand.u32 %v10431, 4294901760
  %10433 = vmatpush1.msra.mxu0 %v10432
  %v10434 = vand.u32 %v9391, 4294901760
  %v10435 = vsub.f32 %v9391, %v10434
  %v10436 = vand.u32 %v10435, 4294901760
  %10437 = vmatprep.subr.mxu0 %v10436
  %v10438 = vand.u32 %v9390, 4294901760
  %v10439 = vsub.f32 %v9390, %v10438
  %v10440 = vand.u32 %v10439, 4294901760
  %10441 = vmatpush1.msra.mxu0 %v10440
  %v10442 = vand.u32 %v9399, 4294901760
  %v10443 = vsub.f32 %v9399, %v10442
  %v10444 = vand.u32 %v10443, 4294901760
  %10445 = vmatprep.subr.mxu0 %v10444
  %v10446 = vand.u32 %v9398, 4294901760
  %v10447 = vsub.f32 %v9398, %v10446
  %v10448 = vand.u32 %v10447, 4294901760
  %10449 = vmatpush1.msra.mxu0 %v10448
  %v10450 = vand.u32 %v9407, 4294901760
  %v10451 = vsub.f32 %v9407, %v10450
  %v10452 = vand.u32 %v10451, 4294901760
  %10453 = vmatprep.subr.mxu0 %v10452
  %v10454 = vand.u32 %v9406, 4294901760
  %v10455 = vsub.f32 %v9406, %v10454
  %v10456 = vand.u32 %v10455, 4294901760
  %10457 = vmatpush1.msra.mxu0 %v10456
  %10458 = vmatprep.subr.mxu0 0.0
  %10459 = vmatpush1.msra.mxu0 0.0
  %10460 = vmatprep.subr.mxu0 0.0
  %10461 = vmatpush1.msra.mxu0 0.0
  %10462 = vmatprep.subr.mxu0 0.0
  %10463 = vmatpush1.msra.mxu0 0.0
  %10464 = vmatprep.subr.mxu0 0.0
  %10465 = vmatpush1.msra.mxu0 0.0
  %10466 = vmatprep.subr.mxu0 0.0
  %10467 = vmatpush1.msra.mxu0 0.0
  %10468 = vmatprep.subr.mxu0 0.0
  %10469 = vmatpush1.msra.mxu0 0.0
  %10470 = vmatprep.subr.mxu0 0.0
  %10471 = vmatpush1.msra.mxu0 0.0
  %10472 = vmatprep.subr.mxu0 0.0
  %10473 = vmatpush1.msra.mxu0 0.0
  %10474 = vmatprep.subr.mxu0 0.0
  %10475 = vmatpush1.msra.mxu0 0.0
  %10476 = vmatprep.subr.mxu0 0.0
  %10477 = vmatpush1.msra.mxu0 0.0
  %10478 = vmatprep.subr.mxu0 0.0
  %10479 = vmatpush1.msra.mxu0 0.0
  %10480 = vmatprep.subr.mxu0 0.0
  %10481 = vmatpush1.msra.mxu0 0.0
  %10482 = vmatprep.subr.mxu0 0.0
  %10483 = vmatpush1.msra.mxu0 0.0
  %10484 = vmatprep.subr.mxu0 0.0
  %10485 = vmatpush1.msra.mxu0 0.0
  %10486 = vmatprep.subr.mxu0 0.0
  %10487 = vmatpush1.msra.mxu0 0.0
  %10488 = vmatprep.subr.mxu0 0.0
  %10489 = vmatpush1.msra.mxu0 0.0
  %10490 = vmatprep.subr.mxu0 0.0
  %10491 = vmatpush1.msra.mxu0 0.0
  %10492 = vmatprep.subr.mxu0 0.0
  %10493 = vmatpush1.msra.mxu0 0.0
  %10494 = vmatprep.subr.mxu0 0.0
  %10495 = vmatpush1.msra.mxu0 0.0
  %10496 = vmatprep.subr.mxu0 0.0
  %10497 = vmatpush1.msra.mxu0 0.0
  %10498 = vmatprep.subr.mxu0 0.0
  %10499 = vmatpush1.msra.mxu0 0.0
  %10500 = vmatprep.subr.mxu0 0.0
  %10501 = vmatpush1.msra.mxu0 0.0
  %10502 = vmatprep.subr.mxu0 0.0
  %10503 = vmatpush1.msra.mxu0 0.0
  %10504 = vmatprep.subr.mxu0 0.0
  %10505 = vmatpush1.msra.mxu0 0.0
  %10506 = vmatprep.subr.mxu0 0.0
  %10507 = vmatpush1.msra.mxu0 0.0
  %10508 = vmatprep.subr.mxu0 0.0
  %10509 = vmatpush1.msra.mxu0 0.0
  %10510 = vmatprep.mubr.f32.mxu0 0.0
  %v10511 = vand.u32 %v96, 4294901760
  %10512 = vmatmul.mubr.f32.gmra.mrb[0].mxu0 %v10511
  %v10513 = vpop.f32.mrb[0].mxu0
  %v10514 = vadd.f32 %v10406, %v10513
  %v10515 = vpop.f32.mrb[0].mxu0
  %v10516 = vadd.f32 %v10408, %v10515
  %10517 = vdwg.mxu0
  %v10518 = vand.u32 %v9367, 4294901760
  %10519 = vmatprep.subr.mxu0 %v10518
  %v10520 = vand.u32 %v9366, 4294901760
  %10521 = vmatpush1.msra.mxu0 %v10520
  %v10522 = vand.u32 %v9375, 4294901760
  %10523 = vmatprep.subr.mxu0 %v10522
  %v10524 = vand.u32 %v9374, 4294901760
  %10525 = vmatpush1.msra.mxu0 %v10524
  %v10526 = vand.u32 %v9383, 4294901760
  %10527 = vmatprep.subr.mxu0 %v10526
  %v10528 = vand.u32 %v9382, 4294901760
  %10529 = vmatpush1.msra.mxu0 %v10528
  %v10530 = vand.u32 %v9391, 4294901760
  %10531 = vmatprep.subr.mxu0 %v10530
  %v10532 = vand.u32 %v9390, 4294901760
  %10533 = vmatpush1.msra.mxu0 %v10532
  %v10534 = vand.u32 %v9399, 4294901760
  %10535 = vmatprep.subr.mxu0 %v10534
  %v10536 = vand.u32 %v9398, 4294901760
  %10537 = vmatpush1.msra.mxu0 %v10536
  %v10538 = vand.u32 %v9407, 4294901760
  %10539 = vmatprep.subr.mxu0 %v10538
  %v10540 = vand.u32 %v9406, 4294901760
  %10541 = vmatpush1.msra.mxu0 %v10540
  %10542 = vmatprep.subr.mxu0 0.0
  %10543 = vmatpush1.msra.mxu0 0.0
  %10544 = vmatprep.subr.mxu0 0.0
  %10545 = vmatpush1.msra.mxu0 0.0
  %10546 = vmatprep.subr.mxu0 0.0
  %10547 = vmatpush1.msra.mxu0 0.0
  %10548 = vmatprep.subr.mxu0 0.0
  %10549 = vmatpush1.msra.mxu0 0.0
  %10550 = vmatprep.subr.mxu0 0.0
  %10551 = vmatpush1.msra.mxu0 0.0
  %10552 = vmatprep.subr.mxu0 0.0
  %10553 = vmatpush1.msra.mxu0 0.0
  %10554 = vmatprep.subr.mxu0 0.0
  %10555 = vmatpush1.msra.mxu0 0.0
  %10556 = vmatprep.subr.mxu0 0.0
  %10557 = vmatpush1.msra.mxu0 0.0
  %10558 = vmatprep.subr.mxu0 0.0
  %10559 = vmatpush1.msra.mxu0 0.0
  %10560 = vmatprep.subr.mxu0 0.0
  %10561 = vmatpush1.msra.mxu0 0.0
  %10562 = vmatprep.subr.mxu0 0.0
  %10563 = vmatpush1.msra.mxu0 0.0
  %10564 = vmatprep.subr.mxu0 0.0
  %10565 = vmatpush1.msra.mxu0 0.0
  %10566 = vmatprep.subr.mxu0 0.0
  %10567 = vmatpush1.msra.mxu0 0.0
  %10568 = vmatprep.subr.mxu0 0.0
  %10569 = vmatpush1.msra.mxu0 0.0
  %10570 = vmatprep.subr.mxu0 0.0
  %10571 = vmatpush1.msra.mxu0 0.0
  %10572 = vmatprep.subr.mxu0 0.0
  %10573 = vmatpush1.msra.mxu0 0.0
  %10574 = vmatprep.subr.mxu0 0.0
  %10575 = vmatpush1.msra.mxu0 0.0
  %10576 = vmatprep.subr.mxu0 0.0
  %10577 = vmatpush1.msra.mxu0 0.0
  %10578 = vmatprep.subr.mxu0 0.0
  %10579 = vmatpush1.msra.mxu0 0.0
  %10580 = vmatprep.subr.mxu0 0.0
  %10581 = vmatpush1.msra.mxu0 0.0
  %10582 = vmatprep.subr.mxu0 0.0
  %10583 = vmatpush1.msra.mxu0 0.0
  %10584 = vmatprep.subr.mxu0 0.0
  %10585 = vmatpush1.msra.mxu0 0.0
  %10586 = vmatprep.subr.mxu0 0.0
  %10587 = vmatpush1.msra.mxu0 0.0
  %10588 = vmatprep.subr.mxu0 0.0
  %10589 = vmatpush1.msra.mxu0 0.0
  %10590 = vmatprep.subr.mxu0 0.0
  %10591 = vmatpush1.msra.mxu0 0.0
  %10592 = vmatprep.subr.mxu0 0.0
  %10593 = vmatpush1.msra.mxu0 0.0
  %10594 = vmatprep.mubr.f32.mxu0 0.0
  %v10595 = vand.u32 %v96, 4294901760
  %10596 = vmatmul.mubr.f32.gmra.mrb[0].mxu0 %v10595
  %v10597 = vpop.f32.mrb[0].mxu0
  %v10598 = vadd.f32 %v10514, %v10597
  %v10599 = vpop.f32.mrb[0].mxu0
  %v10600 = vadd.f32 %v10516, %v10599
  %10601 = vdwg.mxu0
  %v10602 = vand.u32 %v9369, 4294901760
  %10603 = vmatprep.subr.mxu0 %v10602
  %v10604 = vand.u32 %v9368, 4294901760
  %10605 = vmatpush1.msra.mxu0 %v10604
  %v10606 = vand.u32 %v9377, 4294901760
  %10607 = vmatprep.subr.mxu0 %v10606
  %v10608 = vand.u32 %v9376, 4294901760
  %10609 = vmatpush1.msra.mxu0 %v10608
  %v10610 = vand.u32 %v9385, 4294901760
  %10611 = vmatprep.subr.mxu0 %v10610
  %v10612 = vand.u32 %v9384, 4294901760
  %10613 = vmatpush1.msra.mxu0 %v10612
  %v10614 = vand.u32 %v9393, 4294901760
  %10615 = vmatprep.subr.mxu0 %v10614
  %v10616 = vand.u32 %v9392, 4294901760
  %10617 = vmatpush1.msra.mxu0 %v10616
  %v10618 = vand.u32 %v9401, 4294901760
  %10619 = vmatprep.subr.mxu0 %v10618
  %v10620 = vand.u32 %v9400, 4294901760
  %10621 = vmatpush1.msra.mxu0 %v10620
  %v10622 = vand.u32 %v9409, 4294901760
  %10623 = vmatprep.subr.mxu0 %v10622
  %v10624 = vand.u32 %v9408, 4294901760
  %10625 = vmatpush1.msra.mxu0 %v10624
  %10626 = vmatprep.subr.mxu0 0.0
  %10627 = vmatpush1.msra.mxu0 0.0
  %10628 = vmatprep.subr.mxu0 0.0
  %10629 = vmatpush1.msra.mxu0 0.0
  %10630 = vmatprep.subr.mxu0 0.0
  %10631 = vmatpush1.msra.mxu0 0.0
  %10632 = vmatprep.subr.mxu0 0.0
  %10633 = vmatpush1.msra.mxu0 0.0
  %10634 = vmatprep.subr.mxu0 0.0
  %10635 = vmatpush1.msra.mxu0 0.0
  %10636 = vmatprep.subr.mxu0 0.0
  %10637 = vmatpush1.msra.mxu0 0.0
  %10638 = vmatprep.subr.mxu0 0.0
  %10639 = vmatpush1.msra.mxu0 0.0
  %10640 = vmatprep.subr.mxu0 0.0
  %10641 = vmatpush1.msra.mxu0 0.0
  %10642 = vmatprep.subr.mxu0 0.0
  %10643 = vmatpush1.msra.mxu0 0.0
  %10644 = vmatprep.subr.mxu0 0.0
  %10645 = vmatpush1.msra.mxu0 0.0
  %10646 = vmatprep.subr.mxu0 0.0
  %10647 = vmatpush1.msra.mxu0 0.0
  %10648 = vmatprep.subr.mxu0 0.0
  %10649 = vmatpush1.msra.mxu0 0.0
  %10650 = vmatprep.subr.mxu0 0.0
  %10651 = vmatpush1.msra.mxu0 0.0
  %10652 = vmatprep.subr.mxu0 0.0
  %10653 = vmatpush1.msra.mxu0 0.0
  %10654 = vmatprep.subr.mxu0 0.0
  %10655 = vmatpush1.msra.mxu0 0.0
  %10656 = vmatprep.subr.mxu0 0.0
  %10657 = vmatpush1.msra.mxu0 0.0
  %10658 = vmatprep.subr.mxu0 0.0
  %10659 = vmatpush1.msra.mxu0 0.0
  %10660 = vmatprep.subr.mxu0 0.0
  %10661 = vmatpush1.msra.mxu0 0.0
  %10662 = vmatprep.subr.mxu0 0.0
  %10663 = vmatpush1.msra.mxu0 0.0
  %10664 = vmatprep.subr.mxu0 0.0
  %10665 = vmatpush1.msra.mxu0 0.0
  %10666 = vmatprep.subr.mxu0 0.0
  %10667 = vmatpush1.msra.mxu0 0.0
  %10668 = vmatprep.subr.mxu0 0.0
  %10669 = vmatpush1.msra.mxu0 0.0
  %10670 = vmatprep.subr.mxu0 0.0
  %10671 = vmatpush1.msra.mxu0 0.0
  %10672 = vmatprep.subr.mxu0 0.0
  %10673 = vmatpush1.msra.mxu0 0.0
  %10674 = vmatprep.subr.mxu0 0.0
  %10675 = vmatpush1.msra.mxu0 0.0
  %10676 = vmatprep.subr.mxu0 0.0
  %10677 = vmatpush1.msra.mxu0 0.0
  %10678 = vmatprep.mubr.f32.mxu0 0.0
  %v10679 = vand.u32 %v96, 4294901760
  %v10680 = vsub.f32 %v96, %v10679
  %v10681 = vand.u32 %v10680, 4294901760
  %v10682 = vsub.f32 %v10680, %v10681
  %v10683 = vand.u32 %v10682, 4294901760
  %10684 = vmatmul.mubr.f32.gmra.mrb[0].mxu0 %v10683
  %v10685 = vpop.f32.mrb[0].mxu0
  %v10686 = vadd.f32 0.0, %v10685
  %v10687 = vpop.f32.mrb[0].mxu0
  %v10688 = vadd.f32 0.0, %v10687
  %10689 = vdwg.mxu0
  %v10690 = vand.u32 %v9369, 4294901760
  %v10691 = vsub.f32 %v9369, %v10690
  %v10692 = vand.u32 %v10691, 4294901760
  %v10693 = vsub.f32 %v10691, %v10692
  %v10694 = vand.u32 %v10693, 4294901760
  %10695 = vmatprep.subr.mxu0 %v10694
  %v10696 = vand.u32 %v9368, 4294901760
  %v10697 = vsub.f32 %v9368, %v10696
  %v10698 = vand.u32 %v10697, 4294901760
  %v10699 = vsub.f32 %v10697, %v10698
  %v10700 = vand.u32 %v10699, 4294901760
  %10701 = vmatpush1.msra.mxu0 %v10700
  %v10702 = vand.u32 %v9377, 4294901760
  %v10703 = vsub.f32 %v9377, %v10702
  %v10704 = vand.u32 %v10703, 4294901760
  %v10705 = vsub.f32 %v10703, %v10704
  %v10706 = vand.u32 %v10705, 4294901760
  %10707 = vmatprep.subr.mxu0 %v10706
  %v10708 = vand.u32 %v9376, 4294901760
  %v10709 = vsub.f32 %v9376, %v10708
  %v10710 = vand.u32 %v10709, 4294901760
  %v10711 = vsub.f32 %v10709, %v10710
  %v10712 = vand.u32 %v10711, 4294901760
  %10713 = vmatpush1.msra.mxu0 %v10712
  %v10714 = vand.u32 %v9385, 4294901760
  %v10715 = vsub.f32 %v9385, %v10714
  %v10716 = vand.u32 %v10715, 4294901760
  %v10717 = vsub.f32 %v10715, %v10716
  %v10718 = vand.u32 %v10717, 4294901760
  %10719 = vmatprep.subr.mxu0 %v10718
  %v10720 = vand.u32 %v9384, 4294901760
  %v10721 = vsub.f32 %v9384, %v10720
  %v10722 = vand.u32 %v10721, 4294901760
  %v10723 = vsub.f32 %v10721, %v10722
  %v10724 = vand.u32 %v10723, 4294901760
  %10725 = vmatpush1.msra.mxu0 %v10724
  %v10726 = vand.u32 %v9393, 4294901760
  %v10727 = vsub.f32 %v9393, %v10726
  %v10728 = vand.u32 %v10727, 4294901760
  %v10729 = vsub.f32 %v10727, %v10728
  %v10730 = vand.u32 %v10729, 4294901760
  %10731 = vmatprep.subr.mxu0 %v10730
  %v10732 = vand.u32 %v9392, 4294901760
  %v10733 = vsub.f32 %v9392, %v10732
  %v10734 = vand.u32 %v10733, 4294901760
  %v10735 = vsub.f32 %v10733, %v10734
  %v10736 = vand.u32 %v10735, 4294901760
  %10737 = vmatpush1.msra.mxu0 %v10736
  %v10738 = vand.u32 %v9401, 4294901760
  %v10739 = vsub.f32 %v9401, %v10738
  %v10740 = vand.u32 %v10739, 4294901760
  %v10741 = vsub.f32 %v10739, %v10740
  %v10742 = vand.u32 %v10741, 4294901760
  %10743 = vmatprep.subr.mxu0 %v10742
  %v10744 = vand.u32 %v9400, 4294901760
  %v10745 = vsub.f32 %v9400, %v10744
  %v10746 = vand.u32 %v10745, 4294901760
  %v10747 = vsub.f32 %v10745, %v10746
  %v10748 = vand.u32 %v10747, 4294901760
  %10749 = vmatpush1.msra.mxu0 %v10748
  %v10750 = vand.u32 %v9409, 4294901760
  %v10751 = vsub.f32 %v9409, %v10750
  %v10752 = vand.u32 %v10751, 4294901760
  %v10753 = vsub.f32 %v10751, %v10752
  %v10754 = vand.u32 %v10753, 4294901760
  %10755 = vmatprep.subr.mxu0 %v10754
  %v10756 = vand.u32 %v9408, 4294901760
  %v10757 = vsub.f32 %v9408, %v10756
  %v10758 = vand.u32 %v10757, 4294901760
  %v10759 = vsub.f32 %v10757, %v10758
  %v10760 = vand.u32 %v10759, 4294901760
  %10761 = vmatpush1.msra.mxu0 %v10760
  %10762 = vmatprep.subr.mxu0 0.0
  %10763 = vmatpush1.msra.mxu0 0.0
  %10764 = vmatprep.subr.mxu0 0.0
  %10765 = vmatpush1.msra.mxu0 0.0
  %10766 = vmatprep.subr.mxu0 0.0
  %10767 = vmatpush1.msra.mxu0 0.0
  %10768 = vmatprep.subr.mxu0 0.0
  %10769 = vmatpush1.msra.mxu0 0.0
  %10770 = vmatprep.subr.mxu0 0.0
  %10771 = vmatpush1.msra.mxu0 0.0
  %10772 = vmatprep.subr.mxu0 0.0
  %10773 = vmatpush1.msra.mxu0 0.0
  %10774 = vmatprep.subr.mxu0 0.0
  %10775 = vmatpush1.msra.mxu0 0.0
  %10776 = vmatprep.subr.mxu0 0.0
  %10777 = vmatpush1.msra.mxu0 0.0
  %10778 = vmatprep.subr.mxu0 0.0
  %10779 = vmatpush1.msra.mxu0 0.0
  %10780 = vmatprep.subr.mxu0 0.0
  %10781 = vmatpush1.msra.mxu0 0.0
  %10782 = vmatprep.subr.mxu0 0.0
  %10783 = vmatpush1.msra.mxu0 0.0
  %10784 = vmatprep.subr.mxu0 0.0
  %10785 = vmatpush1.msra.mxu0 0.0
  %10786 = vmatprep.subr.mxu0 0.0
  %10787 = vmatpush1.msra.mxu0 0.0
  %10788 = vmatprep.subr.mxu0 0.0
  %10789 = vmatpush1.msra.mxu0 0.0
  %10790 = vmatprep.subr.mxu0 0.0
  %10791 = vmatpush1.msra.mxu0 0.0
  %10792 = vmatprep.subr.mxu0 0.0
  %10793 = vmatpush1.msra.mxu0 0.0
  %10794 = vmatprep.subr.mxu0 0.0
  %10795 = vmatpush1.msra.mxu0 0.0
  %10796 = vmatprep.subr.mxu0 0.0
  %10797 = vmatpush1.msra.mxu0 0.0
  %10798 = vmatprep.subr.mxu0 0.0
  %10799 = vmatpush1.msra.mxu0 0.0
  %10800 = vmatprep.subr.mxu0 0.0
  %10801 = vmatpush1.msra.mxu0 0.0
  %10802 = vmatprep.subr.mxu0 0.0
  %10803 = vmatpush1.msra.mxu0 0.0
  %10804 = vmatprep.subr.mxu0 0.0
  %10805 = vmatpush1.msra.mxu0 0.0
  %10806 = vmatprep.subr.mxu0 0.0
  %10807 = vmatpush1.msra.mxu0 0.0
  %10808 = vmatprep.subr.mxu0 0.0
  %10809 = vmatpush1.msra.mxu0 0.0
  %10810 = vmatprep.subr.mxu0 0.0
  %10811 = vmatpush1.msra.mxu0 0.0
  %10812 = vmatprep.subr.mxu0 0.0
  %10813 = vmatpush1.msra.mxu0 0.0
  %10814 = vmatprep.mubr.f32.mxu0 0.0
  %v10815 = vand.u32 %v96, 4294901760
  %10816 = vmatmul.mubr.f32.gmra.mrb[0].mxu0 %v10815
  %v10817 = vpop.f32.mrb[0].mxu0
  %v10818 = vadd.f32 %v10686, %v10817
  %v10819 = vpop.f32.mrb[0].mxu0
  %v10820 = vadd.f32 %v10688, %v10819
  %10821 = vdwg.mxu0
  %v10822 = vand.u32 %v9369, 4294901760
  %v10823 = vsub.f32 %v9369, %v10822
  %10824 = vmatprep.subr.mxu0 %v10823
  %v10825 = vand.u32 %v9368, 4294901760
  %v10826 = vsub.f32 %v9368, %v10825
  %10827 = vmatpush1.msra.mxu0 %v10826
  %v10828 = vand.u32 %v9377, 4294901760
  %v10829 = vsub.f32 %v9377, %v10828
  %10830 = vmatprep.subr.mxu0 %v10829
  %v10831 = vand.u32 %v9376, 4294901760
  %v10832 = vsub.f32 %v9376, %v10831
  %10833 = vmatpush1.msra.mxu0 %v10832
  %v10834 = vand.u32 %v9385, 4294901760
  %v10835 = vsub.f32 %v9385, %v10834
  %10836 = vmatprep.subr.mxu0 %v10835
  %v10837 = vand.u32 %v9384, 4294901760
  %v10838 = vsub.f32 %v9384, %v10837
  %10839 = vmatpush1.msra.mxu0 %v10838
  %v10840 = vand.u32 %v9393, 4294901760
  %v10841 = vsub.f32 %v9393, %v10840
  %10842 = vmatprep.subr.mxu0 %v10841
  %v10843 = vand.u32 %v9392, 4294901760
  %v10844 = vsub.f32 %v9392, %v10843
  %10845 = vmatpush1.msra.mxu0 %v10844
  %v10846 = vand.u32 %v9401, 4294901760
  %v10847 = vsub.f32 %v9401, %v10846
  %10848 = vmatprep.subr.mxu0 %v10847
  %v10849 = vand.u32 %v9400, 4294901760
  %v10850 = vsub.f32 %v9400, %v10849
  %10851 = vmatpush1.msra.mxu0 %v10850
  %v10852 = vand.u32 %v9409, 4294901760
  %v10853 = vsub.f32 %v9409, %v10852
  %10854 = vmatprep.subr.mxu0 %v10853
  %v10855 = vand.u32 %v9408, 4294901760
  %v10856 = vsub.f32 %v9408, %v10855
  %10857 = vmatpush1.msra.mxu0 %v10856
  %10858 = vmatprep.subr.mxu0 0.0
  %10859 = vmatpush1.msra.mxu0 0.0
  %10860 = vmatprep.subr.mxu0 0.0
  %10861 = vmatpush1.msra.mxu0 0.0
  %10862 = vmatprep.subr.mxu0 0.0
  %10863 = vmatpush1.msra.mxu0 0.0
  %10864 = vmatprep.subr.mxu0 0.0
  %10865 = vmatpush1.msra.mxu0 0.0
  %10866 = vmatprep.subr.mxu0 0.0
  %10867 = vmatpush1.msra.mxu0 0.0
  %10868 = vmatprep.subr.mxu0 0.0
  %10869 = vmatpush1.msra.mxu0 0.0
  %10870 = vmatprep.subr.mxu0 0.0
  %10871 = vmatpush1.msra.mxu0 0.0
  %10872 = vmatprep.subr.mxu0 0.0
  %10873 = vmatpush1.msra.mxu0 0.0
  %10874 = vmatprep.subr.mxu0 0.0
  %10875 = vmatpush1.msra.mxu0 0.0
  %10876 = vmatprep.subr.mxu0 0.0
  %10877 = vmatpush1.msra.mxu0 0.0
  %10878 = vmatprep.subr.mxu0 0.0
  %10879 = vmatpush1.msra.mxu0 0.0
  %10880 = vmatprep.subr.mxu0 0.0
  %10881 = vmatpush1.msra.mxu0 0.0
  %10882 = vmatprep.subr.mxu0 0.0
  %10883 = vmatpush1.msra.mxu0 0.0
  %10884 = vmatprep.subr.mxu0 0.0
  %10885 = vmatpush1.msra.mxu0 0.0
  %10886 = vmatprep.subr.mxu0 0.0
  %10887 = vmatpush1.msra.mxu0 0.0
  %10888 = vmatprep.subr.mxu0 0.0
  %10889 = vmatpush1.msra.mxu0 0.0
  %10890 = vmatprep.subr.mxu0 0.0
  %10891 = vmatpush1.msra.mxu0 0.0
  %10892 = vmatprep.subr.mxu0 0.0
  %10893 = vmatpush1.msra.mxu0 0.0
  %10894 = vmatprep.subr.mxu0 0.0
  %10895 = vmatpush1.msra.mxu0 0.0
  %10896 = vmatprep.subr.mxu0 0.0
  %10897 = vmatpush1.msra.mxu0 0.0
  %10898 = vmatprep.subr.mxu0 0.0
  %10899 = vmatpush1.msra.mxu0 0.0
  %10900 = vmatprep.subr.mxu0 0.0
  %10901 = vmatpush1.msra.mxu0 0.0
  %10902 = vmatprep.subr.mxu0 0.0
  %10903 = vmatpush1.msra.mxu0 0.0
  %10904 = vmatprep.subr.mxu0 0.0
  %10905 = vmatpush1.msra.mxu0 0.0
  %10906 = vmatprep.subr.mxu0 0.0
  %10907 = vmatpush1.msra.mxu0 0.0
  %10908 = vmatprep.subr.mxu0 0.0
  %10909 = vmatpush1.msra.mxu0 0.0
  %10910 = vmatprep.mubr.f32.mxu0 0.0
  %v10911 = vand.u32 %v96, 4294901760
  %v10912 = vsub.f32 %v96, %v10911
  %10913 = vmatmul.mubr.f32.gmra.mrb[0].mxu0 %v10912
  %v10914 = vpop.f32.mrb[0].mxu0
  %v10915 = vadd.f32 %v10818, %v10914
  %v10916 = vpop.f32.mrb[0].mxu0
  %v10917 = vadd.f32 %v10820, %v10916
  %10918 = vdwg.mxu0
  %v10919 = vand.u32 %v9369, 4294901760
  %10920 = vmatprep.subr.mxu0 %v10919
  %v10921 = vand.u32 %v9368, 4294901760
  %10922 = vmatpush1.msra.mxu0 %v10921
  %v10923 = vand.u32 %v9377, 4294901760
  %10924 = vmatprep.subr.mxu0 %v10923
  %v10925 = vand.u32 %v9376, 4294901760
  %10926 = vmatpush1.msra.mxu0 %v10925
  %v10927 = vand.u32 %v9385, 4294901760
  %10928 = vmatprep.subr.mxu0 %v10927
  %v10929 = vand.u32 %v9384, 4294901760
  %10930 = vmatpush1.msra.mxu0 %v10929
  %v10931 = vand.u32 %v9393, 4294901760
  %10932 = vmatprep.subr.mxu0 %v10931
  %v10933 = vand.u32 %v9392, 4294901760
  %10934 = vmatpush1.msra.mxu0 %v10933
  %v10935 = vand.u32 %v9401, 4294901760
  %10936 = vmatprep.subr.mxu0 %v10935
  %v10937 = vand.u32 %v9400, 4294901760
  %10938 = vmatpush1.msra.mxu0 %v10937
  %v10939 = vand.u32 %v9409, 4294901760
  %10940 = vmatprep.subr.mxu0 %v10939
  %v10941 = vand.u32 %v9408, 4294901760
  %10942 = vmatpush1.msra.mxu0 %v10941
  %10943 = vmatprep.subr.mxu0 0.0
  %10944 = vmatpush1.msra.mxu0 0.0
  %10945 = vmatprep.subr.mxu0 0.0
  %10946 = vmatpush1.msra.mxu0 0.0
  %10947 = vmatprep.subr.mxu0 0.0
  %10948 = vmatpush1.msra.mxu0 0.0
  %10949 = vmatprep.subr.mxu0 0.0
  %10950 = vmatpush1.msra.mxu0 0.0
  %10951 = vmatprep.subr.mxu0 0.0
  %10952 = vmatpush1.msra.mxu0 0.0
  %10953 = vmatprep.subr.mxu0 0.0
  %10954 = vmatpush1.msra.mxu0 0.0
  %10955 = vmatprep.subr.mxu0 0.0
  %10956 = vmatpush1.msra.mxu0 0.0
  %10957 = vmatprep.subr.mxu0 0.0
  %10958 = vmatpush1.msra.mxu0 0.0
  %10959 = vmatprep.subr.mxu0 0.0
  %10960 = vmatpush1.msra.mxu0 0.0
  %10961 = vmatprep.subr.mxu0 0.0
  %10962 = vmatpush1.msra.mxu0 0.0
  %10963 = vmatprep.subr.mxu0 0.0
  %10964 = vmatpush1.msra.mxu0 0.0
  %10965 = vmatprep.subr.mxu0 0.0
  %10966 = vmatpush1.msra.mxu0 0.0
  %10967 = vmatprep.subr.mxu0 0.0
  %10968 = vmatpush1.msra.mxu0 0.0
  %10969 = vmatprep.subr.mxu0 0.0
  %10970 = vmatpush1.msra.mxu0 0.0
  %10971 = vmatprep.subr.mxu0 0.0
  %10972 = vmatpush1.msra.mxu0 0.0
  %10973 = vmatprep.subr.mxu0 0.0
  %10974 = vmatpush1.msra.mxu0 0.0
  %10975 = vmatprep.subr.mxu0 0.0
  %10976 = vmatpush1.msra.mxu0 0.0
  %10977 = vmatprep.subr.mxu0 0.0
  %10978 = vmatpush1.msra.mxu0 0.0
  %10979 = vmatprep.subr.mxu0 0.0
  %10980 = vmatpush1.msra.mxu0 0.0
  %10981 = vmatprep.subr.mxu0 0.0
  %10982 = vmatpush1.msra.mxu0 0.0
  %10983 = vmatprep.subr.mxu0 0.0
  %10984 = vmatpush1.msra.mxu0 0.0
  %10985 = vmatprep.subr.mxu0 0.0
  %10986 = vmatpush1.msra.mxu0 0.0
  %10987 = vmatprep.subr.mxu0 0.0
  %10988 = vmatpush1.msra.mxu0 0.0
  %10989 = vmatprep.subr.mxu0 0.0
  %10990 = vmatpush1.msra.mxu0 0.0
  %10991 = vmatprep.subr.mxu0 0.0
  %10992 = vmatpush1.msra.mxu0 0.0
  %10993 = vmatprep.subr.mxu0 0.0
  %10994 = vmatpush1.msra.mxu0 0.0
  %10995 = vmatprep.mubr.f32.mxu0 0.0
  %v10996 = vand.u32 %v96, 4294901760
  %v10997 = vsub.f32 %v96, %v10996
  %v10998 = vand.u32 %v10997, 4294901760
  %10999 = vmatmul.mubr.f32.gmra.mrb[0].mxu0 %v10998
  %v11000 = vpop.f32.mrb[0].mxu0
  %v11001 = vadd.f32 %v10915, %v11000
  %v11002 = vpop.f32.mrb[0].mxu0
  %v11003 = vadd.f32 %v10917, %v11002
  %11004 = vdwg.mxu0
  %v11005 = vand.u32 %v9369, 4294901760
  %v11006 = vsub.f32 %v9369, %v11005
  %v11007 = vand.u32 %v11006, 4294901760
  %11008 = vmatprep.subr.mxu0 %v11007
  %v11009 = vand.u32 %v9368, 4294901760
  %v11010 = vsub.f32 %v9368, %v11009
  %v11011 = vand.u32 %v11010, 4294901760
  %11012 = vmatpush1.msra.mxu0 %v11011
  %v11013 = vand.u32 %v9377, 4294901760
  %v11014 = vsub.f32 %v9377, %v11013
  %v11015 = vand.u32 %v11014, 4294901760
  %11016 = vmatprep.subr.mxu0 %v11015
  %v11017 = vand.u32 %v9376, 4294901760
  %v11018 = vsub.f32 %v9376, %v11017
  %v11019 = vand.u32 %v11018, 4294901760
  %11020 = vmatpush1.msra.mxu0 %v11019
  %v11021 = vand.u32 %v9385, 4294901760
  %v11022 = vsub.f32 %v9385, %v11021
  %v11023 = vand.u32 %v11022, 4294901760
  %11024 = vmatprep.subr.mxu0 %v11023
  %v11025 = vand.u32 %v9384, 4294901760
  %v11026 = vsub.f32 %v9384, %v11025
  %v11027 = vand.u32 %v11026, 4294901760
  %11028 = vmatpush1.msra.mxu0 %v11027
  %v11029 = vand.u32 %v9393, 4294901760
  %v11030 = vsub.f32 %v9393, %v11029
  %v11031 = vand.u32 %v11030, 4294901760
  %11032 = vmatprep.subr.mxu0 %v11031
  %v11033 = vand.u32 %v9392, 4294901760
  %v11034 = vsub.f32 %v9392, %v11033
  %v11035 = vand.u32 %v11034, 4294901760
  %11036 = vmatpush1.msra.mxu0 %v11035
  %v11037 = vand.u32 %v9401, 4294901760
  %v11038 = vsub.f32 %v9401, %v11037
  %v11039 = vand.u32 %v11038, 4294901760
  %11040 = vmatprep.subr.mxu0 %v11039
  %v11041 = vand.u32 %v9400, 4294901760
  %v11042 = vsub.f32 %v9400, %v11041
  %v11043 = vand.u32 %v11042, 4294901760
  %11044 = vmatpush1.msra.mxu0 %v11043
  %v11045 = vand.u32 %v9409, 4294901760
  %v11046 = vsub.f32 %v9409, %v11045
  %v11047 = vand.u32 %v11046, 4294901760
  %11048 = vmatprep.subr.mxu0 %v11047
  %v11049 = vand.u32 %v9408, 4294901760
  %v11050 = vsub.f32 %v9408, %v11049
  %v11051 = vand.u32 %v11050, 4294901760
  %11052 = vmatpush1.msra.mxu0 %v11051
  %11053 = vmatprep.subr.mxu0 0.0
  %11054 = vmatpush1.msra.mxu0 0.0
  %11055 = vmatprep.subr.mxu0 0.0
  %11056 = vmatpush1.msra.mxu0 0.0
  %11057 = vmatprep.subr.mxu0 0.0
  %11058 = vmatpush1.msra.mxu0 0.0
  %11059 = vmatprep.subr.mxu0 0.0
  %11060 = vmatpush1.msra.mxu0 0.0
  %11061 = vmatprep.subr.mxu0 0.0
  %11062 = vmatpush1.msra.mxu0 0.0
  %11063 = vmatprep.subr.mxu0 0.0
  %11064 = vmatpush1.msra.mxu0 0.0
  %11065 = vmatprep.subr.mxu0 0.0
  %11066 = vmatpush1.msra.mxu0 0.0
  %11067 = vmatprep.subr.mxu0 0.0
  %11068 = vmatpush1.msra.mxu0 0.0
  %11069 = vmatprep.subr.mxu0 0.0
  %11070 = vmatpush1.msra.mxu0 0.0
  %11071 = vmatprep.subr.mxu0 0.0
  %11072 = vmatpush1.msra.mxu0 0.0
  %11073 = vmatprep.subr.mxu0 0.0
  %11074 = vmatpush1.msra.mxu0 0.0
  %11075 = vmatprep.subr.mxu0 0.0
  %11076 = vmatpush1.msra.mxu0 0.0
  %11077 = vmatprep.subr.mxu0 0.0
  %11078 = vmatpush1.msra.mxu0 0.0
  %11079 = vmatprep.subr.mxu0 0.0
  %11080 = vmatpush1.msra.mxu0 0.0
  %11081 = vmatprep.subr.mxu0 0.0
  %11082 = vmatpush1.msra.mxu0 0.0
  %11083 = vmatprep.subr.mxu0 0.0
  %11084 = vmatpush1.msra.mxu0 0.0
  %11085 = vmatprep.subr.mxu0 0.0
  %11086 = vmatpush1.msra.mxu0 0.0
  %11087 = vmatprep.subr.mxu0 0.0
  %11088 = vmatpush1.msra.mxu0 0.0
  %11089 = vmatprep.subr.mxu0 0.0
  %11090 = vmatpush1.msra.mxu0 0.0
  %11091 = vmatprep.subr.mxu0 0.0
  %11092 = vmatpush1.msra.mxu0 0.0
  %11093 = vmatprep.subr.mxu0 0.0
  %11094 = vmatpush1.msra.mxu0 0.0
  %11095 = vmatprep.subr.mxu0 0.0
  %11096 = vmatpush1.msra.mxu0 0.0
  %11097 = vmatprep.subr.mxu0 0.0
  %11098 = vmatpush1.msra.mxu0 0.0
  %11099 = vmatprep.subr.mxu0 0.0
  %11100 = vmatpush1.msra.mxu0 0.0
  %11101 = vmatprep.subr.mxu0 0.0
  %11102 = vmatpush1.msra.mxu0 0.0
  %11103 = vmatprep.subr.mxu0 0.0
  %11104 = vmatpush1.msra.mxu0 0.0
  %11105 = vmatprep.mubr.f32.mxu0 0.0
  %v11106 = vand.u32 %v96, 4294901760
  %11107 = vmatmul.mubr.f32.gmra.mrb[0].mxu0 %v11106
  %v11108 = vpop.f32.mrb[0].mxu0
  %v11109 = vadd.f32 %v11001, %v11108
  %v11110 = vpop.f32.mrb[0].mxu0
  %v11111 = vadd.f32 %v11003, %v11110
  %11112 = vdwg.mxu0
  %v11113 = vand.u32 %v9369, 4294901760
  %11114 = vmatprep.subr.mxu0 %v11113
  %v11115 = vand.u32 %v9368, 4294901760
  %11116 = vmatpush1.msra.mxu0 %v11115
  %v11117 = vand.u32 %v9377, 4294901760
  %11118 = vmatprep.subr.mxu0 %v11117
  %v11119 = vand.u32 %v9376, 4294901760
  %11120 = vmatpush1.msra.mxu0 %v11119
  %v11121 = vand.u32 %v9385, 4294901760
  %11122 = vmatprep.subr.mxu0 %v11121
  %v11123 = vand.u32 %v9384, 4294901760
  %11124 = vmatpush1.msra.mxu0 %v11123
  %v11125 = vand.u32 %v9393, 4294901760
  %11126 = vmatprep.subr.mxu0 %v11125
  %v11127 = vand.u32 %v9392, 4294901760
  %11128 = vmatpush1.msra.mxu0 %v11127
  %v11129 = vand.u32 %v9401, 4294901760
  %11130 = vmatprep.subr.mxu0 %v11129
  %v11131 = vand.u32 %v9400, 4294901760
  %11132 = vmatpush1.msra.mxu0 %v11131
  %v11133 = vand.u32 %v9409, 4294901760
  %11134 = vmatprep.subr.mxu0 %v11133
  %v11135 = vand.u32 %v9408, 4294901760
  %11136 = vmatpush1.msra.mxu0 %v11135
  %11137 = vmatprep.subr.mxu0 0.0
  %11138 = vmatpush1.msra.mxu0 0.0
  %11139 = vmatprep.subr.mxu0 0.0
  %11140 = vmatpush1.msra.mxu0 0.0
  %11141 = vmatprep.subr.mxu0 0.0
  %11142 = vmatpush1.msra.mxu0 0.0
  %11143 = vmatprep.subr.mxu0 0.0
  %11144 = vmatpush1.msra.mxu0 0.0
  %11145 = vmatprep.subr.mxu0 0.0
  %11146 = vmatpush1.msra.mxu0 0.0
  %11147 = vmatprep.subr.mxu0 0.0
  %11148 = vmatpush1.msra.mxu0 0.0
  %11149 = vmatprep.subr.mxu0 0.0
  %11150 = vmatpush1.msra.mxu0 0.0
  %11151 = vmatprep.subr.mxu0 0.0
  %11152 = vmatpush1.msra.mxu0 0.0
  %11153 = vmatprep.subr.mxu0 0.0
  %11154 = vmatpush1.msra.mxu0 0.0
  %11155 = vmatprep.subr.mxu0 0.0
  %11156 = vmatpush1.msra.mxu0 0.0
  %11157 = vmatprep.subr.mxu0 0.0
  %11158 = vmatpush1.msra.mxu0 0.0
  %11159 = vmatprep.subr.mxu0 0.0
  %11160 = vmatpush1.msra.mxu0 0.0
  %11161 = vmatprep.subr.mxu0 0.0
  %11162 = vmatpush1.msra.mxu0 0.0
  %11163 = vmatprep.subr.mxu0 0.0
  %11164 = vmatpush1.msra.mxu0 0.0
  %11165 = vmatprep.subr.mxu0 0.0
  %11166 = vmatpush1.msra.mxu0 0.0
  %11167 = vmatprep.subr.mxu0 0.0
  %11168 = vmatpush1.msra.mxu0 0.0
  %11169 = vmatprep.subr.mxu0 0.0
  %11170 = vmatpush1.msra.mxu0 0.0
  %11171 = vmatprep.subr.mxu0 0.0
  %11172 = vmatpush1.msra.mxu0 0.0
  %11173 = vmatprep.subr.mxu0 0.0
  %11174 = vmatpush1.msra.mxu0 0.0
  %11175 = vmatprep.subr.mxu0 0.0
  %11176 = vmatpush1.msra.mxu0 0.0
  %11177 = vmatprep.subr.mxu0 0.0
  %11178 = vmatpush1.msra.mxu0 0.0
  %11179 = vmatprep.subr.mxu0 0.0
  %11180 = vmatpush1.msra.mxu0 0.0
  %11181 = vmatprep.subr.mxu0 0.0
  %11182 = vmatpush1.msra.mxu0 0.0
  %11183 = vmatprep.subr.mxu0 0.0
  %11184 = vmatpush1.msra.mxu0 0.0
  %11185 = vmatprep.subr.mxu0 0.0
  %11186 = vmatpush1.msra.mxu0 0.0
  %11187 = vmatprep.subr.mxu0 0.0
  %11188 = vmatpush1.msra.mxu0 0.0
  %11189 = vmatprep.mubr.f32.mxu0 0.0
  %v11190 = vand.u32 %v96, 4294901760
  %11191 = vmatmul.mubr.f32.gmra.mrb[0].mxu0 %v11190
  %v11192 = vpop.f32.mrb[0].mxu0
  %v11193 = vadd.f32 %v11109, %v11192
  %v11194 = vpop.f32.mrb[0].mxu0
  %v11195 = vadd.f32 %v11111, %v11194
  %11196 = vdwg.mxu0
  %v11197 = vand.u32 %v9371, 4294901760
  %11198 = vmatprep.subr.mxu0 %v11197
  %v11199 = vand.u32 %v9370, 4294901760
  %11200 = vmatpush1.msra.mxu0 %v11199
  %v11201 = vand.u32 %v9379, 4294901760
  %11202 = vmatprep.subr.mxu0 %v11201
  %v11203 = vand.u32 %v9378, 4294901760
  %11204 = vmatpush1.msra.mxu0 %v11203
  %v11205 = vand.u32 %v9387, 4294901760
  %11206 = vmatprep.subr.mxu0 %v11205
  %v11207 = vand.u32 %v9386, 4294901760
  %11208 = vmatpush1.msra.mxu0 %v11207
  %v11209 = vand.u32 %v9395, 4294901760
  %11210 = vmatprep.subr.mxu0 %v11209
  %v11211 = vand.u32 %v9394, 4294901760
  %11212 = vmatpush1.msra.mxu0 %v11211
  %v11213 = vand.u32 %v9403, 4294901760
  %11214 = vmatprep.subr.mxu0 %v11213
  %v11215 = vand.u32 %v9402, 4294901760
  %11216 = vmatpush1.msra.mxu0 %v11215
  %v11217 = vand.u32 %v9411, 4294901760
  %11218 = vmatprep.subr.mxu0 %v11217
  %v11219 = vand.u32 %v9410, 4294901760
  %11220 = vmatpush1.msra.mxu0 %v11219
  %11221 = vmatprep.subr.mxu0 0.0
  %11222 = vmatpush1.msra.mxu0 0.0
  %11223 = vmatprep.subr.mxu0 0.0
  %11224 = vmatpush1.msra.mxu0 0.0
  %11225 = vmatprep.subr.mxu0 0.0
  %11226 = vmatpush1.msra.mxu0 0.0
  %11227 = vmatprep.subr.mxu0 0.0
  %11228 = vmatpush1.msra.mxu0 0.0
  %11229 = vmatprep.subr.mxu0 0.0
  %11230 = vmatpush1.msra.mxu0 0.0
  %11231 = vmatprep.subr.mxu0 0.0
  %11232 = vmatpush1.msra.mxu0 0.0
  %11233 = vmatprep.subr.mxu0 0.0
  %11234 = vmatpush1.msra.mxu0 0.0
  %11235 = vmatprep.subr.mxu0 0.0
  %11236 = vmatpush1.msra.mxu0 0.0
  %11237 = vmatprep.subr.mxu0 0.0
  %11238 = vmatpush1.msra.mxu0 0.0
  %11239 = vmatprep.subr.mxu0 0.0
  %11240 = vmatpush1.msra.mxu0 0.0
  %11241 = vmatprep.subr.mxu0 0.0
  %11242 = vmatpush1.msra.mxu0 0.0
  %11243 = vmatprep.subr.mxu0 0.0
  %11244 = vmatpush1.msra.mxu0 0.0
  %11245 = vmatprep.subr.mxu0 0.0
  %11246 = vmatpush1.msra.mxu0 0.0
  %11247 = vmatprep.subr.mxu0 0.0
  %11248 = vmatpush1.msra.mxu0 0.0
  %11249 = vmatprep.subr.mxu0 0.0
  %11250 = vmatpush1.msra.mxu0 0.0
  %11251 = vmatprep.subr.mxu0 0.0
  %11252 = vmatpush1.msra.mxu0 0.0
  %11253 = vmatprep.subr.mxu0 0.0
  %11254 = vmatpush1.msra.mxu0 0.0
  %11255 = vmatprep.subr.mxu0 0.0
  %11256 = vmatpush1.msra.mxu0 0.0
  %11257 = vmatprep.subr.mxu0 0.0
  %11258 = vmatpush1.msra.mxu0 0.0
  %11259 = vmatprep.subr.mxu0 0.0
  %11260 = vmatpush1.msra.mxu0 0.0
  %11261 = vmatprep.subr.mxu0 0.0
  %11262 = vmatpush1.msra.mxu0 0.0
  %11263 = vmatprep.subr.mxu0 0.0
  %11264 = vmatpush1.msra.mxu0 0.0
  %11265 = vmatprep.subr.mxu0 0.0
  %11266 = vmatpush1.msra.mxu0 0.0
  %11267 = vmatprep.subr.mxu0 0.0
  %11268 = vmatpush1.msra.mxu0 0.0
  %11269 = vmatprep.subr.mxu0 0.0
  %11270 = vmatpush1.msra.mxu0 0.0
  %11271 = vmatprep.subr.mxu0 0.0
  %11272 = vmatpush1.msra.mxu0 0.0
  %11273 = vmatprep.mubr.f32.mxu0 0.0
  %v11274 = vand.u32 %v96, 4294901760
  %v11275 = vsub.f32 %v96, %v11274
  %v11276 = vand.u32 %v11275, 4294901760
  %v11277 = vsub.f32 %v11275, %v11276
  %v11278 = vand.u32 %v11277, 4294901760
  %11279 = vmatmul.mubr.f32.gmra.mrb[0].mxu0 %v11278
  %v11280 = vpop.f32.mrb[0].mxu0
  %v11281 = vadd.f32 0.0, %v11280
  %v11282 = vpop.f32.mrb[0].mxu0
  %v11283 = vadd.f32 0.0, %v11282
  %11284 = vdwg.mxu0
  %v11285 = vand.u32 %v9371, 4294901760
  %v11286 = vsub.f32 %v9371, %v11285
  %v11287 = vand.u32 %v11286, 4294901760
  %v11288 = vsub.f32 %v11286, %v11287
  %v11289 = vand.u32 %v11288, 4294901760
  %11290 = vmatprep.subr.mxu0 %v11289
  %v11291 = vand.u32 %v9370, 4294901760
  %v11292 = vsub.f32 %v9370, %v11291
  %v11293 = vand.u32 %v11292, 4294901760
  %v11294 = vsub.f32 %v11292, %v11293
  %v11295 = vand.u32 %v11294, 4294901760
  %11296 = vmatpush1.msra.mxu0 %v11295
  %v11297 = vand.u32 %v9379, 4294901760
  %v11298 = vsub.f32 %v9379, %v11297
  %v11299 = vand.u32 %v11298, 4294901760
  %v11300 = vsub.f32 %v11298, %v11299
  %v11301 = vand.u32 %v11300, 4294901760
  %11302 = vmatprep.subr.mxu0 %v11301
  %v11303 = vand.u32 %v9378, 4294901760
  %v11304 = vsub.f32 %v9378, %v11303
  %v11305 = vand.u32 %v11304, 4294901760
  %v11306 = vsub.f32 %v11304, %v11305
  %v11307 = vand.u32 %v11306, 4294901760
  %11308 = vmatpush1.msra.mxu0 %v11307
  %v11309 = vand.u32 %v9387, 4294901760
  %v11310 = vsub.f32 %v9387, %v11309
  %v11311 = vand.u32 %v11310, 4294901760
  %v11312 = vsub.f32 %v11310, %v11311
  %v11313 = vand.u32 %v11312, 4294901760
  %11314 = vmatprep.subr.mxu0 %v11313
  %v11315 = vand.u32 %v9386, 4294901760
  %v11316 = vsub.f32 %v9386, %v11315
  %v11317 = vand.u32 %v11316, 4294901760
  %v11318 = vsub.f32 %v11316, %v11317
  %v11319 = vand.u32 %v11318, 4294901760
  %11320 = vmatpush1.msra.mxu0 %v11319
  %v11321 = vand.u32 %v9395, 4294901760
  %v11322 = vsub.f32 %v9395, %v11321
  %v11323 = vand.u32 %v11322, 4294901760
  %v11324 = vsub.f32 %v11322, %v11323
  %v11325 = vand.u32 %v11324, 4294901760
  %11326 = vmatprep.subr.mxu0 %v11325
  %v11327 = vand.u32 %v9394, 4294901760
  %v11328 = vsub.f32 %v9394, %v11327
  %v11329 = vand.u32 %v11328, 4294901760
  %v11330 = vsub.f32 %v11328, %v11329
  %v11331 = vand.u32 %v11330, 4294901760
  %11332 = vmatpush1.msra.mxu0 %v11331
  %v11333 = vand.u32 %v9403, 4294901760
  %v11334 = vsub.f32 %v9403, %v11333
  %v11335 = vand.u32 %v11334, 4294901760
  %v11336 = vsub.f32 %v11334, %v11335
  %v11337 = vand.u32 %v11336, 4294901760
  %11338 = vmatprep.subr.mxu0 %v11337
  %v11339 = vand.u32 %v9402, 4294901760
  %v11340 = vsub.f32 %v9402, %v11339
  %v11341 = vand.u32 %v11340, 4294901760
  %v11342 = vsub.f32 %v11340, %v11341
  %v11343 = vand.u32 %v11342, 4294901760
  %11344 = vmatpush1.msra.mxu0 %v11343
  %v11345 = vand.u32 %v9411, 4294901760
  %v11346 = vsub.f32 %v9411, %v11345
  %v11347 = vand.u32 %v11346, 4294901760
  %v11348 = vsub.f32 %v11346, %v11347
  %v11349 = vand.u32 %v11348, 4294901760
  %11350 = vmatprep.subr.mxu0 %v11349
  %v11351 = vand.u32 %v9410, 4294901760
  %v11352 = vsub.f32 %v9410, %v11351
  %v11353 = vand.u32 %v11352, 4294901760
  %v11354 = vsub.f32 %v11352, %v11353
  %v11355 = vand.u32 %v11354, 4294901760
  %11356 = vmatpush1.msra.mxu0 %v11355
  %11357 = vmatprep.subr.mxu0 0.0
  %11358 = vmatpush1.msra.mxu0 0.0
  %11359 = vmatprep.subr.mxu0 0.0
  %11360 = vmatpush1.msra.mxu0 0.0
  %11361 = vmatprep.subr.mxu0 0.0
  %11362 = vmatpush1.msra.mxu0 0.0
  %11363 = vmatprep.subr.mxu0 0.0
  %11364 = vmatpush1.msra.mxu0 0.0
  %11365 = vmatprep.subr.mxu0 0.0
  %11366 = vmatpush1.msra.mxu0 0.0
  %11367 = vmatprep.subr.mxu0 0.0
  %11368 = vmatpush1.msra.mxu0 0.0
  %11369 = vmatprep.subr.mxu0 0.0
  %11370 = vmatpush1.msra.mxu0 0.0
  %11371 = vmatprep.subr.mxu0 0.0
  %11372 = vmatpush1.msra.mxu0 0.0
  %11373 = vmatprep.subr.mxu0 0.0
  %11374 = vmatpush1.msra.mxu0 0.0
  %11375 = vmatprep.subr.mxu0 0.0
  %11376 = vmatpush1.msra.mxu0 0.0
  %11377 = vmatprep.subr.mxu0 0.0
  %11378 = vmatpush1.msra.mxu0 0.0
  %11379 = vmatprep.subr.mxu0 0.0
  %11380 = vmatpush1.msra.mxu0 0.0
  %11381 = vmatprep.subr.mxu0 0.0
  %11382 = vmatpush1.msra.mxu0 0.0
  %11383 = vmatprep.subr.mxu0 0.0
  %11384 = vmatpush1.msra.mxu0 0.0
  %11385 = vmatprep.subr.mxu0 0.0
  %11386 = vmatpush1.msra.mxu0 0.0
  %11387 = vmatprep.subr.mxu0 0.0
  %11388 = vmatpush1.msra.mxu0 0.0
  %11389 = vmatprep.subr.mxu0 0.0
  %11390 = vmatpush1.msra.mxu0 0.0
  %11391 = vmatprep.subr.mxu0 0.0
  %11392 = vmatpush1.msra.mxu0 0.0
  %11393 = vmatprep.subr.mxu0 0.0
  %11394 = vmatpush1.msra.mxu0 0.0
  %11395 = vmatprep.subr.mxu0 0.0
  %11396 = vmatpush1.msra.mxu0 0.0
  %11397 = vmatprep.subr.mxu0 0.0
  %11398 = vmatpush1.msra.mxu0 0.0
  %11399 = vmatprep.subr.mxu0 0.0
  %11400 = vmatpush1.msra.mxu0 0.0
  %11401 = vmatprep.subr.mxu0 0.0
  %11402 = vmatpush1.msra.mxu0 0.0
  %11403 = vmatprep.subr.mxu0 0.0
  %11404 = vmatpush1.msra.mxu0 0.0
  %11405 = vmatprep.subr.mxu0 0.0
  %11406 = vmatpush1.msra.mxu0 0.0
  %11407 = vmatprep.subr.mxu0 0.0
  %11408 = vmatpush1.msra.mxu0 0.0
  %11409 = vmatprep.mubr.f32.mxu0 0.0
  %v11410 = vand.u32 %v96, 4294901760
  %11411 = vmatmul.mubr.f32.gmra.mrb[0].mxu0 %v11410
  %v11412 = vpop.f32.mrb[0].mxu0
  %v11413 = vadd.f32 %v11281, %v11412
  %v11414 = vpop.f32.mrb[0].mxu0
  %v11415 = vadd.f32 %v11283, %v11414
  %11416 = vdwg.mxu0
  %v11417 = vand.u32 %v9371, 4294901760
  %v11418 = vsub.f32 %v9371, %v11417
  %11419 = vmatprep.subr.mxu0 %v11418
  %v11420 = vand.u32 %v9370, 4294901760
  %v11421 = vsub.f32 %v9370, %v11420
  %11422 = vmatpush1.msra.mxu0 %v11421
  %v11423 = vand.u32 %v9379, 4294901760
  %v11424 = vsub.f32 %v9379, %v11423
  %11425 = vmatprep.subr.mxu0 %v11424
  %v11426 = vand.u32 %v9378, 4294901760
  %v11427 = vsub.f32 %v9378, %v11426
  %11428 = vmatpush1.msra.mxu0 %v11427
  %v11429 = vand.u32 %v9387, 4294901760
  %v11430 = vsub.f32 %v9387, %v11429
  %11431 = vmatprep.subr.mxu0 %v11430
  %v11432 = vand.u32 %v9386, 4294901760
  %v11433 = vsub.f32 %v9386, %v11432
  %11434 = vmatpush1.msra.mxu0 %v11433
  %v11435 = vand.u32 %v9395, 4294901760
  %v11436 = vsub.f32 %v9395, %v11435
  %11437 = vmatprep.subr.mxu0 %v11436
  %v11438 = vand.u32 %v9394, 4294901760
  %v11439 = vsub.f32 %v9394, %v11438
  %11440 = vmatpush1.msra.mxu0 %v11439
  %v11441 = vand.u32 %v9403, 4294901760
  %v11442 = vsub.f32 %v9403, %v11441
  %11443 = vmatprep.subr.mxu0 %v11442
  %v11444 = vand.u32 %v9402, 4294901760
  %v11445 = vsub.f32 %v9402, %v11444
  %11446 = vmatpush1.msra.mxu0 %v11445
  %v11447 = vand.u32 %v9411, 4294901760
  %v11448 = vsub.f32 %v9411, %v11447
  %11449 = vmatprep.subr.mxu0 %v11448
  %v11450 = vand.u32 %v9410, 4294901760
  %v11451 = vsub.f32 %v9410, %v11450
  %11452 = vmatpush1.msra.mxu0 %v11451
  %11453 = vmatprep.subr.mxu0 0.0
  %11454 = vmatpush1.msra.mxu0 0.0
  %11455 = vmatprep.subr.mxu0 0.0
  %11456 = vmatpush1.msra.mxu0 0.0
  %11457 = vmatprep.subr.mxu0 0.0
  %11458 = vmatpush1.msra.mxu0 0.0
  %11459 = vmatprep.subr.mxu0 0.0
  %11460 = vmatpush1.msra.mxu0 0.0
  %11461 = vmatprep.subr.mxu0 0.0
  %11462 = vmatpush1.msra.mxu0 0.0
  %11463 = vmatprep.subr.mxu0 0.0
  %11464 = vmatpush1.msra.mxu0 0.0
  %11465 = vmatprep.subr.mxu0 0.0
  %11466 = vmatpush1.msra.mxu0 0.0
  %11467 = vmatprep.subr.mxu0 0.0
  %11468 = vmatpush1.msra.mxu0 0.0
  %11469 = vmatprep.subr.mxu0 0.0
  %11470 = vmatpush1.msra.mxu0 0.0
  %11471 = vmatprep.subr.mxu0 0.0
  %11472 = vmatpush1.msra.mxu0 0.0
  %11473 = vmatprep.subr.mxu0 0.0
  %11474 = vmatpush1.msra.mxu0 0.0
  %11475 = vmatprep.subr.mxu0 0.0
  %11476 = vmatpush1.msra.mxu0 0.0
  %11477 = vmatprep.subr.mxu0 0.0
  %11478 = vmatpush1.msra.mxu0 0.0
  %11479 = vmatprep.subr.mxu0 0.0
  %11480 = vmatpush1.msra.mxu0 0.0
  %11481 = vmatprep.subr.mxu0 0.0
  %11482 = vmatpush1.msra.mxu0 0.0
  %11483 = vmatprep.subr.mxu0 0.0
  %11484 = vmatpush1.msra.mxu0 0.0
  %11485 = vmatprep.subr.mxu0 0.0
  %11486 = vmatpush1.msra.mxu0 0.0
  %11487 = vmatprep.subr.mxu0 0.0
  %11488 = vmatpush1.msra.mxu0 0.0
  %11489 = vmatprep.subr.mxu0 0.0
  %11490 = vmatpush1.msra.mxu0 0.0
  %11491 = vmatprep.subr.mxu0 0.0
  %11492 = vmatpush1.msra.mxu0 0.0
  %11493 = vmatprep.subr.mxu0 0.0
  %11494 = vmatpush1.msra.mxu0 0.0
  %11495 = vmatprep.subr.mxu0 0.0
  %11496 = vmatpush1.msra.mxu0 0.0
  %11497 = vmatprep.subr.mxu0 0.0
  %11498 = vmatpush1.msra.mxu0 0.0
  %11499 = vmatprep.subr.mxu0 0.0
  %11500 = vmatpush1.msra.mxu0 0.0
  %11501 = vmatprep.subr.mxu0 0.0
  %11502 = vmatpush1.msra.mxu0 0.0
  %11503 = vmatprep.subr.mxu0 0.0
  %11504 = vmatpush1.msra.mxu0 0.0
  %11505 = vmatprep.mubr.f32.mxu0 0.0
  %v11506 = vand.u32 %v96, 4294901760
  %v11507 = vsub.f32 %v96, %v11506
  %11508 = vmatmul.mubr.f32.gmra.mrb[0].mxu0 %v11507
  %v11509 = vpop.f32.mrb[0].mxu0
  %v11510 = vadd.f32 %v11413, %v11509
  %v11511 = vpop.f32.mrb[0].mxu0
  %v11512 = vadd.f32 %v11415, %v11511
  %11513 = vdwg.mxu0
  %v11514 = vand.u32 %v9371, 4294901760
  %11515 = vmatprep.subr.mxu0 %v11514
  %v11516 = vand.u32 %v9370, 4294901760
  %11517 = vmatpush1.msra.mxu0 %v11516
  %v11518 = vand.u32 %v9379, 4294901760
  %11519 = vmatprep.subr.mxu0 %v11518
  %v11520 = vand.u32 %v9378, 4294901760
  %11521 = vmatpush1.msra.mxu0 %v11520
  %v11522 = vand.u32 %v9387, 4294901760
  %11523 = vmatprep.subr.mxu0 %v11522
  %v11524 = vand.u32 %v9386, 4294901760
  %11525 = vmatpush1.msra.mxu0 %v11524
  %v11526 = vand.u32 %v9395, 4294901760
  %11527 = vmatprep.subr.mxu0 %v11526
  %v11528 = vand.u32 %v9394, 4294901760
  %11529 = vmatpush1.msra.mxu0 %v11528
  %v11530 = vand.u32 %v9403, 4294901760
  %11531 = vmatprep.subr.mxu0 %v11530
  %v11532 = vand.u32 %v9402, 4294901760
  %11533 = vmatpush1.msra.mxu0 %v11532
  %v11534 = vand.u32 %v9411, 4294901760
  %11535 = vmatprep.subr.mxu0 %v11534
  %v11536 = vand.u32 %v9410, 4294901760
  %11537 = vmatpush1.msra.mxu0 %v11536
  %11538 = vmatprep.subr.mxu0 0.0
  %11539 = vmatpush1.msra.mxu0 0.0
  %11540 = vmatprep.subr.mxu0 0.0
  %11541 = vmatpush1.msra.mxu0 0.0
  %11542 = vmatprep.subr.mxu0 0.0
  %11543 = vmatpush1.msra.mxu0 0.0
  %11544 = vmatprep.subr.mxu0 0.0
  %11545 = vmatpush1.msra.mxu0 0.0
  %11546 = vmatprep.subr.mxu0 0.0
  %11547 = vmatpush1.msra.mxu0 0.0
  %11548 = vmatprep.subr.mxu0 0.0
  %11549 = vmatpush1.msra.mxu0 0.0
  %11550 = vmatprep.subr.mxu0 0.0
  %11551 = vmatpush1.msra.mxu0 0.0
  %11552 = vmatprep.subr.mxu0 0.0
  %11553 = vmatpush1.msra.mxu0 0.0
  %11554 = vmatprep.subr.mxu0 0.0
  %11555 = vmatpush1.msra.mxu0 0.0
  %11556 = vmatprep.subr.mxu0 0.0
  %11557 = vmatpush1.msra.mxu0 0.0
  %11558 = vmatprep.subr.mxu0 0.0
  %11559 = vmatpush1.msra.mxu0 0.0
  %11560 = vmatprep.subr.mxu0 0.0
  %11561 = vmatpush1.msra.mxu0 0.0
  %11562 = vmatprep.subr.mxu0 0.0
  %11563 = vmatpush1.msra.mxu0 0.0
  %11564 = vmatprep.subr.mxu0 0.0
  %11565 = vmatpush1.msra.mxu0 0.0
  %11566 = vmatprep.subr.mxu0 0.0
  %11567 = vmatpush1.msra.mxu0 0.0
  %11568 = vmatprep.subr.mxu0 0.0
  %11569 = vmatpush1.msra.mxu0 0.0
  %11570 = vmatprep.subr.mxu0 0.0
  %11571 = vmatpush1.msra.mxu0 0.0
  %11572 = vmatprep.subr.mxu0 0.0
  %11573 = vmatpush1.msra.mxu0 0.0
  %11574 = vmatprep.subr.mxu0 0.0
  %11575 = vmatpush1.msra.mxu0 0.0
  %11576 = vmatprep.subr.mxu0 0.0
  %11577 = vmatpush1.msra.mxu0 0.0
  %11578 = vmatprep.subr.mxu0 0.0
  %11579 = vmatpush1.msra.mxu0 0.0
  %11580 = vmatprep.subr.mxu0 0.0
  %11581 = vmatpush1.msra.mxu0 0.0
  %11582 = vmatprep.subr.mxu0 0.0
  %11583 = vmatpush1.msra.mxu0 0.0
  %11584 = vmatprep.subr.mxu0 0.0
  %11585 = vmatpush1.msra.mxu0 0.0
  %11586 = vmatprep.subr.mxu0 0.0
  %11587 = vmatpush1.msra.mxu0 0.0
  %11588 = vmatprep.subr.mxu0 0.0
  %11589 = vmatpush1.msra.mxu0 0.0
  %11590 = vmatprep.mubr.f32.mxu0 0.0
  %v11591 = vand.u32 %v96, 4294901760
  %v11592 = vsub.f32 %v96, %v11591
  %v11593 = vand.u32 %v11592, 4294901760
  %11594 = vmatmul.mubr.f32.gmra.mrb[0].mxu0 %v11593
  %v11595 = vpop.f32.mrb[0].mxu0
  %v11596 = vadd.f32 %v11510, %v11595
  %v11597 = vpop.f32.mrb[0].mxu0
  %v11598 = vadd.f32 %v11512, %v11597
  %11599 = vdwg.mxu0
  %v11600 = vand.u32 %v9371, 4294901760
  %v11601 = vsub.f32 %v9371, %v11600
  %v11602 = vand.u32 %v11601, 4294901760
  %11603 = vmatprep.subr.mxu0 %v11602
  %v11604 = vand.u32 %v9370, 4294901760
  %v11605 = vsub.f32 %v9370, %v11604
  %v11606 = vand.u32 %v11605, 4294901760
  %11607 = vmatpush1.msra.mxu0 %v11606
  %v11608 = vand.u32 %v9379, 4294901760
  %v11609 = vsub.f32 %v9379, %v11608
  %v11610 = vand.u32 %v11609, 4294901760
  %11611 = vmatprep.subr.mxu0 %v11610
  %v11612 = vand.u32 %v9378, 4294901760
  %v11613 = vsub.f32 %v9378, %v11612
  %v11614 = vand.u32 %v11613, 4294901760
  %11615 = vmatpush1.msra.mxu0 %v11614
  %v11616 = vand.u32 %v9387, 4294901760
  %v11617 = vsub.f32 %v9387, %v11616
  %v11618 = vand.u32 %v11617, 4294901760
  %11619 = vmatprep.subr.mxu0 %v11618
  %v11620 = vand.u32 %v9386, 4294901760
  %v11621 = vsub.f32 %v9386, %v11620
  %v11622 = vand.u32 %v11621, 4294901760
  %11623 = vmatpush1.msra.mxu0 %v11622
  %v11624 = vand.u32 %v9395, 4294901760
  %v11625 = vsub.f32 %v9395, %v11624
  %v11626 = vand.u32 %v11625, 4294901760
  %11627 = vmatprep.subr.mxu0 %v11626
  %v11628 = vand.u32 %v9394, 4294901760
  %v11629 = vsub.f32 %v9394, %v11628
  %v11630 = vand.u32 %v11629, 4294901760
  %11631 = vmatpush1.msra.mxu0 %v11630
  %v11632 = vand.u32 %v9403, 4294901760
  %v11633 = vsub.f32 %v9403, %v11632
  %v11634 = vand.u32 %v11633, 4294901760
  %11635 = vmatprep.subr.mxu0 %v11634
  %v11636 = vand.u32 %v9402, 4294901760
  %v11637 = vsub.f32 %v9402, %v11636
  %v11638 = vand.u32 %v11637, 4294901760
  %11639 = vmatpush1.msra.mxu0 %v11638
  %v11640 = vand.u32 %v9411, 4294901760
  %v11641 = vsub.f32 %v9411, %v11640
  %v11642 = vand.u32 %v11641, 4294901760
  %11643 = vmatprep.subr.mxu0 %v11642
  %v11644 = vand.u32 %v9410, 4294901760
  %v11645 = vsub.f32 %v9410, %v11644
  %v11646 = vand.u32 %v11645, 4294901760
  %11647 = vmatpush1.msra.mxu0 %v11646
  %11648 = vmatprep.subr.mxu0 0.0
  %11649 = vmatpush1.msra.mxu0 0.0
  %11650 = vmatprep.subr.mxu0 0.0
  %11651 = vmatpush1.msra.mxu0 0.0
  %11652 = vmatprep.subr.mxu0 0.0
  %11653 = vmatpush1.msra.mxu0 0.0
  %11654 = vmatprep.subr.mxu0 0.0
  %11655 = vmatpush1.msra.mxu0 0.0
  %11656 = vmatprep.subr.mxu0 0.0
  %11657 = vmatpush1.msra.mxu0 0.0
  %11658 = vmatprep.subr.mxu0 0.0
  %11659 = vmatpush1.msra.mxu0 0.0
  %11660 = vmatprep.subr.mxu0 0.0
  %11661 = vmatpush1.msra.mxu0 0.0
  %11662 = vmatprep.subr.mxu0 0.0
  %11663 = vmatpush1.msra.mxu0 0.0
  %11664 = vmatprep.subr.mxu0 0.0
  %11665 = vmatpush1.msra.mxu0 0.0
  %11666 = vmatprep.subr.mxu0 0.0
  %11667 = vmatpush1.msra.mxu0 0.0
  %11668 = vmatprep.subr.mxu0 0.0
  %11669 = vmatpush1.msra.mxu0 0.0
  %11670 = vmatprep.subr.mxu0 0.0
  %11671 = vmatpush1.msra.mxu0 0.0
  %11672 = vmatprep.subr.mxu0 0.0
  %11673 = vmatpush1.msra.mxu0 0.0
  %11674 = vmatprep.subr.mxu0 0.0
  %11675 = vmatpush1.msra.mxu0 0.0
  %11676 = vmatprep.subr.mxu0 0.0
  %11677 = vmatpush1.msra.mxu0 0.0
  %11678 = vmatprep.subr.mxu0 0.0
  %11679 = vmatpush1.msra.mxu0 0.0
  %11680 = vmatprep.subr.mxu0 0.0
  %11681 = vmatpush1.msra.mxu0 0.0
  %11682 = vmatprep.subr.mxu0 0.0
  %11683 = vmatpush1.msra.mxu0 0.0
  %11684 = vmatprep.subr.mxu0 0.0
  %11685 = vmatpush1.msra.mxu0 0.0
  %11686 = vmatprep.subr.mxu0 0.0
  %11687 = vmatpush1.msra.mxu0 0.0
  %11688 = vmatprep.subr.mxu0 0.0
  %11689 = vmatpush1.msra.mxu0 0.0
  %11690 = vmatprep.subr.mxu0 0.0
  %11691 = vmatpush1.msra.mxu0 0.0
  %11692 = vmatprep.subr.mxu0 0.0
  %11693 = vmatpush1.msra.mxu0 0.0
  %11694 = vmatprep.subr.mxu0 0.0
  %11695 = vmatpush1.msra.mxu0 0.0
  %11696 = vmatprep.subr.mxu0 0.0
  %11697 = vmatpush1.msra.mxu0 0.0
  %11698 = vmatprep.subr.mxu0 0.0
  %11699 = vmatpush1.msra.mxu0 0.0
  %11700 = vmatprep.mubr.f32.mxu0 0.0
  %v11701 = vand.u32 %v96, 4294901760
  %11702 = vmatmul.mubr.f32.gmra.mrb[0].mxu0 %v11701
  %v11703 = vpop.f32.mrb[0].mxu0
  %v11704 = vadd.f32 %v11596, %v11703
  %v11705 = vpop.f32.mrb[0].mxu0
  %v11706 = vadd.f32 %v11598, %v11705
  %11707 = vdwg.mxu0
  %v11708 = vand.u32 %v9371, 4294901760
  %11709 = vmatprep.subr.mxu0 %v11708
  %v11710 = vand.u32 %v9370, 4294901760
  %11711 = vmatpush1.msra.mxu0 %v11710
  %v11712 = vand.u32 %v9379, 4294901760
  %11713 = vmatprep.subr.mxu0 %v11712
  %v11714 = vand.u32 %v9378, 4294901760
  %11715 = vmatpush1.msra.mxu0 %v11714
  %v11716 = vand.u32 %v9387, 4294901760
  %11717 = vmatprep.subr.mxu0 %v11716
  %v11718 = vand.u32 %v9386, 4294901760
  %11719 = vmatpush1.msra.mxu0 %v11718
  %v11720 = vand.u32 %v9395, 4294901760
  %11721 = vmatprep.subr.mxu0 %v11720
  %v11722 = vand.u32 %v9394, 4294901760
  %11723 = vmatpush1.msra.mxu0 %v11722
  %v11724 = vand.u32 %v9403, 4294901760
  %11725 = vmatprep.subr.mxu0 %v11724
  %v11726 = vand.u32 %v9402, 4294901760
  %11727 = vmatpush1.msra.mxu0 %v11726
  %v11728 = vand.u32 %v9411, 4294901760
  %11729 = vmatprep.subr.mxu0 %v11728
  %v11730 = vand.u32 %v9410, 4294901760
  %11731 = vmatpush1.msra.mxu0 %v11730
  %11732 = vmatprep.subr.mxu0 0.0
  %11733 = vmatpush1.msra.mxu0 0.0
  %11734 = vmatprep.subr.mxu0 0.0
  %11735 = vmatpush1.msra.mxu0 0.0
  %11736 = vmatprep.subr.mxu0 0.0
  %11737 = vmatpush1.msra.mxu0 0.0
  %11738 = vmatprep.subr.mxu0 0.0
  %11739 = vmatpush1.msra.mxu0 0.0
  %11740 = vmatprep.subr.mxu0 0.0
  %11741 = vmatpush1.msra.mxu0 0.0
  %11742 = vmatprep.subr.mxu0 0.0
  %11743 = vmatpush1.msra.mxu0 0.0
  %11744 = vmatprep.subr.mxu0 0.0
  %11745 = vmatpush1.msra.mxu0 0.0
  %11746 = vmatprep.subr.mxu0 0.0
  %11747 = vmatpush1.msra.mxu0 0.0
  %11748 = vmatprep.subr.mxu0 0.0
  %11749 = vmatpush1.msra.mxu0 0.0
  %11750 = vmatprep.subr.mxu0 0.0
  %11751 = vmatpush1.msra.mxu0 0.0
  %11752 = vmatprep.subr.mxu0 0.0
  %11753 = vmatpush1.msra.mxu0 0.0
  %11754 = vmatprep.subr.mxu0 0.0
  %11755 = vmatpush1.msra.mxu0 0.0
  %11756 = vmatprep.subr.mxu0 0.0
  %11757 = vmatpush1.msra.mxu0 0.0
  %11758 = vmatprep.subr.mxu0 0.0
  %11759 = vmatpush1.msra.mxu0 0.0
  %11760 = vmatprep.subr.mxu0 0.0
  %11761 = vmatpush1.msra.mxu0 0.0
  %11762 = vmatprep.subr.mxu0 0.0
  %11763 = vmatpush1.msra.mxu0 0.0
  %11764 = vmatprep.subr.mxu0 0.0
  %11765 = vmatpush1.msra.mxu0 0.0
  %11766 = vmatprep.subr.mxu0 0.0
  %11767 = vmatpush1.msra.mxu0 0.0
  %11768 = vmatprep.subr.mxu0 0.0
  %11769 = vmatpush1.msra.mxu0 0.0
  %11770 = vmatprep.subr.mxu0 0.0
  %11771 = vmatpush1.msra.mxu0 0.0
  %11772 = vmatprep.subr.mxu0 0.0
  %11773 = vmatpush1.msra.mxu0 0.0
  %11774 = vmatprep.subr.mxu0 0.0
  %11775 = vmatpush1.msra.mxu0 0.0
  %11776 = vmatprep.subr.mxu0 0.0
  %11777 = vmatpush1.msra.mxu0 0.0
  %11778 = vmatprep.subr.mxu0 0.0
  %11779 = vmatpush1.msra.mxu0 0.0
  %11780 = vmatprep.subr.mxu0 0.0
  %11781 = vmatpush1.msra.mxu0 0.0
  %11782 = vmatprep.subr.mxu0 0.0
  %11783 = vmatpush1.msra.mxu0 0.0
  %11784 = vmatprep.mubr.f32.mxu0 0.0
  %v11785 = vand.u32 %v96, 4294901760
  %11786 = vmatmul.mubr.f32.gmra.mrb[0].mxu0 %v11785
  %v11787 = vpop.f32.mrb[0].mxu0
  %v11788 = vadd.f32 %v11704, %v11787
  %v11789 = vpop.f32.mrb[0].mxu0
  %v11790 = vadd.f32 %v11706, %v11789
  %11791 = vdwg.mxu0
  %v11792 = vmul.f32 %v10003, %v7731
  %v11793 = vmul.f32 %v10005, %v7733
  %v11794 = vmul.f32 %v10598, %v8274
  %v11795 = vmul.f32 %v10600, %v8276
  %v11796 = vmul.f32 %v11193, %v8817
  %v11797 = vmul.f32 %v11195, %v8819
  %v11798 = vmul.f32 %v11788, %v9360
  %v11799 = vmul.f32 %v11790, %v9362
  %v11808 = vcombine.low %v11792, %v11793
  %v11809 = vcombine.low %v11794, %v11795
  %v11811 = vunpack.c.l.s4 1983009808
  %v11812 = vunpack.c.0.s8 %v11811
  %v11813 = vlaneseq
  %v11814 = vshrl.u32 %v11813, 7
  %v11815 = vsub.s32 %v11812, %v11814
  %v11816 = vrot.slane %v11808, %v11815
  %v11818 = vunpack.c.l.s4 1983009808
  %v11819 = vunpack.c.0.s8 %v11818
  %v11820 = vlaneseq
  %v11821 = vshrl.u32 %v11820, 7
  %v11822 = vsub.s32 %v11819, %v11821
  %v11823 = vrot.slane %v11809, %v11822
  %v11824 = vcombine.low %v11816, %v11823
  %v11825 = vcombine.low %v11796, %v11797
  %v11826 = vcombine.low %v11798, %v11799
  %v11828 = vunpack.c.l.s4 1983009808
  %v11829 = vunpack.c.0.s8 %v11828
  %v11830 = vlaneseq
  %v11831 = vshrl.u32 %v11830, 7
  %v11832 = vsub.s32 %v11829, %v11831
  %v11833 = vrot.slane %v11825, %v11832
  %v11835 = vunpack.c.l.s4 1983009808
  %v11836 = vunpack.c.0.s8 %v11835
  %v11837 = vlaneseq
  %v11838 = vshrl.u32 %v11837, 7
  %v11839 = vsub.s32 %v11836, %v11838
  %v11840 = vrot.slane %v11826, %v11839
  %v11841 = vcombine.low %v11833, %v11840
  %v11844 = vadd.f32 %v44, %v11824
  %v11845 = vadd.f32 %v45, %v11841
  %v11846 = vmax.f32 %v11844, -2.0
  %v11847 = vmax.f32 %v11845, -2.0
  %v11848 = vmin.f32 %v11846, 2.0
  %v11849 = vmin.f32 %v11847, 2.0
  %11850 = vst [vmem:[%s13] sm:$0xff] %v11848
  %11851 = vst [vmem:[%s13 + $0x8] sm:$0xff] %v11849
  // Predicated region
  $region50: #{bp_rnet_forward.1} parent=0 // pred_check
    _
  $region51: #{bp_rnet_forward.1} parent=0 // pred_check_branch
    %11853 = sbr.rel (0) target = $region53
  $region52: #{bp_rnet_forward.1} parent=0 // pred_region
    _
  $region53: #{bp_rnet_forward.1} parent=0 // pred_fallthru
    _
  // Predicated region
  $region54: #{bp_rnet_forward.1} parent=0 // pred_check
    _
  $region55: #{bp_rnet_forward.1} parent=0 // pred_check_branch
    %11855 = sbr.rel (0) target = $region57
  $region56: #{bp_rnet_forward.1} parent=0 // pred_region
    _
  $region57: #{bp_rnet_forward.1} parent=0 // pred_fallthru
    _
  // Predicated region
  $region58: #{bp_rnet_forward.1} parent=0 // pred_check
    _
  $region59: #{bp_rnet_forward.1} parent=0 // pred_check_branch
    %11857 = sbr.rel (0) target = $region61
  $region60: #{bp_rnet_forward.1} parent=0 // pred_region
    _
  $region61: #{bp_rnet_forward.1} parent=0 // pred_fallthru
    _
  // Predicated region
  $region62: #{bp_rnet_forward.1} parent=0 // pred_check
    _
  $region63: #{bp_rnet_forward.1} parent=0 // pred_check_branch
    %11859 = sbr.rel (0) target = $region65
  $region64: #{bp_rnet_forward.1} parent=0 // pred_region
    _
  $region65: #{bp_rnet_forward.1} parent=0 // pred_fallthru
    _

</llo_original>
